<compile_context>
chip_gen: v6e
topology: v6e:2x2x1
jax: 0.10.0
libtpu: 0.0.40
codegen_flags: <defaults>
</compile_context>

<pallas_src>
import functools

import jax
import jax.numpy as jnp
from jax.experimental import pallas as pl
from jax.experimental.pallas import tpu as pltpu


def _layer_norm(x, gamma, beta, eps=1e-5):
  mu = jnp.mean(x, axis=-1, keepdims=True)
  var = jnp.mean((x - mu) ** 2, axis=-1, keepdims=True)
  return (x - mu) * jax.lax.rsqrt(var + eps) * gamma + beta


# ---------------------------------------------------------------------------
# Pallas kernel: embedding + 2 encoder layers + fused heads, all in VMEM.
# ---------------------------------------------------------------------------

def _fused_model_kernel(ids_ref, emb_ref, pos_ref, wq, wk, wv, bq, bk, bv,
                        wo, bo, ln1g, ln1b, w1, b1, w2, b2, ln2g, ln2b,
                        whead, bhead, out_ref, *,
                        num_heads, batch, seq, ff_chunk):
  B, S, H = batch, seq, num_heads
  V, D = emb_ref.shape
  Dh = D // H
  N = B * S
  L = wq.shape[0]
  FF = w1.shape[-1]
  scale = 1.0 / float(Dh) ** 0.5

  # ---- embedding lookup (exact: one-hot f32 matmul) + positional add ----
  ids = ids_ref[...]                                              # (N, 1) int32
  onehot = (ids == jax.lax.broadcasted_iota(jnp.int32, (N, V), 1))
  x = jnp.dot(onehot.astype(jnp.float32), emb_ref[...],
              preferred_element_type=jnp.float32)                 # (N, D) f32
  res = x + jnp.broadcast_to(pos_ref[0:S, :], (B, S, D)).reshape(N, D)

  def split_heads(t):      # (N, D) f32 -> (H*B, S, Dh) bf16, head-major batch
    parts = [t[:, h * Dh:(h + 1) * Dh].reshape(B, S, Dh) for h in range(H)]
    return jnp.stack(parts, axis=0).reshape(H * B, S, Dh).astype(jnp.bfloat16)

  def merge_heads(t):      # (H*B, S, Dh) f32 -> (N, D) f32
    t = t.reshape(H, B, S, Dh)
    return jnp.concatenate([t[h].reshape(N, Dh) for h in range(H)], axis=-1)

  for l in range(L):               # static unroll; weights resident in VMEM
    # ---- multi-head self-attention ----
    res_b = res.astype(jnp.bfloat16)
    q = jnp.dot(res_b, wq[l], preferred_element_type=jnp.float32) + bq[l]
    k = jnp.dot(res_b, wk[l], preferred_element_type=jnp.float32) + bk[l]
    v = jnp.dot(res_b, wv[l], preferred_element_type=jnp.float32) + bv[l]

    qh, kh, vh = split_heads(q), split_heads(k), split_heads(v)
    s = jnp.einsum('bqd,bkd->bqk', qh, kh,
                   preferred_element_type=jnp.float32) * scale    # (H*B, S, S)
    s = s - jnp.max(s, axis=-1, keepdims=True)
    p = jnp.exp(s)
    p = p * pl.reciprocal(jnp.sum(p, axis=-1, keepdims=True), approx=True)
    ctx = jnp.einsum('bqk,bkd->bqd', p.astype(jnp.bfloat16), vh,
                     preferred_element_type=jnp.float32)          # (H*B, S, Dh)
    attn = jnp.dot(merge_heads(ctx).astype(jnp.bfloat16), wo[l],
                   preferred_element_type=jnp.float32) + bo[l]
    # TODO(synk): dropout layers of TransformerEncoderLayer omitted (eval mode).
    res = _layer_norm(res + attn, ln1g[l], ln1b[l])

    # ---- feed-forward, chunked over the 2048-wide hidden dim ----
    res_b = res.astype(jnp.bfloat16)
    ffn = jnp.zeros((N, D), jnp.float32)
    for c0 in range(0, FF, ff_chunk):
      c1 = c0 + ff_chunk
      hid = jnp.dot(res_b, w1[l, :, c0:c1],
                    preferred_element_type=jnp.float32) + b1[l, :, c0:c1]
      hid = jnp.maximum(hid, 0.0).astype(jnp.bfloat16)
      ffn = ffn + jnp.dot(hid, w2[l, c0:c1, :],
                          preferred_element_type=jnp.float32)
    res = _layer_norm(res + ffn + b2[l], ln2g[l], ln2b[l])

  # ---- fused (template | tag) heads, lane-dense (N, 128) store ----
  out_ref[...] = jnp.dot(res.astype(jnp.bfloat16), whead[...],
                         preferred_element_type=jnp.float32) + bhead[...]


_PACKED_ORDER = ("emb", "pos", "wq", "wk", "wv", "bq", "bk", "bv",
                 "wo", "bo", "ln1_g", "ln1_b", "w1", "b1", "w2", "b2",
                 "ln2_g", "ln2_b", "whead", "bhead")


def fused_forward(input_ids, packed, *, num_heads, ff_chunk=512):
  """input_ids (B, S) int32 -> lane-padded logits (B*S, P) f32."""
  B, S = input_ids.shape
  N = B * S
  L, D, FF = packed["w1"].shape
  V = packed["emb"].shape[0]
  P = packed["whead"].shape[-1]

  ids = input_ids.reshape(N, 1).astype(jnp.int32)

  flops = (2 * N * V * D                                  # embedding one-hot
           + L * (3 * 2 * N * D * D                       # q/k/v projections
                  + 2 * 2 * N * S * D                     # scores + ctx
                  + 2 * N * D * D                         # out projection
                  + 2 * 2 * N * D * FF)                   # FFN
           + 2 * N * D * P)                               # fused heads
  transcendentals = L * (B * num_heads * S * S + B * num_heads * S)
  bytes_accessed = (ids.size * 4 + N * P * 4
                    + sum(int(v.size) * v.dtype.itemsize
                          for v in packed.values()))

  kernel = functools.partial(_fused_model_kernel, num_heads=num_heads,
                             batch=B, seq=S, ff_chunk=ff_chunk)
  return pl.pallas_call(
      kernel,
      out_shape=jax.ShapeDtypeStruct((N, P), jnp.float32),
      cost_estimate=pl.CostEstimate(flops=int(flops),
                                    transcendentals=int(transcendentals),
                                    bytes_accessed=int(bytes_accessed)),
      compiler_params=pltpu.CompilerParams(
          vmem_limit_bytes=8 * 1024 * 1024),
  )(ids, *(packed[k] for k in _PACKED_ORDER))


def transformer_classifier_tagger(input_ids, packed, *, num_heads,
                                  num_templates, num_tags):
  B, S = input_ids.shape
  logits = fused_forward(input_ids, packed, num_heads=num_heads)
  logits = logits.reshape(B, S, -1)
  template_logits = logits[:, 0, :num_templates]                    # CLS token
  tag_logits = logits[:, :, num_templates:num_templates + num_tags]
  return template_logits, tag_logits


# ---------------------------------------------------------------------------
# Parameters: PyTorch-layout init, then pack (stack, transpose, bf16, pad).
# ---------------------------------------------------------------------------

def init_params(key, vocab_size, D, num_layers, num_templates, num_tags,
                max_len, FF):
  std = 0.02
  keys = jax.random.split(key, 6 + num_layers)
  emb = jax.random.normal(keys[0], (vocab_size, D), jnp.float32) * std
  emb = emb.at[0].set(0.0)                       # padding_idx=0 row is zero
  pos = jax.random.normal(keys[1], (max_len, D), jnp.float32) * std

  layers = []
  for i in range(num_layers):
    lk = jax.random.split(keys[6 + i], 12)
    layers.append(dict(
        wqkv=jax.random.normal(lk[0], (3 * D, D), jnp.float32) * std,
        bqkv=jax.random.normal(lk[1], (3 * D,), jnp.float32) * std,
        wo=jax.random.normal(lk[2], (D, D), jnp.float32) * std,
        bo=jax.random.normal(lk[3], (D,), jnp.float32) * std,
        ln1_g=1.0 + jax.random.normal(lk[4], (D,), jnp.float32) * 0.1,
        ln1_b=jax.random.normal(lk[5], (D,), jnp.float32) * 0.1,
        w1=jax.random.normal(lk[6], (FF, D), jnp.float32) * std,
        b1=jax.random.normal(lk[7], (FF,), jnp.float32) * std,
        w2=jax.random.normal(lk[8], (D, FF), jnp.float32) * std,
        b2=jax.random.normal(lk[9], (D,), jnp.float32) * std,
        ln2_g=1.0 + jax.random.normal(lk[10], (D,), jnp.float32) * 0.1,
        ln2_b=jax.random.normal(lk[11], (D,), jnp.float32) * 0.1,
    ))

  wt = jax.random.normal(keys[2], (num_templates, D), jnp.float32) * std
  bt = jax.random.normal(keys[3], (num_templates,), jnp.float32) * std
  wtag = jax.random.normal(keys[4], (num_tags, D), jnp.float32) * std
  btag = jax.random.normal(keys[5], (num_tags,), jnp.float32) * std
  return dict(emb=emb, pos=pos, layers=layers, wt=wt, bt=bt,
              wtag=wtag, btag=btag)


def pack_params(params, lane_pad=128):
  L = len(params["layers"])
  D = params["emb"].shape[1]

  def stack(name):
    return jnp.stack([params["layers"][i][name] for i in range(L)])

  def t_bf16(w):                       # (L, out, in) -> (L, in, out) bf16
    return jnp.transpose(w, (0, 2, 1)).astype(jnp.bfloat16)

  wqkv = stack("wqkv")                 # (L, 3D, D)
  bqkv = stack("bqkv")                 # (L, 3D)

  pad_v = (-params["emb"].shape[0]) % 8
  packed = dict(
      emb=jnp.pad(params["emb"], ((0, pad_v), (0, 0))),   # (V_pad, D) f32
      pos=params["pos"],                                  # (max_len, D) f32
      wq=t_bf16(wqkv[:, 0 * D:1 * D, :]),
      wk=t_bf16(wqkv[:, 1 * D:2 * D, :]),
      wv=t_bf16(wqkv[:, 2 * D:3 * D, :]),
      bq=bqkv[:, 0 * D:1 * D].reshape(L, 1, D),
      bk=bqkv[:, 1 * D:2 * D].reshape(L, 1, D),
      bv=bqkv[:, 2 * D:3 * D].reshape(L, 1, D),
      wo=t_bf16(stack("wo")), bo=stack("bo").reshape(L, 1, D),
      ln1_g=stack("ln1_g").reshape(L, 1, D),
      ln1_b=stack("ln1_b").reshape(L, 1, D),
      w1=t_bf16(stack("w1")), b1=stack("b1").reshape(L, 1, -1),
      w2=t_bf16(stack("w2")), b2=stack("b2").reshape(L, 1, D),
      ln2_g=stack("ln2_g").reshape(L, 1, D),
      ln2_b=stack("ln2_b").reshape(L, 1, D),
  )

  # Fused heads: rows = [template_classifier ; token_tagger], lane-padded to a
  # multiple of 128 -> lane-dense, unmasked output stores.
  w_heads = jnp.concatenate([params["wt"], params["wtag"]], axis=0)  # (T+G, D)
  b_heads = jnp.concatenate([params["bt"], params["btag"]], axis=0)
  pad = (-w_heads.shape[0]) % lane_pad
  packed["whead"] = jnp.transpose(
      jnp.pad(w_heads, ((0, pad), (0, 0)))).astype(jnp.bfloat16)     # (D, P)
  packed["bhead"] = jnp.pad(b_heads, ((0, pad),)).reshape(1, -1)     # (1, P)
  return packed


# ---------------------------------------------------------------------------
# Pure-f32 JAX reference of the PyTorch module math (for correctness check).
# ---------------------------------------------------------------------------

def reference_forward(input_ids, params, num_heads):
  B, S = input_ids.shape
  D = params["emb"].shape[1]
  H, Dh = num_heads, params["emb"].shape[1] // num_heads
  h = params["emb"][input_ids] + params["pos"][:S][None, :, :]
  for layer in params["layers"]:
    qkv = h @ layer["wqkv"].T + layer["bqkv"]
    q, k, v = jnp.split(qkv, 3, axis=-1)
    def sh(t):
      return t.reshape(B, S, H, Dh).transpose(0, 2, 1, 3)
    qh, kh, vh = sh(q), sh(k), sh(v)
    scores = jnp.einsum('bhqd,bhkd->bhqk', qh, kh) / (Dh ** 0.5)
    p = jax.nn.softmax(scores, axis=-1)
    ctx = jnp.einsum('bhqk,bhkd->bhqd', p, vh).transpose(0, 2, 1, 3)
    attn = ctx.reshape(B, S, D) @ layer["wo"].T + layer["bo"]
    h = _layer_norm(h + attn, layer["ln1_g"], layer["ln1_b"])
    hid = jnp.maximum(h @ layer["w1"].T + layer["b1"], 0.0)
    ffn = hid @ layer["w2"].T + layer["b2"]
    h = _layer_norm(h + ffn, layer["ln2_g"], layer["ln2_b"])
  template = h[:, 0, :] @ params["wt"].T + params["bt"]
  tags = h @ params["wtag"].T + params["btag"]
  return template, tags


# ---------------------------------------------------------------------------

if __name__ == "__main__":
  vocab_size = 50
  embedding_dim = 32
  num_heads = 4
  num_layers = 2
  num_templates = 5
  num_tags = 7
  max_len = 128
  dim_feedforward = 2048          # nn.TransformerEncoderLayer default
  batch, seq = 2, 8

  key = jax.random.PRNGKey(0)
  pkey, dkey = jax.random.split(key)
  params = init_params(pkey, vocab_size, embedding_dim, num_layers,
                       num_templates, num_tags, max_len, dim_feedforward)
  packed = pack_params(params)

  input_ids = jax.random.randint(dkey, (batch, seq), 1, vocab_size,
                                 dtype=jnp.int32)
  input_ids = input_ids.at[:, -2:].set(0)   # a couple of padding tokens

  fwd = jax.jit(functools.partial(
      transformer_classifier_tagger, num_heads=num_heads,
      num_templates=num_templates, num_tags=num_tags))
  template_logits, tag_logits = fwd(input_ids, packed)
  jax.block_until_ready((template_logits, tag_logits))

  # Cross-check the fused bf16 Pallas kernel against the f32 PyTorch-math ref.
  ref_template, ref_tags = reference_forward(input_ids, params, num_heads)

  assert template_logits.shape == (batch, num_templates)
  assert tag_logits.shape == (batch, seq, num_tags)
  assert bool(jnp.all(jnp.isfinite(template_logits)))
  assert bool(jnp.all(jnp.isfinite(tag_logits)))
  assert bool(jnp.allclose(template_logits, ref_template, atol=2e-2, rtol=2e-2))
  assert bool(jnp.allclose(tag_logits, ref_tags, atol=2e-2, rtol=2e-2))
  print("KERNEL_OK")
</pallas_src>

<mosaic_0001>
module attributes {stable_mosaic.version = 11 : i64} {
  func.func @_fused_model_kernel(%arg0: memref<16x1xi32, #tpu.memory_space<vmem>>, %arg1: memref<56x32xf32, #tpu.memory_space<vmem>>, %arg2: memref<128x32xf32, #tpu.memory_space<vmem>>, %arg3: memref<2x32x32xbf16, #tpu.memory_space<vmem>>, %arg4: memref<2x32x32xbf16, #tpu.memory_space<vmem>>, %arg5: memref<2x32x32xbf16, #tpu.memory_space<vmem>>, %arg6: memref<2x1x32xf32, #tpu.memory_space<vmem>>, %arg7: memref<2x1x32xf32, #tpu.memory_space<vmem>>, %arg8: memref<2x1x32xf32, #tpu.memory_space<vmem>>, %arg9: memref<2x32x32xbf16, #tpu.memory_space<vmem>>, %arg10: memref<2x1x32xf32, #tpu.memory_space<vmem>>, %arg11: memref<2x1x32xf32, #tpu.memory_space<vmem>>, %arg12: memref<2x1x32xf32, #tpu.memory_space<vmem>>, %arg13: memref<2x32x2048xbf16, #tpu.memory_space<vmem>>, %arg14: memref<2x1x2048xf32, #tpu.memory_space<vmem>>, %arg15: memref<2x2048x32xbf16, #tpu.memory_space<vmem>>, %arg16: memref<2x1x32xf32, #tpu.memory_space<vmem>>, %arg17: memref<2x1x32xf32, #tpu.memory_space<vmem>>, %arg18: memref<2x1x32xf32, #tpu.memory_space<vmem>>, %arg19: memref<32x128xbf16, #tpu.memory_space<vmem>>, %arg20: memref<1x128xf32, #tpu.memory_space<vmem>>, %arg21: memref<16x128xf32, #tpu.memory_space<vmem>>) attributes {dimension_semantics = [], scalar_prefetch = 0 : i64, scratch_operands = 0 : i64, tpu.core_type = #tpu.core_type<tc>} {
    %c0 = arith.constant 0 : index
    %c0_0 = arith.constant 0 : index
    %0 = vector.load %arg0[%c0, %c0_0] : memref<16x1xi32, #tpu.memory_space<vmem>>, vector<16x1xi32>
    %1 = tpu.iota {dimensions = array<i32: 1>} : vector<16x56xi32>
    %2 = vector.broadcast %0 : vector<16x1xi32> to vector<16x56xi32>
    %3 = arith.cmpi eq, %2, %1 : vector<16x56xi32>
    %4 = arith.extui %3 : vector<16x56xi1> to vector<16x56xi32>
    %5 = arith.sitofp %4 : vector<16x56xi32> to vector<16x56xf32>
    %c0_1 = arith.constant 0 : index
    %c0_2 = arith.constant 0 : index
    %6 = vector.load %arg1[%c0_1, %c0_2] : memref<56x32xf32, #tpu.memory_space<vmem>>, vector<56x32xf32>
    %cst = arith.constant dense<0.000000e+00> : vector<16x32xf32>
    %7 = tpu.matmul %5, %6, %cst {dimension_numbers = #tpu.dot_dimension_numbers<[1], [0], [0], [1], [0, 0, 1, 1], [], []>} : vector<16x56xf32>, vector<56x32xf32>, vector<16x32xf32> -> vector<16x32xf32>
    %c0_3 = arith.constant 0 : index
    %c0_4 = arith.constant 0 : index
    %8 = vector.load %arg2[%c0_3, %c0_4] : memref<128x32xf32, #tpu.memory_space<vmem>>, vector<8x32xf32>
    %9 = vector.shape_cast %8 : vector<8x32xf32> to vector<1x8x32xf32>
    %10 = vector.broadcast %9 : vector<1x8x32xf32> to vector<2x8x32xf32>
    %11 = vector.shape_cast %10 : vector<2x8x32xf32> to vector<16x32xf32>
    %12 = arith.addf %7, %11 : vector<16x32xf32>
    %13 = arith.truncf %12 : vector<16x32xf32> to vector<16x32xbf16>
    %c0_5 = arith.constant 0 : index
    %c0_6 = arith.constant 0 : index
    %c0_7 = arith.constant 0 : index
    %14 = vector.load %arg3[%c0_5, %c0_6, %c0_7] : memref<2x32x32xbf16, #tpu.memory_space<vmem>>, vector<1x32x32xbf16>
    %15 = vector.shape_cast %14 : vector<1x32x32xbf16> to vector<32x32xbf16>
    %cst_8 = arith.constant dense<0.000000e+00> : vector<16x32xf32>
    %16 = tpu.matmul %13, %15, %cst_8 {dimension_numbers = #tpu.dot_dimension_numbers<[1], [0], [0], [1], [0, 0, 1, 1], [], []>} : vector<16x32xbf16>, vector<32x32xbf16>, vector<16x32xf32> -> vector<16x32xf32>
    %c0_9 = arith.constant 0 : index
    %c0_10 = arith.constant 0 : index
    %c0_11 = arith.constant 0 : index
    %17 = vector.load %arg6[%c0_9, %c0_10, %c0_11] : memref<2x1x32xf32, #tpu.memory_space<vmem>>, vector<1x1x32xf32>
    %18 = vector.shape_cast %17 : vector<1x1x32xf32> to vector<1x32xf32>
    %19 = vector.broadcast %18 : vector<1x32xf32> to vector<16x32xf32>
    %20 = arith.addf %16, %19 : vector<16x32xf32>
    %c0_12 = arith.constant 0 : index
    %c0_13 = arith.constant 0 : index
    %c0_14 = arith.constant 0 : index
    %21 = vector.load %arg4[%c0_12, %c0_13, %c0_14] : memref<2x32x32xbf16, #tpu.memory_space<vmem>>, vector<1x32x32xbf16>
    %22 = vector.shape_cast %21 : vector<1x32x32xbf16> to vector<32x32xbf16>
    %cst_15 = arith.constant dense<0.000000e+00> : vector<16x32xf32>
    %23 = tpu.matmul %13, %22, %cst_15 {dimension_numbers = #tpu.dot_dimension_numbers<[1], [0], [0], [1], [0, 0, 1, 1], [], []>} : vector<16x32xbf16>, vector<32x32xbf16>, vector<16x32xf32> -> vector<16x32xf32>
    %c0_16 = arith.constant 0 : index
    %c0_17 = arith.constant 0 : index
    %c0_18 = arith.constant 0 : index
    %24 = vector.load %arg7[%c0_16, %c0_17, %c0_18] : memref<2x1x32xf32, #tpu.memory_space<vmem>>, vector<1x1x32xf32>
    %25 = vector.shape_cast %24 : vector<1x1x32xf32> to vector<1x32xf32>
    %26 = vector.broadcast %25 : vector<1x32xf32> to vector<16x32xf32>
    %27 = arith.addf %23, %26 : vector<16x32xf32>
    %c0_19 = arith.constant 0 : index
    %c0_20 = arith.constant 0 : index
    %c0_21 = arith.constant 0 : index
    %28 = vector.load %arg5[%c0_19, %c0_20, %c0_21] : memref<2x32x32xbf16, #tpu.memory_space<vmem>>, vector<1x32x32xbf16>
    %29 = vector.shape_cast %28 : vector<1x32x32xbf16> to vector<32x32xbf16>
    %cst_22 = arith.constant dense<0.000000e+00> : vector<16x32xf32>
    %30 = tpu.matmul %13, %29, %cst_22 {dimension_numbers = #tpu.dot_dimension_numbers<[1], [0], [0], [1], [0, 0, 1, 1], [], []>} : vector<16x32xbf16>, vector<32x32xbf16>, vector<16x32xf32> -> vector<16x32xf32>
    %c0_23 = arith.constant 0 : index
    %c0_24 = arith.constant 0 : index
    %c0_25 = arith.constant 0 : index
    %31 = vector.load %arg8[%c0_23, %c0_24, %c0_25] : memref<2x1x32xf32, #tpu.memory_space<vmem>>, vector<1x1x32xf32>
    %32 = vector.shape_cast %31 : vector<1x1x32xf32> to vector<1x32xf32>
    %33 = vector.broadcast %32 : vector<1x32xf32> to vector<16x32xf32>
    %34 = arith.addf %30, %33 : vector<16x32xf32>
    %35 = vector.extract_strided_slice %20 {offsets = [0, 0], sizes = [16, 8], strides = [1, 1]} : vector<16x32xf32> to vector<16x8xf32>
    %36 = vector.shape_cast %35 : vector<16x8xf32> to vector<2x8x8xf32>
    %37 = vector.extract_strided_slice %20 {offsets = [0, 8], sizes = [16, 8], strides = [1, 1]} : vector<16x32xf32> to vector<16x8xf32>
    %38 = vector.shape_cast %37 : vector<16x8xf32> to vector<2x8x8xf32>
    %39 = vector.extract_strided_slice %20 {offsets = [0, 16], sizes = [16, 8], strides = [1, 1]} : vector<16x32xf32> to vector<16x8xf32>
    %40 = vector.shape_cast %39 : vector<16x8xf32> to vector<2x8x8xf32>
    %41 = vector.extract_strided_slice %20 {offsets = [0, 24], sizes = [16, 8], strides = [1, 1]} : vector<16x32xf32> to vector<16x8xf32>
    %42 = vector.shape_cast %41 : vector<16x8xf32> to vector<2x8x8xf32>
    %43 = vector.shape_cast %36 : vector<2x8x8xf32> to vector<1x2x8x8xf32>
    %44 = vector.shape_cast %38 : vector<2x8x8xf32> to vector<1x2x8x8xf32>
    %45 = vector.shape_cast %40 : vector<2x8x8xf32> to vector<1x2x8x8xf32>
    %46 = vector.shape_cast %42 : vector<2x8x8xf32> to vector<1x2x8x8xf32>
    %47 = tpu.concatenate %43, %44, %45, %46 in 0 : vector<1x2x8x8xf32>, vector<1x2x8x8xf32>, vector<1x2x8x8xf32>, vector<1x2x8x8xf32> -> vector<4x2x8x8xf32>
    %48 = vector.shape_cast %47 : vector<4x2x8x8xf32> to vector<8x8x8xf32>
    %49 = arith.truncf %48 : vector<8x8x8xf32> to vector<8x8x8xbf16>
    %50 = vector.extract_strided_slice %27 {offsets = [0, 0], sizes = [16, 8], strides = [1, 1]} : vector<16x32xf32> to vector<16x8xf32>
    %51 = vector.shape_cast %50 : vector<16x8xf32> to vector<2x8x8xf32>
    %52 = vector.extract_strided_slice %27 {offsets = [0, 8], sizes = [16, 8], strides = [1, 1]} : vector<16x32xf32> to vector<16x8xf32>
    %53 = vector.shape_cast %52 : vector<16x8xf32> to vector<2x8x8xf32>
    %54 = vector.extract_strided_slice %27 {offsets = [0, 16], sizes = [16, 8], strides = [1, 1]} : vector<16x32xf32> to vector<16x8xf32>
    %55 = vector.shape_cast %54 : vector<16x8xf32> to vector<2x8x8xf32>
    %56 = vector.extract_strided_slice %27 {offsets = [0, 24], sizes = [16, 8], strides = [1, 1]} : vector<16x32xf32> to vector<16x8xf32>
    %57 = vector.shape_cast %56 : vector<16x8xf32> to vector<2x8x8xf32>
    %58 = vector.shape_cast %51 : vector<2x8x8xf32> to vector<1x2x8x8xf32>
    %59 = vector.shape_cast %53 : vector<2x8x8xf32> to vector<1x2x8x8xf32>
    %60 = vector.shape_cast %55 : vector<2x8x8xf32> to vector<1x2x8x8xf32>
    %61 = vector.shape_cast %57 : vector<2x8x8xf32> to vector<1x2x8x8xf32>
    %62 = tpu.concatenate %58, %59, %60, %61 in 0 : vector<1x2x8x8xf32>, vector<1x2x8x8xf32>, vector<1x2x8x8xf32>, vector<1x2x8x8xf32> -> vector<4x2x8x8xf32>
    %63 = vector.shape_cast %62 : vector<4x2x8x8xf32> to vector<8x8x8xf32>
    %64 = arith.truncf %63 : vector<8x8x8xf32> to vector<8x8x8xbf16>
    %65 = vector.extract_strided_slice %34 {offsets = [0, 0], sizes = [16, 8], strides = [1, 1]} : vector<16x32xf32> to vector<16x8xf32>
    %66 = vector.shape_cast %65 : vector<16x8xf32> to vector<2x8x8xf32>
    %67 = vector.extract_strided_slice %34 {offsets = [0, 8], sizes = [16, 8], strides = [1, 1]} : vector<16x32xf32> to vector<16x8xf32>
    %68 = vector.shape_cast %67 : vector<16x8xf32> to vector<2x8x8xf32>
    %69 = vector.extract_strided_slice %34 {offsets = [0, 16], sizes = [16, 8], strides = [1, 1]} : vector<16x32xf32> to vector<16x8xf32>
    %70 = vector.shape_cast %69 : vector<16x8xf32> to vector<2x8x8xf32>
    %71 = vector.extract_strided_slice %34 {offsets = [0, 24], sizes = [16, 8], strides = [1, 1]} : vector<16x32xf32> to vector<16x8xf32>
    %72 = vector.shape_cast %71 : vector<16x8xf32> to vector<2x8x8xf32>
    %73 = vector.shape_cast %66 : vector<2x8x8xf32> to vector<1x2x8x8xf32>
    %74 = vector.shape_cast %68 : vector<2x8x8xf32> to vector<1x2x8x8xf32>
    %75 = vector.shape_cast %70 : vector<2x8x8xf32> to vector<1x2x8x8xf32>
    %76 = vector.shape_cast %72 : vector<2x8x8xf32> to vector<1x2x8x8xf32>
    %77 = tpu.concatenate %73, %74, %75, %76 in 0 : vector<1x2x8x8xf32>, vector<1x2x8x8xf32>, vector<1x2x8x8xf32>, vector<1x2x8x8xf32> -> vector<4x2x8x8xf32>
    %78 = vector.shape_cast %77 : vector<4x2x8x8xf32> to vector<8x8x8xf32>
    %79 = arith.truncf %78 : vector<8x8x8xf32> to vector<8x8x8xbf16>
    "tpu.trace_start"() <{level = 10 : i32, message = "bqd,bkd->bqk"}> : () -> ()
    %cst_26 = arith.constant dense<0.000000e+00> : vector<8x8x8xf32>
    %80 = tpu.matmul %49, %64, %cst_26 {dimension_numbers = #tpu.dot_dimension_numbers<[2], [2], [1], [1], [0, 0, 0, 1, 1, 1], [0], [0]>} : vector<8x8x8xbf16>, vector<8x8x8xbf16>, vector<8x8x8xf32> -> vector<8x8x8xf32>
    "tpu.trace_stop"() : () -> ()
    %cst_27 = arith.constant 0.353553385 : f32
    %81 = vector.broadcast %cst_27 : f32 to vector<8x8x8xf32>
    %82 = arith.mulf %80, %81 : vector<8x8x8xf32>
    %cst_28 = arith.constant dense<0xFF800000> : vector<8x8xf32>
    %83 = vector.multi_reduction <maximumf>, %82, %cst_28 [2] : vector<8x8x8xf32> to vector<8x8xf32>
    %84 = vector.shape_cast %83 : vector<8x8xf32> to vector<8x8x1xf32>
    %85 = vector.broadcast %84 : vector<8x8x1xf32> to vector<8x8x8xf32>
    %86 = arith.subf %82, %85 : vector<8x8x8xf32>
    %87 = math.exp %86 : vector<8x8x8xf32>
    %cst_29 = arith.constant dense<0.000000e+00> : vector<8x8xf32>
    %88 = vector.multi_reduction <add>, %87, %cst_29 [2] : vector<8x8x8xf32> to vector<8x8xf32>
    %89 = vector.shape_cast %88 : vector<8x8xf32> to vector<8x8x1xf32>
    %90 = tpu.reciprocal %89 {approx = true} : vector<8x8x1xf32> -> vector<8x8x1xf32>
    %91 = vector.broadcast %90 : vector<8x8x1xf32> to vector<8x8x8xf32>
    %92 = arith.mulf %87, %91 : vector<8x8x8xf32>
    %93 = arith.truncf %92 : vector<8x8x8xf32> to vector<8x8x8xbf16>
    "tpu.trace_start"() <{level = 10 : i32, message = "bqk,bkd->bqd"}> : () -> ()
    %cst_30 = arith.constant dense<0.000000e+00> : vector<8x8x8xf32>
    %94 = tpu.matmul %93, %79, %cst_30 {dimension_numbers = #tpu.dot_dimension_numbers<[2], [1], [1], [2], [0, 0, 0, 1, 1, 2], [0], [0]>} : vector<8x8x8xbf16>, vector<8x8x8xbf16>, vector<8x8x8xf32> -> vector<8x8x8xf32>
    "tpu.trace_stop"() : () -> ()
    %95 = vector.shape_cast %94 : vector<8x8x8xf32> to vector<4x2x8x8xf32>
    %96 = vector.extract_strided_slice %95 {offsets = [0, 0, 0, 0], sizes = [1, 2, 8, 8], strides = [1, 1, 1, 1]} : vector<4x2x8x8xf32> to vector<1x2x8x8xf32>
    %97 = vector.shape_cast %96 : vector<1x2x8x8xf32> to vector<2x8x8xf32>
    %98 = vector.shape_cast %97 : vector<2x8x8xf32> to vector<16x8xf32>
    %99 = vector.extract_strided_slice %95 {offsets = [1, 0, 0, 0], sizes = [1, 2, 8, 8], strides = [1, 1, 1, 1]} : vector<4x2x8x8xf32> to vector<1x2x8x8xf32>
    %100 = vector.shape_cast %99 : vector<1x2x8x8xf32> to vector<2x8x8xf32>
    %101 = vector.shape_cast %100 : vector<2x8x8xf32> to vector<16x8xf32>
    %102 = vector.extract_strided_slice %95 {offsets = [2, 0, 0, 0], sizes = [1, 2, 8, 8], strides = [1, 1, 1, 1]} : vector<4x2x8x8xf32> to vector<1x2x8x8xf32>
    %103 = vector.shape_cast %102 : vector<1x2x8x8xf32> to vector<2x8x8xf32>
    %104 = vector.shape_cast %103 : vector<2x8x8xf32> to vector<16x8xf32>
    %105 = vector.extract_strided_slice %95 {offsets = [3, 0, 0, 0], sizes = [1, 2, 8, 8], strides = [1, 1, 1, 1]} : vector<4x2x8x8xf32> to vector<1x2x8x8xf32>
    %106 = vector.shape_cast %105 : vector<1x2x8x8xf32> to vector<2x8x8xf32>
    %107 = vector.shape_cast %106 : vector<2x8x8xf32> to vector<16x8xf32>
    %108 = tpu.concatenate %98, %101, %104, %107 in 1 : vector<16x8xf32>, vector<16x8xf32>, vector<16x8xf32>, vector<16x8xf32> -> vector<16x32xf32>
    %109 = arith.truncf %108 : vector<16x32xf32> to vector<16x32xbf16>
    %c0_31 = arith.constant 0 : index
    %c0_32 = arith.constant 0 : index
    %c0_33 = arith.constant 0 : index
    %110 = vector.load %arg9[%c0_31, %c0_32, %c0_33] : memref<2x32x32xbf16, #tpu.memory_space<vmem>>, vector<1x32x32xbf16>
    %111 = vector.shape_cast %110 : vector<1x32x32xbf16> to vector<32x32xbf16>
    %cst_34 = arith.constant dense<0.000000e+00> : vector<16x32xf32>
    %112 = tpu.matmul %109, %111, %cst_34 {dimension_numbers = #tpu.dot_dimension_numbers<[1], [0], [0], [1], [0, 0, 1, 1], [], []>} : vector<16x32xbf16>, vector<32x32xbf16>, vector<16x32xf32> -> vector<16x32xf32>
    %c0_35 = arith.constant 0 : index
    %c0_36 = arith.constant 0 : index
    %c0_37 = arith.constant 0 : index
    %113 = vector.load %arg10[%c0_35, %c0_36, %c0_37] : memref<2x1x32xf32, #tpu.memory_space<vmem>>, vector<1x1x32xf32>
    %114 = vector.shape_cast %113 : vector<1x1x32xf32> to vector<1x32xf32>
    %115 = vector.broadcast %114 : vector<1x32xf32> to vector<16x32xf32>
    %116 = arith.addf %112, %115 : vector<16x32xf32>
    %117 = arith.addf %12, %116 : vector<16x32xf32>
    %c0_38 = arith.constant 0 : index
    %c0_39 = arith.constant 0 : index
    %c0_40 = arith.constant 0 : index
    %118 = vector.load %arg11[%c0_38, %c0_39, %c0_40] : memref<2x1x32xf32, #tpu.memory_space<vmem>>, vector<1x1x32xf32>
    %119 = vector.shape_cast %118 : vector<1x1x32xf32> to vector<1x32xf32>
    %c0_41 = arith.constant 0 : index
    %c0_42 = arith.constant 0 : index
    %c0_43 = arith.constant 0 : index
    %120 = vector.load %arg12[%c0_41, %c0_42, %c0_43] : memref<2x1x32xf32, #tpu.memory_space<vmem>>, vector<1x1x32xf32>
    %121 = vector.shape_cast %120 : vector<1x1x32xf32> to vector<1x32xf32>
    %cst_44 = arith.constant dense<0.000000e+00> : vector<16xf32>
    %122 = vector.multi_reduction <add>, %117, %cst_44 [1] : vector<16x32xf32> to vector<16xf32>
    %123 = vector.shape_cast %122 : vector<16xf32> to vector<16x1xf32>
    %cst_45 = arith.constant 3.200000e+01 : f32
    %124 = vector.broadcast %cst_45 : f32 to vector<16x1xf32>
    %125 = arith.divf %123, %124 : vector<16x1xf32>
    %126 = vector.broadcast %125 : vector<16x1xf32> to vector<16x32xf32>
    %127 = arith.subf %117, %126 : vector<16x32xf32>
    %128 = arith.mulf %127, %127 : vector<16x32xf32>
    %cst_46 = arith.constant dense<0.000000e+00> : vector<16xf32>
    %129 = vector.multi_reduction <add>, %128, %cst_46 [1] : vector<16x32xf32> to vector<16xf32>
    %130 = vector.shape_cast %129 : vector<16xf32> to vector<16x1xf32>
    %cst_47 = arith.constant 3.200000e+01 : f32
    %131 = vector.broadcast %cst_47 : f32 to vector<16x1xf32>
    %132 = arith.divf %130, %131 : vector<16x1xf32>
    %133 = vector.broadcast %125 : vector<16x1xf32> to vector<16x32xf32>
    %134 = arith.subf %117, %133 : vector<16x32xf32>
    %cst_48 = arith.constant 9.99999974E-6 : f32
    %135 = vector.broadcast %cst_48 : f32 to vector<16x1xf32>
    %136 = arith.addf %132, %135 : vector<16x1xf32>
    %137 = math.rsqrt %136 : vector<16x1xf32>
    %138 = vector.broadcast %137 : vector<16x1xf32> to vector<16x32xf32>
    %139 = arith.mulf %134, %138 : vector<16x32xf32>
    %140 = vector.broadcast %119 : vector<1x32xf32> to vector<16x32xf32>
    %141 = arith.mulf %139, %140 : vector<16x32xf32>
    %142 = vector.broadcast %121 : vector<1x32xf32> to vector<16x32xf32>
    %143 = arith.addf %141, %142 : vector<16x32xf32>
    %144 = arith.truncf %143 : vector<16x32xf32> to vector<16x32xbf16>
    %cst_49 = arith.constant 0.000000e+00 : f32
    %145 = vector.broadcast %cst_49 : f32 to vector<16x32xf32>
    %c0_50 = arith.constant 0 : index
    %c0_51 = arith.constant 0 : index
    %c0_52 = arith.constant 0 : index
    %146 = vector.load %arg13[%c0_50, %c0_51, %c0_52] : memref<2x32x2048xbf16, #tpu.memory_space<vmem>>, vector<1x32x512xbf16>
    %147 = vector.shape_cast %146 : vector<1x32x512xbf16> to vector<32x512xbf16>
    %cst_53 = arith.constant dense<0.000000e+00> : vector<16x512xf32>
    %148 = tpu.matmul %144, %147, %cst_53 {dimension_numbers = #tpu.dot_dimension_numbers<[1], [0], [0], [1], [0, 0, 1, 1], [], []>} : vector<16x32xbf16>, vector<32x512xbf16>, vector<16x512xf32> -> vector<16x512xf32>
    %c0_54 = arith.constant 0 : index
    %c0_55 = arith.constant 0 : index
    %c0_56 = arith.constant 0 : index
    %149 = vector.load %arg14[%c0_54, %c0_55, %c0_56] : memref<2x1x2048xf32, #tpu.memory_space<vmem>>, vector<1x1x512xf32>
    %150 = vector.shape_cast %149 : vector<1x1x512xf32> to vector<1x512xf32>
    %151 = vector.broadcast %150 : vector<1x512xf32> to vector<16x512xf32>
    %152 = arith.addf %148, %151 : vector<16x512xf32>
    %cst_57 = arith.constant 0.000000e+00 : f32
    %153 = vector.broadcast %cst_57 : f32 to vector<16x512xf32>
    %154 = arith.maximumf %152, %153 : vector<16x512xf32>
    %155 = arith.truncf %154 : vector<16x512xf32> to vector<16x512xbf16>
    %c0_58 = arith.constant 0 : index
    %c0_59 = arith.constant 0 : index
    %c0_60 = arith.constant 0 : index
    %156 = vector.load %arg15[%c0_58, %c0_59, %c0_60] : memref<2x2048x32xbf16, #tpu.memory_space<vmem>>, vector<1x512x32xbf16>
    %157 = vector.shape_cast %156 : vector<1x512x32xbf16> to vector<512x32xbf16>
    %cst_61 = arith.constant dense<0.000000e+00> : vector<16x32xf32>
    %158 = tpu.matmul %155, %157, %cst_61 {dimension_numbers = #tpu.dot_dimension_numbers<[1], [0], [0], [1], [0, 0, 1, 1], [], []>} : vector<16x512xbf16>, vector<512x32xbf16>, vector<16x32xf32> -> vector<16x32xf32>
    %159 = arith.addf %145, %158 : vector<16x32xf32>
    %c0_62 = arith.constant 0 : index
    %c0_63 = arith.constant 0 : index
    %c512 = arith.constant 512 : index
    %160 = vector.load %arg13[%c0_62, %c0_63, %c512] : memref<2x32x2048xbf16, #tpu.memory_space<vmem>>, vector<1x32x512xbf16>
    %161 = vector.shape_cast %160 : vector<1x32x512xbf16> to vector<32x512xbf16>
    %cst_64 = arith.constant dense<0.000000e+00> : vector<16x512xf32>
    %162 = tpu.matmul %144, %161, %cst_64 {dimension_numbers = #tpu.dot_dimension_numbers<[1], [0], [0], [1], [0, 0, 1, 1], [], []>} : vector<16x32xbf16>, vector<32x512xbf16>, vector<16x512xf32> -> vector<16x512xf32>
    %c0_65 = arith.constant 0 : index
    %c0_66 = arith.constant 0 : index
    %c512_67 = arith.constant 512 : index
    %163 = vector.load %arg14[%c0_65, %c0_66, %c512_67] : memref<2x1x2048xf32, #tpu.memory_space<vmem>>, vector<1x1x512xf32>
    %164 = vector.shape_cast %163 : vector<1x1x512xf32> to vector<1x512xf32>
    %165 = vector.broadcast %164 : vector<1x512xf32> to vector<16x512xf32>
    %166 = arith.addf %162, %165 : vector<16x512xf32>
    %cst_68 = arith.constant 0.000000e+00 : f32
    %167 = vector.broadcast %cst_68 : f32 to vector<16x512xf32>
    %168 = arith.maximumf %166, %167 : vector<16x512xf32>
    %169 = arith.truncf %168 : vector<16x512xf32> to vector<16x512xbf16>
    %c0_69 = arith.constant 0 : index
    %c512_70 = arith.constant 512 : index
    %c0_71 = arith.constant 0 : index
    %170 = vector.load %arg15[%c0_69, %c512_70, %c0_71] : memref<2x2048x32xbf16, #tpu.memory_space<vmem>>, vector<1x512x32xbf16>
    %171 = vector.shape_cast %170 : vector<1x512x32xbf16> to vector<512x32xbf16>
    %cst_72 = arith.constant dense<0.000000e+00> : vector<16x32xf32>
    %172 = tpu.matmul %169, %171, %cst_72 {dimension_numbers = #tpu.dot_dimension_numbers<[1], [0], [0], [1], [0, 0, 1, 1], [], []>} : vector<16x512xbf16>, vector<512x32xbf16>, vector<16x32xf32> -> vector<16x32xf32>
    %173 = arith.addf %159, %172 : vector<16x32xf32>
    %c0_73 = arith.constant 0 : index
    %c0_74 = arith.constant 0 : index
    %c1024 = arith.constant 1024 : index
    %174 = vector.load %arg13[%c0_73, %c0_74, %c1024] : memref<2x32x2048xbf16, #tpu.memory_space<vmem>>, vector<1x32x512xbf16>
    %175 = vector.shape_cast %174 : vector<1x32x512xbf16> to vector<32x512xbf16>
    %cst_75 = arith.constant dense<0.000000e+00> : vector<16x512xf32>
    %176 = tpu.matmul %144, %175, %cst_75 {dimension_numbers = #tpu.dot_dimension_numbers<[1], [0], [0], [1], [0, 0, 1, 1], [], []>} : vector<16x32xbf16>, vector<32x512xbf16>, vector<16x512xf32> -> vector<16x512xf32>
    %c0_76 = arith.constant 0 : index
    %c0_77 = arith.constant 0 : index
    %c1024_78 = arith.constant 1024 : index
    %177 = vector.load %arg14[%c0_76, %c0_77, %c1024_78] : memref<2x1x2048xf32, #tpu.memory_space<vmem>>, vector<1x1x512xf32>
    %178 = vector.shape_cast %177 : vector<1x1x512xf32> to vector<1x512xf32>
    %179 = vector.broadcast %178 : vector<1x512xf32> to vector<16x512xf32>
    %180 = arith.addf %176, %179 : vector<16x512xf32>
    %cst_79 = arith.constant 0.000000e+00 : f32
    %181 = vector.broadcast %cst_79 : f32 to vector<16x512xf32>
    %182 = arith.maximumf %180, %181 : vector<16x512xf32>
    %183 = arith.truncf %182 : vector<16x512xf32> to vector<16x512xbf16>
    %c0_80 = arith.constant 0 : index
    %c1024_81 = arith.constant 1024 : index
    %c0_82 = arith.constant 0 : index
    %184 = vector.load %arg15[%c0_80, %c1024_81, %c0_82] : memref<2x2048x32xbf16, #tpu.memory_space<vmem>>, vector<1x512x32xbf16>
    %185 = vector.shape_cast %184 : vector<1x512x32xbf16> to vector<512x32xbf16>
    %cst_83 = arith.constant dense<0.000000e+00> : vector<16x32xf32>
    %186 = tpu.matmul %183, %185, %cst_83 {dimension_numbers = #tpu.dot_dimension_numbers<[1], [0], [0], [1], [0, 0, 1, 1], [], []>} : vector<16x512xbf16>, vector<512x32xbf16>, vector<16x32xf32> -> vector<16x32xf32>
    %187 = arith.addf %173, %186 : vector<16x32xf32>
    %c0_84 = arith.constant 0 : index
    %c0_85 = arith.constant 0 : index
    %c1536 = arith.constant 1536 : index
    %188 = vector.load %arg13[%c0_84, %c0_85, %c1536] : memref<2x32x2048xbf16, #tpu.memory_space<vmem>>, vector<1x32x512xbf16>
    %189 = vector.shape_cast %188 : vector<1x32x512xbf16> to vector<32x512xbf16>
    %cst_86 = arith.constant dense<0.000000e+00> : vector<16x512xf32>
    %190 = tpu.matmul %144, %189, %cst_86 {dimension_numbers = #tpu.dot_dimension_numbers<[1], [0], [0], [1], [0, 0, 1, 1], [], []>} : vector<16x32xbf16>, vector<32x512xbf16>, vector<16x512xf32> -> vector<16x512xf32>
    %c0_87 = arith.constant 0 : index
    %c0_88 = arith.constant 0 : index
    %c1536_89 = arith.constant 1536 : index
    %191 = vector.load %arg14[%c0_87, %c0_88, %c1536_89] : memref<2x1x2048xf32, #tpu.memory_space<vmem>>, vector<1x1x512xf32>
    %192 = vector.shape_cast %191 : vector<1x1x512xf32> to vector<1x512xf32>
    %193 = vector.broadcast %192 : vector<1x512xf32> to vector<16x512xf32>
    %194 = arith.addf %190, %193 : vector<16x512xf32>
    %cst_90 = arith.constant 0.000000e+00 : f32
    %195 = vector.broadcast %cst_90 : f32 to vector<16x512xf32>
    %196 = arith.maximumf %194, %195 : vector<16x512xf32>
    %197 = arith.truncf %196 : vector<16x512xf32> to vector<16x512xbf16>
    %c0_91 = arith.constant 0 : index
    %c1536_92 = arith.constant 1536 : index
    %c0_93 = arith.constant 0 : index
    %198 = vector.load %arg15[%c0_91, %c1536_92, %c0_93] : memref<2x2048x32xbf16, #tpu.memory_space<vmem>>, vector<1x512x32xbf16>
    %199 = vector.shape_cast %198 : vector<1x512x32xbf16> to vector<512x32xbf16>
    %cst_94 = arith.constant dense<0.000000e+00> : vector<16x32xf32>
    %200 = tpu.matmul %197, %199, %cst_94 {dimension_numbers = #tpu.dot_dimension_numbers<[1], [0], [0], [1], [0, 0, 1, 1], [], []>} : vector<16x512xbf16>, vector<512x32xbf16>, vector<16x32xf32> -> vector<16x32xf32>
    %201 = arith.addf %187, %200 : vector<16x32xf32>
    %202 = arith.addf %143, %201 : vector<16x32xf32>
    %c0_95 = arith.constant 0 : index
    %c0_96 = arith.constant 0 : index
    %c0_97 = arith.constant 0 : index
    %203 = vector.load %arg16[%c0_95, %c0_96, %c0_97] : memref<2x1x32xf32, #tpu.memory_space<vmem>>, vector<1x1x32xf32>
    %204 = vector.shape_cast %203 : vector<1x1x32xf32> to vector<1x32xf32>
    %205 = vector.broadcast %204 : vector<1x32xf32> to vector<16x32xf32>
    %206 = arith.addf %202, %205 : vector<16x32xf32>
    %c0_98 = arith.constant 0 : index
    %c0_99 = arith.constant 0 : index
    %c0_100 = arith.constant 0 : index
    %207 = vector.load %arg17[%c0_98, %c0_99, %c0_100] : memref<2x1x32xf32, #tpu.memory_space<vmem>>, vector<1x1x32xf32>
    %208 = vector.shape_cast %207 : vector<1x1x32xf32> to vector<1x32xf32>
    %c0_101 = arith.constant 0 : index
    %c0_102 = arith.constant 0 : index
    %c0_103 = arith.constant 0 : index
    %209 = vector.load %arg18[%c0_101, %c0_102, %c0_103] : memref<2x1x32xf32, #tpu.memory_space<vmem>>, vector<1x1x32xf32>
    %210 = vector.shape_cast %209 : vector<1x1x32xf32> to vector<1x32xf32>
    %cst_104 = arith.constant dense<0.000000e+00> : vector<16xf32>
    %211 = vector.multi_reduction <add>, %206, %cst_104 [1] : vector<16x32xf32> to vector<16xf32>
    %212 = vector.shape_cast %211 : vector<16xf32> to vector<16x1xf32>
    %cst_105 = arith.constant 3.200000e+01 : f32
    %213 = vector.broadcast %cst_105 : f32 to vector<16x1xf32>
    %214 = arith.divf %212, %213 : vector<16x1xf32>
    %215 = vector.broadcast %214 : vector<16x1xf32> to vector<16x32xf32>
    %216 = arith.subf %206, %215 : vector<16x32xf32>
    %217 = arith.mulf %216, %216 : vector<16x32xf32>
    %cst_106 = arith.constant dense<0.000000e+00> : vector<16xf32>
    %218 = vector.multi_reduction <add>, %217, %cst_106 [1] : vector<16x32xf32> to vector<16xf32>
    %219 = vector.shape_cast %218 : vector<16xf32> to vector<16x1xf32>
    %cst_107 = arith.constant 3.200000e+01 : f32
    %220 = vector.broadcast %cst_107 : f32 to vector<16x1xf32>
    %221 = arith.divf %219, %220 : vector<16x1xf32>
    %222 = vector.broadcast %214 : vector<16x1xf32> to vector<16x32xf32>
    %223 = arith.subf %206, %222 : vector<16x32xf32>
    %cst_108 = arith.constant 9.99999974E-6 : f32
    %224 = vector.broadcast %cst_108 : f32 to vector<16x1xf32>
    %225 = arith.addf %221, %224 : vector<16x1xf32>
    %226 = math.rsqrt %225 : vector<16x1xf32>
    %227 = vector.broadcast %226 : vector<16x1xf32> to vector<16x32xf32>
    %228 = arith.mulf %223, %227 : vector<16x32xf32>
    %229 = vector.broadcast %208 : vector<1x32xf32> to vector<16x32xf32>
    %230 = arith.mulf %228, %229 : vector<16x32xf32>
    %231 = vector.broadcast %210 : vector<1x32xf32> to vector<16x32xf32>
    %232 = arith.addf %230, %231 : vector<16x32xf32>
    %233 = arith.truncf %232 : vector<16x32xf32> to vector<16x32xbf16>
    %c1 = arith.constant 1 : index
    %c0_109 = arith.constant 0 : index
    %c0_110 = arith.constant 0 : index
    %234 = vector.load %arg3[%c1, %c0_109, %c0_110] : memref<2x32x32xbf16, #tpu.memory_space<vmem>>, vector<1x32x32xbf16>
    %235 = vector.shape_cast %234 : vector<1x32x32xbf16> to vector<32x32xbf16>
    %cst_111 = arith.constant dense<0.000000e+00> : vector<16x32xf32>
    %236 = tpu.matmul %233, %235, %cst_111 {dimension_numbers = #tpu.dot_dimension_numbers<[1], [0], [0], [1], [0, 0, 1, 1], [], []>} : vector<16x32xbf16>, vector<32x32xbf16>, vector<16x32xf32> -> vector<16x32xf32>
    %c1_112 = arith.constant 1 : index
    %c0_113 = arith.constant 0 : index
    %c0_114 = arith.constant 0 : index
    %237 = vector.load %arg6[%c1_112, %c0_113, %c0_114] : memref<2x1x32xf32, #tpu.memory_space<vmem>>, vector<1x1x32xf32>
    %238 = vector.shape_cast %237 : vector<1x1x32xf32> to vector<1x32xf32>
    %239 = vector.broadcast %238 : vector<1x32xf32> to vector<16x32xf32>
    %240 = arith.addf %236, %239 : vector<16x32xf32>
    %c1_115 = arith.constant 1 : index
    %c0_116 = arith.constant 0 : index
    %c0_117 = arith.constant 0 : index
    %241 = vector.load %arg4[%c1_115, %c0_116, %c0_117] : memref<2x32x32xbf16, #tpu.memory_space<vmem>>, vector<1x32x32xbf16>
    %242 = vector.shape_cast %241 : vector<1x32x32xbf16> to vector<32x32xbf16>
    %cst_118 = arith.constant dense<0.000000e+00> : vector<16x32xf32>
    %243 = tpu.matmul %233, %242, %cst_118 {dimension_numbers = #tpu.dot_dimension_numbers<[1], [0], [0], [1], [0, 0, 1, 1], [], []>} : vector<16x32xbf16>, vector<32x32xbf16>, vector<16x32xf32> -> vector<16x32xf32>
    %c1_119 = arith.constant 1 : index
    %c0_120 = arith.constant 0 : index
    %c0_121 = arith.constant 0 : index
    %244 = vector.load %arg7[%c1_119, %c0_120, %c0_121] : memref<2x1x32xf32, #tpu.memory_space<vmem>>, vector<1x1x32xf32>
    %245 = vector.shape_cast %244 : vector<1x1x32xf32> to vector<1x32xf32>
    %246 = vector.broadcast %245 : vector<1x32xf32> to vector<16x32xf32>
    %247 = arith.addf %243, %246 : vector<16x32xf32>
    %c1_122 = arith.constant 1 : index
    %c0_123 = arith.constant 0 : index
    %c0_124 = arith.constant 0 : index
    %248 = vector.load %arg5[%c1_122, %c0_123, %c0_124] : memref<2x32x32xbf16, #tpu.memory_space<vmem>>, vector<1x32x32xbf16>
    %249 = vector.shape_cast %248 : vector<1x32x32xbf16> to vector<32x32xbf16>
    %cst_125 = arith.constant dense<0.000000e+00> : vector<16x32xf32>
    %250 = tpu.matmul %233, %249, %cst_125 {dimension_numbers = #tpu.dot_dimension_numbers<[1], [0], [0], [1], [0, 0, 1, 1], [], []>} : vector<16x32xbf16>, vector<32x32xbf16>, vector<16x32xf32> -> vector<16x32xf32>
    %c1_126 = arith.constant 1 : index
    %c0_127 = arith.constant 0 : index
    %c0_128 = arith.constant 0 : index
    %251 = vector.load %arg8[%c1_126, %c0_127, %c0_128] : memref<2x1x32xf32, #tpu.memory_space<vmem>>, vector<1x1x32xf32>
    %252 = vector.shape_cast %251 : vector<1x1x32xf32> to vector<1x32xf32>
    %253 = vector.broadcast %252 : vector<1x32xf32> to vector<16x32xf32>
    %254 = arith.addf %250, %253 : vector<16x32xf32>
    %255 = vector.extract_strided_slice %240 {offsets = [0, 0], sizes = [16, 8], strides = [1, 1]} : vector<16x32xf32> to vector<16x8xf32>
    %256 = vector.shape_cast %255 : vector<16x8xf32> to vector<2x8x8xf32>
    %257 = vector.extract_strided_slice %240 {offsets = [0, 8], sizes = [16, 8], strides = [1, 1]} : vector<16x32xf32> to vector<16x8xf32>
    %258 = vector.shape_cast %257 : vector<16x8xf32> to vector<2x8x8xf32>
    %259 = vector.extract_strided_slice %240 {offsets = [0, 16], sizes = [16, 8], strides = [1, 1]} : vector<16x32xf32> to vector<16x8xf32>
    %260 = vector.shape_cast %259 : vector<16x8xf32> to vector<2x8x8xf32>
    %261 = vector.extract_strided_slice %240 {offsets = [0, 24], sizes = [16, 8], strides = [1, 1]} : vector<16x32xf32> to vector<16x8xf32>
    %262 = vector.shape_cast %261 : vector<16x8xf32> to vector<2x8x8xf32>
    %263 = vector.shape_cast %256 : vector<2x8x8xf32> to vector<1x2x8x8xf32>
    %264 = vector.shape_cast %258 : vector<2x8x8xf32> to vector<1x2x8x8xf32>
    %265 = vector.shape_cast %260 : vector<2x8x8xf32> to vector<1x2x8x8xf32>
    %266 = vector.shape_cast %262 : vector<2x8x8xf32> to vector<1x2x8x8xf32>
    %267 = tpu.concatenate %263, %264, %265, %266 in 0 : vector<1x2x8x8xf32>, vector<1x2x8x8xf32>, vector<1x2x8x8xf32>, vector<1x2x8x8xf32> -> vector<4x2x8x8xf32>
    %268 = vector.shape_cast %267 : vector<4x2x8x8xf32> to vector<8x8x8xf32>
    %269 = arith.truncf %268 : vector<8x8x8xf32> to vector<8x8x8xbf16>
    %270 = vector.extract_strided_slice %247 {offsets = [0, 0], sizes = [16, 8], strides = [1, 1]} : vector<16x32xf32> to vector<16x8xf32>
    %271 = vector.shape_cast %270 : vector<16x8xf32> to vector<2x8x8xf32>
    %272 = vector.extract_strided_slice %247 {offsets = [0, 8], sizes = [16, 8], strides = [1, 1]} : vector<16x32xf32> to vector<16x8xf32>
    %273 = vector.shape_cast %272 : vector<16x8xf32> to vector<2x8x8xf32>
    %274 = vector.extract_strided_slice %247 {offsets = [0, 16], sizes = [16, 8], strides = [1, 1]} : vector<16x32xf32> to vector<16x8xf32>
    %275 = vector.shape_cast %274 : vector<16x8xf32> to vector<2x8x8xf32>
    %276 = vector.extract_strided_slice %247 {offsets = [0, 24], sizes = [16, 8], strides = [1, 1]} : vector<16x32xf32> to vector<16x8xf32>
    %277 = vector.shape_cast %276 : vector<16x8xf32> to vector<2x8x8xf32>
    %278 = vector.shape_cast %271 : vector<2x8x8xf32> to vector<1x2x8x8xf32>
    %279 = vector.shape_cast %273 : vector<2x8x8xf32> to vector<1x2x8x8xf32>
    %280 = vector.shape_cast %275 : vector<2x8x8xf32> to vector<1x2x8x8xf32>
    %281 = vector.shape_cast %277 : vector<2x8x8xf32> to vector<1x2x8x8xf32>
    %282 = tpu.concatenate %278, %279, %280, %281 in 0 : vector<1x2x8x8xf32>, vector<1x2x8x8xf32>, vector<1x2x8x8xf32>, vector<1x2x8x8xf32> -> vector<4x2x8x8xf32>
    %283 = vector.shape_cast %282 : vector<4x2x8x8xf32> to vector<8x8x8xf32>
    %284 = arith.truncf %283 : vector<8x8x8xf32> to vector<8x8x8xbf16>
    %285 = vector.extract_strided_slice %254 {offsets = [0, 0], sizes = [16, 8], strides = [1, 1]} : vector<16x32xf32> to vector<16x8xf32>
    %286 = vector.shape_cast %285 : vector<16x8xf32> to vector<2x8x8xf32>
    %287 = vector.extract_strided_slice %254 {offsets = [0, 8], sizes = [16, 8], strides = [1, 1]} : vector<16x32xf32> to vector<16x8xf32>
    %288 = vector.shape_cast %287 : vector<16x8xf32> to vector<2x8x8xf32>
    %289 = vector.extract_strided_slice %254 {offsets = [0, 16], sizes = [16, 8], strides = [1, 1]} : vector<16x32xf32> to vector<16x8xf32>
    %290 = vector.shape_cast %289 : vector<16x8xf32> to vector<2x8x8xf32>
    %291 = vector.extract_strided_slice %254 {offsets = [0, 24], sizes = [16, 8], strides = [1, 1]} : vector<16x32xf32> to vector<16x8xf32>
    %292 = vector.shape_cast %291 : vector<16x8xf32> to vector<2x8x8xf32>
    %293 = vector.shape_cast %286 : vector<2x8x8xf32> to vector<1x2x8x8xf32>
    %294 = vector.shape_cast %288 : vector<2x8x8xf32> to vector<1x2x8x8xf32>
    %295 = vector.shape_cast %290 : vector<2x8x8xf32> to vector<1x2x8x8xf32>
    %296 = vector.shape_cast %292 : vector<2x8x8xf32> to vector<1x2x8x8xf32>
    %297 = tpu.concatenate %293, %294, %295, %296 in 0 : vector<1x2x8x8xf32>, vector<1x2x8x8xf32>, vector<1x2x8x8xf32>, vector<1x2x8x8xf32> -> vector<4x2x8x8xf32>
    %298 = vector.shape_cast %297 : vector<4x2x8x8xf32> to vector<8x8x8xf32>
    %299 = arith.truncf %298 : vector<8x8x8xf32> to vector<8x8x8xbf16>
    "tpu.trace_start"() <{level = 10 : i32, message = "bqd,bkd->bqk"}> : () -> ()
    %cst_129 = arith.constant dense<0.000000e+00> : vector<8x8x8xf32>
    %300 = tpu.matmul %269, %284, %cst_129 {dimension_numbers = #tpu.dot_dimension_numbers<[2], [2], [1], [1], [0, 0, 0, 1, 1, 1], [0], [0]>} : vector<8x8x8xbf16>, vector<8x8x8xbf16>, vector<8x8x8xf32> -> vector<8x8x8xf32>
    "tpu.trace_stop"() : () -> ()
    %cst_130 = arith.constant 0.353553385 : f32
    %301 = vector.broadcast %cst_130 : f32 to vector<8x8x8xf32>
    %302 = arith.mulf %300, %301 : vector<8x8x8xf32>
    %cst_131 = arith.constant dense<0xFF800000> : vector<8x8xf32>
    %303 = vector.multi_reduction <maximumf>, %302, %cst_131 [2] : vector<8x8x8xf32> to vector<8x8xf32>
    %304 = vector.shape_cast %303 : vector<8x8xf32> to vector<8x8x1xf32>
    %305 = vector.broadcast %304 : vector<8x8x1xf32> to vector<8x8x8xf32>
    %306 = arith.subf %302, %305 : vector<8x8x8xf32>
    %307 = math.exp %306 : vector<8x8x8xf32>
    %cst_132 = arith.constant dense<0.000000e+00> : vector<8x8xf32>
    %308 = vector.multi_reduction <add>, %307, %cst_132 [2] : vector<8x8x8xf32> to vector<8x8xf32>
    %309 = vector.shape_cast %308 : vector<8x8xf32> to vector<8x8x1xf32>
    %310 = tpu.reciprocal %309 {approx = true} : vector<8x8x1xf32> -> vector<8x8x1xf32>
    %311 = vector.broadcast %310 : vector<8x8x1xf32> to vector<8x8x8xf32>
    %312 = arith.mulf %307, %311 : vector<8x8x8xf32>
    %313 = arith.truncf %312 : vector<8x8x8xf32> to vector<8x8x8xbf16>
    "tpu.trace_start"() <{level = 10 : i32, message = "bqk,bkd->bqd"}> : () -> ()
    %cst_133 = arith.constant dense<0.000000e+00> : vector<8x8x8xf32>
    %314 = tpu.matmul %313, %299, %cst_133 {dimension_numbers = #tpu.dot_dimension_numbers<[2], [1], [1], [2], [0, 0, 0, 1, 1, 2], [0], [0]>} : vector<8x8x8xbf16>, vector<8x8x8xbf16>, vector<8x8x8xf32> -> vector<8x8x8xf32>
    "tpu.trace_stop"() : () -> ()
    %315 = vector.shape_cast %314 : vector<8x8x8xf32> to vector<4x2x8x8xf32>
    %316 = vector.extract_strided_slice %315 {offsets = [0, 0, 0, 0], sizes = [1, 2, 8, 8], strides = [1, 1, 1, 1]} : vector<4x2x8x8xf32> to vector<1x2x8x8xf32>
    %317 = vector.shape_cast %316 : vector<1x2x8x8xf32> to vector<2x8x8xf32>
    %318 = vector.shape_cast %317 : vector<2x8x8xf32> to vector<16x8xf32>
    %319 = vector.extract_strided_slice %315 {offsets = [1, 0, 0, 0], sizes = [1, 2, 8, 8], strides = [1, 1, 1, 1]} : vector<4x2x8x8xf32> to vector<1x2x8x8xf32>
    %320 = vector.shape_cast %319 : vector<1x2x8x8xf32> to vector<2x8x8xf32>
    %321 = vector.shape_cast %320 : vector<2x8x8xf32> to vector<16x8xf32>
    %322 = vector.extract_strided_slice %315 {offsets = [2, 0, 0, 0], sizes = [1, 2, 8, 8], strides = [1, 1, 1, 1]} : vector<4x2x8x8xf32> to vector<1x2x8x8xf32>
    %323 = vector.shape_cast %322 : vector<1x2x8x8xf32> to vector<2x8x8xf32>
    %324 = vector.shape_cast %323 : vector<2x8x8xf32> to vector<16x8xf32>
    %325 = vector.extract_strided_slice %315 {offsets = [3, 0, 0, 0], sizes = [1, 2, 8, 8], strides = [1, 1, 1, 1]} : vector<4x2x8x8xf32> to vector<1x2x8x8xf32>
    %326 = vector.shape_cast %325 : vector<1x2x8x8xf32> to vector<2x8x8xf32>
    %327 = vector.shape_cast %326 : vector<2x8x8xf32> to vector<16x8xf32>
    %328 = tpu.concatenate %318, %321, %324, %327 in 1 : vector<16x8xf32>, vector<16x8xf32>, vector<16x8xf32>, vector<16x8xf32> -> vector<16x32xf32>
    %329 = arith.truncf %328 : vector<16x32xf32> to vector<16x32xbf16>
    %c1_134 = arith.constant 1 : index
    %c0_135 = arith.constant 0 : index
    %c0_136 = arith.constant 0 : index
    %330 = vector.load %arg9[%c1_134, %c0_135, %c0_136] : memref<2x32x32xbf16, #tpu.memory_space<vmem>>, vector<1x32x32xbf16>
    %331 = vector.shape_cast %330 : vector<1x32x32xbf16> to vector<32x32xbf16>
    %cst_137 = arith.constant dense<0.000000e+00> : vector<16x32xf32>
    %332 = tpu.matmul %329, %331, %cst_137 {dimension_numbers = #tpu.dot_dimension_numbers<[1], [0], [0], [1], [0, 0, 1, 1], [], []>} : vector<16x32xbf16>, vector<32x32xbf16>, vector<16x32xf32> -> vector<16x32xf32>
    %c1_138 = arith.constant 1 : index
    %c0_139 = arith.constant 0 : index
    %c0_140 = arith.constant 0 : index
    %333 = vector.load %arg10[%c1_138, %c0_139, %c0_140] : memref<2x1x32xf32, #tpu.memory_space<vmem>>, vector<1x1x32xf32>
    %334 = vector.shape_cast %333 : vector<1x1x32xf32> to vector<1x32xf32>
    %335 = vector.broadcast %334 : vector<1x32xf32> to vector<16x32xf32>
    %336 = arith.addf %332, %335 : vector<16x32xf32>
    %337 = arith.addf %232, %336 : vector<16x32xf32>
    %c1_141 = arith.constant 1 : index
    %c0_142 = arith.constant 0 : index
    %c0_143 = arith.constant 0 : index
    %338 = vector.load %arg11[%c1_141, %c0_142, %c0_143] : memref<2x1x32xf32, #tpu.memory_space<vmem>>, vector<1x1x32xf32>
    %339 = vector.shape_cast %338 : vector<1x1x32xf32> to vector<1x32xf32>
    %c1_144 = arith.constant 1 : index
    %c0_145 = arith.constant 0 : index
    %c0_146 = arith.constant 0 : index
    %340 = vector.load %arg12[%c1_144, %c0_145, %c0_146] : memref<2x1x32xf32, #tpu.memory_space<vmem>>, vector<1x1x32xf32>
    %341 = vector.shape_cast %340 : vector<1x1x32xf32> to vector<1x32xf32>
    %cst_147 = arith.constant dense<0.000000e+00> : vector<16xf32>
    %342 = vector.multi_reduction <add>, %337, %cst_147 [1] : vector<16x32xf32> to vector<16xf32>
    %343 = vector.shape_cast %342 : vector<16xf32> to vector<16x1xf32>
    %cst_148 = arith.constant 3.200000e+01 : f32
    %344 = vector.broadcast %cst_148 : f32 to vector<16x1xf32>
    %345 = arith.divf %343, %344 : vector<16x1xf32>
    %346 = vector.broadcast %345 : vector<16x1xf32> to vector<16x32xf32>
    %347 = arith.subf %337, %346 : vector<16x32xf32>
    %348 = arith.mulf %347, %347 : vector<16x32xf32>
    %cst_149 = arith.constant dense<0.000000e+00> : vector<16xf32>
    %349 = vector.multi_reduction <add>, %348, %cst_149 [1] : vector<16x32xf32> to vector<16xf32>
    %350 = vector.shape_cast %349 : vector<16xf32> to vector<16x1xf32>
    %cst_150 = arith.constant 3.200000e+01 : f32
    %351 = vector.broadcast %cst_150 : f32 to vector<16x1xf32>
    %352 = arith.divf %350, %351 : vector<16x1xf32>
    %353 = vector.broadcast %345 : vector<16x1xf32> to vector<16x32xf32>
    %354 = arith.subf %337, %353 : vector<16x32xf32>
    %cst_151 = arith.constant 9.99999974E-6 : f32
    %355 = vector.broadcast %cst_151 : f32 to vector<16x1xf32>
    %356 = arith.addf %352, %355 : vector<16x1xf32>
    %357 = math.rsqrt %356 : vector<16x1xf32>
    %358 = vector.broadcast %357 : vector<16x1xf32> to vector<16x32xf32>
    %359 = arith.mulf %354, %358 : vector<16x32xf32>
    %360 = vector.broadcast %339 : vector<1x32xf32> to vector<16x32xf32>
    %361 = arith.mulf %359, %360 : vector<16x32xf32>
    %362 = vector.broadcast %341 : vector<1x32xf32> to vector<16x32xf32>
    %363 = arith.addf %361, %362 : vector<16x32xf32>
    %364 = arith.truncf %363 : vector<16x32xf32> to vector<16x32xbf16>
    %cst_152 = arith.constant 0.000000e+00 : f32
    %365 = vector.broadcast %cst_152 : f32 to vector<16x32xf32>
    %c1_153 = arith.constant 1 : index
    %c0_154 = arith.constant 0 : index
    %c0_155 = arith.constant 0 : index
    %366 = vector.load %arg13[%c1_153, %c0_154, %c0_155] : memref<2x32x2048xbf16, #tpu.memory_space<vmem>>, vector<1x32x512xbf16>
    %367 = vector.shape_cast %366 : vector<1x32x512xbf16> to vector<32x512xbf16>
    %cst_156 = arith.constant dense<0.000000e+00> : vector<16x512xf32>
    %368 = tpu.matmul %364, %367, %cst_156 {dimension_numbers = #tpu.dot_dimension_numbers<[1], [0], [0], [1], [0, 0, 1, 1], [], []>} : vector<16x32xbf16>, vector<32x512xbf16>, vector<16x512xf32> -> vector<16x512xf32>
    %c1_157 = arith.constant 1 : index
    %c0_158 = arith.constant 0 : index
    %c0_159 = arith.constant 0 : index
    %369 = vector.load %arg14[%c1_157, %c0_158, %c0_159] : memref<2x1x2048xf32, #tpu.memory_space<vmem>>, vector<1x1x512xf32>
    %370 = vector.shape_cast %369 : vector<1x1x512xf32> to vector<1x512xf32>
    %371 = vector.broadcast %370 : vector<1x512xf32> to vector<16x512xf32>
    %372 = arith.addf %368, %371 : vector<16x512xf32>
    %cst_160 = arith.constant 0.000000e+00 : f32
    %373 = vector.broadcast %cst_160 : f32 to vector<16x512xf32>
    %374 = arith.maximumf %372, %373 : vector<16x512xf32>
    %375 = arith.truncf %374 : vector<16x512xf32> to vector<16x512xbf16>
    %c1_161 = arith.constant 1 : index
    %c0_162 = arith.constant 0 : index
    %c0_163 = arith.constant 0 : index
    %376 = vector.load %arg15[%c1_161, %c0_162, %c0_163] : memref<2x2048x32xbf16, #tpu.memory_space<vmem>>, vector<1x512x32xbf16>
    %377 = vector.shape_cast %376 : vector<1x512x32xbf16> to vector<512x32xbf16>
    %cst_164 = arith.constant dense<0.000000e+00> : vector<16x32xf32>
    %378 = tpu.matmul %375, %377, %cst_164 {dimension_numbers = #tpu.dot_dimension_numbers<[1], [0], [0], [1], [0, 0, 1, 1], [], []>} : vector<16x512xbf16>, vector<512x32xbf16>, vector<16x32xf32> -> vector<16x32xf32>
    %379 = arith.addf %365, %378 : vector<16x32xf32>
    %c1_165 = arith.constant 1 : index
    %c0_166 = arith.constant 0 : index
    %c512_167 = arith.constant 512 : index
    %380 = vector.load %arg13[%c1_165, %c0_166, %c512_167] : memref<2x32x2048xbf16, #tpu.memory_space<vmem>>, vector<1x32x512xbf16>
    %381 = vector.shape_cast %380 : vector<1x32x512xbf16> to vector<32x512xbf16>
    %cst_168 = arith.constant dense<0.000000e+00> : vector<16x512xf32>
    %382 = tpu.matmul %364, %381, %cst_168 {dimension_numbers = #tpu.dot_dimension_numbers<[1], [0], [0], [1], [0, 0, 1, 1], [], []>} : vector<16x32xbf16>, vector<32x512xbf16>, vector<16x512xf32> -> vector<16x512xf32>
    %c1_169 = arith.constant 1 : index
    %c0_170 = arith.constant 0 : index
    %c512_171 = arith.constant 512 : index
    %383 = vector.load %arg14[%c1_169, %c0_170, %c512_171] : memref<2x1x2048xf32, #tpu.memory_space<vmem>>, vector<1x1x512xf32>
    %384 = vector.shape_cast %383 : vector<1x1x512xf32> to vector<1x512xf32>
    %385 = vector.broadcast %384 : vector<1x512xf32> to vector<16x512xf32>
    %386 = arith.addf %382, %385 : vector<16x512xf32>
    %cst_172 = arith.constant 0.000000e+00 : f32
    %387 = vector.broadcast %cst_172 : f32 to vector<16x512xf32>
    %388 = arith.maximumf %386, %387 : vector<16x512xf32>
    %389 = arith.truncf %388 : vector<16x512xf32> to vector<16x512xbf16>
    %c1_173 = arith.constant 1 : index
    %c512_174 = arith.constant 512 : index
    %c0_175 = arith.constant 0 : index
    %390 = vector.load %arg15[%c1_173, %c512_174, %c0_175] : memref<2x2048x32xbf16, #tpu.memory_space<vmem>>, vector<1x512x32xbf16>
    %391 = vector.shape_cast %390 : vector<1x512x32xbf16> to vector<512x32xbf16>
    %cst_176 = arith.constant dense<0.000000e+00> : vector<16x32xf32>
    %392 = tpu.matmul %389, %391, %cst_176 {dimension_numbers = #tpu.dot_dimension_numbers<[1], [0], [0], [1], [0, 0, 1, 1], [], []>} : vector<16x512xbf16>, vector<512x32xbf16>, vector<16x32xf32> -> vector<16x32xf32>
    %393 = arith.addf %379, %392 : vector<16x32xf32>
    %c1_177 = arith.constant 1 : index
    %c0_178 = arith.constant 0 : index
    %c1024_179 = arith.constant 1024 : index
    %394 = vector.load %arg13[%c1_177, %c0_178, %c1024_179] : memref<2x32x2048xbf16, #tpu.memory_space<vmem>>, vector<1x32x512xbf16>
    %395 = vector.shape_cast %394 : vector<1x32x512xbf16> to vector<32x512xbf16>
    %cst_180 = arith.constant dense<0.000000e+00> : vector<16x512xf32>
    %396 = tpu.matmul %364, %395, %cst_180 {dimension_numbers = #tpu.dot_dimension_numbers<[1], [0], [0], [1], [0, 0, 1, 1], [], []>} : vector<16x32xbf16>, vector<32x512xbf16>, vector<16x512xf32> -> vector<16x512xf32>
    %c1_181 = arith.constant 1 : index
    %c0_182 = arith.constant 0 : index
    %c1024_183 = arith.constant 1024 : index
    %397 = vector.load %arg14[%c1_181, %c0_182, %c1024_183] : memref<2x1x2048xf32, #tpu.memory_space<vmem>>, vector<1x1x512xf32>
    %398 = vector.shape_cast %397 : vector<1x1x512xf32> to vector<1x512xf32>
    %399 = vector.broadcast %398 : vector<1x512xf32> to vector<16x512xf32>
    %400 = arith.addf %396, %399 : vector<16x512xf32>
    %cst_184 = arith.constant 0.000000e+00 : f32
    %401 = vector.broadcast %cst_184 : f32 to vector<16x512xf32>
    %402 = arith.maximumf %400, %401 : vector<16x512xf32>
    %403 = arith.truncf %402 : vector<16x512xf32> to vector<16x512xbf16>
    %c1_185 = arith.constant 1 : index
    %c1024_186 = arith.constant 1024 : index
    %c0_187 = arith.constant 0 : index
    %404 = vector.load %arg15[%c1_185, %c1024_186, %c0_187] : memref<2x2048x32xbf16, #tpu.memory_space<vmem>>, vector<1x512x32xbf16>
    %405 = vector.shape_cast %404 : vector<1x512x32xbf16> to vector<512x32xbf16>
    %cst_188 = arith.constant dense<0.000000e+00> : vector<16x32xf32>
    %406 = tpu.matmul %403, %405, %cst_188 {dimension_numbers = #tpu.dot_dimension_numbers<[1], [0], [0], [1], [0, 0, 1, 1], [], []>} : vector<16x512xbf16>, vector<512x32xbf16>, vector<16x32xf32> -> vector<16x32xf32>
    %407 = arith.addf %393, %406 : vector<16x32xf32>
    %c1_189 = arith.constant 1 : index
    %c0_190 = arith.constant 0 : index
    %c1536_191 = arith.constant 1536 : index
    %408 = vector.load %arg13[%c1_189, %c0_190, %c1536_191] : memref<2x32x2048xbf16, #tpu.memory_space<vmem>>, vector<1x32x512xbf16>
    %409 = vector.shape_cast %408 : vector<1x32x512xbf16> to vector<32x512xbf16>
    %cst_192 = arith.constant dense<0.000000e+00> : vector<16x512xf32>
    %410 = tpu.matmul %364, %409, %cst_192 {dimension_numbers = #tpu.dot_dimension_numbers<[1], [0], [0], [1], [0, 0, 1, 1], [], []>} : vector<16x32xbf16>, vector<32x512xbf16>, vector<16x512xf32> -> vector<16x512xf32>
    %c1_193 = arith.constant 1 : index
    %c0_194 = arith.constant 0 : index
    %c1536_195 = arith.constant 1536 : index
    %411 = vector.load %arg14[%c1_193, %c0_194, %c1536_195] : memref<2x1x2048xf32, #tpu.memory_space<vmem>>, vector<1x1x512xf32>
    %412 = vector.shape_cast %411 : vector<1x1x512xf32> to vector<1x512xf32>
    %413 = vector.broadcast %412 : vector<1x512xf32> to vector<16x512xf32>
    %414 = arith.addf %410, %413 : vector<16x512xf32>
    %cst_196 = arith.constant 0.000000e+00 : f32
    %415 = vector.broadcast %cst_196 : f32 to vector<16x512xf32>
    %416 = arith.maximumf %414, %415 : vector<16x512xf32>
    %417 = arith.truncf %416 : vector<16x512xf32> to vector<16x512xbf16>
    %c1_197 = arith.constant 1 : index
    %c1536_198 = arith.constant 1536 : index
    %c0_199 = arith.constant 0 : index
    %418 = vector.load %arg15[%c1_197, %c1536_198, %c0_199] : memref<2x2048x32xbf16, #tpu.memory_space<vmem>>, vector<1x512x32xbf16>
    %419 = vector.shape_cast %418 : vector<1x512x32xbf16> to vector<512x32xbf16>
    %cst_200 = arith.constant dense<0.000000e+00> : vector<16x32xf32>
    %420 = tpu.matmul %417, %419, %cst_200 {dimension_numbers = #tpu.dot_dimension_numbers<[1], [0], [0], [1], [0, 0, 1, 1], [], []>} : vector<16x512xbf16>, vector<512x32xbf16>, vector<16x32xf32> -> vector<16x32xf32>
    %421 = arith.addf %407, %420 : vector<16x32xf32>
    %422 = arith.addf %363, %421 : vector<16x32xf32>
    %c1_201 = arith.constant 1 : index
    %c0_202 = arith.constant 0 : index
    %c0_203 = arith.constant 0 : index
    %423 = vector.load %arg16[%c1_201, %c0_202, %c0_203] : memref<2x1x32xf32, #tpu.memory_space<vmem>>, vector<1x1x32xf32>
    %424 = vector.shape_cast %423 : vector<1x1x32xf32> to vector<1x32xf32>
    %425 = vector.broadcast %424 : vector<1x32xf32> to vector<16x32xf32>
    %426 = arith.addf %422, %425 : vector<16x32xf32>
    %c1_204 = arith.constant 1 : index
    %c0_205 = arith.constant 0 : index
    %c0_206 = arith.constant 0 : index
    %427 = vector.load %arg17[%c1_204, %c0_205, %c0_206] : memref<2x1x32xf32, #tpu.memory_space<vmem>>, vector<1x1x32xf32>
    %428 = vector.shape_cast %427 : vector<1x1x32xf32> to vector<1x32xf32>
    %c1_207 = arith.constant 1 : index
    %c0_208 = arith.constant 0 : index
    %c0_209 = arith.constant 0 : index
    %429 = vector.load %arg18[%c1_207, %c0_208, %c0_209] : memref<2x1x32xf32, #tpu.memory_space<vmem>>, vector<1x1x32xf32>
    %430 = vector.shape_cast %429 : vector<1x1x32xf32> to vector<1x32xf32>
    %cst_210 = arith.constant dense<0.000000e+00> : vector<16xf32>
    %431 = vector.multi_reduction <add>, %426, %cst_210 [1] : vector<16x32xf32> to vector<16xf32>
    %432 = vector.shape_cast %431 : vector<16xf32> to vector<16x1xf32>
    %cst_211 = arith.constant 3.200000e+01 : f32
    %433 = vector.broadcast %cst_211 : f32 to vector<16x1xf32>
    %434 = arith.divf %432, %433 : vector<16x1xf32>
    %435 = vector.broadcast %434 : vector<16x1xf32> to vector<16x32xf32>
    %436 = arith.subf %426, %435 : vector<16x32xf32>
    %437 = arith.mulf %436, %436 : vector<16x32xf32>
    %cst_212 = arith.constant dense<0.000000e+00> : vector<16xf32>
    %438 = vector.multi_reduction <add>, %437, %cst_212 [1] : vector<16x32xf32> to vector<16xf32>
    %439 = vector.shape_cast %438 : vector<16xf32> to vector<16x1xf32>
    %cst_213 = arith.constant 3.200000e+01 : f32
    %440 = vector.broadcast %cst_213 : f32 to vector<16x1xf32>
    %441 = arith.divf %439, %440 : vector<16x1xf32>
    %442 = vector.broadcast %434 : vector<16x1xf32> to vector<16x32xf32>
    %443 = arith.subf %426, %442 : vector<16x32xf32>
    %cst_214 = arith.constant 9.99999974E-6 : f32
    %444 = vector.broadcast %cst_214 : f32 to vector<16x1xf32>
    %445 = arith.addf %441, %444 : vector<16x1xf32>
    %446 = math.rsqrt %445 : vector<16x1xf32>
    %447 = vector.broadcast %446 : vector<16x1xf32> to vector<16x32xf32>
    %448 = arith.mulf %443, %447 : vector<16x32xf32>
    %449 = vector.broadcast %428 : vector<1x32xf32> to vector<16x32xf32>
    %450 = arith.mulf %448, %449 : vector<16x32xf32>
    %451 = vector.broadcast %430 : vector<1x32xf32> to vector<16x32xf32>
    %452 = arith.addf %450, %451 : vector<16x32xf32>
    %453 = arith.truncf %452 : vector<16x32xf32> to vector<16x32xbf16>
    %c0_215 = arith.constant 0 : index
    %c0_216 = arith.constant 0 : index
    %454 = vector.load %arg19[%c0_215, %c0_216] : memref<32x128xbf16, #tpu.memory_space<vmem>>, vector<32x128xbf16>
    %cst_217 = arith.constant dense<0.000000e+00> : vector<16x128xf32>
    %455 = tpu.matmul %453, %454, %cst_217 {dimension_numbers = #tpu.dot_dimension_numbers<[1], [0], [0], [1], [0, 0, 1, 1], [], []>} : vector<16x32xbf16>, vector<32x128xbf16>, vector<16x128xf32> -> vector<16x128xf32>
    %c0_218 = arith.constant 0 : index
    %c0_219 = arith.constant 0 : index
    %456 = vector.load %arg20[%c0_218, %c0_219] : memref<1x128xf32, #tpu.memory_space<vmem>>, vector<1x128xf32>
    %457 = vector.broadcast %456 : vector<1x128xf32> to vector<16x128xf32>
    %458 = arith.addf %455, %457 : vector<16x128xf32>
    %c0_220 = arith.constant 0 : index
    %c0_221 = arith.constant 0 : index
    %459 = vector.load %arg21[%c0_220, %c0_221] : memref<16x128xf32, #tpu.memory_space<vmem>>, vector<16x128xf32>
    tpu.vector_store %arg21[%c0_220, %c0_221], %458 {strides = array<i32>} : memref<16x128xf32, #tpu.memory_space<vmem>>, vector<16x128xf32>,
    return
  }
}

</mosaic_0001>

<llo_original>
// kernel: transformer_classifier_tagger.1
$region0: #{transformer_classifier_tagger.1}
  #allocation0 [shape = 'u32[]', space=smem, size = 0x4, offset = 0x4, fixed_abs, tag = 'smem constant byte address 0x4 - core index']
  #allocation1 [shape = 'u32[144,128]{1,0:T(1,128)}', space=vmem, size = 0x12000, scoped, tag = 'internal scratch']
  %s0 = inlined_call_operand.vmem [shape: s32[16,1], index: 0, kind: input, shape index: {}]
  %s1 = inlined_call_operand.vmem [shape: f32[56,32], index: 1, kind: input, shape index: {}]
  %s2 = inlined_call_operand.vmem [shape: f32[128,32], index: 2, kind: input, shape index: {}]
  %s3 = inlined_call_operand.vmem [shape: bf16[2,32,32], index: 3, kind: input, shape index: {}]
  %s4 = inlined_call_operand.vmem [shape: bf16[2,32,32], index: 4, kind: input, shape index: {}]
  %s5 = inlined_call_operand.vmem [shape: bf16[2,32,32], index: 5, kind: input, shape index: {}]
  %s6 = inlined_call_operand.vmem [shape: f32[2,1,32], index: 6, kind: input, shape index: {}]
  %s7 = inlined_call_operand.vmem [shape: f32[2,1,32], index: 7, kind: input, shape index: {}]
  %s8 = inlined_call_operand.vmem [shape: f32[2,1,32], index: 8, kind: input, shape index: {}]
  %s9 = inlined_call_operand.vmem [shape: bf16[2,32,32], index: 9, kind: input, shape index: {}]
  %s10 = inlined_call_operand.vmem [shape: f32[2,1,32], index: 10, kind: input, shape index: {}]
  %s11 = inlined_call_operand.vmem [shape: f32[2,1,32], index: 11, kind: input, shape index: {}]
  %s12 = inlined_call_operand.vmem [shape: f32[2,1,32], index: 12, kind: input, shape index: {}]
  %s13 = inlined_call_operand.vmem [shape: bf16[2,32,2048], index: 13, kind: input, shape index: {}]
  %s14 = inlined_call_operand.vmem [shape: f32[2,1,2048], index: 14, kind: input, shape index: {}]
  %s15 = inlined_call_operand.vmem [shape: bf16[2,2048,32], index: 15, kind: input, shape index: {}]
  %s16 = inlined_call_operand.vmem [shape: f32[2,1,32], index: 16, kind: input, shape index: {}]
  %s17 = inlined_call_operand.vmem [shape: f32[2,1,32], index: 17, kind: input, shape index: {}]
  %s18 = inlined_call_operand.vmem [shape: f32[2,1,32], index: 18, kind: input, shape index: {}]
  %s19 = inlined_call_operand.vmem [shape: bf16[32,128], index: 19, kind: input, shape index: {}]
  %s20 = inlined_call_operand.vmem [shape: f32[1,128], index: 20, kind: input, shape index: {}]
  %s21 = inlined_call_operand.vmem [shape: f32[16,128], index: 21, kind: output, shape index: {}]
  %s22 = sld [smem:[#allocation0]]
  $region94: #{transformer_classifier_tagger.1} parent=0
    _
  %s24 = ssub.s32 1, %s22
  %s25 = scalar_select 0, %s24, %s22
  // Predicated region
  $region2: #{transformer_classifier_tagger.1} parent=0 // pred_check
    _
  $region3: #{transformer_classifier_tagger.1} parent=0 // pred_check_branch
    %27 = sbr.rel (0) target = $region5
  $region4: #{transformer_classifier_tagger.1} parent=0 // pred_region
    _
  $region5: #{transformer_classifier_tagger.1} parent=0 // pred_fallthru
    _
  // Predicated region
  $region6: #{transformer_classifier_tagger.1} parent=0 // pred_check
    _
  $region7: #{transformer_classifier_tagger.1} parent=0 // pred_check_branch
    %29 = sbr.rel (0) target = $region9
  $region8: #{transformer_classifier_tagger.1} parent=0 // pred_region
    _
  $region9: #{transformer_classifier_tagger.1} parent=0 // pred_fallthru
    _
  // Predicated region
  $region10: #{transformer_classifier_tagger.1} parent=0 // pred_check
    _
  $region11: #{transformer_classifier_tagger.1} parent=0 // pred_check_branch
    %31 = sbr.rel (0) target = $region13
  $region12: #{transformer_classifier_tagger.1} parent=0 // pred_region
    _
  $region13: #{transformer_classifier_tagger.1} parent=0 // pred_fallthru
    _
  // Predicated region
  $region14: #{transformer_classifier_tagger.1} parent=0 // pred_check
    _
  $region15: #{transformer_classifier_tagger.1} parent=0 // pred_check_branch
    %33 = sbr.rel (0) target = $region17
  $region16: #{transformer_classifier_tagger.1} parent=0 // pred_region
    _
  $region17: #{transformer_classifier_tagger.1} parent=0 // pred_fallthru
    _
  // Predicated region
  $region18: #{transformer_classifier_tagger.1} parent=0 // pred_check
    _
  $region19: #{transformer_classifier_tagger.1} parent=0 // pred_check_branch
    %35 = sbr.rel (0) target = $region21
  $region20: #{transformer_classifier_tagger.1} parent=0 // pred_region
    _
  $region21: #{transformer_classifier_tagger.1} parent=0 // pred_fallthru
    _
  // Predicated region
  $region22: #{transformer_classifier_tagger.1} parent=0 // pred_check
    _
  $region23: #{transformer_classifier_tagger.1} parent=0 // pred_check_branch
    %37 = sbr.rel (0) target = $region25
  $region24: #{transformer_classifier_tagger.1} parent=0 // pred_region
    _
  $region25: #{transformer_classifier_tagger.1} parent=0 // pred_fallthru
    _
  // Predicated region
  $region26: #{transformer_classifier_tagger.1} parent=0 // pred_check
    _
  $region27: #{transformer_classifier_tagger.1} parent=0 // pred_check_branch
    %39 = sbr.rel (0) target = $region29
  $region28: #{transformer_classifier_tagger.1} parent=0 // pred_region
    _
  $region29: #{transformer_classifier_tagger.1} parent=0 // pred_fallthru
    _
  // Predicated region
  $region30: #{transformer_classifier_tagger.1} parent=0 // pred_check
    _
  $region31: #{transformer_classifier_tagger.1} parent=0 // pred_check_branch
    %41 = sbr.rel (0) target = $region33
  $region32: #{transformer_classifier_tagger.1} parent=0 // pred_region
    _
  $region33: #{transformer_classifier_tagger.1} parent=0 // pred_fallthru
    _
  // Predicated region
  $region34: #{transformer_classifier_tagger.1} parent=0 // pred_check
    _
  $region35: #{transformer_classifier_tagger.1} parent=0 // pred_check_branch
    %43 = sbr.rel (0) target = $region37
  $region36: #{transformer_classifier_tagger.1} parent=0 // pred_region
    _
  $region37: #{transformer_classifier_tagger.1} parent=0 // pred_fallthru
    _
  // Predicated region
  $region38: #{transformer_classifier_tagger.1} parent=0 // pred_check
    _
  $region39: #{transformer_classifier_tagger.1} parent=0 // pred_check_branch
    %45 = sbr.rel (0) target = $region41
  $region40: #{transformer_classifier_tagger.1} parent=0 // pred_region
    _
  $region41: #{transformer_classifier_tagger.1} parent=0 // pred_fallthru
    _
  // Predicated region
  $region42: #{transformer_classifier_tagger.1} parent=0 // pred_check
    _
  $region43: #{transformer_classifier_tagger.1} parent=0 // pred_check_branch
    %47 = sbr.rel (0) target = $region45
  $region44: #{transformer_classifier_tagger.1} parent=0 // pred_region
    _
  $region45: #{transformer_classifier_tagger.1} parent=0 // pred_fallthru
    _
  // Predicated region
  $region46: #{transformer_classifier_tagger.1} parent=0 // pred_check
    _
  $region47: #{transformer_classifier_tagger.1} parent=0 // pred_check_branch
    %49 = sbr.rel (0) target = $region49
  $region48: #{transformer_classifier_tagger.1} parent=0 // pred_region
    _
  $region49: #{transformer_classifier_tagger.1} parent=0 // pred_fallthru
    _
  // Predicated region
  $region50: #{transformer_classifier_tagger.1} parent=0 // pred_check
    _
  $region51: #{transformer_classifier_tagger.1} parent=0 // pred_check_branch
    %51 = sbr.rel (0) target = $region53
  $region52: #{transformer_classifier_tagger.1} parent=0 // pred_region
    _
  $region53: #{transformer_classifier_tagger.1} parent=0 // pred_fallthru
    _
  // Predicated region
  $region54: #{transformer_classifier_tagger.1} parent=0 // pred_check
    _
  $region55: #{transformer_classifier_tagger.1} parent=0 // pred_check_branch
    %53 = sbr.rel (0) target = $region57
  $region56: #{transformer_classifier_tagger.1} parent=0 // pred_region
    _
  $region57: #{transformer_classifier_tagger.1} parent=0 // pred_fallthru
    _
  // Predicated region
  $region58: #{transformer_classifier_tagger.1} parent=0 // pred_check
    _
  $region59: #{transformer_classifier_tagger.1} parent=0 // pred_check_branch
    %55 = sbr.rel (0) target = $region61
  $region60: #{transformer_classifier_tagger.1} parent=0 // pred_region
    _
  $region61: #{transformer_classifier_tagger.1} parent=0 // pred_fallthru
    _
  // Predicated region
  $region62: #{transformer_classifier_tagger.1} parent=0 // pred_check
    _
  $region63: #{transformer_classifier_tagger.1} parent=0 // pred_check_branch
    %57 = sbr.rel (0) target = $region65
  $region64: #{transformer_classifier_tagger.1} parent=0 // pred_region
    _
  $region65: #{transformer_classifier_tagger.1} parent=0 // pred_fallthru
    _
  // Predicated region
  $region66: #{transformer_classifier_tagger.1} parent=0 // pred_check
    _
  $region67: #{transformer_classifier_tagger.1} parent=0 // pred_check_branch
    %59 = sbr.rel (0) target = $region69
  $region68: #{transformer_classifier_tagger.1} parent=0 // pred_region
    _
  $region69: #{transformer_classifier_tagger.1} parent=0 // pred_fallthru
    _
  // Predicated region
  $region70: #{transformer_classifier_tagger.1} parent=0 // pred_check
    _
  $region71: #{transformer_classifier_tagger.1} parent=0 // pred_check_branch
    %61 = sbr.rel (0) target = $region73
  $region72: #{transformer_classifier_tagger.1} parent=0 // pred_region
    _
  $region73: #{transformer_classifier_tagger.1} parent=0 // pred_fallthru
    _
  // Predicated region
  $region74: #{transformer_classifier_tagger.1} parent=0 // pred_check
    _
  $region75: #{transformer_classifier_tagger.1} parent=0 // pred_check_branch
    %63 = sbr.rel (0) target = $region77
  $region76: #{transformer_classifier_tagger.1} parent=0 // pred_region
    _
  $region77: #{transformer_classifier_tagger.1} parent=0 // pred_fallthru
    _
  // Predicated region
  $region78: #{transformer_classifier_tagger.1} parent=0 // pred_check
    _
  $region79: #{transformer_classifier_tagger.1} parent=0 // pred_check_branch
    %65 = sbr.rel (0) target = $region81
  $region80: #{transformer_classifier_tagger.1} parent=0 // pred_region
    _
  $region81: #{transformer_classifier_tagger.1} parent=0 // pred_fallthru
    _
  // Predicated region
  $region82: #{transformer_classifier_tagger.1} parent=0 // pred_check
    _
  $region83: #{transformer_classifier_tagger.1} parent=0 // pred_check_branch
    %67 = sbr.rel (0) target = $region85
  $region84: #{transformer_classifier_tagger.1} parent=0 // pred_region
    _
  $region85: #{transformer_classifier_tagger.1} parent=0 // pred_fallthru
    _
  %v69 = vld [vmem:[%s0] sm:$0xff]
  %v70 = vld [vmem:[%s0 + $0x8] sm:$0xff]
  %v71 = vlaneseq
  %v72 = vand.u32 %v71, 127
  %73 = vset.pattern.permute.xlu0 0
  %74 = vperm.xlu0 %73, %v69
  %v75 = vpop.permute.xlu0 %74
  %76 = vset.pattern.permute.xlu0 0
  %77 = vperm.xlu0 %76, %v70
  %v78 = vpop.permute.xlu0 %77
  %vm79 = vcmp.eq.s32.totalorder %v75, %v72
  %vm80 = vcmp.eq.s32.totalorder %v78, %v72
  %v81 = vsel %vm79, 1, 0
  %v82 = vsel %vm80, 1, 0
  %v83 = vcvt.s32.f32 %v81
  %v84 = vcvt.s32.f32 %v82
  %v85 = vld [vmem:[%s1] sm:$0xff]
  %v86 = vld [vmem:[%s1 + $0x8] sm:$0xff]
  %v87 = vld [vmem:[%s1 + $0x10] sm:$0xff]
  %v88 = vld [vmem:[%s1 + $0x18] sm:$0xff]
  %v89 = vld [vmem:[%s1 + $0x20] sm:$0xff]
  %v90 = vld [vmem:[%s1 + $0x28] sm:$0xff]
  %v91 = vld [vmem:[%s1 + $0x30] sm:$0xff]
  %v92 = vld [vmem:[%s2] sm:$0xff]
  %vm93 = vcmask 457728
  %v95 = vsel %vm93, %v83, 0
  %v98 = vsel %vm93, %v84, 0
  %100 = vmatprep.subr.mxu0 0.0
  %101 = vmatpush1.msra.mxu0 0.0
  %102 = vmatprep.subr.mxu0 0.0
  %103 = vmatpush1.msra.mxu0 0.0
  %104 = vmatprep.subr.mxu0 0.0
  %105 = vmatpush1.msra.mxu0 0.0
  %106 = vmatprep.subr.mxu0 0.0
  %107 = vmatpush1.msra.mxu0 0.0
  %108 = vmatprep.subr.mxu0 0.0
  %109 = vmatpush1.msra.mxu0 0.0
  %110 = vmatprep.subr.mxu0 0.0
  %111 = vmatpush1.msra.mxu0 0.0
  %112 = vmatprep.subr.mxu0 0.0
  %113 = vmatpush1.msra.mxu0 0.0
  %114 = vmatprep.subr.mxu0 0.0
  %115 = vmatpush1.msra.mxu0 0.0
  %116 = vmatprep.subr.mxu0 0.0
  %117 = vmatpush1.msra.mxu0 0.0
  %118 = vmatprep.subr.mxu0 0.0
  %119 = vmatpush1.msra.mxu0 %v91
  %120 = vmatprep.subr.mxu0 0.0
  %121 = vmatpush1.msra.mxu0 %v90
  %122 = vmatprep.subr.mxu0 0.0
  %123 = vmatpush1.msra.mxu0 %v89
  %124 = vmatprep.subr.mxu0 0.0
  %125 = vmatpush1.msra.mxu0 %v88
  %126 = vmatprep.subr.mxu0 0.0
  %127 = vmatpush1.msra.mxu0 %v87
  %128 = vmatprep.subr.mxu0 0.0
  %129 = vmatpush1.msra.mxu0 %v86
  %130 = vmatprep.subr.mxu0 0.0
  %131 = vmatpush1.msra.mxu0 %v85
  %132 = vmatprep.subr.mxu0 0.0
  %133 = vmatpush2.msra.mxu0 0.0
  %134 = vmatprep.subr.mxu0 0.0
  %135 = vmatpush2.msra.mxu0 0.0
  %136 = vmatprep.subr.mxu0 0.0
  %137 = vmatpush2.msra.mxu0 0.0
  %138 = vmatprep.subr.mxu0 0.0
  %139 = vmatpush2.msra.mxu0 0.0
  %140 = vmatprep.subr.mxu0 0.0
  %141 = vmatpush2.msra.mxu0 0.0
  %142 = vmatprep.subr.mxu0 0.0
  %143 = vmatpush2.msra.mxu0 0.0
  %144 = vmatprep.subr.mxu0 0.0
  %145 = vmatpush2.msra.mxu0 0.0
  %146 = vmatprep.subr.mxu0 0.0
  %147 = vmatpush2.msra.mxu0 0.0
  %148 = vmatprep.subr.mxu0 0.0
  %149 = vmatpush2.msra.mxu0 0.0
  %150 = vmatprep.subr.mxu0 0.0
  %151 = vmatpush2.msra.mxu0 0.0
  %152 = vmatprep.subr.mxu0 0.0
  %153 = vmatpush2.msra.mxu0 0.0
  %154 = vmatprep.subr.mxu0 0.0
  %155 = vmatpush2.msra.mxu0 0.0
  %156 = vmatprep.subr.mxu0 0.0
  %157 = vmatpush2.msra.mxu0 0.0
  %158 = vmatprep.subr.mxu0 0.0
  %159 = vmatpush2.msra.mxu0 0.0
  %160 = vmatprep.subr.mxu0 0.0
  %161 = vmatpush2.msra.mxu0 0.0
  %162 = vmatprep.subr.mxu0 0.0
  %163 = vmatpush2.msra.mxu0 0.0
  %164 = vmatprep.mubr.f32.mxu0 0.0
  %165 = vmatmul.mubr.f32.gmra.mxu0 %v95
  %v166 = vpop.f32.mrf.mxu0
  %v167 = vadd.f32 %v92, %v166
  %v168 = vpop.f32.mrf.mxu0
  %169 = vmatprep.mubr.f32.mxu0 0.0
  %170 = vmatmul.mubr.f32.gmra.mxu0 %v98
  %v171 = vpop.f32.mrf.mxu0
  %v172 = vadd.f32 %v92, %v171
  %v173 = vpop.f32.mrf.mxu0
  %174 = vdwg.mxu0
  %v175 = vpack.c.bf16 %v172, %v167
  %v176 = vld [vmem:[%s3] sm:$0xf]
  %v177 = vld [vmem:[%s3 + $0x4] sm:$0xf]
  %v178 = vld [vmem:[%s3 + $0x8] sm:$0xf]
  %v179 = vld [vmem:[%s3 + $0xc] sm:$0xf]
  %v180 = vld [vmem:[%s6] sm:$0x1]
  %v182 = vlaneseq
  %v183 = vshrl.u32 %v182, 7
  %v184 = vsub.s32 0, %v183
  %v185 = vrot.slane %v180, %v184
  %v191 = vunpack.c.l.b16 %v176
  %v192 = vunpack.c.l.b16 %v177
  %v193 = vunpack.c.l.b16 %v178
  %v194 = vunpack.c.l.b16 %v179
  %v195 = vpack.c.b16 %v192, %v191
  %v196 = vpack.c.b16 %v194, %v193
  %vm199 = vcmask 261120
  %v201 = vsel %vm199, %v175, 0
  %203 = vmatprep.subr.bf16.mxu0 0
  %204 = vmatpush1.bf16.msra.mxu0 0
  %205 = vmatprep.subr.bf16.mxu0 0
  %206 = vmatpush1.bf16.msra.mxu0 0
  %207 = vmatprep.subr.bf16.mxu0 0
  %208 = vmatpush1.bf16.msra.mxu0 0
  %209 = vmatprep.subr.bf16.mxu0 0
  %210 = vmatpush1.bf16.msra.mxu0 0
  %211 = vmatprep.subr.bf16.mxu0 0
  %212 = vmatpush1.bf16.msra.mxu0 0
  %213 = vmatprep.subr.bf16.mxu0 0
  %214 = vmatpush1.bf16.msra.mxu0 0
  %215 = vmatprep.subr.bf16.mxu0 0
  %216 = vmatpush1.bf16.msra.mxu0 %v196
  %217 = vmatprep.subr.bf16.mxu0 0
  %218 = vmatpush1.bf16.msra.mxu0 %v195
  %219 = vmatprep.subr.bf16.mxu0 0
  %220 = vmatpush2.bf16.msra.mxu0 0
  %221 = vmatprep.subr.bf16.mxu0 0
  %222 = vmatpush2.bf16.msra.mxu0 0
  %223 = vmatprep.subr.bf16.mxu0 0
  %224 = vmatpush2.bf16.msra.mxu0 0
  %225 = vmatprep.subr.bf16.mxu0 0
  %226 = vmatpush2.bf16.msra.mxu0 0
  %227 = vmatprep.subr.bf16.mxu0 0
  %228 = vmatpush2.bf16.msra.mxu0 0
  %229 = vmatprep.subr.bf16.mxu0 0
  %230 = vmatpush2.bf16.msra.mxu0 0
  %231 = vmatprep.subr.bf16.mxu0 0
  %232 = vmatpush2.bf16.msra.mxu0 0
  %233 = vmatprep.subr.bf16.mxu0 0
  %234 = vmatpush2.bf16.msra.mxu0 0
  %235 = vmatprep.mubr.bf16.mxu0 0
  %236 = vmatmul.mubr.bf16.gmra.mxu0 %v201
  %v237 = vpop.f32.mrf.mxu0
  %v238 = vadd.f32 %v185, %v237
  %v239 = vpop.f32.mrf.mxu0
  %v240 = vpop.f32.mrf.mxu0
  %v241 = vadd.f32 %v185, %v240
  %v242 = vpop.f32.mrf.mxu0
  %243 = vdwg.mxu0
  %v244 = vld [vmem:[%s4] sm:$0xf]
  %v245 = vld [vmem:[%s4 + $0x4] sm:$0xf]
  %v246 = vld [vmem:[%s4 + $0x8] sm:$0xf]
  %v247 = vld [vmem:[%s4 + $0xc] sm:$0xf]
  %v248 = vld [vmem:[%s7] sm:$0x1]
  %v250 = vlaneseq
  %v251 = vshrl.u32 %v250, 7
  %v252 = vsub.s32 0, %v251
  %v253 = vrot.slane %v248, %v252
  %v259 = vunpack.c.l.b16 %v244
  %v260 = vunpack.c.l.b16 %v245
  %v261 = vunpack.c.l.b16 %v246
  %v262 = vunpack.c.l.b16 %v247
  %v263 = vpack.c.b16 %v260, %v259
  %v264 = vpack.c.b16 %v262, %v261
  %267 = vmatprep.subr.bf16.mxu0 0
  %268 = vmatpush1.bf16.msra.mxu0 0
  %269 = vmatprep.subr.bf16.mxu0 0
  %270 = vmatpush1.bf16.msra.mxu0 0
  %271 = vmatprep.subr.bf16.mxu0 0
  %272 = vmatpush1.bf16.msra.mxu0 0
  %273 = vmatprep.subr.bf16.mxu0 0
  %274 = vmatpush1.bf16.msra.mxu0 0
  %275 = vmatprep.subr.bf16.mxu0 0
  %276 = vmatpush1.bf16.msra.mxu0 0
  %277 = vmatprep.subr.bf16.mxu0 0
  %278 = vmatpush1.bf16.msra.mxu0 0
  %279 = vmatprep.subr.bf16.mxu0 0
  %280 = vmatpush1.bf16.msra.mxu0 %v264
  %281 = vmatprep.subr.bf16.mxu0 0
  %282 = vmatpush1.bf16.msra.mxu0 %v263
  %283 = vmatprep.subr.bf16.mxu0 0
  %284 = vmatpush2.bf16.msra.mxu0 0
  %285 = vmatprep.subr.bf16.mxu0 0
  %286 = vmatpush2.bf16.msra.mxu0 0
  %287 = vmatprep.subr.bf16.mxu0 0
  %288 = vmatpush2.bf16.msra.mxu0 0
  %289 = vmatprep.subr.bf16.mxu0 0
  %290 = vmatpush2.bf16.msra.mxu0 0
  %291 = vmatprep.subr.bf16.mxu0 0
  %292 = vmatpush2.bf16.msra.mxu0 0
  %293 = vmatprep.subr.bf16.mxu0 0
  %294 = vmatpush2.bf16.msra.mxu0 0
  %295 = vmatprep.subr.bf16.mxu0 0
  %296 = vmatpush2.bf16.msra.mxu0 0
  %297 = vmatprep.subr.bf16.mxu0 0
  %298 = vmatpush2.bf16.msra.mxu0 0
  %299 = vmatprep.mubr.bf16.mxu0 0
  %300 = vmatmul.mubr.bf16.gmra.mxu0 %v201
  %v301 = vpop.f32.mrf.mxu0
  %v302 = vadd.f32 %v253, %v301
  %v303 = vpop.f32.mrf.mxu0
  %v304 = vpop.f32.mrf.mxu0
  %v305 = vadd.f32 %v253, %v304
  %v306 = vpop.f32.mrf.mxu0
  %307 = vdwg.mxu0
  %v308 = vld [vmem:[%s5] sm:$0xf]
  %v309 = vld [vmem:[%s5 + $0x4] sm:$0xf]
  %v310 = vld [vmem:[%s5 + $0x8] sm:$0xf]
  %v311 = vld [vmem:[%s5 + $0xc] sm:$0xf]
  %v312 = vld [vmem:[%s8] sm:$0x1]
  %v314 = vlaneseq
  %v315 = vshrl.u32 %v314, 7
  %v316 = vsub.s32 0, %v315
  %v317 = vrot.slane %v312, %v316
  %v323 = vunpack.c.l.b16 %v308
  %v324 = vunpack.c.l.b16 %v309
  %v325 = vunpack.c.l.b16 %v310
  %v326 = vunpack.c.l.b16 %v311
  %v327 = vpack.c.b16 %v324, %v323
  %v328 = vpack.c.b16 %v326, %v325
  %331 = vmatprep.subr.bf16.mxu0 0
  %332 = vmatpush1.bf16.msra.mxu0 0
  %333 = vmatprep.subr.bf16.mxu0 0
  %334 = vmatpush1.bf16.msra.mxu0 0
  %335 = vmatprep.subr.bf16.mxu0 0
  %336 = vmatpush1.bf16.msra.mxu0 0
  %337 = vmatprep.subr.bf16.mxu0 0
  %338 = vmatpush1.bf16.msra.mxu0 0
  %339 = vmatprep.subr.bf16.mxu0 0
  %340 = vmatpush1.bf16.msra.mxu0 0
  %341 = vmatprep.subr.bf16.mxu0 0
  %342 = vmatpush1.bf16.msra.mxu0 0
  %343 = vmatprep.subr.bf16.mxu0 0
  %344 = vmatpush1.bf16.msra.mxu0 %v328
  %345 = vmatprep.subr.bf16.mxu0 0
  %346 = vmatpush1.bf16.msra.mxu0 %v327
  %347 = vmatprep.subr.bf16.mxu0 0
  %348 = vmatpush2.bf16.msra.mxu0 0
  %349 = vmatprep.subr.bf16.mxu0 0
  %350 = vmatpush2.bf16.msra.mxu0 0
  %351 = vmatprep.subr.bf16.mxu0 0
  %352 = vmatpush2.bf16.msra.mxu0 0
  %353 = vmatprep.subr.bf16.mxu0 0
  %354 = vmatpush2.bf16.msra.mxu0 0
  %355 = vmatprep.subr.bf16.mxu0 0
  %356 = vmatpush2.bf16.msra.mxu0 0
  %357 = vmatprep.subr.bf16.mxu0 0
  %358 = vmatpush2.bf16.msra.mxu0 0
  %359 = vmatprep.subr.bf16.mxu0 0
  %360 = vmatpush2.bf16.msra.mxu0 0
  %361 = vmatprep.subr.bf16.mxu0 0
  %362 = vmatpush2.bf16.msra.mxu0 0
  %363 = vmatprep.mubr.bf16.mxu0 0
  %364 = vmatmul.mubr.bf16.gmra.mxu0 %v201
  %v365 = vpop.f32.mrf.mxu0
  %v366 = vadd.f32 %v317, %v365
  %v367 = vpop.f32.mrf.mxu0
  %v368 = vpop.f32.mrf.mxu0
  %v369 = vadd.f32 %v317, %v368
  %v370 = vpop.f32.mrf.mxu0
  %371 = vdwg.mxu0
  %374 = vrot.lane.b32.xlu0 %v238, 120
  %v375 = vpop.permute.xlu0 %374
  %376 = vrot.lane.b32.xlu0 %v241, 120
  %v377 = vpop.permute.xlu0 %376
  %380 = vrot.lane.b32.xlu0 %v238, 112
  %v381 = vpop.permute.xlu0 %380
  %382 = vrot.lane.b32.xlu0 %v241, 112
  %v383 = vpop.permute.xlu0 %382
  %386 = vrot.lane.b32.xlu0 %v238, 104
  %v387 = vpop.permute.xlu0 %386
  %388 = vrot.lane.b32.xlu0 %v241, 104
  %v389 = vpop.permute.xlu0 %388
  %v392 = vpack.c.bf16 %v238, %v238
  %v393 = vpack.c.bf16 %v241, %v241
  %v394 = vpack.c.bf16 %v375, %v375
  %v395 = vpack.c.bf16 %v377, %v377
  %v396 = vpack.c.bf16 %v381, %v381
  %v397 = vpack.c.bf16 %v383, %v383
  %v398 = vpack.c.bf16 %v387, %v387
  %v399 = vpack.c.bf16 %v389, %v389
  %402 = vrot.lane.b32.xlu0 %v302, 120
  %v403 = vpop.permute.xlu0 %402
  %404 = vrot.lane.b32.xlu0 %v305, 120
  %v405 = vpop.permute.xlu0 %404
  %408 = vrot.lane.b32.xlu0 %v302, 112
  %v409 = vpop.permute.xlu0 %408
  %410 = vrot.lane.b32.xlu0 %v305, 112
  %v411 = vpop.permute.xlu0 %410
  %414 = vrot.lane.b32.xlu0 %v302, 104
  %v415 = vpop.permute.xlu0 %414
  %416 = vrot.lane.b32.xlu0 %v305, 104
  %v417 = vpop.permute.xlu0 %416
  %v420 = vpack.c.bf16 %v302, %v302
  %v421 = vpack.c.bf16 %v305, %v305
  %v422 = vpack.c.bf16 %v403, %v403
  %v423 = vpack.c.bf16 %v405, %v405
  %v424 = vpack.c.bf16 %v409, %v409
  %v425 = vpack.c.bf16 %v411, %v411
  %v426 = vpack.c.bf16 %v415, %v415
  %v427 = vpack.c.bf16 %v417, %v417
  %430 = vrot.lane.b32.xlu0 %v366, 120
  %v431 = vpop.permute.xlu0 %430
  %432 = vrot.lane.b32.xlu0 %v369, 120
  %v433 = vpop.permute.xlu0 %432
  %436 = vrot.lane.b32.xlu0 %v366, 112
  %v437 = vpop.permute.xlu0 %436
  %438 = vrot.lane.b32.xlu0 %v369, 112
  %v439 = vpop.permute.xlu0 %438
  %442 = vrot.lane.b32.xlu0 %v366, 104
  %v443 = vpop.permute.xlu0 %442
  %444 = vrot.lane.b32.xlu0 %v369, 104
  %v445 = vpop.permute.xlu0 %444
  %v448 = vpack.c.bf16 %v366, %v366
  %v449 = vpack.c.bf16 %v369, %v369
  %v450 = vpack.c.bf16 %v431, %v431
  %v451 = vpack.c.bf16 %v433, %v433
  %v452 = vpack.c.bf16 %v437, %v437
  %v453 = vpack.c.bf16 %v439, %v439
  %v454 = vpack.c.bf16 %v443, %v443
  %v455 = vpack.c.bf16 %v445, %v445
  %vm456 = vcmask 64512
  %v458 = vsel %vm456, %v392, 0
  %v461 = vsel %vm456, %v420, 0
  %463 = vmatprep.subr.bf16.mxu0 0
  %464 = vmatpush1.bf16.xpose.msra.mxu0 0
  %465 = vmatprep.subr.bf16.mxu0 0
  %466 = vmatpush1.bf16.xpose.msra.mxu0 0
  %467 = vmatprep.subr.bf16.mxu0 0
  %468 = vmatpush1.bf16.xpose.msra.mxu0 0
  %469 = vmatprep.subr.bf16.mxu0 0
  %470 = vmatpush1.bf16.xpose.msra.mxu0 0
  %471 = vmatprep.subr.bf16.mxu0 0
  %472 = vmatpush1.bf16.xpose.msra.mxu0 0
  %473 = vmatprep.subr.bf16.mxu0 0
  %474 = vmatpush1.bf16.xpose.msra.mxu0 0
  %475 = vmatprep.subr.bf16.mxu0 0
  %476 = vmatpush1.bf16.xpose.msra.mxu0 0
  %477 = vmatprep.subr.bf16.mxu0 0
  %478 = vmatpush1.bf16.xpose.msra.mxu0 %v461
  %479 = vmatprep.subr.bf16.mxu0 0
  %480 = vmatpush2.bf16.xpose.msra.mxu0 0
  %481 = vmatprep.subr.bf16.mxu0 0
  %482 = vmatpush2.bf16.xpose.msra.mxu0 0
  %483 = vmatprep.subr.bf16.mxu0 0
  %484 = vmatpush2.bf16.xpose.msra.mxu0 0
  %485 = vmatprep.subr.bf16.mxu0 0
  %486 = vmatpush2.bf16.xpose.msra.mxu0 0
  %487 = vmatprep.subr.bf16.mxu0 0
  %488 = vmatpush2.bf16.xpose.msra.mxu0 0
  %489 = vmatprep.subr.bf16.mxu0 0
  %490 = vmatpush2.bf16.xpose.msra.mxu0 0
  %491 = vmatprep.subr.bf16.mxu0 0
  %492 = vmatpush2.bf16.xpose.msra.mxu0 0
  %493 = vmatprep.subr.bf16.mxu0 0
  %494 = vmatpush2.bf16.xpose.msra.mxu0 0
  %495 = vmatprep.mubr.bf16.mxu0 0
  %496 = vmatmul.mubr.bf16.gmra.mxu0 %v458
  %v497 = vpop.f32.mrf.mxu0
  %v498 = vadd.f32 0.0, %v497
  %v499 = vpop.f32.mrf.mxu0
  %v500 = vpop.f32.mrf.mxu0
  %v501 = vpop.f32.mrf.mxu0
  %502 = vdwg.mxu0
  %v504 = vsel %vm456, %v393, 0
  %v507 = vsel %vm456, %v421, 0
  %509 = vmatprep.subr.bf16.mxu0 0
  %510 = vmatpush1.bf16.xpose.msra.mxu0 0
  %511 = vmatprep.subr.bf16.mxu0 0
  %512 = vmatpush1.bf16.xpose.msra.mxu0 0
  %513 = vmatprep.subr.bf16.mxu0 0
  %514 = vmatpush1.bf16.xpose.msra.mxu0 0
  %515 = vmatprep.subr.bf16.mxu0 0
  %516 = vmatpush1.bf16.xpose.msra.mxu0 0
  %517 = vmatprep.subr.bf16.mxu0 0
  %518 = vmatpush1.bf16.xpose.msra.mxu0 0
  %519 = vmatprep.subr.bf16.mxu0 0
  %520 = vmatpush1.bf16.xpose.msra.mxu0 0
  %521 = vmatprep.subr.bf16.mxu0 0
  %522 = vmatpush1.bf16.xpose.msra.mxu0 0
  %523 = vmatprep.subr.bf16.mxu0 0
  %524 = vmatpush1.bf16.xpose.msra.mxu0 %v507
  %525 = vmatprep.subr.bf16.mxu0 0
  %526 = vmatpush2.bf16.xpose.msra.mxu0 0
  %527 = vmatprep.subr.bf16.mxu0 0
  %528 = vmatpush2.bf16.xpose.msra.mxu0 0
  %529 = vmatprep.subr.bf16.mxu0 0
  %530 = vmatpush2.bf16.xpose.msra.mxu0 0
  %531 = vmatprep.subr.bf16.mxu0 0
  %532 = vmatpush2.bf16.xpose.msra.mxu0 0
  %533 = vmatprep.subr.bf16.mxu0 0
  %534 = vmatpush2.bf16.xpose.msra.mxu0 0
  %535 = vmatprep.subr.bf16.mxu0 0
  %536 = vmatpush2.bf16.xpose.msra.mxu0 0
  %537 = vmatprep.subr.bf16.mxu0 0
  %538 = vmatpush2.bf16.xpose.msra.mxu0 0
  %539 = vmatprep.subr.bf16.mxu0 0
  %540 = vmatpush2.bf16.xpose.msra.mxu0 0
  %541 = vmatprep.mubr.bf16.mxu0 0
  %542 = vmatmul.mubr.bf16.gmra.mxu0 %v504
  %v543 = vpop.f32.mrf.mxu0
  %v544 = vadd.f32 0.0, %v543
  %v545 = vpop.f32.mrf.mxu0
  %v546 = vpop.f32.mrf.mxu0
  %v547 = vpop.f32.mrf.mxu0
  %548 = vdwg.mxu0
  %v550 = vsel %vm456, %v394, 0
  %v553 = vsel %vm456, %v422, 0
  %555 = vmatprep.subr.bf16.mxu0 0
  %556 = vmatpush1.bf16.xpose.msra.mxu0 0
  %557 = vmatprep.subr.bf16.mxu0 0
  %558 = vmatpush1.bf16.xpose.msra.mxu0 0
  %559 = vmatprep.subr.bf16.mxu0 0
  %560 = vmatpush1.bf16.xpose.msra.mxu0 0
  %561 = vmatprep.subr.bf16.mxu0 0
  %562 = vmatpush1.bf16.xpose.msra.mxu0 0
  %563 = vmatprep.subr.bf16.mxu0 0
  %564 = vmatpush1.bf16.xpose.msra.mxu0 0
  %565 = vmatprep.subr.bf16.mxu0 0
  %566 = vmatpush1.bf16.xpose.msra.mxu0 0
  %567 = vmatprep.subr.bf16.mxu0 0
  %568 = vmatpush1.bf16.xpose.msra.mxu0 0
  %569 = vmatprep.subr.bf16.mxu0 0
  %570 = vmatpush1.bf16.xpose.msra.mxu0 %v553
  %571 = vmatprep.subr.bf16.mxu0 0
  %572 = vmatpush2.bf16.xpose.msra.mxu0 0
  %573 = vmatprep.subr.bf16.mxu0 0
  %574 = vmatpush2.bf16.xpose.msra.mxu0 0
  %575 = vmatprep.subr.bf16.mxu0 0
  %576 = vmatpush2.bf16.xpose.msra.mxu0 0
  %577 = vmatprep.subr.bf16.mxu0 0
  %578 = vmatpush2.bf16.xpose.msra.mxu0 0
  %579 = vmatprep.subr.bf16.mxu0 0
  %580 = vmatpush2.bf16.xpose.msra.mxu0 0
  %581 = vmatprep.subr.bf16.mxu0 0
  %582 = vmatpush2.bf16.xpose.msra.mxu0 0
  %583 = vmatprep.subr.bf16.mxu0 0
  %584 = vmatpush2.bf16.xpose.msra.mxu0 0
  %585 = vmatprep.subr.bf16.mxu0 0
  %586 = vmatpush2.bf16.xpose.msra.mxu0 0
  %587 = vmatprep.mubr.bf16.mxu0 0
  %588 = vmatmul.mubr.bf16.gmra.mxu0 %v550
  %v589 = vpop.f32.mrf.mxu0
  %v590 = vadd.f32 0.0, %v589
  %v591 = vpop.f32.mrf.mxu0
  %v592 = vpop.f32.mrf.mxu0
  %v593 = vpop.f32.mrf.mxu0
  %594 = vdwg.mxu0
  %v596 = vsel %vm456, %v395, 0
  %v599 = vsel %vm456, %v423, 0
  %601 = vmatprep.subr.bf16.mxu0 0
  %602 = vmatpush1.bf16.xpose.msra.mxu0 0
  %603 = vmatprep.subr.bf16.mxu0 0
  %604 = vmatpush1.bf16.xpose.msra.mxu0 0
  %605 = vmatprep.subr.bf16.mxu0 0
  %606 = vmatpush1.bf16.xpose.msra.mxu0 0
  %607 = vmatprep.subr.bf16.mxu0 0
  %608 = vmatpush1.bf16.xpose.msra.mxu0 0
  %609 = vmatprep.subr.bf16.mxu0 0
  %610 = vmatpush1.bf16.xpose.msra.mxu0 0
  %611 = vmatprep.subr.bf16.mxu0 0
  %612 = vmatpush1.bf16.xpose.msra.mxu0 0
  %613 = vmatprep.subr.bf16.mxu0 0
  %614 = vmatpush1.bf16.xpose.msra.mxu0 0
  %615 = vmatprep.subr.bf16.mxu0 0
  %616 = vmatpush1.bf16.xpose.msra.mxu0 %v599
  %617 = vmatprep.subr.bf16.mxu0 0
  %618 = vmatpush2.bf16.xpose.msra.mxu0 0
  %619 = vmatprep.subr.bf16.mxu0 0
  %620 = vmatpush2.bf16.xpose.msra.mxu0 0
  %621 = vmatprep.subr.bf16.mxu0 0
  %622 = vmatpush2.bf16.xpose.msra.mxu0 0
  %623 = vmatprep.subr.bf16.mxu0 0
  %624 = vmatpush2.bf16.xpose.msra.mxu0 0
  %625 = vmatprep.subr.bf16.mxu0 0
  %626 = vmatpush2.bf16.xpose.msra.mxu0 0
  %627 = vmatprep.subr.bf16.mxu0 0
  %628 = vmatpush2.bf16.xpose.msra.mxu0 0
  %629 = vmatprep.subr.bf16.mxu0 0
  %630 = vmatpush2.bf16.xpose.msra.mxu0 0
  %631 = vmatprep.subr.bf16.mxu0 0
  %632 = vmatpush2.bf16.xpose.msra.mxu0 0
  %633 = vmatprep.mubr.bf16.mxu0 0
  %634 = vmatmul.mubr.bf16.gmra.mxu0 %v596
  %v635 = vpop.f32.mrf.mxu0
  %v636 = vadd.f32 0.0, %v635
  %v637 = vpop.f32.mrf.mxu0
  %v638 = vpop.f32.mrf.mxu0
  %v639 = vpop.f32.mrf.mxu0
  %640 = vdwg.mxu0
  %v642 = vsel %vm456, %v396, 0
  %v645 = vsel %vm456, %v424, 0
  %647 = vmatprep.subr.bf16.mxu0 0
  %648 = vmatpush1.bf16.xpose.msra.mxu0 0
  %649 = vmatprep.subr.bf16.mxu0 0
  %650 = vmatpush1.bf16.xpose.msra.mxu0 0
  %651 = vmatprep.subr.bf16.mxu0 0
  %652 = vmatpush1.bf16.xpose.msra.mxu0 0
  %653 = vmatprep.subr.bf16.mxu0 0
  %654 = vmatpush1.bf16.xpose.msra.mxu0 0
  %655 = vmatprep.subr.bf16.mxu0 0
  %656 = vmatpush1.bf16.xpose.msra.mxu0 0
  %657 = vmatprep.subr.bf16.mxu0 0
  %658 = vmatpush1.bf16.xpose.msra.mxu0 0
  %659 = vmatprep.subr.bf16.mxu0 0
  %660 = vmatpush1.bf16.xpose.msra.mxu0 0
  %661 = vmatprep.subr.bf16.mxu0 0
  %662 = vmatpush1.bf16.xpose.msra.mxu0 %v645
  %663 = vmatprep.subr.bf16.mxu0 0
  %664 = vmatpush2.bf16.xpose.msra.mxu0 0
  %665 = vmatprep.subr.bf16.mxu0 0
  %666 = vmatpush2.bf16.xpose.msra.mxu0 0
  %667 = vmatprep.subr.bf16.mxu0 0
  %668 = vmatpush2.bf16.xpose.msra.mxu0 0
  %669 = vmatprep.subr.bf16.mxu0 0
  %670 = vmatpush2.bf16.xpose.msra.mxu0 0
  %671 = vmatprep.subr.bf16.mxu0 0
  %672 = vmatpush2.bf16.xpose.msra.mxu0 0
  %673 = vmatprep.subr.bf16.mxu0 0
  %674 = vmatpush2.bf16.xpose.msra.mxu0 0
  %675 = vmatprep.subr.bf16.mxu0 0
  %676 = vmatpush2.bf16.xpose.msra.mxu0 0
  %677 = vmatprep.subr.bf16.mxu0 0
  %678 = vmatpush2.bf16.xpose.msra.mxu0 0
  %679 = vmatprep.mubr.bf16.mxu0 0
  %680 = vmatmul.mubr.bf16.gmra.mxu0 %v642
  %v681 = vpop.f32.mrf.mxu0
  %v682 = vadd.f32 0.0, %v681
  %v683 = vpop.f32.mrf.mxu0
  %v684 = vpop.f32.mrf.mxu0
  %v685 = vpop.f32.mrf.mxu0
  %686 = vdwg.mxu0
  %v688 = vsel %vm456, %v397, 0
  %v691 = vsel %vm456, %v425, 0
  %693 = vmatprep.subr.bf16.mxu0 0
  %694 = vmatpush1.bf16.xpose.msra.mxu0 0
  %695 = vmatprep.subr.bf16.mxu0 0
  %696 = vmatpush1.bf16.xpose.msra.mxu0 0
  %697 = vmatprep.subr.bf16.mxu0 0
  %698 = vmatpush1.bf16.xpose.msra.mxu0 0
  %699 = vmatprep.subr.bf16.mxu0 0
  %700 = vmatpush1.bf16.xpose.msra.mxu0 0
  %701 = vmatprep.subr.bf16.mxu0 0
  %702 = vmatpush1.bf16.xpose.msra.mxu0 0
  %703 = vmatprep.subr.bf16.mxu0 0
  %704 = vmatpush1.bf16.xpose.msra.mxu0 0
  %705 = vmatprep.subr.bf16.mxu0 0
  %706 = vmatpush1.bf16.xpose.msra.mxu0 0
  %707 = vmatprep.subr.bf16.mxu0 0
  %708 = vmatpush1.bf16.xpose.msra.mxu0 %v691
  %709 = vmatprep.subr.bf16.mxu0 0
  %710 = vmatpush2.bf16.xpose.msra.mxu0 0
  %711 = vmatprep.subr.bf16.mxu0 0
  %712 = vmatpush2.bf16.xpose.msra.mxu0 0
  %713 = vmatprep.subr.bf16.mxu0 0
  %714 = vmatpush2.bf16.xpose.msra.mxu0 0
  %715 = vmatprep.subr.bf16.mxu0 0
  %716 = vmatpush2.bf16.xpose.msra.mxu0 0
  %717 = vmatprep.subr.bf16.mxu0 0
  %718 = vmatpush2.bf16.xpose.msra.mxu0 0
  %719 = vmatprep.subr.bf16.mxu0 0
  %720 = vmatpush2.bf16.xpose.msra.mxu0 0
  %721 = vmatprep.subr.bf16.mxu0 0
  %722 = vmatpush2.bf16.xpose.msra.mxu0 0
  %723 = vmatprep.subr.bf16.mxu0 0
  %724 = vmatpush2.bf16.xpose.msra.mxu0 0
  %725 = vmatprep.mubr.bf16.mxu0 0
  %726 = vmatmul.mubr.bf16.gmra.mxu0 %v688
  %v727 = vpop.f32.mrf.mxu0
  %v728 = vadd.f32 0.0, %v727
  %v729 = vpop.f32.mrf.mxu0
  %v730 = vpop.f32.mrf.mxu0
  %v731 = vpop.f32.mrf.mxu0
  %732 = vdwg.mxu0
  %v734 = vsel %vm456, %v398, 0
  %v737 = vsel %vm456, %v426, 0
  %739 = vmatprep.subr.bf16.mxu0 0
  %740 = vmatpush1.bf16.xpose.msra.mxu0 0
  %741 = vmatprep.subr.bf16.mxu0 0
  %742 = vmatpush1.bf16.xpose.msra.mxu0 0
  %743 = vmatprep.subr.bf16.mxu0 0
  %744 = vmatpush1.bf16.xpose.msra.mxu0 0
  %745 = vmatprep.subr.bf16.mxu0 0
  %746 = vmatpush1.bf16.xpose.msra.mxu0 0
  %747 = vmatprep.subr.bf16.mxu0 0
  %748 = vmatpush1.bf16.xpose.msra.mxu0 0
  %749 = vmatprep.subr.bf16.mxu0 0
  %750 = vmatpush1.bf16.xpose.msra.mxu0 0
  %751 = vmatprep.subr.bf16.mxu0 0
  %752 = vmatpush1.bf16.xpose.msra.mxu0 0
  %753 = vmatprep.subr.bf16.mxu0 0
  %754 = vmatpush1.bf16.xpose.msra.mxu0 %v737
  %755 = vmatprep.subr.bf16.mxu0 0
  %756 = vmatpush2.bf16.xpose.msra.mxu0 0
  %757 = vmatprep.subr.bf16.mxu0 0
  %758 = vmatpush2.bf16.xpose.msra.mxu0 0
  %759 = vmatprep.subr.bf16.mxu0 0
  %760 = vmatpush2.bf16.xpose.msra.mxu0 0
  %761 = vmatprep.subr.bf16.mxu0 0
  %762 = vmatpush2.bf16.xpose.msra.mxu0 0
  %763 = vmatprep.subr.bf16.mxu0 0
  %764 = vmatpush2.bf16.xpose.msra.mxu0 0
  %765 = vmatprep.subr.bf16.mxu0 0
  %766 = vmatpush2.bf16.xpose.msra.mxu0 0
  %767 = vmatprep.subr.bf16.mxu0 0
  %768 = vmatpush2.bf16.xpose.msra.mxu0 0
  %769 = vmatprep.subr.bf16.mxu0 0
  %770 = vmatpush2.bf16.xpose.msra.mxu0 0
  %771 = vmatprep.mubr.bf16.mxu0 0
  %772 = vmatmul.mubr.bf16.gmra.mxu0 %v734
  %v773 = vpop.f32.mrf.mxu0
  %v774 = vadd.f32 0.0, %v773
  %v775 = vpop.f32.mrf.mxu0
  %v776 = vpop.f32.mrf.mxu0
  %v777 = vpop.f32.mrf.mxu0
  %778 = vdwg.mxu0
  %v780 = vsel %vm456, %v399, 0
  %v783 = vsel %vm456, %v427, 0
  %785 = vmatprep.subr.bf16.mxu0 0
  %786 = vmatpush1.bf16.xpose.msra.mxu0 0
  %787 = vmatprep.subr.bf16.mxu0 0
  %788 = vmatpush1.bf16.xpose.msra.mxu0 0
  %789 = vmatprep.subr.bf16.mxu0 0
  %790 = vmatpush1.bf16.xpose.msra.mxu0 0
  %791 = vmatprep.subr.bf16.mxu0 0
  %792 = vmatpush1.bf16.xpose.msra.mxu0 0
  %793 = vmatprep.subr.bf16.mxu0 0
  %794 = vmatpush1.bf16.xpose.msra.mxu0 0
  %795 = vmatprep.subr.bf16.mxu0 0
  %796 = vmatpush1.bf16.xpose.msra.mxu0 0
  %797 = vmatprep.subr.bf16.mxu0 0
  %798 = vmatpush1.bf16.xpose.msra.mxu0 0
  %799 = vmatprep.subr.bf16.mxu0 0
  %800 = vmatpush1.bf16.xpose.msra.mxu0 %v783
  %801 = vmatprep.subr.bf16.mxu0 0
  %802 = vmatpush2.bf16.xpose.msra.mxu0 0
  %803 = vmatprep.subr.bf16.mxu0 0
  %804 = vmatpush2.bf16.xpose.msra.mxu0 0
  %805 = vmatprep.subr.bf16.mxu0 0
  %806 = vmatpush2.bf16.xpose.msra.mxu0 0
  %807 = vmatprep.subr.bf16.mxu0 0
  %808 = vmatpush2.bf16.xpose.msra.mxu0 0
  %809 = vmatprep.subr.bf16.mxu0 0
  %810 = vmatpush2.bf16.xpose.msra.mxu0 0
  %811 = vmatprep.subr.bf16.mxu0 0
  %812 = vmatpush2.bf16.xpose.msra.mxu0 0
  %813 = vmatprep.subr.bf16.mxu0 0
  %814 = vmatpush2.bf16.xpose.msra.mxu0 0
  %815 = vmatprep.subr.bf16.mxu0 0
  %816 = vmatpush2.bf16.xpose.msra.mxu0 0
  %817 = vmatprep.mubr.bf16.mxu0 0
  %818 = vmatmul.mubr.bf16.gmra.mxu0 %v780
  %v819 = vpop.f32.mrf.mxu0
  %v820 = vadd.f32 0.0, %v819
  %v821 = vpop.f32.mrf.mxu0
  %v822 = vpop.f32.mrf.mxu0
  %v823 = vpop.f32.mrf.mxu0
  %824 = vdwg.mxu0
  %v825 = vmul.f32 %v498, 0.35355338
  %v826 = vmul.f32 %v544, 0.35355338
  %v827 = vmul.f32 %v590, 0.35355338
  %v828 = vmul.f32 %v636, 0.35355338
  %v829 = vmul.f32 %v682, 0.35355338
  %v830 = vmul.f32 %v728, 0.35355338
  %v831 = vmul.f32 %v774, 0.35355338
  %v832 = vmul.f32 %v820, 0.35355338
  %v833 = vsel %vm456, %v825, -inf
  %834 = vmax.xlane.f32.xlu0 %v833
  %v835 = vpop.xlane.xlu0 %834
  %v836 = vsel %vm456, %v826, -inf
  %837 = vmax.xlane.f32.xlu0 %v836
  %v838 = vpop.xlane.xlu0 %837
  %v839 = vsel %vm456, %v827, -inf
  %840 = vmax.xlane.f32.xlu0 %v839
  %v841 = vpop.xlane.xlu0 %840
  %v842 = vsel %vm456, %v828, -inf
  %843 = vmax.xlane.f32.xlu0 %v842
  %v844 = vpop.xlane.xlu0 %843
  %v845 = vsel %vm456, %v829, -inf
  %846 = vmax.xlane.f32.xlu0 %v845
  %v847 = vpop.xlane.xlu0 %846
  %v848 = vsel %vm456, %v830, -inf
  %849 = vmax.xlane.f32.xlu0 %v848
  %v850 = vpop.xlane.xlu0 %849
  %v851 = vsel %vm456, %v831, -inf
  %852 = vmax.xlane.f32.xlu0 %v851
  %v853 = vpop.xlane.xlu0 %852
  %v854 = vsel %vm456, %v832, -inf
  %855 = vmax.xlane.f32.xlu0 %v854
  %v856 = vpop.xlane.xlu0 %855
  %v857 = vsub.f32 %v825, %v835
  %v858 = vsub.f32 %v826, %v838
  %v859 = vsub.f32 %v827, %v841
  %v860 = vsub.f32 %v828, %v844
  %v861 = vsub.f32 %v829, %v847
  %v862 = vsub.f32 %v830, %v850
  %v863 = vsub.f32 %v831, %v853
  %v864 = vsub.f32 %v832, %v856
  %v865 = vmul.f32 %v857, 1.442695
  %v866 = vpow.pop %v865
  %v867 = vmul.f32 %v858, 1.442695
  %v868 = vpow.pop %v867
  %v869 = vmul.f32 %v859, 1.442695
  %v870 = vpow.pop %v869
  %v871 = vmul.f32 %v860, 1.442695
  %v872 = vpow.pop %v871
  %v873 = vmul.f32 %v861, 1.442695
  %v874 = vpow.pop %v873
  %v875 = vmul.f32 %v862, 1.442695
  %v876 = vpow.pop %v875
  %v877 = vmul.f32 %v863, 1.442695
  %v878 = vpow.pop %v877
  %v879 = vmul.f32 %v864, 1.442695
  %v880 = vpow.pop %v879
  %v881 = vsel %vm456, %v866, 0.0
  %882 = vadd.xlane.f32.xlu0 %v881
  %v883 = vpop.xlane.xlu0 %882
  %v884 = vsel %vm456, %v868, 0.0
  %885 = vadd.xlane.f32.xlu0 %v884
  %v886 = vpop.xlane.xlu0 %885
  %v887 = vsel %vm456, %v870, 0.0
  %888 = vadd.xlane.f32.xlu0 %v887
  %v889 = vpop.xlane.xlu0 %888
  %v890 = vsel %vm456, %v872, 0.0
  %891 = vadd.xlane.f32.xlu0 %v890
  %v892 = vpop.xlane.xlu0 %891
  %v893 = vsel %vm456, %v874, 0.0
  %894 = vadd.xlane.f32.xlu0 %v893
  %v895 = vpop.xlane.xlu0 %894
  %v896 = vsel %vm456, %v876, 0.0
  %897 = vadd.xlane.f32.xlu0 %v896
  %v898 = vpop.xlane.xlu0 %897
  %v899 = vsel %vm456, %v878, 0.0
  %900 = vadd.xlane.f32.xlu0 %v899
  %v901 = vpop.xlane.xlu0 %900
  %v902 = vsel %vm456, %v880, 0.0
  %903 = vadd.xlane.f32.xlu0 %v902
  %v904 = vpop.xlane.xlu0 %903
  %v905 = vrcp.pop %v883
  %v906 = vrcp.pop %v886
  %v907 = vrcp.pop %v889
  %v908 = vrcp.pop %v892
  %v909 = vrcp.pop %v895
  %v910 = vrcp.pop %v898
  %v911 = vrcp.pop %v901
  %v912 = vrcp.pop %v904
  %v913 = vmul.f32 %v866, %v905
  %v914 = vmul.f32 %v868, %v906
  %v915 = vmul.f32 %v870, %v907
  %v916 = vmul.f32 %v872, %v908
  %v917 = vmul.f32 %v874, %v909
  %v918 = vmul.f32 %v876, %v910
  %v919 = vmul.f32 %v878, %v911
  %v920 = vmul.f32 %v880, %v912
  %v921 = vpack.c.bf16 %v913, %v913
  %v922 = vpack.c.bf16 %v914, %v914
  %v923 = vpack.c.bf16 %v915, %v915
  %v924 = vpack.c.bf16 %v916, %v916
  %v925 = vpack.c.bf16 %v917, %v917
  %v926 = vpack.c.bf16 %v918, %v918
  %v927 = vpack.c.bf16 %v919, %v919
  %v928 = vpack.c.bf16 %v920, %v920
  %v930 = vsel %vm456, %v921, 0
  %vm932 = vcmask 1043456
  %v934 = vsel %vm932, %v448, 0
  %936 = vmatprep.subr.bf16.mxu0 0
  %937 = vmatpush1.bf16.msra.mxu0 0
  %938 = vmatprep.subr.bf16.mxu0 0
  %939 = vmatpush1.bf16.msra.mxu0 0
  %940 = vmatprep.subr.bf16.mxu0 0
  %941 = vmatpush1.bf16.msra.mxu0 0
  %942 = vmatprep.subr.bf16.mxu0 0
  %943 = vmatpush1.bf16.msra.mxu0 0
  %944 = vmatprep.subr.bf16.mxu0 0
  %945 = vmatpush1.bf16.msra.mxu0 0
  %946 = vmatprep.subr.bf16.mxu0 0
  %947 = vmatpush1.bf16.msra.mxu0 0
  %948 = vmatprep.subr.bf16.mxu0 0
  %949 = vmatpush1.bf16.msra.mxu0 0
  %950 = vmatprep.subr.bf16.mxu0 0
  %951 = vmatpush1.bf16.msra.mxu0 %v934
  %952 = vmatprep.subr.bf16.mxu0 0
  %953 = vmatpush2.bf16.msra.mxu0 0
  %954 = vmatprep.subr.bf16.mxu0 0
  %955 = vmatpush2.bf16.msra.mxu0 0
  %956 = vmatprep.subr.bf16.mxu0 0
  %957 = vmatpush2.bf16.msra.mxu0 0
  %958 = vmatprep.subr.bf16.mxu0 0
  %959 = vmatpush2.bf16.msra.mxu0 0
  %960 = vmatprep.subr.bf16.mxu0 0
  %961 = vmatpush2.bf16.msra.mxu0 0
  %962 = vmatprep.subr.bf16.mxu0 0
  %963 = vmatpush2.bf16.msra.mxu0 0
  %964 = vmatprep.subr.bf16.mxu0 0
  %965 = vmatpush2.bf16.msra.mxu0 0
  %966 = vmatprep.subr.bf16.mxu0 0
  %967 = vmatpush2.bf16.msra.mxu0 0
  %968 = vmatprep.mubr.bf16.mxu0 0
  %969 = vmatmul.mubr.bf16.gmra.mxu0 %v930
  %v970 = vpop.f32.mrf.mxu0
  %v971 = vadd.f32 0.0, %v970
  %v972 = vpop.f32.mrf.mxu0
  %v973 = vpop.f32.mrf.mxu0
  %v974 = vpop.f32.mrf.mxu0
  %975 = vdwg.mxu0
  %v977 = vsel %vm456, %v922, 0
  %v980 = vsel %vm932, %v449, 0
  %982 = vmatprep.subr.bf16.mxu0 0
  %983 = vmatpush1.bf16.msra.mxu0 0
  %984 = vmatprep.subr.bf16.mxu0 0
  %985 = vmatpush1.bf16.msra.mxu0 0
  %986 = vmatprep.subr.bf16.mxu0 0
  %987 = vmatpush1.bf16.msra.mxu0 0
  %988 = vmatprep.subr.bf16.mxu0 0
  %989 = vmatpush1.bf16.msra.mxu0 0
  %990 = vmatprep.subr.bf16.mxu0 0
  %991 = vmatpush1.bf16.msra.mxu0 0
  %992 = vmatprep.subr.bf16.mxu0 0
  %993 = vmatpush1.bf16.msra.mxu0 0
  %994 = vmatprep.subr.bf16.mxu0 0
  %995 = vmatpush1.bf16.msra.mxu0 0
  %996 = vmatprep.subr.bf16.mxu0 0
  %997 = vmatpush1.bf16.msra.mxu0 %v980
  %998 = vmatprep.subr.bf16.mxu0 0
  %999 = vmatpush2.bf16.msra.mxu0 0
  %1000 = vmatprep.subr.bf16.mxu0 0
  %1001 = vmatpush2.bf16.msra.mxu0 0
  %1002 = vmatprep.subr.bf16.mxu0 0
  %1003 = vmatpush2.bf16.msra.mxu0 0
  %1004 = vmatprep.subr.bf16.mxu0 0
  %1005 = vmatpush2.bf16.msra.mxu0 0
  %1006 = vmatprep.subr.bf16.mxu0 0
  %1007 = vmatpush2.bf16.msra.mxu0 0
  %1008 = vmatprep.subr.bf16.mxu0 0
  %1009 = vmatpush2.bf16.msra.mxu0 0
  %1010 = vmatprep.subr.bf16.mxu0 0
  %1011 = vmatpush2.bf16.msra.mxu0 0
  %1012 = vmatprep.subr.bf16.mxu0 0
  %1013 = vmatpush2.bf16.msra.mxu0 0
  %1014 = vmatprep.mubr.bf16.mxu0 0
  %1015 = vmatmul.mubr.bf16.gmra.mxu0 %v977
  %v1016 = vpop.f32.mrf.mxu0
  %v1017 = vadd.f32 0.0, %v1016
  %v1018 = vpop.f32.mrf.mxu0
  %v1019 = vpop.f32.mrf.mxu0
  %v1020 = vpop.f32.mrf.mxu0
  %1021 = vdwg.mxu0
  %v1023 = vsel %vm456, %v923, 0
  %v1026 = vsel %vm932, %v450, 0
  %1028 = vmatprep.subr.bf16.mxu0 0
  %1029 = vmatpush1.bf16.msra.mxu0 0
  %1030 = vmatprep.subr.bf16.mxu0 0
  %1031 = vmatpush1.bf16.msra.mxu0 0
  %1032 = vmatprep.subr.bf16.mxu0 0
  %1033 = vmatpush1.bf16.msra.mxu0 0
  %1034 = vmatprep.subr.bf16.mxu0 0
  %1035 = vmatpush1.bf16.msra.mxu0 0
  %1036 = vmatprep.subr.bf16.mxu0 0
  %1037 = vmatpush1.bf16.msra.mxu0 0
  %1038 = vmatprep.subr.bf16.mxu0 0
  %1039 = vmatpush1.bf16.msra.mxu0 0
  %1040 = vmatprep.subr.bf16.mxu0 0
  %1041 = vmatpush1.bf16.msra.mxu0 0
  %1042 = vmatprep.subr.bf16.mxu0 0
  %1043 = vmatpush1.bf16.msra.mxu0 %v1026
  %1044 = vmatprep.subr.bf16.mxu0 0
  %1045 = vmatpush2.bf16.msra.mxu0 0
  %1046 = vmatprep.subr.bf16.mxu0 0
  %1047 = vmatpush2.bf16.msra.mxu0 0
  %1048 = vmatprep.subr.bf16.mxu0 0
  %1049 = vmatpush2.bf16.msra.mxu0 0
  %1050 = vmatprep.subr.bf16.mxu0 0
  %1051 = vmatpush2.bf16.msra.mxu0 0
  %1052 = vmatprep.subr.bf16.mxu0 0
  %1053 = vmatpush2.bf16.msra.mxu0 0
  %1054 = vmatprep.subr.bf16.mxu0 0
  %1055 = vmatpush2.bf16.msra.mxu0 0
  %1056 = vmatprep.subr.bf16.mxu0 0
  %1057 = vmatpush2.bf16.msra.mxu0 0
  %1058 = vmatprep.subr.bf16.mxu0 0
  %1059 = vmatpush2.bf16.msra.mxu0 0
  %1060 = vmatprep.mubr.bf16.mxu0 0
  %1061 = vmatmul.mubr.bf16.gmra.mxu0 %v1023
  %v1062 = vpop.f32.mrf.mxu0
  %v1063 = vadd.f32 0.0, %v1062
  %v1064 = vpop.f32.mrf.mxu0
  %v1065 = vpop.f32.mrf.mxu0
  %v1066 = vpop.f32.mrf.mxu0
  %1067 = vdwg.mxu0
  %v1069 = vsel %vm456, %v924, 0
  %v1072 = vsel %vm932, %v451, 0
  %1074 = vmatprep.subr.bf16.mxu0 0
  %1075 = vmatpush1.bf16.msra.mxu0 0
  %1076 = vmatprep.subr.bf16.mxu0 0
  %1077 = vmatpush1.bf16.msra.mxu0 0
  %1078 = vmatprep.subr.bf16.mxu0 0
  %1079 = vmatpush1.bf16.msra.mxu0 0
  %1080 = vmatprep.subr.bf16.mxu0 0
  %1081 = vmatpush1.bf16.msra.mxu0 0
  %1082 = vmatprep.subr.bf16.mxu0 0
  %1083 = vmatpush1.bf16.msra.mxu0 0
  %1084 = vmatprep.subr.bf16.mxu0 0
  %1085 = vmatpush1.bf16.msra.mxu0 0
  %1086 = vmatprep.subr.bf16.mxu0 0
  %1087 = vmatpush1.bf16.msra.mxu0 0
  %1088 = vmatprep.subr.bf16.mxu0 0
  %1089 = vmatpush1.bf16.msra.mxu0 %v1072
  %1090 = vmatprep.subr.bf16.mxu0 0
  %1091 = vmatpush2.bf16.msra.mxu0 0
  %1092 = vmatprep.subr.bf16.mxu0 0
  %1093 = vmatpush2.bf16.msra.mxu0 0
  %1094 = vmatprep.subr.bf16.mxu0 0
  %1095 = vmatpush2.bf16.msra.mxu0 0
  %1096 = vmatprep.subr.bf16.mxu0 0
  %1097 = vmatpush2.bf16.msra.mxu0 0
  %1098 = vmatprep.subr.bf16.mxu0 0
  %1099 = vmatpush2.bf16.msra.mxu0 0
  %1100 = vmatprep.subr.bf16.mxu0 0
  %1101 = vmatpush2.bf16.msra.mxu0 0
  %1102 = vmatprep.subr.bf16.mxu0 0
  %1103 = vmatpush2.bf16.msra.mxu0 0
  %1104 = vmatprep.subr.bf16.mxu0 0
  %1105 = vmatpush2.bf16.msra.mxu0 0
  %1106 = vmatprep.mubr.bf16.mxu0 0
  %1107 = vmatmul.mubr.bf16.gmra.mxu0 %v1069
  %v1108 = vpop.f32.mrf.mxu0
  %v1109 = vadd.f32 0.0, %v1108
  %v1110 = vpop.f32.mrf.mxu0
  %v1111 = vpop.f32.mrf.mxu0
  %v1112 = vpop.f32.mrf.mxu0
  %1113 = vdwg.mxu0
  %v1115 = vsel %vm456, %v925, 0
  %v1118 = vsel %vm932, %v452, 0
  %1120 = vmatprep.subr.bf16.mxu0 0
  %1121 = vmatpush1.bf16.msra.mxu0 0
  %1122 = vmatprep.subr.bf16.mxu0 0
  %1123 = vmatpush1.bf16.msra.mxu0 0
  %1124 = vmatprep.subr.bf16.mxu0 0
  %1125 = vmatpush1.bf16.msra.mxu0 0
  %1126 = vmatprep.subr.bf16.mxu0 0
  %1127 = vmatpush1.bf16.msra.mxu0 0
  %1128 = vmatprep.subr.bf16.mxu0 0
  %1129 = vmatpush1.bf16.msra.mxu0 0
  %1130 = vmatprep.subr.bf16.mxu0 0
  %1131 = vmatpush1.bf16.msra.mxu0 0
  %1132 = vmatprep.subr.bf16.mxu0 0
  %1133 = vmatpush1.bf16.msra.mxu0 0
  %1134 = vmatprep.subr.bf16.mxu0 0
  %1135 = vmatpush1.bf16.msra.mxu0 %v1118
  %1136 = vmatprep.subr.bf16.mxu0 0
  %1137 = vmatpush2.bf16.msra.mxu0 0
  %1138 = vmatprep.subr.bf16.mxu0 0
  %1139 = vmatpush2.bf16.msra.mxu0 0
  %1140 = vmatprep.subr.bf16.mxu0 0
  %1141 = vmatpush2.bf16.msra.mxu0 0
  %1142 = vmatprep.subr.bf16.mxu0 0
  %1143 = vmatpush2.bf16.msra.mxu0 0
  %1144 = vmatprep.subr.bf16.mxu0 0
  %1145 = vmatpush2.bf16.msra.mxu0 0
  %1146 = vmatprep.subr.bf16.mxu0 0
  %1147 = vmatpush2.bf16.msra.mxu0 0
  %1148 = vmatprep.subr.bf16.mxu0 0
  %1149 = vmatpush2.bf16.msra.mxu0 0
  %1150 = vmatprep.subr.bf16.mxu0 0
  %1151 = vmatpush2.bf16.msra.mxu0 0
  %1152 = vmatprep.mubr.bf16.mxu0 0
  %1153 = vmatmul.mubr.bf16.gmra.mxu0 %v1115
  %v1154 = vpop.f32.mrf.mxu0
  %v1155 = vadd.f32 0.0, %v1154
  %v1156 = vpop.f32.mrf.mxu0
  %v1157 = vpop.f32.mrf.mxu0
  %v1158 = vpop.f32.mrf.mxu0
  %1159 = vdwg.mxu0
  %v1161 = vsel %vm456, %v926, 0
  %v1164 = vsel %vm932, %v453, 0
  %1166 = vmatprep.subr.bf16.mxu0 0
  %1167 = vmatpush1.bf16.msra.mxu0 0
  %1168 = vmatprep.subr.bf16.mxu0 0
  %1169 = vmatpush1.bf16.msra.mxu0 0
  %1170 = vmatprep.subr.bf16.mxu0 0
  %1171 = vmatpush1.bf16.msra.mxu0 0
  %1172 = vmatprep.subr.bf16.mxu0 0
  %1173 = vmatpush1.bf16.msra.mxu0 0
  %1174 = vmatprep.subr.bf16.mxu0 0
  %1175 = vmatpush1.bf16.msra.mxu0 0
  %1176 = vmatprep.subr.bf16.mxu0 0
  %1177 = vmatpush1.bf16.msra.mxu0 0
  %1178 = vmatprep.subr.bf16.mxu0 0
  %1179 = vmatpush1.bf16.msra.mxu0 0
  %1180 = vmatprep.subr.bf16.mxu0 0
  %1181 = vmatpush1.bf16.msra.mxu0 %v1164
  %1182 = vmatprep.subr.bf16.mxu0 0
  %1183 = vmatpush2.bf16.msra.mxu0 0
  %1184 = vmatprep.subr.bf16.mxu0 0
  %1185 = vmatpush2.bf16.msra.mxu0 0
  %1186 = vmatprep.subr.bf16.mxu0 0
  %1187 = vmatpush2.bf16.msra.mxu0 0
  %1188 = vmatprep.subr.bf16.mxu0 0
  %1189 = vmatpush2.bf16.msra.mxu0 0
  %1190 = vmatprep.subr.bf16.mxu0 0
  %1191 = vmatpush2.bf16.msra.mxu0 0
  %1192 = vmatprep.subr.bf16.mxu0 0
  %1193 = vmatpush2.bf16.msra.mxu0 0
  %1194 = vmatprep.subr.bf16.mxu0 0
  %1195 = vmatpush2.bf16.msra.mxu0 0
  %1196 = vmatprep.subr.bf16.mxu0 0
  %1197 = vmatpush2.bf16.msra.mxu0 0
  %1198 = vmatprep.mubr.bf16.mxu0 0
  %1199 = vmatmul.mubr.bf16.gmra.mxu0 %v1161
  %v1200 = vpop.f32.mrf.mxu0
  %v1201 = vadd.f32 0.0, %v1200
  %v1202 = vpop.f32.mrf.mxu0
  %v1203 = vpop.f32.mrf.mxu0
  %v1204 = vpop.f32.mrf.mxu0
  %1205 = vdwg.mxu0
  %v1207 = vsel %vm456, %v927, 0
  %v1210 = vsel %vm932, %v454, 0
  %1212 = vmatprep.subr.bf16.mxu0 0
  %1213 = vmatpush1.bf16.msra.mxu0 0
  %1214 = vmatprep.subr.bf16.mxu0 0
  %1215 = vmatpush1.bf16.msra.mxu0 0
  %1216 = vmatprep.subr.bf16.mxu0 0
  %1217 = vmatpush1.bf16.msra.mxu0 0
  %1218 = vmatprep.subr.bf16.mxu0 0
  %1219 = vmatpush1.bf16.msra.mxu0 0
  %1220 = vmatprep.subr.bf16.mxu0 0
  %1221 = vmatpush1.bf16.msra.mxu0 0
  %1222 = vmatprep.subr.bf16.mxu0 0
  %1223 = vmatpush1.bf16.msra.mxu0 0
  %1224 = vmatprep.subr.bf16.mxu0 0
  %1225 = vmatpush1.bf16.msra.mxu0 0
  %1226 = vmatprep.subr.bf16.mxu0 0
  %1227 = vmatpush1.bf16.msra.mxu0 %v1210
  %1228 = vmatprep.subr.bf16.mxu0 0
  %1229 = vmatpush2.bf16.msra.mxu0 0
  %1230 = vmatprep.subr.bf16.mxu0 0
  %1231 = vmatpush2.bf16.msra.mxu0 0
  %1232 = vmatprep.subr.bf16.mxu0 0
  %1233 = vmatpush2.bf16.msra.mxu0 0
  %1234 = vmatprep.subr.bf16.mxu0 0
  %1235 = vmatpush2.bf16.msra.mxu0 0
  %1236 = vmatprep.subr.bf16.mxu0 0
  %1237 = vmatpush2.bf16.msra.mxu0 0
  %1238 = vmatprep.subr.bf16.mxu0 0
  %1239 = vmatpush2.bf16.msra.mxu0 0
  %1240 = vmatprep.subr.bf16.mxu0 0
  %1241 = vmatpush2.bf16.msra.mxu0 0
  %1242 = vmatprep.subr.bf16.mxu0 0
  %1243 = vmatpush2.bf16.msra.mxu0 0
  %1244 = vmatprep.mubr.bf16.mxu0 0
  %1245 = vmatmul.mubr.bf16.gmra.mxu0 %v1207
  %v1246 = vpop.f32.mrf.mxu0
  %v1247 = vadd.f32 0.0, %v1246
  %v1248 = vpop.f32.mrf.mxu0
  %v1249 = vpop.f32.mrf.mxu0
  %v1250 = vpop.f32.mrf.mxu0
  %1251 = vdwg.mxu0
  %v1253 = vsel %vm456, %v928, 0
  %v1256 = vsel %vm932, %v455, 0
  %1258 = vmatprep.subr.bf16.mxu0 0
  %1259 = vmatpush1.bf16.msra.mxu0 0
  %1260 = vmatprep.subr.bf16.mxu0 0
  %1261 = vmatpush1.bf16.msra.mxu0 0
  %1262 = vmatprep.subr.bf16.mxu0 0
  %1263 = vmatpush1.bf16.msra.mxu0 0
  %1264 = vmatprep.subr.bf16.mxu0 0
  %1265 = vmatpush1.bf16.msra.mxu0 0
  %1266 = vmatprep.subr.bf16.mxu0 0
  %1267 = vmatpush1.bf16.msra.mxu0 0
  %1268 = vmatprep.subr.bf16.mxu0 0
  %1269 = vmatpush1.bf16.msra.mxu0 0
  %1270 = vmatprep.subr.bf16.mxu0 0
  %1271 = vmatpush1.bf16.msra.mxu0 0
  %1272 = vmatprep.subr.bf16.mxu0 0
  %1273 = vmatpush1.bf16.msra.mxu0 %v1256
  %1274 = vmatprep.subr.bf16.mxu0 0
  %1275 = vmatpush2.bf16.msra.mxu0 0
  %1276 = vmatprep.subr.bf16.mxu0 0
  %1277 = vmatpush2.bf16.msra.mxu0 0
  %1278 = vmatprep.subr.bf16.mxu0 0
  %1279 = vmatpush2.bf16.msra.mxu0 0
  %1280 = vmatprep.subr.bf16.mxu0 0
  %1281 = vmatpush2.bf16.msra.mxu0 0
  %1282 = vmatprep.subr.bf16.mxu0 0
  %1283 = vmatpush2.bf16.msra.mxu0 0
  %1284 = vmatprep.subr.bf16.mxu0 0
  %1285 = vmatpush2.bf16.msra.mxu0 0
  %1286 = vmatprep.subr.bf16.mxu0 0
  %1287 = vmatpush2.bf16.msra.mxu0 0
  %1288 = vmatprep.subr.bf16.mxu0 0
  %1289 = vmatpush2.bf16.msra.mxu0 0
  %1290 = vmatprep.mubr.bf16.mxu0 0
  %1291 = vmatmul.mubr.bf16.gmra.mxu0 %v1253
  %v1292 = vpop.f32.mrf.mxu0
  %v1293 = vadd.f32 0.0, %v1292
  %v1294 = vpop.f32.mrf.mxu0
  %v1295 = vpop.f32.mrf.mxu0
  %v1296 = vpop.f32.mrf.mxu0
  %1297 = vdwg.mxu0
  %1300 = vrot.lane.b32.xlu0 %v1063, 8
  %v1301 = vpop.permute.xlu0 %1300
  %1302 = vrot.lane.b32.xlu0 %v1109, 8
  %v1303 = vpop.permute.xlu0 %1302
  %1308 = vrot.lane.b32.xlu0 %v1155, 16
  %v1309 = vpop.permute.xlu0 %1308
  %1310 = vrot.lane.b32.xlu0 %v1201, 16
  %v1311 = vpop.permute.xlu0 %1310
  %1316 = vrot.lane.b32.xlu0 %v1247, 24
  %v1317 = vpop.permute.xlu0 %1316
  %1318 = vrot.lane.b32.xlu0 %v1293, 24
  %v1319 = vpop.permute.xlu0 %1318
  %v1322 = vsel %vm456, %v971, %v1301
  %v1323 = vsel %vm456, %v1017, %v1303
  %vm1324 = vcmask 130048
  %v1325 = vsel %vm1324, %v1322, %v1309
  %v1326 = vsel %vm1324, %v1323, %v1311
  %vm1327 = vcmask 195584
  %v1328 = vsel %vm1327, %v1325, %v1317
  %v1329 = vsel %vm1327, %v1326, %v1319
  %v1330 = vpack.c.bf16 %v1329, %v1328
  %v1331 = vld [vmem:[%s9] sm:$0xf]
  %v1332 = vld [vmem:[%s9 + $0x4] sm:$0xf]
  %v1333 = vld [vmem:[%s9 + $0x8] sm:$0xf]
  %v1334 = vld [vmem:[%s9 + $0xc] sm:$0xf]
  %v1335 = vld [vmem:[%s10] sm:$0x1]
  %v1337 = vlaneseq
  %v1338 = vshrl.u32 %v1337, 7
  %v1339 = vsub.s32 0, %v1338
  %v1340 = vrot.slane %v1335, %v1339
  %v1346 = vunpack.c.l.b16 %v1331
  %v1347 = vunpack.c.l.b16 %v1332
  %v1348 = vunpack.c.l.b16 %v1333
  %v1349 = vunpack.c.l.b16 %v1334
  %v1350 = vpack.c.b16 %v1347, %v1346
  %v1351 = vpack.c.b16 %v1349, %v1348
  %v1355 = vsel %vm199, %v1330, 0
  %1357 = vmatprep.subr.bf16.mxu0 0
  %1358 = vmatpush1.bf16.msra.mxu0 0
  %1359 = vmatprep.subr.bf16.mxu0 0
  %1360 = vmatpush1.bf16.msra.mxu0 0
  %1361 = vmatprep.subr.bf16.mxu0 0
  %1362 = vmatpush1.bf16.msra.mxu0 0
  %1363 = vmatprep.subr.bf16.mxu0 0
  %1364 = vmatpush1.bf16.msra.mxu0 0
  %1365 = vmatprep.subr.bf16.mxu0 0
  %1366 = vmatpush1.bf16.msra.mxu0 0
  %1367 = vmatprep.subr.bf16.mxu0 0
  %1368 = vmatpush1.bf16.msra.mxu0 0
  %1369 = vmatprep.subr.bf16.mxu0 0
  %1370 = vmatpush1.bf16.msra.mxu0 %v1351
  %1371 = vmatprep.subr.bf16.mxu0 0
  %1372 = vmatpush1.bf16.msra.mxu0 %v1350
  %1373 = vmatprep.subr.bf16.mxu0 0
  %1374 = vmatpush2.bf16.msra.mxu0 0
  %1375 = vmatprep.subr.bf16.mxu0 0
  %1376 = vmatpush2.bf16.msra.mxu0 0
  %1377 = vmatprep.subr.bf16.mxu0 0
  %1378 = vmatpush2.bf16.msra.mxu0 0
  %1379 = vmatprep.subr.bf16.mxu0 0
  %1380 = vmatpush2.bf16.msra.mxu0 0
  %1381 = vmatprep.subr.bf16.mxu0 0
  %1382 = vmatpush2.bf16.msra.mxu0 0
  %1383 = vmatprep.subr.bf16.mxu0 0
  %1384 = vmatpush2.bf16.msra.mxu0 0
  %1385 = vmatprep.subr.bf16.mxu0 0
  %1386 = vmatpush2.bf16.msra.mxu0 0
  %1387 = vmatprep.subr.bf16.mxu0 0
  %1388 = vmatpush2.bf16.msra.mxu0 0
  %1389 = vmatprep.mubr.bf16.mxu0 0
  %1390 = vmatmul.mubr.bf16.gmra.mxu0 %v1355
  %v1391 = vpop.f32.mrf.mxu0
  %v1392 = vadd.f32 %v1340, %v1391
  %v1393 = vpop.f32.mrf.mxu0
  %v1394 = vpop.f32.mrf.mxu0
  %v1395 = vadd.f32 %v1340, %v1394
  %v1396 = vpop.f32.mrf.mxu0
  %1397 = vdwg.mxu0
  %v1398 = vadd.f32 %v167, %v1392
  %v1399 = vadd.f32 %v172, %v1395
  %v1400 = vld [vmem:[%s11] sm:$0x1]
  %v1401 = vld [vmem:[%s12] sm:$0x1]
  %v1402 = vsel %vm199, %v1398, 0.0
  %1403 = vadd.xlane.f32.xlu0 %v1402
  %v1404 = vpop.xlane.xlu0 %1403
  %v1405 = vsel %vm199, %v1399, 0.0
  %1406 = vadd.xlane.f32.xlu0 %v1405
  %v1407 = vpop.xlane.xlu0 %1406
  %v1408 = vrcp.pop 32.0
  %v1409 = vmul.f32 %v1404, %v1408
  %v1410 = vmul.f32 %v1407, %v1408
  %v1411 = vsub.f32 %v1398, %v1409
  %v1412 = vsub.f32 %v1399, %v1410
  %v1413 = vmul.f32 %v1411, %v1411
  %v1414 = vmul.f32 %v1412, %v1412
  %v1415 = vsel %vm199, %v1413, 0.0
  %1416 = vadd.xlane.f32.xlu0 %v1415
  %v1417 = vpop.xlane.xlu0 %1416
  %v1418 = vsel %vm199, %v1414, 0.0
  %1419 = vadd.xlane.f32.xlu0 %v1418
  %v1420 = vpop.xlane.xlu0 %1419
  %v1421 = vmul.f32 %v1417, %v1408
  %v1422 = vmul.f32 %v1420, %v1408
  %v1423 = vadd.f32 %v1421, 1e-05
  %v1424 = vadd.f32 %v1422, 1e-05
  %v1425 = vrsqrt.pop %v1423
  %v1426 = vrsqrt.pop %v1424
  %v1427 = vmul.f32 %v1411, %v1425
  %v1428 = vmul.f32 %v1412, %v1426
  %v1430 = vlaneseq
  %v1431 = vshrl.u32 %v1430, 7
  %v1432 = vsub.s32 0, %v1431
  %v1433 = vrot.slane %v1400, %v1432
  %v1435 = vmul.f32 %v1427, %v1433
  %v1436 = vmul.f32 %v1428, %v1433
  %v1438 = vlaneseq
  %v1439 = vshrl.u32 %v1438, 7
  %v1440 = vsub.s32 0, %v1439
  %v1441 = vrot.slane %v1401, %v1440
  %v1443 = vadd.f32 %v1435, %v1441
  %v1444 = vadd.f32 %v1436, %v1441
  %v1445 = vpack.c.bf16 %v1444, %v1443
  %v1446 = vld [vmem:[%s13] sm:$0xff]
  %v1447 = vld [vmem:[%s13 + $0x8] sm:$0xff]
  %v1448 = vld [vmem:[%s13 + $0x40] sm:$0xff]
  %v1449 = vld [vmem:[%s13 + $0x48] sm:$0xff]
  %v1450 = vld [vmem:[%s13 + $0x80] sm:$0xff]
  %v1451 = vld [vmem:[%s13 + $0x88] sm:$0xff]
  %v1452 = vld [vmem:[%s13 + $0xc0] sm:$0xff]
  %v1453 = vld [vmem:[%s13 + $0xc8] sm:$0xff]
  %v1454 = vld [vmem:[%s14] sm:$0xf]
  %v1456 = vlaneseq
  %v1457 = vshrl.u32 %v1456, 7
  %v1458 = vsub.s32 0, %v1457
  %v1459 = vrot.slane %v1454, %v1458
  %v1460 = vlaneseq
  %v1461 = vshrl.u32 %v1460, 7
  %v1462 = vsub.s32 1, %v1461
  %v1463 = vrot.slane %v1454, %v1462
  %v1464 = vlaneseq
  %v1465 = vshrl.u32 %v1464, 7
  %v1466 = vsub.s32 2, %v1465
  %v1467 = vrot.slane %v1454, %v1466
  %v1468 = vlaneseq
  %v1469 = vshrl.u32 %v1468, 7
  %v1470 = vsub.s32 3, %v1469
  %v1471 = vrot.slane %v1454, %v1470
  %v1484 = vunpack.c.l.b16 %v1446
  %v1485 = vunpack.c.h.b16 %v1446
  %v1486 = vunpack.c.l.b16 %v1447
  %v1487 = vunpack.c.h.b16 %v1447
  %v1488 = vunpack.c.l.b16 %v1448
  %v1489 = vunpack.c.h.b16 %v1448
  %v1490 = vunpack.c.l.b16 %v1449
  %v1491 = vunpack.c.h.b16 %v1449
  %v1492 = vunpack.c.l.b16 %v1450
  %v1493 = vunpack.c.h.b16 %v1450
  %v1494 = vunpack.c.l.b16 %v1451
  %v1495 = vunpack.c.h.b16 %v1451
  %v1496 = vunpack.c.l.b16 %v1452
  %v1497 = vunpack.c.h.b16 %v1452
  %v1498 = vunpack.c.l.b16 %v1453
  %v1499 = vunpack.c.h.b16 %v1453
  %v1500 = vpack.c.b16 %v1488, %v1484
  %v1501 = vpack.c.b16 %v1489, %v1485
  %v1502 = vpack.c.b16 %v1490, %v1486
  %v1503 = vpack.c.b16 %v1491, %v1487
  %v1504 = vpack.c.b16 %v1496, %v1492
  %v1505 = vpack.c.b16 %v1497, %v1493
  %v1506 = vpack.c.b16 %v1498, %v1494
  %v1507 = vpack.c.b16 %v1499, %v1495
  %v1517 = vsel %vm199, %v1445, 0
  %1519 = vmatprep.subr.bf16.mxu0 0
  %1520 = vmatpush1.bf16.msra.mxu0 0
  %1521 = vmatprep.subr.bf16.mxu0 0
  %1522 = vmatpush1.bf16.msra.mxu0 0
  %1523 = vmatprep.subr.bf16.mxu0 0
  %1524 = vmatpush1.bf16.msra.mxu0 0
  %1525 = vmatprep.subr.bf16.mxu0 0
  %1526 = vmatpush1.bf16.msra.mxu0 0
  %1527 = vmatprep.subr.bf16.mxu0 0
  %1528 = vmatpush1.bf16.msra.mxu0 0
  %1529 = vmatprep.subr.bf16.mxu0 0
  %1530 = vmatpush1.bf16.msra.mxu0 0
  %1531 = vmatprep.subr.bf16.mxu0 %v1505
  %1532 = vmatpush1.bf16.msra.mxu0 %v1504
  %1533 = vmatprep.subr.bf16.mxu0 %v1501
  %1534 = vmatpush1.bf16.msra.mxu0 %v1500
  %1535 = vmatprep.subr.bf16.mxu0 0
  %1536 = vmatpush2.bf16.msra.mxu0 0
  %1537 = vmatprep.subr.bf16.mxu0 0
  %1538 = vmatpush2.bf16.msra.mxu0 0
  %1539 = vmatprep.subr.bf16.mxu0 0
  %1540 = vmatpush2.bf16.msra.mxu0 0
  %1541 = vmatprep.subr.bf16.mxu0 0
  %1542 = vmatpush2.bf16.msra.mxu0 0
  %1543 = vmatprep.subr.bf16.mxu0 0
  %1544 = vmatpush2.bf16.msra.mxu0 0
  %1545 = vmatprep.subr.bf16.mxu0 0
  %1546 = vmatpush2.bf16.msra.mxu0 0
  %1547 = vmatprep.subr.bf16.mxu0 0
  %1548 = vmatpush2.bf16.msra.mxu0 0
  %1549 = vmatprep.subr.bf16.mxu0 0
  %1550 = vmatpush2.bf16.msra.mxu0 0
  %1551 = vmatprep.mubr.bf16.mxu0 0
  %1552 = vmatmul.mubr.bf16.gmra.mxu0 %v1517
  %v1553 = vpop.f32.mrf.mxu0
  %v1554 = vadd.f32 %v1459, %v1553
  %v1555 = vpop.f32.mrf.mxu0
  %v1556 = vadd.f32 %v1463, %v1555
  %v1557 = vpop.f32.mrf.mxu0
  %v1558 = vadd.f32 %v1459, %v1557
  %v1559 = vpop.f32.mrf.mxu0
  %v1560 = vadd.f32 %v1463, %v1559
  %1561 = vdwg.mxu0
  %1562 = vmatprep.subr.bf16.mxu0 0
  %1563 = vmatpush1.bf16.msra.mxu0 0
  %1564 = vmatprep.subr.bf16.mxu0 0
  %1565 = vmatpush1.bf16.msra.mxu0 0
  %1566 = vmatprep.subr.bf16.mxu0 0
  %1567 = vmatpush1.bf16.msra.mxu0 0
  %1568 = vmatprep.subr.bf16.mxu0 0
  %1569 = vmatpush1.bf16.msra.mxu0 0
  %1570 = vmatprep.subr.bf16.mxu0 0
  %1571 = vmatpush1.bf16.msra.mxu0 0
  %1572 = vmatprep.subr.bf16.mxu0 0
  %1573 = vmatpush1.bf16.msra.mxu0 0
  %1574 = vmatprep.subr.bf16.mxu0 %v1507
  %1575 = vmatpush1.bf16.msra.mxu0 %v1506
  %1576 = vmatprep.subr.bf16.mxu0 %v1503
  %1577 = vmatpush1.bf16.msra.mxu0 %v1502
  %1578 = vmatprep.subr.bf16.mxu0 0
  %1579 = vmatpush2.bf16.msra.mxu0 0
  %1580 = vmatprep.subr.bf16.mxu0 0
  %1581 = vmatpush2.bf16.msra.mxu0 0
  %1582 = vmatprep.subr.bf16.mxu0 0
  %1583 = vmatpush2.bf16.msra.mxu0 0
  %1584 = vmatprep.subr.bf16.mxu0 0
  %1585 = vmatpush2.bf16.msra.mxu0 0
  %1586 = vmatprep.subr.bf16.mxu0 0
  %1587 = vmatpush2.bf16.msra.mxu0 0
  %1588 = vmatprep.subr.bf16.mxu0 0
  %1589 = vmatpush2.bf16.msra.mxu0 0
  %1590 = vmatprep.subr.bf16.mxu0 0
  %1591 = vmatpush2.bf16.msra.mxu0 0
  %1592 = vmatprep.subr.bf16.mxu0 0
  %1593 = vmatpush2.bf16.msra.mxu0 0
  %1594 = vmatprep.mubr.bf16.mxu0 0
  %1595 = vmatmul.mubr.bf16.gmra.mxu0 %v1517
  %v1596 = vpop.f32.mrf.mxu0
  %v1597 = vadd.f32 %v1467, %v1596
  %v1598 = vpop.f32.mrf.mxu0
  %v1599 = vadd.f32 %v1471, %v1598
  %v1600 = vpop.f32.mrf.mxu0
  %v1601 = vadd.f32 %v1467, %v1600
  %v1602 = vpop.f32.mrf.mxu0
  %v1603 = vadd.f32 %v1471, %v1602
  %1604 = vdwg.mxu0
  %v1605 = vmax.f32 %v1554, 0.0
  %v1606 = vmax.f32 %v1556, 0.0
  %v1607 = vmax.f32 %v1597, 0.0
  %v1608 = vmax.f32 %v1599, 0.0
  %v1609 = vmax.f32 %v1558, 0.0
  %v1610 = vmax.f32 %v1560, 0.0
  %v1611 = vmax.f32 %v1601, 0.0
  %v1612 = vmax.f32 %v1603, 0.0
  %v1613 = vpack.c.bf16 %v1609, %v1605
  %v1614 = vpack.c.bf16 %v1610, %v1606
  %v1615 = vpack.c.bf16 %v1611, %v1607
  %v1616 = vpack.c.bf16 %v1612, %v1608
  %v1617 = vld [vmem:[%s15] sm:$0xf]
  %v1618 = vld [vmem:[%s15 + $0x4] sm:$0xf]
  %v1619 = vld [vmem:[%s15 + $0x8] sm:$0xf]
  %v1620 = vld [vmem:[%s15 + $0xc] sm:$0xf]
  %v1621 = vld [vmem:[%s15 + $0x10] sm:$0xf]
  %v1622 = vld [vmem:[%s15 + $0x14] sm:$0xf]
  %v1623 = vld [vmem:[%s15 + $0x18] sm:$0xf]
  %v1624 = vld [vmem:[%s15 + $0x1c] sm:$0xf]
  %v1625 = vld [vmem:[%s15 + $0x20] sm:$0xf]
  %v1626 = vld [vmem:[%s15 + $0x24] sm:$0xf]
  %v1627 = vld [vmem:[%s15 + $0x28] sm:$0xf]
  %v1628 = vld [vmem:[%s15 + $0x2c] sm:$0xf]
  %v1629 = vld [vmem:[%s15 + $0x30] sm:$0xf]
  %v1630 = vld [vmem:[%s15 + $0x34] sm:$0xf]
  %v1631 = vld [vmem:[%s15 + $0x38] sm:$0xf]
  %v1632 = vld [vmem:[%s15 + $0x3c] sm:$0xf]
  %v1633 = vld [vmem:[%s15 + $0x40] sm:$0xf]
  %v1634 = vld [vmem:[%s15 + $0x44] sm:$0xf]
  %v1635 = vld [vmem:[%s15 + $0x48] sm:$0xf]
  %v1636 = vld [vmem:[%s15 + $0x4c] sm:$0xf]
  %v1637 = vld [vmem:[%s15 + $0x50] sm:$0xf]
  %v1638 = vld [vmem:[%s15 + $0x54] sm:$0xf]
  %v1639 = vld [vmem:[%s15 + $0x58] sm:$0xf]
  %v1640 = vld [vmem:[%s15 + $0x5c] sm:$0xf]
  %v1641 = vld [vmem:[%s15 + $0x60] sm:$0xf]
  %v1642 = vld [vmem:[%s15 + $0x64] sm:$0xf]
  %v1643 = vld [vmem:[%s15 + $0x68] sm:$0xf]
  %v1644 = vld [vmem:[%s15 + $0x6c] sm:$0xf]
  %v1645 = vld [vmem:[%s15 + $0x70] sm:$0xf]
  %v1646 = vld [vmem:[%s15 + $0x74] sm:$0xf]
  %v1647 = vld [vmem:[%s15 + $0x78] sm:$0xf]
  %v1648 = vld [vmem:[%s15 + $0x7c] sm:$0xf]
  %v1649 = vld [vmem:[%s15 + $0x80] sm:$0xf]
  %v1650 = vld [vmem:[%s15 + $0x84] sm:$0xf]
  %v1651 = vld [vmem:[%s15 + $0x88] sm:$0xf]
  %v1652 = vld [vmem:[%s15 + $0x8c] sm:$0xf]
  %v1653 = vld [vmem:[%s15 + $0x90] sm:$0xf]
  %v1654 = vld [vmem:[%s15 + $0x94] sm:$0xf]
  %v1655 = vld [vmem:[%s15 + $0x98] sm:$0xf]
  %v1656 = vld [vmem:[%s15 + $0x9c] sm:$0xf]
  %v1657 = vld [vmem:[%s15 + $0xa0] sm:$0xf]
  %v1658 = vld [vmem:[%s15 + $0xa4] sm:$0xf]
  %v1659 = vld [vmem:[%s15 + $0xa8] sm:$0xf]
  %v1660 = vld [vmem:[%s15 + $0xac] sm:$0xf]
  %v1661 = vld [vmem:[%s15 + $0xb0] sm:$0xf]
  %v1662 = vld [vmem:[%s15 + $0xb4] sm:$0xf]
  %v1663 = vld [vmem:[%s15 + $0xb8] sm:$0xf]
  %v1664 = vld [vmem:[%s15 + $0xbc] sm:$0xf]
  %v1665 = vld [vmem:[%s15 + $0xc0] sm:$0xf]
  %v1666 = vld [vmem:[%s15 + $0xc4] sm:$0xf]
  %v1667 = vld [vmem:[%s15 + $0xc8] sm:$0xf]
  %v1668 = vld [vmem:[%s15 + $0xcc] sm:$0xf]
  %v1669 = vld [vmem:[%s15 + $0xd0] sm:$0xf]
  %v1670 = vld [vmem:[%s15 + $0xd4] sm:$0xf]
  %v1671 = vld [vmem:[%s15 + $0xd8] sm:$0xf]
  %v1672 = vld [vmem:[%s15 + $0xdc] sm:$0xf]
  %v1673 = vld [vmem:[%s15 + $0xe0] sm:$0xf]
  %v1674 = vld [vmem:[%s15 + $0xe4] sm:$0xf]
  %v1675 = vld [vmem:[%s15 + $0xe8] sm:$0xf]
  %v1676 = vld [vmem:[%s15 + $0xec] sm:$0xf]
  %v1677 = vld [vmem:[%s15 + $0xf0] sm:$0xf]
  %v1678 = vld [vmem:[%s15 + $0xf4] sm:$0xf]
  %v1679 = vld [vmem:[%s15 + $0xf8] sm:$0xf]
  %v1680 = vld [vmem:[%s15 + $0xfc] sm:$0xf]
  %v1681 = vld [vmem:[%s13 + $0x10] sm:$0xff]
  %v1682 = vld [vmem:[%s13 + $0x18] sm:$0xff]
  %v1683 = vld [vmem:[%s13 + $0x50] sm:$0xff]
  %v1684 = vld [vmem:[%s13 + $0x58] sm:$0xff]
  %v1685 = vld [vmem:[%s13 + $0x90] sm:$0xff]
  %v1686 = vld [vmem:[%s13 + $0x98] sm:$0xff]
  %v1687 = vld [vmem:[%s13 + $0xd0] sm:$0xff]
  %v1688 = vld [vmem:[%s13 + $0xd8] sm:$0xff]
  %v1689 = vld [vmem:[%s14 + $0x4] sm:$0xf]
  %v1691 = vlaneseq
  %v1692 = vshrl.u32 %v1691, 7
  %v1693 = vsub.s32 0, %v1692
  %v1694 = vrot.slane %v1689, %v1693
  %v1695 = vlaneseq
  %v1696 = vshrl.u32 %v1695, 7
  %v1697 = vsub.s32 1, %v1696
  %v1698 = vrot.slane %v1689, %v1697
  %v1699 = vlaneseq
  %v1700 = vshrl.u32 %v1699, 7
  %v1701 = vsub.s32 2, %v1700
  %v1702 = vrot.slane %v1689, %v1701
  %v1703 = vlaneseq
  %v1704 = vshrl.u32 %v1703, 7
  %v1705 = vsub.s32 3, %v1704
  %v1706 = vrot.slane %v1689, %v1705
  %v1719 = vunpack.c.l.b16 %v1681
  %v1720 = vunpack.c.h.b16 %v1681
  %v1721 = vunpack.c.l.b16 %v1682
  %v1722 = vunpack.c.h.b16 %v1682
  %v1723 = vunpack.c.l.b16 %v1683
  %v1724 = vunpack.c.h.b16 %v1683
  %v1725 = vunpack.c.l.b16 %v1684
  %v1726 = vunpack.c.h.b16 %v1684
  %v1727 = vunpack.c.l.b16 %v1685
  %v1728 = vunpack.c.h.b16 %v1685
  %v1729 = vunpack.c.l.b16 %v1686
  %v1730 = vunpack.c.h.b16 %v1686
  %v1731 = vunpack.c.l.b16 %v1687
  %v1732 = vunpack.c.h.b16 %v1687
  %v1733 = vunpack.c.l.b16 %v1688
  %v1734 = vunpack.c.h.b16 %v1688
  %v1735 = vpack.c.b16 %v1723, %v1719
  %v1736 = vpack.c.b16 %v1724, %v1720
  %v1737 = vpack.c.b16 %v1725, %v1721
  %v1738 = vpack.c.b16 %v1726, %v1722
  %v1739 = vpack.c.b16 %v1731, %v1727
  %v1740 = vpack.c.b16 %v1732, %v1728
  %v1741 = vpack.c.b16 %v1733, %v1729
  %v1742 = vpack.c.b16 %v1734, %v1730
  %1751 = vmatprep.subr.bf16.mxu0 0
  %1752 = vmatpush1.bf16.msra.mxu0 0
  %1753 = vmatprep.subr.bf16.mxu0 0
  %1754 = vmatpush1.bf16.msra.mxu0 0
  %1755 = vmatprep.subr.bf16.mxu0 0
  %1756 = vmatpush1.bf16.msra.mxu0 0
  %1757 = vmatprep.subr.bf16.mxu0 0
  %1758 = vmatpush1.bf16.msra.mxu0 0
  %1759 = vmatprep.subr.bf16.mxu0 0
  %1760 = vmatpush1.bf16.msra.mxu0 0
  %1761 = vmatprep.subr.bf16.mxu0 0
  %1762 = vmatpush1.bf16.msra.mxu0 0
  %1763 = vmatprep.subr.bf16.mxu0 %v1740
  %1764 = vmatpush1.bf16.msra.mxu0 %v1739
  %1765 = vmatprep.subr.bf16.mxu0 %v1736
  %1766 = vmatpush1.bf16.msra.mxu0 %v1735
  %1767 = vmatprep.subr.bf16.mxu0 0
  %1768 = vmatpush2.bf16.msra.mxu0 0
  %1769 = vmatprep.subr.bf16.mxu0 0
  %1770 = vmatpush2.bf16.msra.mxu0 0
  %1771 = vmatprep.subr.bf16.mxu0 0
  %1772 = vmatpush2.bf16.msra.mxu0 0
  %1773 = vmatprep.subr.bf16.mxu0 0
  %1774 = vmatpush2.bf16.msra.mxu0 0
  %1775 = vmatprep.subr.bf16.mxu0 0
  %1776 = vmatpush2.bf16.msra.mxu0 0
  %1777 = vmatprep.subr.bf16.mxu0 0
  %1778 = vmatpush2.bf16.msra.mxu0 0
  %1779 = vmatprep.subr.bf16.mxu0 0
  %1780 = vmatpush2.bf16.msra.mxu0 0
  %1781 = vmatprep.subr.bf16.mxu0 0
  %1782 = vmatpush2.bf16.msra.mxu0 0
  %1783 = vmatprep.mubr.bf16.mxu0 0
  %1784 = vmatmul.mubr.bf16.gmra.mxu0 %v1517
  %v1785 = vpop.f32.mrf.mxu0
  %v1786 = vadd.f32 %v1694, %v1785
  %v1787 = vpop.f32.mrf.mxu0
  %v1788 = vadd.f32 %v1698, %v1787
  %v1789 = vpop.f32.mrf.mxu0
  %v1790 = vadd.f32 %v1694, %v1789
  %v1791 = vpop.f32.mrf.mxu0
  %v1792 = vadd.f32 %v1698, %v1791
  %1793 = vdwg.mxu0
  %1794 = vmatprep.subr.bf16.mxu0 0
  %1795 = vmatpush1.bf16.msra.mxu0 0
  %1796 = vmatprep.subr.bf16.mxu0 0
  %1797 = vmatpush1.bf16.msra.mxu0 0
  %1798 = vmatprep.subr.bf16.mxu0 0
  %1799 = vmatpush1.bf16.msra.mxu0 0
  %1800 = vmatprep.subr.bf16.mxu0 0
  %1801 = vmatpush1.bf16.msra.mxu0 0
  %1802 = vmatprep.subr.bf16.mxu0 0
  %1803 = vmatpush1.bf16.msra.mxu0 0
  %1804 = vmatprep.subr.bf16.mxu0 0
  %1805 = vmatpush1.bf16.msra.mxu0 0
  %1806 = vmatprep.subr.bf16.mxu0 %v1742
  %1807 = vmatpush1.bf16.msra.mxu0 %v1741
  %1808 = vmatprep.subr.bf16.mxu0 %v1738
  %1809 = vmatpush1.bf16.msra.mxu0 %v1737
  %1810 = vmatprep.subr.bf16.mxu0 0
  %1811 = vmatpush2.bf16.msra.mxu0 0
  %1812 = vmatprep.subr.bf16.mxu0 0
  %1813 = vmatpush2.bf16.msra.mxu0 0
  %1814 = vmatprep.subr.bf16.mxu0 0
  %1815 = vmatpush2.bf16.msra.mxu0 0
  %1816 = vmatprep.subr.bf16.mxu0 0
  %1817 = vmatpush2.bf16.msra.mxu0 0
  %1818 = vmatprep.subr.bf16.mxu0 0
  %1819 = vmatpush2.bf16.msra.mxu0 0
  %1820 = vmatprep.subr.bf16.mxu0 0
  %1821 = vmatpush2.bf16.msra.mxu0 0
  %1822 = vmatprep.subr.bf16.mxu0 0
  %1823 = vmatpush2.bf16.msra.mxu0 0
  %1824 = vmatprep.subr.bf16.mxu0 0
  %1825 = vmatpush2.bf16.msra.mxu0 0
  %1826 = vmatprep.mubr.bf16.mxu0 0
  %1827 = vmatmul.mubr.bf16.gmra.mxu0 %v1517
  %v1828 = vpop.f32.mrf.mxu0
  %v1829 = vadd.f32 %v1702, %v1828
  %v1830 = vpop.f32.mrf.mxu0
  %v1831 = vadd.f32 %v1706, %v1830
  %v1832 = vpop.f32.mrf.mxu0
  %v1833 = vadd.f32 %v1702, %v1832
  %v1834 = vpop.f32.mrf.mxu0
  %v1835 = vadd.f32 %v1706, %v1834
  %1836 = vdwg.mxu0
  %v1837 = vmax.f32 %v1786, 0.0
  %v1838 = vmax.f32 %v1788, 0.0
  %v1839 = vmax.f32 %v1829, 0.0
  %v1840 = vmax.f32 %v1831, 0.0
  %v1841 = vmax.f32 %v1790, 0.0
  %v1842 = vmax.f32 %v1792, 0.0
  %v1843 = vmax.f32 %v1833, 0.0
  %v1844 = vmax.f32 %v1835, 0.0
  %v1845 = vpack.c.bf16 %v1841, %v1837
  %v1846 = vpack.c.bf16 %v1842, %v1838
  %v1847 = vpack.c.bf16 %v1843, %v1839
  %v1848 = vpack.c.bf16 %v1844, %v1840
  %v1849 = vld [vmem:[%s15 + $0x100] sm:$0xf]
  %v1850 = vld [vmem:[%s15 + $0x104] sm:$0xf]
  %v1851 = vld [vmem:[%s15 + $0x108] sm:$0xf]
  %v1852 = vld [vmem:[%s15 + $0x10c] sm:$0xf]
  %v1853 = vld [vmem:[%s15 + $0x110] sm:$0xf]
  %v1854 = vld [vmem:[%s15 + $0x114] sm:$0xf]
  %v1855 = vld [vmem:[%s15 + $0x118] sm:$0xf]
  %v1856 = vld [vmem:[%s15 + $0x11c] sm:$0xf]
  %v1857 = vld [vmem:[%s15 + $0x120] sm:$0xf]
  %v1858 = vld [vmem:[%s15 + $0x124] sm:$0xf]
  %v1859 = vld [vmem:[%s15 + $0x128] sm:$0xf]
  %v1860 = vld [vmem:[%s15 + $0x12c] sm:$0xf]
  %v1861 = vld [vmem:[%s15 + $0x130] sm:$0xf]
  %v1862 = vld [vmem:[%s15 + $0x134] sm:$0xf]
  %v1863 = vld [vmem:[%s15 + $0x138] sm:$0xf]
  %v1864 = vld [vmem:[%s15 + $0x13c] sm:$0xf]
  %v1865 = vld [vmem:[%s15 + $0x140] sm:$0xf]
  %v1866 = vld [vmem:[%s15 + $0x144] sm:$0xf]
  %v1867 = vld [vmem:[%s15 + $0x148] sm:$0xf]
  %v1868 = vld [vmem:[%s15 + $0x14c] sm:$0xf]
  %v1869 = vld [vmem:[%s15 + $0x150] sm:$0xf]
  %v1870 = vld [vmem:[%s15 + $0x154] sm:$0xf]
  %v1871 = vld [vmem:[%s15 + $0x158] sm:$0xf]
  %v1872 = vld [vmem:[%s15 + $0x15c] sm:$0xf]
  %v1873 = vld [vmem:[%s15 + $0x160] sm:$0xf]
  %v1874 = vld [vmem:[%s15 + $0x164] sm:$0xf]
  %v1875 = vld [vmem:[%s15 + $0x168] sm:$0xf]
  %v1876 = vld [vmem:[%s15 + $0x16c] sm:$0xf]
  %v1877 = vld [vmem:[%s15 + $0x170] sm:$0xf]
  %v1878 = vld [vmem:[%s15 + $0x174] sm:$0xf]
  %v1879 = vld [vmem:[%s15 + $0x178] sm:$0xf]
  %v1880 = vld [vmem:[%s15 + $0x17c] sm:$0xf]
  %v1881 = vld [vmem:[%s15 + $0x180] sm:$0xf]
  %v1882 = vld [vmem:[%s15 + $0x184] sm:$0xf]
  %v1883 = vld [vmem:[%s15 + $0x188] sm:$0xf]
  %v1884 = vld [vmem:[%s15 + $0x18c] sm:$0xf]
  %v1885 = vld [vmem:[%s15 + $0x190] sm:$0xf]
  %v1886 = vld [vmem:[%s15 + $0x194] sm:$0xf]
  %v1887 = vld [vmem:[%s15 + $0x198] sm:$0xf]
  %v1888 = vld [vmem:[%s15 + $0x19c] sm:$0xf]
  %v1889 = vld [vmem:[%s15 + $0x1a0] sm:$0xf]
  %v1890 = vld [vmem:[%s15 + $0x1a4] sm:$0xf]
  %v1891 = vld [vmem:[%s15 + $0x1a8] sm:$0xf]
  %v1892 = vld [vmem:[%s15 + $0x1ac] sm:$0xf]
  %v1893 = vld [vmem:[%s15 + $0x1b0] sm:$0xf]
  %v1894 = vld [vmem:[%s15 + $0x1b4] sm:$0xf]
  %v1895 = vld [vmem:[%s15 + $0x1b8] sm:$0xf]
  %v1896 = vld [vmem:[%s15 + $0x1bc] sm:$0xf]
  %v1897 = vld [vmem:[%s15 + $0x1c0] sm:$0xf]
  %v1898 = vld [vmem:[%s15 + $0x1c4] sm:$0xf]
  %v1899 = vld [vmem:[%s15 + $0x1c8] sm:$0xf]
  %v1900 = vld [vmem:[%s15 + $0x1cc] sm:$0xf]
  %v1901 = vld [vmem:[%s15 + $0x1d0] sm:$0xf]
  %v1902 = vld [vmem:[%s15 + $0x1d4] sm:$0xf]
  %v1903 = vld [vmem:[%s15 + $0x1d8] sm:$0xf]
  %v1904 = vld [vmem:[%s15 + $0x1dc] sm:$0xf]
  %v1905 = vld [vmem:[%s15 + $0x1e0] sm:$0xf]
  %v1906 = vld [vmem:[%s15 + $0x1e4] sm:$0xf]
  %v1907 = vld [vmem:[%s15 + $0x1e8] sm:$0xf]
  %v1908 = vld [vmem:[%s15 + $0x1ec] sm:$0xf]
  %v1909 = vld [vmem:[%s15 + $0x1f0] sm:$0xf]
  %v1910 = vld [vmem:[%s15 + $0x1f4] sm:$0xf]
  %v1911 = vld [vmem:[%s15 + $0x1f8] sm:$0xf]
  %v1912 = vld [vmem:[%s15 + $0x1fc] sm:$0xf]
  %v1977 = vunpack.c.l.b16 %v1849
  %v1978 = vunpack.c.l.b16 %v1850
  %v1979 = vunpack.c.l.b16 %v1851
  %v1980 = vunpack.c.l.b16 %v1852
  %v1981 = vunpack.c.l.b16 %v1853
  %v1982 = vunpack.c.l.b16 %v1854
  %v1983 = vunpack.c.l.b16 %v1855
  %v1984 = vunpack.c.l.b16 %v1856
  %v1985 = vunpack.c.l.b16 %v1857
  %v1986 = vunpack.c.l.b16 %v1858
  %v1987 = vunpack.c.l.b16 %v1859
  %v1988 = vunpack.c.l.b16 %v1860
  %v1989 = vunpack.c.l.b16 %v1861
  %v1990 = vunpack.c.l.b16 %v1862
  %v1991 = vunpack.c.l.b16 %v1863
  %v1992 = vunpack.c.l.b16 %v1864
  %v1993 = vunpack.c.l.b16 %v1865
  %v1994 = vunpack.c.l.b16 %v1866
  %v1995 = vunpack.c.l.b16 %v1867
  %v1996 = vunpack.c.l.b16 %v1868
  %v1997 = vunpack.c.l.b16 %v1869
  %v1998 = vunpack.c.l.b16 %v1870
  %v1999 = vunpack.c.l.b16 %v1871
  %v2000 = vunpack.c.l.b16 %v1872
  %v2001 = vunpack.c.l.b16 %v1873
  %v2002 = vunpack.c.l.b16 %v1874
  %v2003 = vunpack.c.l.b16 %v1875
  %v2004 = vunpack.c.l.b16 %v1876
  %v2005 = vunpack.c.l.b16 %v1877
  %v2006 = vunpack.c.l.b16 %v1878
  %v2007 = vunpack.c.l.b16 %v1879
  %v2008 = vunpack.c.l.b16 %v1880
  %v2009 = vunpack.c.l.b16 %v1881
  %v2010 = vunpack.c.l.b16 %v1882
  %v2011 = vunpack.c.l.b16 %v1883
  %v2012 = vunpack.c.l.b16 %v1884
  %v2013 = vunpack.c.l.b16 %v1885
  %v2014 = vunpack.c.l.b16 %v1886
  %v2015 = vunpack.c.l.b16 %v1887
  %v2016 = vunpack.c.l.b16 %v1888
  %v2017 = vunpack.c.l.b16 %v1889
  %v2018 = vunpack.c.l.b16 %v1890
  %v2019 = vunpack.c.l.b16 %v1891
  %v2020 = vunpack.c.l.b16 %v1892
  %v2021 = vunpack.c.l.b16 %v1893
  %v2022 = vunpack.c.l.b16 %v1894
  %v2023 = vunpack.c.l.b16 %v1895
  %v2024 = vunpack.c.l.b16 %v1896
  %v2025 = vunpack.c.l.b16 %v1897
  %v2026 = vunpack.c.l.b16 %v1898
  %v2027 = vunpack.c.l.b16 %v1899
  %v2028 = vunpack.c.l.b16 %v1900
  %v2029 = vunpack.c.l.b16 %v1901
  %v2030 = vunpack.c.l.b16 %v1902
  %v2031 = vunpack.c.l.b16 %v1903
  %v2032 = vunpack.c.l.b16 %v1904
  %v2033 = vunpack.c.l.b16 %v1905
  %v2034 = vunpack.c.l.b16 %v1906
  %v2035 = vunpack.c.l.b16 %v1907
  %v2036 = vunpack.c.l.b16 %v1908
  %v2037 = vunpack.c.l.b16 %v1909
  %v2038 = vunpack.c.l.b16 %v1910
  %v2039 = vunpack.c.l.b16 %v1911
  %v2040 = vunpack.c.l.b16 %v1912
  %v2041 = vpack.c.b16 %v1978, %v1977
  %v2042 = vpack.c.b16 %v1980, %v1979
  %v2043 = vpack.c.b16 %v1982, %v1981
  %v2044 = vpack.c.b16 %v1984, %v1983
  %v2045 = vpack.c.b16 %v1986, %v1985
  %v2046 = vpack.c.b16 %v1988, %v1987
  %v2047 = vpack.c.b16 %v1990, %v1989
  %v2048 = vpack.c.b16 %v1992, %v1991
  %v2049 = vpack.c.b16 %v1994, %v1993
  %v2050 = vpack.c.b16 %v1996, %v1995
  %v2051 = vpack.c.b16 %v1998, %v1997
  %v2052 = vpack.c.b16 %v2000, %v1999
  %v2053 = vpack.c.b16 %v2002, %v2001
  %v2054 = vpack.c.b16 %v2004, %v2003
  %v2055 = vpack.c.b16 %v2006, %v2005
  %v2056 = vpack.c.b16 %v2008, %v2007
  %v2057 = vpack.c.b16 %v2010, %v2009
  %v2058 = vpack.c.b16 %v2012, %v2011
  %v2059 = vpack.c.b16 %v2014, %v2013
  %v2060 = vpack.c.b16 %v2016, %v2015
  %v2061 = vpack.c.b16 %v2018, %v2017
  %v2062 = vpack.c.b16 %v2020, %v2019
  %v2063 = vpack.c.b16 %v2022, %v2021
  %v2064 = vpack.c.b16 %v2024, %v2023
  %v2065 = vpack.c.b16 %v2026, %v2025
  %v2066 = vpack.c.b16 %v2028, %v2027
  %v2067 = vpack.c.b16 %v2030, %v2029
  %v2068 = vpack.c.b16 %v2032, %v2031
  %v2069 = vpack.c.b16 %v2034, %v2033
  %v2070 = vpack.c.b16 %v2036, %v2035
  %v2071 = vpack.c.b16 %v2038, %v2037
  %v2072 = vpack.c.b16 %v2040, %v2039
  %2105 = vmatprep.subr.bf16.mxu0 0
  %2106 = vmatpush1.bf16.msra.mxu0 %v2048
  %2107 = vmatprep.subr.bf16.mxu0 0
  %2108 = vmatpush1.bf16.msra.mxu0 %v2047
  %2109 = vmatprep.subr.bf16.mxu0 0
  %2110 = vmatpush1.bf16.msra.mxu0 %v2046
  %2111 = vmatprep.subr.bf16.mxu0 0
  %2112 = vmatpush1.bf16.msra.mxu0 %v2045
  %2113 = vmatprep.subr.bf16.mxu0 0
  %2114 = vmatpush1.bf16.msra.mxu0 %v2044
  %2115 = vmatprep.subr.bf16.mxu0 0
  %2116 = vmatpush1.bf16.msra.mxu0 %v2043
  %2117 = vmatprep.subr.bf16.mxu0 0
  %2118 = vmatpush1.bf16.msra.mxu0 %v2042
  %2119 = vmatprep.subr.bf16.mxu0 0
  %2120 = vmatpush1.bf16.msra.mxu0 %v2041
  %2121 = vmatprep.subr.bf16.mxu0 0
  %2122 = vmatpush2.bf16.msra.mxu0 %v2056
  %2123 = vmatprep.subr.bf16.mxu0 0
  %2124 = vmatpush2.bf16.msra.mxu0 %v2055
  %2125 = vmatprep.subr.bf16.mxu0 0
  %2126 = vmatpush2.bf16.msra.mxu0 %v2054
  %2127 = vmatprep.subr.bf16.mxu0 0
  %2128 = vmatpush2.bf16.msra.mxu0 %v2053
  %2129 = vmatprep.subr.bf16.mxu0 0
  %2130 = vmatpush2.bf16.msra.mxu0 %v2052
  %2131 = vmatprep.subr.bf16.mxu0 0
  %2132 = vmatpush2.bf16.msra.mxu0 %v2051
  %2133 = vmatprep.subr.bf16.mxu0 0
  %2134 = vmatpush2.bf16.msra.mxu0 %v2050
  %2135 = vmatprep.subr.bf16.mxu0 0
  %2136 = vmatpush2.bf16.msra.mxu0 %v2049
  %2137 = vmatprep.mubr.bf16.mxu0 %v1846
  %2138 = vmatmul.mubr.bf16.gmra.mxu0 %v1845
  %v2139 = vpop.f32.mrf.mxu0
  %v2140 = vadd.f32 0.0, %v2139
  %v2141 = vpop.f32.mrf.mxu0
  %v2142 = vpop.f32.mrf.mxu0
  %v2143 = vadd.f32 0.0, %v2142
  %v2144 = vpop.f32.mrf.mxu0
  %2145 = vdwg.mxu0
  %2146 = vmatprep.subr.bf16.mxu0 0
  %2147 = vmatpush1.bf16.msra.mxu0 %v2064
  %2148 = vmatprep.subr.bf16.mxu0 0
  %2149 = vmatpush1.bf16.msra.mxu0 %v2063
  %2150 = vmatprep.subr.bf16.mxu0 0
  %2151 = vmatpush1.bf16.msra.mxu0 %v2062
  %2152 = vmatprep.subr.bf16.mxu0 0
  %2153 = vmatpush1.bf16.msra.mxu0 %v2061
  %2154 = vmatprep.subr.bf16.mxu0 0
  %2155 = vmatpush1.bf16.msra.mxu0 %v2060
  %2156 = vmatprep.subr.bf16.mxu0 0
  %2157 = vmatpush1.bf16.msra.mxu0 %v2059
  %2158 = vmatprep.subr.bf16.mxu0 0
  %2159 = vmatpush1.bf16.msra.mxu0 %v2058
  %2160 = vmatprep.subr.bf16.mxu0 0
  %2161 = vmatpush1.bf16.msra.mxu0 %v2057
  %2162 = vmatprep.subr.bf16.mxu0 0
  %2163 = vmatpush2.bf16.msra.mxu0 %v2072
  %2164 = vmatprep.subr.bf16.mxu0 0
  %2165 = vmatpush2.bf16.msra.mxu0 %v2071
  %2166 = vmatprep.subr.bf16.mxu0 0
  %2167 = vmatpush2.bf16.msra.mxu0 %v2070
  %2168 = vmatprep.subr.bf16.mxu0 0
  %2169 = vmatpush2.bf16.msra.mxu0 %v2069
  %2170 = vmatprep.subr.bf16.mxu0 0
  %2171 = vmatpush2.bf16.msra.mxu0 %v2068
  %2172 = vmatprep.subr.bf16.mxu0 0
  %2173 = vmatpush2.bf16.msra.mxu0 %v2067
  %2174 = vmatprep.subr.bf16.mxu0 0
  %2175 = vmatpush2.bf16.msra.mxu0 %v2066
  %2176 = vmatprep.subr.bf16.mxu0 0
  %2177 = vmatpush2.bf16.msra.mxu0 %v2065
  %2178 = vmatprep.mubr.bf16.mxu0 %v1848
  %2179 = vmatmul.mubr.bf16.gmra.mxu0 %v1847
  %v2180 = vpop.f32.mrf.mxu0
  %v2181 = vadd.f32 %v2140, %v2180
  %v2182 = vpop.f32.mrf.mxu0
  %v2183 = vpop.f32.mrf.mxu0
  %v2184 = vadd.f32 %v2143, %v2183
  %v2185 = vpop.f32.mrf.mxu0
  %2186 = vdwg.mxu0
  %v2251 = vunpack.c.l.b16 %v1617
  %v2252 = vunpack.c.l.b16 %v1618
  %v2253 = vunpack.c.l.b16 %v1619
  %v2254 = vunpack.c.l.b16 %v1620
  %v2255 = vunpack.c.l.b16 %v1621
  %v2256 = vunpack.c.l.b16 %v1622
  %v2257 = vunpack.c.l.b16 %v1623
  %v2258 = vunpack.c.l.b16 %v1624
  %v2259 = vunpack.c.l.b16 %v1625
  %v2260 = vunpack.c.l.b16 %v1626
  %v2261 = vunpack.c.l.b16 %v1627
  %v2262 = vunpack.c.l.b16 %v1628
  %v2263 = vunpack.c.l.b16 %v1629
  %v2264 = vunpack.c.l.b16 %v1630
  %v2265 = vunpack.c.l.b16 %v1631
  %v2266 = vunpack.c.l.b16 %v1632
  %v2267 = vunpack.c.l.b16 %v1633
  %v2268 = vunpack.c.l.b16 %v1634
  %v2269 = vunpack.c.l.b16 %v1635
  %v2270 = vunpack.c.l.b16 %v1636
  %v2271 = vunpack.c.l.b16 %v1637
  %v2272 = vunpack.c.l.b16 %v1638
  %v2273 = vunpack.c.l.b16 %v1639
  %v2274 = vunpack.c.l.b16 %v1640
  %v2275 = vunpack.c.l.b16 %v1641
  %v2276 = vunpack.c.l.b16 %v1642
  %v2277 = vunpack.c.l.b16 %v1643
  %v2278 = vunpack.c.l.b16 %v1644
  %v2279 = vunpack.c.l.b16 %v1645
  %v2280 = vunpack.c.l.b16 %v1646
  %v2281 = vunpack.c.l.b16 %v1647
  %v2282 = vunpack.c.l.b16 %v1648
  %v2283 = vunpack.c.l.b16 %v1649
  %v2284 = vunpack.c.l.b16 %v1650
  %v2285 = vunpack.c.l.b16 %v1651
  %v2286 = vunpack.c.l.b16 %v1652
  %v2287 = vunpack.c.l.b16 %v1653
  %v2288 = vunpack.c.l.b16 %v1654
  %v2289 = vunpack.c.l.b16 %v1655
  %v2290 = vunpack.c.l.b16 %v1656
  %v2291 = vunpack.c.l.b16 %v1657
  %v2292 = vunpack.c.l.b16 %v1658
  %v2293 = vunpack.c.l.b16 %v1659
  %v2294 = vunpack.c.l.b16 %v1660
  %v2295 = vunpack.c.l.b16 %v1661
  %v2296 = vunpack.c.l.b16 %v1662
  %v2297 = vunpack.c.l.b16 %v1663
  %v2298 = vunpack.c.l.b16 %v1664
  %v2299 = vunpack.c.l.b16 %v1665
  %v2300 = vunpack.c.l.b16 %v1666
  %v2301 = vunpack.c.l.b16 %v1667
  %v2302 = vunpack.c.l.b16 %v1668
  %v2303 = vunpack.c.l.b16 %v1669
  %v2304 = vunpack.c.l.b16 %v1670
  %v2305 = vunpack.c.l.b16 %v1671
  %v2306 = vunpack.c.l.b16 %v1672
  %v2307 = vunpack.c.l.b16 %v1673
  %v2308 = vunpack.c.l.b16 %v1674
  %v2309 = vunpack.c.l.b16 %v1675
  %v2310 = vunpack.c.l.b16 %v1676
  %v2311 = vunpack.c.l.b16 %v1677
  %v2312 = vunpack.c.l.b16 %v1678
  %v2313 = vunpack.c.l.b16 %v1679
  %v2314 = vunpack.c.l.b16 %v1680
  %v2315 = vpack.c.b16 %v2252, %v2251
  %v2316 = vpack.c.b16 %v2254, %v2253
  %v2317 = vpack.c.b16 %v2256, %v2255
  %v2318 = vpack.c.b16 %v2258, %v2257
  %v2319 = vpack.c.b16 %v2260, %v2259
  %v2320 = vpack.c.b16 %v2262, %v2261
  %v2321 = vpack.c.b16 %v2264, %v2263
  %v2322 = vpack.c.b16 %v2266, %v2265
  %v2323 = vpack.c.b16 %v2268, %v2267
  %v2324 = vpack.c.b16 %v2270, %v2269
  %v2325 = vpack.c.b16 %v2272, %v2271
  %v2326 = vpack.c.b16 %v2274, %v2273
  %v2327 = vpack.c.b16 %v2276, %v2275
  %v2328 = vpack.c.b16 %v2278, %v2277
  %v2329 = vpack.c.b16 %v2280, %v2279
  %v2330 = vpack.c.b16 %v2282, %v2281
  %v2331 = vpack.c.b16 %v2284, %v2283
  %v2332 = vpack.c.b16 %v2286, %v2285
  %v2333 = vpack.c.b16 %v2288, %v2287
  %v2334 = vpack.c.b16 %v2290, %v2289
  %v2335 = vpack.c.b16 %v2292, %v2291
  %v2336 = vpack.c.b16 %v2294, %v2293
  %v2337 = vpack.c.b16 %v2296, %v2295
  %v2338 = vpack.c.b16 %v2298, %v2297
  %v2339 = vpack.c.b16 %v2300, %v2299
  %v2340 = vpack.c.b16 %v2302, %v2301
  %v2341 = vpack.c.b16 %v2304, %v2303
  %v2342 = vpack.c.b16 %v2306, %v2305
  %v2343 = vpack.c.b16 %v2308, %v2307
  %v2344 = vpack.c.b16 %v2310, %v2309
  %v2345 = vpack.c.b16 %v2312, %v2311
  %v2346 = vpack.c.b16 %v2314, %v2313
  %2379 = vmatprep.subr.bf16.mxu0 0
  %2380 = vmatpush1.bf16.msra.mxu0 %v2322
  %2381 = vmatprep.subr.bf16.mxu0 0
  %2382 = vmatpush1.bf16.msra.mxu0 %v2321
  %2383 = vmatprep.subr.bf16.mxu0 0
  %2384 = vmatpush1.bf16.msra.mxu0 %v2320
  %2385 = vmatprep.subr.bf16.mxu0 0
  %2386 = vmatpush1.bf16.msra.mxu0 %v2319
  %2387 = vmatprep.subr.bf16.mxu0 0
  %2388 = vmatpush1.bf16.msra.mxu0 %v2318
  %2389 = vmatprep.subr.bf16.mxu0 0
  %2390 = vmatpush1.bf16.msra.mxu0 %v2317
  %2391 = vmatprep.subr.bf16.mxu0 0
  %2392 = vmatpush1.bf16.msra.mxu0 %v2316
  %2393 = vmatprep.subr.bf16.mxu0 0
  %2394 = vmatpush1.bf16.msra.mxu0 %v2315
  %2395 = vmatprep.subr.bf16.mxu0 0
  %2396 = vmatpush2.bf16.msra.mxu0 %v2330
  %2397 = vmatprep.subr.bf16.mxu0 0
  %2398 = vmatpush2.bf16.msra.mxu0 %v2329
  %2399 = vmatprep.subr.bf16.mxu0 0
  %2400 = vmatpush2.bf16.msra.mxu0 %v2328
  %2401 = vmatprep.subr.bf16.mxu0 0
  %2402 = vmatpush2.bf16.msra.mxu0 %v2327
  %2403 = vmatprep.subr.bf16.mxu0 0
  %2404 = vmatpush2.bf16.msra.mxu0 %v2326
  %2405 = vmatprep.subr.bf16.mxu0 0
  %2406 = vmatpush2.bf16.msra.mxu0 %v2325
  %2407 = vmatprep.subr.bf16.mxu0 0
  %2408 = vmatpush2.bf16.msra.mxu0 %v2324
  %2409 = vmatprep.subr.bf16.mxu0 0
  %2410 = vmatpush2.bf16.msra.mxu0 %v2323
  %2411 = vmatprep.mubr.bf16.mxu0 %v1614
  %2412 = vmatmul.mubr.bf16.gmra.mxu0 %v1613
  %v2413 = vpop.f32.mrf.mxu0
  %v2414 = vadd.f32 %v2181, %v2413
  %v2415 = vpop.f32.mrf.mxu0
  %v2416 = vpop.f32.mrf.mxu0
  %v2417 = vadd.f32 %v2184, %v2416
  %v2418 = vpop.f32.mrf.mxu0
  %2419 = vdwg.mxu0
  %2420 = vmatprep.subr.bf16.mxu0 0
  %2421 = vmatpush1.bf16.msra.mxu0 %v2338
  %2422 = vmatprep.subr.bf16.mxu0 0
  %2423 = vmatpush1.bf16.msra.mxu0 %v2337
  %2424 = vmatprep.subr.bf16.mxu0 0
  %2425 = vmatpush1.bf16.msra.mxu0 %v2336
  %2426 = vmatprep.subr.bf16.mxu0 0
  %2427 = vmatpush1.bf16.msra.mxu0 %v2335
  %2428 = vmatprep.subr.bf16.mxu0 0
  %2429 = vmatpush1.bf16.msra.mxu0 %v2334
  %2430 = vmatprep.subr.bf16.mxu0 0
  %2431 = vmatpush1.bf16.msra.mxu0 %v2333
  %2432 = vmatprep.subr.bf16.mxu0 0
  %2433 = vmatpush1.bf16.msra.mxu0 %v2332
  %2434 = vmatprep.subr.bf16.mxu0 0
  %2435 = vmatpush1.bf16.msra.mxu0 %v2331
  %2436 = vmatprep.subr.bf16.mxu0 0
  %2437 = vmatpush2.bf16.msra.mxu0 %v2346
  %2438 = vmatprep.subr.bf16.mxu0 0
  %2439 = vmatpush2.bf16.msra.mxu0 %v2345
  %2440 = vmatprep.subr.bf16.mxu0 0
  %2441 = vmatpush2.bf16.msra.mxu0 %v2344
  %2442 = vmatprep.subr.bf16.mxu0 0
  %2443 = vmatpush2.bf16.msra.mxu0 %v2343
  %2444 = vmatprep.subr.bf16.mxu0 0
  %2445 = vmatpush2.bf16.msra.mxu0 %v2342
  %2446 = vmatprep.subr.bf16.mxu0 0
  %2447 = vmatpush2.bf16.msra.mxu0 %v2341
  %2448 = vmatprep.subr.bf16.mxu0 0
  %2449 = vmatpush2.bf16.msra.mxu0 %v2340
  %2450 = vmatprep.subr.bf16.mxu0 0
  %2451 = vmatpush2.bf16.msra.mxu0 %v2339
  %2452 = vmatprep.mubr.bf16.mxu0 %v1616
  %2453 = vmatmul.mubr.bf16.gmra.mxu0 %v1615
  %v2454 = vpop.f32.mrf.mxu0
  %v2455 = vadd.f32 %v2414, %v2454
  %v2456 = vpop.f32.mrf.mxu0
  %v2457 = vpop.f32.mrf.mxu0
  %v2458 = vadd.f32 %v2417, %v2457
  %v2459 = vpop.f32.mrf.mxu0
  %2460 = vdwg.mxu0
  %v2461 = vld [vmem:[%s13 + $0x20] sm:$0xff]
  %v2462 = vld [vmem:[%s13 + $0x28] sm:$0xff]
  %v2463 = vld [vmem:[%s13 + $0x60] sm:$0xff]
  %v2464 = vld [vmem:[%s13 + $0x68] sm:$0xff]
  %v2465 = vld [vmem:[%s13 + $0xa0] sm:$0xff]
  %v2466 = vld [vmem:[%s13 + $0xa8] sm:$0xff]
  %v2467 = vld [vmem:[%s13 + $0xe0] sm:$0xff]
  %v2468 = vld [vmem:[%s13 + $0xe8] sm:$0xff]
  %v2469 = vld [vmem:[%s14 + $0x8] sm:$0xf]
  %v2471 = vlaneseq
  %v2472 = vshrl.u32 %v2471, 7
  %v2473 = vsub.s32 0, %v2472
  %v2474 = vrot.slane %v2469, %v2473
  %v2475 = vlaneseq
  %v2476 = vshrl.u32 %v2475, 7
  %v2477 = vsub.s32 1, %v2476
  %v2478 = vrot.slane %v2469, %v2477
  %v2479 = vlaneseq
  %v2480 = vshrl.u32 %v2479, 7
  %v2481 = vsub.s32 2, %v2480
  %v2482 = vrot.slane %v2469, %v2481
  %v2483 = vlaneseq
  %v2484 = vshrl.u32 %v2483, 7
  %v2485 = vsub.s32 3, %v2484
  %v2486 = vrot.slane %v2469, %v2485
  %v2499 = vunpack.c.l.b16 %v2461
  %v2500 = vunpack.c.h.b16 %v2461
  %v2501 = vunpack.c.l.b16 %v2462
  %v2502 = vunpack.c.h.b16 %v2462
  %v2503 = vunpack.c.l.b16 %v2463
  %v2504 = vunpack.c.h.b16 %v2463
  %v2505 = vunpack.c.l.b16 %v2464
  %v2506 = vunpack.c.h.b16 %v2464
  %v2507 = vunpack.c.l.b16 %v2465
  %v2508 = vunpack.c.h.b16 %v2465
  %v2509 = vunpack.c.l.b16 %v2466
  %v2510 = vunpack.c.h.b16 %v2466
  %v2511 = vunpack.c.l.b16 %v2467
  %v2512 = vunpack.c.h.b16 %v2467
  %v2513 = vunpack.c.l.b16 %v2468
  %v2514 = vunpack.c.h.b16 %v2468
  %v2515 = vpack.c.b16 %v2503, %v2499
  %v2516 = vpack.c.b16 %v2504, %v2500
  %v2517 = vpack.c.b16 %v2505, %v2501
  %v2518 = vpack.c.b16 %v2506, %v2502
  %v2519 = vpack.c.b16 %v2511, %v2507
  %v2520 = vpack.c.b16 %v2512, %v2508
  %v2521 = vpack.c.b16 %v2513, %v2509
  %v2522 = vpack.c.b16 %v2514, %v2510
  %2531 = vmatprep.subr.bf16.mxu0 0
  %2532 = vmatpush1.bf16.msra.mxu0 0
  %2533 = vmatprep.subr.bf16.mxu0 0
  %2534 = vmatpush1.bf16.msra.mxu0 0
  %2535 = vmatprep.subr.bf16.mxu0 0
  %2536 = vmatpush1.bf16.msra.mxu0 0
  %2537 = vmatprep.subr.bf16.mxu0 0
  %2538 = vmatpush1.bf16.msra.mxu0 0
  %2539 = vmatprep.subr.bf16.mxu0 0
  %2540 = vmatpush1.bf16.msra.mxu0 0
  %2541 = vmatprep.subr.bf16.mxu0 0
  %2542 = vmatpush1.bf16.msra.mxu0 0
  %2543 = vmatprep.subr.bf16.mxu0 %v2520
  %2544 = vmatpush1.bf16.msra.mxu0 %v2519
  %2545 = vmatprep.subr.bf16.mxu0 %v2516
  %2546 = vmatpush1.bf16.msra.mxu0 %v2515
  %2547 = vmatprep.subr.bf16.mxu0 0
  %2548 = vmatpush2.bf16.msra.mxu0 0
  %2549 = vmatprep.subr.bf16.mxu0 0
  %2550 = vmatpush2.bf16.msra.mxu0 0
  %2551 = vmatprep.subr.bf16.mxu0 0
  %2552 = vmatpush2.bf16.msra.mxu0 0
  %2553 = vmatprep.subr.bf16.mxu0 0
  %2554 = vmatpush2.bf16.msra.mxu0 0
  %2555 = vmatprep.subr.bf16.mxu0 0
  %2556 = vmatpush2.bf16.msra.mxu0 0
  %2557 = vmatprep.subr.bf16.mxu0 0
  %2558 = vmatpush2.bf16.msra.mxu0 0
  %2559 = vmatprep.subr.bf16.mxu0 0
  %2560 = vmatpush2.bf16.msra.mxu0 0
  %2561 = vmatprep.subr.bf16.mxu0 0
  %2562 = vmatpush2.bf16.msra.mxu0 0
  %2563 = vmatprep.mubr.bf16.mxu0 0
  %2564 = vmatmul.mubr.bf16.gmra.mxu0 %v1517
  %v2565 = vpop.f32.mrf.mxu0
  %v2566 = vadd.f32 %v2474, %v2565
  %v2567 = vpop.f32.mrf.mxu0
  %v2568 = vadd.f32 %v2478, %v2567
  %v2569 = vpop.f32.mrf.mxu0
  %v2570 = vadd.f32 %v2474, %v2569
  %v2571 = vpop.f32.mrf.mxu0
  %v2572 = vadd.f32 %v2478, %v2571
  %2573 = vdwg.mxu0
  %2574 = vmatprep.subr.bf16.mxu0 0
  %2575 = vmatpush1.bf16.msra.mxu0 0
  %2576 = vmatprep.subr.bf16.mxu0 0
  %2577 = vmatpush1.bf16.msra.mxu0 0
  %2578 = vmatprep.subr.bf16.mxu0 0
  %2579 = vmatpush1.bf16.msra.mxu0 0
  %2580 = vmatprep.subr.bf16.mxu0 0
  %2581 = vmatpush1.bf16.msra.mxu0 0
  %2582 = vmatprep.subr.bf16.mxu0 0
  %2583 = vmatpush1.bf16.msra.mxu0 0
  %2584 = vmatprep.subr.bf16.mxu0 0
  %2585 = vmatpush1.bf16.msra.mxu0 0
  %2586 = vmatprep.subr.bf16.mxu0 %v2522
  %2587 = vmatpush1.bf16.msra.mxu0 %v2521
  %2588 = vmatprep.subr.bf16.mxu0 %v2518
  %2589 = vmatpush1.bf16.msra.mxu0 %v2517
  %2590 = vmatprep.subr.bf16.mxu0 0
  %2591 = vmatpush2.bf16.msra.mxu0 0
  %2592 = vmatprep.subr.bf16.mxu0 0
  %2593 = vmatpush2.bf16.msra.mxu0 0
  %2594 = vmatprep.subr.bf16.mxu0 0
  %2595 = vmatpush2.bf16.msra.mxu0 0
  %2596 = vmatprep.subr.bf16.mxu0 0
  %2597 = vmatpush2.bf16.msra.mxu0 0
  %2598 = vmatprep.subr.bf16.mxu0 0
  %2599 = vmatpush2.bf16.msra.mxu0 0
  %2600 = vmatprep.subr.bf16.mxu0 0
  %2601 = vmatpush2.bf16.msra.mxu0 0
  %2602 = vmatprep.subr.bf16.mxu0 0
  %2603 = vmatpush2.bf16.msra.mxu0 0
  %2604 = vmatprep.subr.bf16.mxu0 0
  %2605 = vmatpush2.bf16.msra.mxu0 0
  %2606 = vmatprep.mubr.bf16.mxu0 0
  %2607 = vmatmul.mubr.bf16.gmra.mxu0 %v1517
  %v2608 = vpop.f32.mrf.mxu0
  %v2609 = vadd.f32 %v2482, %v2608
  %v2610 = vpop.f32.mrf.mxu0
  %v2611 = vadd.f32 %v2486, %v2610
  %v2612 = vpop.f32.mrf.mxu0
  %v2613 = vadd.f32 %v2482, %v2612
  %v2614 = vpop.f32.mrf.mxu0
  %v2615 = vadd.f32 %v2486, %v2614
  %2616 = vdwg.mxu0
  %v2617 = vmax.f32 %v2566, 0.0
  %v2618 = vmax.f32 %v2568, 0.0
  %v2619 = vmax.f32 %v2609, 0.0
  %v2620 = vmax.f32 %v2611, 0.0
  %v2621 = vmax.f32 %v2570, 0.0
  %v2622 = vmax.f32 %v2572, 0.0
  %v2623 = vmax.f32 %v2613, 0.0
  %v2624 = vmax.f32 %v2615, 0.0
  %v2625 = vpack.c.bf16 %v2621, %v2617
  %v2626 = vpack.c.bf16 %v2622, %v2618
  %v2627 = vpack.c.bf16 %v2623, %v2619
  %v2628 = vpack.c.bf16 %v2624, %v2620
  %v2629 = vld [vmem:[%s15 + $0x200] sm:$0xf]
  %v2630 = vld [vmem:[%s15 + $0x204] sm:$0xf]
  %v2631 = vld [vmem:[%s15 + $0x208] sm:$0xf]
  %v2632 = vld [vmem:[%s15 + $0x20c] sm:$0xf]
  %v2633 = vld [vmem:[%s15 + $0x210] sm:$0xf]
  %v2634 = vld [vmem:[%s15 + $0x214] sm:$0xf]
  %v2635 = vld [vmem:[%s15 + $0x218] sm:$0xf]
  %v2636 = vld [vmem:[%s15 + $0x21c] sm:$0xf]
  %v2637 = vld [vmem:[%s15 + $0x220] sm:$0xf]
  %v2638 = vld [vmem:[%s15 + $0x224] sm:$0xf]
  %v2639 = vld [vmem:[%s15 + $0x228] sm:$0xf]
  %v2640 = vld [vmem:[%s15 + $0x22c] sm:$0xf]
  %v2641 = vld [vmem:[%s15 + $0x230] sm:$0xf]
  %v2642 = vld [vmem:[%s15 + $0x234] sm:$0xf]
  %v2643 = vld [vmem:[%s15 + $0x238] sm:$0xf]
  %v2644 = vld [vmem:[%s15 + $0x23c] sm:$0xf]
  %v2645 = vld [vmem:[%s15 + $0x240] sm:$0xf]
  %v2646 = vld [vmem:[%s15 + $0x244] sm:$0xf]
  %v2647 = vld [vmem:[%s15 + $0x248] sm:$0xf]
  %v2648 = vld [vmem:[%s15 + $0x24c] sm:$0xf]
  %v2649 = vld [vmem:[%s15 + $0x250] sm:$0xf]
  %v2650 = vld [vmem:[%s15 + $0x254] sm:$0xf]
  %v2651 = vld [vmem:[%s15 + $0x258] sm:$0xf]
  %v2652 = vld [vmem:[%s15 + $0x25c] sm:$0xf]
  %v2653 = vld [vmem:[%s15 + $0x260] sm:$0xf]
  %v2654 = vld [vmem:[%s15 + $0x264] sm:$0xf]
  %v2655 = vld [vmem:[%s15 + $0x268] sm:$0xf]
  %v2656 = vld [vmem:[%s15 + $0x26c] sm:$0xf]
  %v2657 = vld [vmem:[%s15 + $0x270] sm:$0xf]
  %v2658 = vld [vmem:[%s15 + $0x274] sm:$0xf]
  %v2659 = vld [vmem:[%s15 + $0x278] sm:$0xf]
  %v2660 = vld [vmem:[%s15 + $0x27c] sm:$0xf]
  %v2661 = vld [vmem:[%s15 + $0x280] sm:$0xf]
  %v2662 = vld [vmem:[%s15 + $0x284] sm:$0xf]
  %v2663 = vld [vmem:[%s15 + $0x288] sm:$0xf]
  %v2664 = vld [vmem:[%s15 + $0x28c] sm:$0xf]
  %v2665 = vld [vmem:[%s15 + $0x290] sm:$0xf]
  %v2666 = vld [vmem:[%s15 + $0x294] sm:$0xf]
  %v2667 = vld [vmem:[%s15 + $0x298] sm:$0xf]
  %v2668 = vld [vmem:[%s15 + $0x29c] sm:$0xf]
  %v2669 = vld [vmem:[%s15 + $0x2a0] sm:$0xf]
  %v2670 = vld [vmem:[%s15 + $0x2a4] sm:$0xf]
  %v2671 = vld [vmem:[%s15 + $0x2a8] sm:$0xf]
  %v2672 = vld [vmem:[%s15 + $0x2ac] sm:$0xf]
  %v2673 = vld [vmem:[%s15 + $0x2b0] sm:$0xf]
  %v2674 = vld [vmem:[%s15 + $0x2b4] sm:$0xf]
  %v2675 = vld [vmem:[%s15 + $0x2b8] sm:$0xf]
  %v2676 = vld [vmem:[%s15 + $0x2bc] sm:$0xf]
  %v2677 = vld [vmem:[%s15 + $0x2c0] sm:$0xf]
  %v2678 = vld [vmem:[%s15 + $0x2c4] sm:$0xf]
  %v2679 = vld [vmem:[%s15 + $0x2c8] sm:$0xf]
  %v2680 = vld [vmem:[%s15 + $0x2cc] sm:$0xf]
  %v2681 = vld [vmem:[%s15 + $0x2d0] sm:$0xf]
  %v2682 = vld [vmem:[%s15 + $0x2d4] sm:$0xf]
  %v2683 = vld [vmem:[%s15 + $0x2d8] sm:$0xf]
  %v2684 = vld [vmem:[%s15 + $0x2dc] sm:$0xf]
  %v2685 = vld [vmem:[%s15 + $0x2e0] sm:$0xf]
  %v2686 = vld [vmem:[%s15 + $0x2e4] sm:$0xf]
  %v2687 = vld [vmem:[%s15 + $0x2e8] sm:$0xf]
  %v2688 = vld [vmem:[%s15 + $0x2ec] sm:$0xf]
  %v2689 = vld [vmem:[%s15 + $0x2f0] sm:$0xf]
  %v2690 = vld [vmem:[%s15 + $0x2f4] sm:$0xf]
  %v2691 = vld [vmem:[%s15 + $0x2f8] sm:$0xf]
  %v2692 = vld [vmem:[%s15 + $0x2fc] sm:$0xf]
  %v2757 = vunpack.c.l.b16 %v2629
  %v2758 = vunpack.c.l.b16 %v2630
  %v2759 = vunpack.c.l.b16 %v2631
  %v2760 = vunpack.c.l.b16 %v2632
  %v2761 = vunpack.c.l.b16 %v2633
  %v2762 = vunpack.c.l.b16 %v2634
  %v2763 = vunpack.c.l.b16 %v2635
  %v2764 = vunpack.c.l.b16 %v2636
  %v2765 = vunpack.c.l.b16 %v2637
  %v2766 = vunpack.c.l.b16 %v2638
  %v2767 = vunpack.c.l.b16 %v2639
  %v2768 = vunpack.c.l.b16 %v2640
  %v2769 = vunpack.c.l.b16 %v2641
  %v2770 = vunpack.c.l.b16 %v2642
  %v2771 = vunpack.c.l.b16 %v2643
  %v2772 = vunpack.c.l.b16 %v2644
  %v2773 = vunpack.c.l.b16 %v2645
  %v2774 = vunpack.c.l.b16 %v2646
  %v2775 = vunpack.c.l.b16 %v2647
  %v2776 = vunpack.c.l.b16 %v2648
  %v2777 = vunpack.c.l.b16 %v2649
  %v2778 = vunpack.c.l.b16 %v2650
  %v2779 = vunpack.c.l.b16 %v2651
  %v2780 = vunpack.c.l.b16 %v2652
  %v2781 = vunpack.c.l.b16 %v2653
  %v2782 = vunpack.c.l.b16 %v2654
  %v2783 = vunpack.c.l.b16 %v2655
  %v2784 = vunpack.c.l.b16 %v2656
  %v2785 = vunpack.c.l.b16 %v2657
  %v2786 = vunpack.c.l.b16 %v2658
  %v2787 = vunpack.c.l.b16 %v2659
  %v2788 = vunpack.c.l.b16 %v2660
  %v2789 = vunpack.c.l.b16 %v2661
  %v2790 = vunpack.c.l.b16 %v2662
  %v2791 = vunpack.c.l.b16 %v2663
  %v2792 = vunpack.c.l.b16 %v2664
  %v2793 = vunpack.c.l.b16 %v2665
  %v2794 = vunpack.c.l.b16 %v2666
  %v2795 = vunpack.c.l.b16 %v2667
  %v2796 = vunpack.c.l.b16 %v2668
  %v2797 = vunpack.c.l.b16 %v2669
  %v2798 = vunpack.c.l.b16 %v2670
  %v2799 = vunpack.c.l.b16 %v2671
  %v2800 = vunpack.c.l.b16 %v2672
  %v2801 = vunpack.c.l.b16 %v2673
  %v2802 = vunpack.c.l.b16 %v2674
  %v2803 = vunpack.c.l.b16 %v2675
  %v2804 = vunpack.c.l.b16 %v2676
  %v2805 = vunpack.c.l.b16 %v2677
  %v2806 = vunpack.c.l.b16 %v2678
  %v2807 = vunpack.c.l.b16 %v2679
  %v2808 = vunpack.c.l.b16 %v2680
  %v2809 = vunpack.c.l.b16 %v2681
  %v2810 = vunpack.c.l.b16 %v2682
  %v2811 = vunpack.c.l.b16 %v2683
  %v2812 = vunpack.c.l.b16 %v2684
  %v2813 = vunpack.c.l.b16 %v2685
  %v2814 = vunpack.c.l.b16 %v2686
  %v2815 = vunpack.c.l.b16 %v2687
  %v2816 = vunpack.c.l.b16 %v2688
  %v2817 = vunpack.c.l.b16 %v2689
  %v2818 = vunpack.c.l.b16 %v2690
  %v2819 = vunpack.c.l.b16 %v2691
  %v2820 = vunpack.c.l.b16 %v2692
  %v2821 = vpack.c.b16 %v2758, %v2757
  %v2822 = vpack.c.b16 %v2760, %v2759
  %v2823 = vpack.c.b16 %v2762, %v2761
  %v2824 = vpack.c.b16 %v2764, %v2763
  %v2825 = vpack.c.b16 %v2766, %v2765
  %v2826 = vpack.c.b16 %v2768, %v2767
  %v2827 = vpack.c.b16 %v2770, %v2769
  %v2828 = vpack.c.b16 %v2772, %v2771
  %v2829 = vpack.c.b16 %v2774, %v2773
  %v2830 = vpack.c.b16 %v2776, %v2775
  %v2831 = vpack.c.b16 %v2778, %v2777
  %v2832 = vpack.c.b16 %v2780, %v2779
  %v2833 = vpack.c.b16 %v2782, %v2781
  %v2834 = vpack.c.b16 %v2784, %v2783
  %v2835 = vpack.c.b16 %v2786, %v2785
  %v2836 = vpack.c.b16 %v2788, %v2787
  %v2837 = vpack.c.b16 %v2790, %v2789
  %v2838 = vpack.c.b16 %v2792, %v2791
  %v2839 = vpack.c.b16 %v2794, %v2793
  %v2840 = vpack.c.b16 %v2796, %v2795
  %v2841 = vpack.c.b16 %v2798, %v2797
  %v2842 = vpack.c.b16 %v2800, %v2799
  %v2843 = vpack.c.b16 %v2802, %v2801
  %v2844 = vpack.c.b16 %v2804, %v2803
  %v2845 = vpack.c.b16 %v2806, %v2805
  %v2846 = vpack.c.b16 %v2808, %v2807
  %v2847 = vpack.c.b16 %v2810, %v2809
  %v2848 = vpack.c.b16 %v2812, %v2811
  %v2849 = vpack.c.b16 %v2814, %v2813
  %v2850 = vpack.c.b16 %v2816, %v2815
  %v2851 = vpack.c.b16 %v2818, %v2817
  %v2852 = vpack.c.b16 %v2820, %v2819
  %2885 = vmatprep.subr.bf16.mxu0 0
  %2886 = vmatpush1.bf16.msra.mxu0 %v2828
  %2887 = vmatprep.subr.bf16.mxu0 0
  %2888 = vmatpush1.bf16.msra.mxu0 %v2827
  %2889 = vmatprep.subr.bf16.mxu0 0
  %2890 = vmatpush1.bf16.msra.mxu0 %v2826
  %2891 = vmatprep.subr.bf16.mxu0 0
  %2892 = vmatpush1.bf16.msra.mxu0 %v2825
  %2893 = vmatprep.subr.bf16.mxu0 0
  %2894 = vmatpush1.bf16.msra.mxu0 %v2824
  %2895 = vmatprep.subr.bf16.mxu0 0
  %2896 = vmatpush1.bf16.msra.mxu0 %v2823
  %2897 = vmatprep.subr.bf16.mxu0 0
  %2898 = vmatpush1.bf16.msra.mxu0 %v2822
  %2899 = vmatprep.subr.bf16.mxu0 0
  %2900 = vmatpush1.bf16.msra.mxu0 %v2821
  %2901 = vmatprep.subr.bf16.mxu0 0
  %2902 = vmatpush2.bf16.msra.mxu0 %v2836
  %2903 = vmatprep.subr.bf16.mxu0 0
  %2904 = vmatpush2.bf16.msra.mxu0 %v2835
  %2905 = vmatprep.subr.bf16.mxu0 0
  %2906 = vmatpush2.bf16.msra.mxu0 %v2834
  %2907 = vmatprep.subr.bf16.mxu0 0
  %2908 = vmatpush2.bf16.msra.mxu0 %v2833
  %2909 = vmatprep.subr.bf16.mxu0 0
  %2910 = vmatpush2.bf16.msra.mxu0 %v2832
  %2911 = vmatprep.subr.bf16.mxu0 0
  %2912 = vmatpush2.bf16.msra.mxu0 %v2831
  %2913 = vmatprep.subr.bf16.mxu0 0
  %2914 = vmatpush2.bf16.msra.mxu0 %v2830
  %2915 = vmatprep.subr.bf16.mxu0 0
  %2916 = vmatpush2.bf16.msra.mxu0 %v2829
  %2917 = vmatprep.mubr.bf16.mxu0 %v2626
  %2918 = vmatmul.mubr.bf16.gmra.mxu0 %v2625
  %v2919 = vpop.f32.mrf.mxu0
  %v2920 = vadd.f32 0.0, %v2919
  %v2921 = vpop.f32.mrf.mxu0
  %v2922 = vpop.f32.mrf.mxu0
  %v2923 = vadd.f32 0.0, %v2922
  %v2924 = vpop.f32.mrf.mxu0
  %2925 = vdwg.mxu0
  %2926 = vmatprep.subr.bf16.mxu0 0
  %2927 = vmatpush1.bf16.msra.mxu0 %v2844
  %2928 = vmatprep.subr.bf16.mxu0 0
  %2929 = vmatpush1.bf16.msra.mxu0 %v2843
  %2930 = vmatprep.subr.bf16.mxu0 0
  %2931 = vmatpush1.bf16.msra.mxu0 %v2842
  %2932 = vmatprep.subr.bf16.mxu0 0
  %2933 = vmatpush1.bf16.msra.mxu0 %v2841
  %2934 = vmatprep.subr.bf16.mxu0 0
  %2935 = vmatpush1.bf16.msra.mxu0 %v2840
  %2936 = vmatprep.subr.bf16.mxu0 0
  %2937 = vmatpush1.bf16.msra.mxu0 %v2839
  %2938 = vmatprep.subr.bf16.mxu0 0
  %2939 = vmatpush1.bf16.msra.mxu0 %v2838
  %2940 = vmatprep.subr.bf16.mxu0 0
  %2941 = vmatpush1.bf16.msra.mxu0 %v2837
  %2942 = vmatprep.subr.bf16.mxu0 0
  %2943 = vmatpush2.bf16.msra.mxu0 %v2852
  %2944 = vmatprep.subr.bf16.mxu0 0
  %2945 = vmatpush2.bf16.msra.mxu0 %v2851
  %2946 = vmatprep.subr.bf16.mxu0 0
  %2947 = vmatpush2.bf16.msra.mxu0 %v2850
  %2948 = vmatprep.subr.bf16.mxu0 0
  %2949 = vmatpush2.bf16.msra.mxu0 %v2849
  %2950 = vmatprep.subr.bf16.mxu0 0
  %2951 = vmatpush2.bf16.msra.mxu0 %v2848
  %2952 = vmatprep.subr.bf16.mxu0 0
  %2953 = vmatpush2.bf16.msra.mxu0 %v2847
  %2954 = vmatprep.subr.bf16.mxu0 0
  %2955 = vmatpush2.bf16.msra.mxu0 %v2846
  %2956 = vmatprep.subr.bf16.mxu0 0
  %2957 = vmatpush2.bf16.msra.mxu0 %v2845
  %2958 = vmatprep.mubr.bf16.mxu0 %v2628
  %2959 = vmatmul.mubr.bf16.gmra.mxu0 %v2627
  %v2960 = vpop.f32.mrf.mxu0
  %v2961 = vadd.f32 %v2920, %v2960
  %v2962 = vpop.f32.mrf.mxu0
  %v2963 = vpop.f32.mrf.mxu0
  %v2964 = vadd.f32 %v2923, %v2963
  %v2965 = vpop.f32.mrf.mxu0
  %2966 = vdwg.mxu0
  %v2967 = vadd.f32 %v2455, %v2961
  %v2968 = vadd.f32 %v2458, %v2964
  %v2969 = vld [vmem:[%s13 + $0x30] sm:$0xff]
  %v2970 = vld [vmem:[%s13 + $0x38] sm:$0xff]
  %v2971 = vld [vmem:[%s13 + $0x70] sm:$0xff]
  %v2972 = vld [vmem:[%s13 + $0x78] sm:$0xff]
  %v2973 = vld [vmem:[%s13 + $0xb0] sm:$0xff]
  %v2974 = vld [vmem:[%s13 + $0xb8] sm:$0xff]
  %v2975 = vld [vmem:[%s13 + $0xf0] sm:$0xff]
  %v2976 = vld [vmem:[%s13 + $0xf8] sm:$0xff]
  %v2977 = vld [vmem:[%s14 + $0xc] sm:$0xf]
  %v2979 = vlaneseq
  %v2980 = vshrl.u32 %v2979, 7
  %v2981 = vsub.s32 0, %v2980
  %v2982 = vrot.slane %v2977, %v2981
  %v2983 = vlaneseq
  %v2984 = vshrl.u32 %v2983, 7
  %v2985 = vsub.s32 1, %v2984
  %v2986 = vrot.slane %v2977, %v2985
  %v2987 = vlaneseq
  %v2988 = vshrl.u32 %v2987, 7
  %v2989 = vsub.s32 2, %v2988
  %v2990 = vrot.slane %v2977, %v2989
  %v2991 = vlaneseq
  %v2992 = vshrl.u32 %v2991, 7
  %v2993 = vsub.s32 3, %v2992
  %v2994 = vrot.slane %v2977, %v2993
  %v3007 = vunpack.c.l.b16 %v2969
  %v3008 = vunpack.c.h.b16 %v2969
  %v3009 = vunpack.c.l.b16 %v2970
  %v3010 = vunpack.c.h.b16 %v2970
  %v3011 = vunpack.c.l.b16 %v2971
  %v3012 = vunpack.c.h.b16 %v2971
  %v3013 = vunpack.c.l.b16 %v2972
  %v3014 = vunpack.c.h.b16 %v2972
  %v3015 = vunpack.c.l.b16 %v2973
  %v3016 = vunpack.c.h.b16 %v2973
  %v3017 = vunpack.c.l.b16 %v2974
  %v3018 = vunpack.c.h.b16 %v2974
  %v3019 = vunpack.c.l.b16 %v2975
  %v3020 = vunpack.c.h.b16 %v2975
  %v3021 = vunpack.c.l.b16 %v2976
  %v3022 = vunpack.c.h.b16 %v2976
  %v3023 = vpack.c.b16 %v3011, %v3007
  %v3024 = vpack.c.b16 %v3012, %v3008
  %v3025 = vpack.c.b16 %v3013, %v3009
  %v3026 = vpack.c.b16 %v3014, %v3010
  %v3027 = vpack.c.b16 %v3019, %v3015
  %v3028 = vpack.c.b16 %v3020, %v3016
  %v3029 = vpack.c.b16 %v3021, %v3017
  %v3030 = vpack.c.b16 %v3022, %v3018
  %3039 = vmatprep.subr.bf16.mxu0 0
  %3040 = vmatpush1.bf16.msra.mxu0 0
  %3041 = vmatprep.subr.bf16.mxu0 0
  %3042 = vmatpush1.bf16.msra.mxu0 0
  %3043 = vmatprep.subr.bf16.mxu0 0
  %3044 = vmatpush1.bf16.msra.mxu0 0
  %3045 = vmatprep.subr.bf16.mxu0 0
  %3046 = vmatpush1.bf16.msra.mxu0 0
  %3047 = vmatprep.subr.bf16.mxu0 0
  %3048 = vmatpush1.bf16.msra.mxu0 0
  %3049 = vmatprep.subr.bf16.mxu0 0
  %3050 = vmatpush1.bf16.msra.mxu0 0
  %3051 = vmatprep.subr.bf16.mxu0 %v3028
  %3052 = vmatpush1.bf16.msra.mxu0 %v3027
  %3053 = vmatprep.subr.bf16.mxu0 %v3024
  %3054 = vmatpush1.bf16.msra.mxu0 %v3023
  %3055 = vmatprep.subr.bf16.mxu0 0
  %3056 = vmatpush2.bf16.msra.mxu0 0
  %3057 = vmatprep.subr.bf16.mxu0 0
  %3058 = vmatpush2.bf16.msra.mxu0 0
  %3059 = vmatprep.subr.bf16.mxu0 0
  %3060 = vmatpush2.bf16.msra.mxu0 0
  %3061 = vmatprep.subr.bf16.mxu0 0
  %3062 = vmatpush2.bf16.msra.mxu0 0
  %3063 = vmatprep.subr.bf16.mxu0 0
  %3064 = vmatpush2.bf16.msra.mxu0 0
  %3065 = vmatprep.subr.bf16.mxu0 0
  %3066 = vmatpush2.bf16.msra.mxu0 0
  %3067 = vmatprep.subr.bf16.mxu0 0
  %3068 = vmatpush2.bf16.msra.mxu0 0
  %3069 = vmatprep.subr.bf16.mxu0 0
  %3070 = vmatpush2.bf16.msra.mxu0 0
  %3071 = vmatprep.mubr.bf16.mxu0 0
  %3072 = vmatmul.mubr.bf16.gmra.mxu0 %v1517
  %v3073 = vpop.f32.mrf.mxu0
  %v3074 = vadd.f32 %v2982, %v3073
  %v3075 = vpop.f32.mrf.mxu0
  %v3076 = vadd.f32 %v2986, %v3075
  %v3077 = vpop.f32.mrf.mxu0
  %v3078 = vadd.f32 %v2982, %v3077
  %v3079 = vpop.f32.mrf.mxu0
  %v3080 = vadd.f32 %v2986, %v3079
  %3081 = vdwg.mxu0
  %3082 = vmatprep.subr.bf16.mxu0 0
  %3083 = vmatpush1.bf16.msra.mxu0 0
  %3084 = vmatprep.subr.bf16.mxu0 0
  %3085 = vmatpush1.bf16.msra.mxu0 0
  %3086 = vmatprep.subr.bf16.mxu0 0
  %3087 = vmatpush1.bf16.msra.mxu0 0
  %3088 = vmatprep.subr.bf16.mxu0 0
  %3089 = vmatpush1.bf16.msra.mxu0 0
  %3090 = vmatprep.subr.bf16.mxu0 0
  %3091 = vmatpush1.bf16.msra.mxu0 0
  %3092 = vmatprep.subr.bf16.mxu0 0
  %3093 = vmatpush1.bf16.msra.mxu0 0
  %3094 = vmatprep.subr.bf16.mxu0 %v3030
  %3095 = vmatpush1.bf16.msra.mxu0 %v3029
  %3096 = vmatprep.subr.bf16.mxu0 %v3026
  %3097 = vmatpush1.bf16.msra.mxu0 %v3025
  %3098 = vmatprep.subr.bf16.mxu0 0
  %3099 = vmatpush2.bf16.msra.mxu0 0
  %3100 = vmatprep.subr.bf16.mxu0 0
  %3101 = vmatpush2.bf16.msra.mxu0 0
  %3102 = vmatprep.subr.bf16.mxu0 0
  %3103 = vmatpush2.bf16.msra.mxu0 0
  %3104 = vmatprep.subr.bf16.mxu0 0
  %3105 = vmatpush2.bf16.msra.mxu0 0
  %3106 = vmatprep.subr.bf16.mxu0 0
  %3107 = vmatpush2.bf16.msra.mxu0 0
  %3108 = vmatprep.subr.bf16.mxu0 0
  %3109 = vmatpush2.bf16.msra.mxu0 0
  %3110 = vmatprep.subr.bf16.mxu0 0
  %3111 = vmatpush2.bf16.msra.mxu0 0
  %3112 = vmatprep.subr.bf16.mxu0 0
  %3113 = vmatpush2.bf16.msra.mxu0 0
  %3114 = vmatprep.mubr.bf16.mxu0 0
  %3115 = vmatmul.mubr.bf16.gmra.mxu0 %v1517
  %v3116 = vpop.f32.mrf.mxu0
  %v3117 = vadd.f32 %v2990, %v3116
  %v3118 = vpop.f32.mrf.mxu0
  %v3119 = vadd.f32 %v2994, %v3118
  %v3120 = vpop.f32.mrf.mxu0
  %v3121 = vadd.f32 %v2990, %v3120
  %v3122 = vpop.f32.mrf.mxu0
  %v3123 = vadd.f32 %v2994, %v3122
  %3124 = vdwg.mxu0
  %v3125 = vmax.f32 %v3074, 0.0
  %v3126 = vmax.f32 %v3076, 0.0
  %v3127 = vmax.f32 %v3117, 0.0
  %v3128 = vmax.f32 %v3119, 0.0
  %v3129 = vmax.f32 %v3078, 0.0
  %v3130 = vmax.f32 %v3080, 0.0
  %v3131 = vmax.f32 %v3121, 0.0
  %v3132 = vmax.f32 %v3123, 0.0
  %v3133 = vpack.c.bf16 %v3129, %v3125
  %v3134 = vpack.c.bf16 %v3130, %v3126
  %v3135 = vpack.c.bf16 %v3131, %v3127
  %v3136 = vpack.c.bf16 %v3132, %v3128
  %v3137 = vld [vmem:[%s15 + $0x300] sm:$0xf]
  %v3138 = vld [vmem:[%s15 + $0x304] sm:$0xf]
  %v3139 = vld [vmem:[%s15 + $0x308] sm:$0xf]
  %v3140 = vld [vmem:[%s15 + $0x30c] sm:$0xf]
  %v3141 = vld [vmem:[%s15 + $0x310] sm:$0xf]
  %v3142 = vld [vmem:[%s15 + $0x314] sm:$0xf]
  %v3143 = vld [vmem:[%s15 + $0x318] sm:$0xf]
  %v3144 = vld [vmem:[%s15 + $0x31c] sm:$0xf]
  %v3145 = vld [vmem:[%s15 + $0x320] sm:$0xf]
  %v3146 = vld [vmem:[%s15 + $0x324] sm:$0xf]
  %v3147 = vld [vmem:[%s15 + $0x328] sm:$0xf]
  %v3148 = vld [vmem:[%s15 + $0x32c] sm:$0xf]
  %v3149 = vld [vmem:[%s15 + $0x330] sm:$0xf]
  %v3150 = vld [vmem:[%s15 + $0x334] sm:$0xf]
  %v3151 = vld [vmem:[%s15 + $0x338] sm:$0xf]
  %v3152 = vld [vmem:[%s15 + $0x33c] sm:$0xf]
  %v3153 = vld [vmem:[%s15 + $0x340] sm:$0xf]
  %v3154 = vld [vmem:[%s15 + $0x344] sm:$0xf]
  %v3155 = vld [vmem:[%s15 + $0x348] sm:$0xf]
  %v3156 = vld [vmem:[%s15 + $0x34c] sm:$0xf]
  %v3157 = vld [vmem:[%s15 + $0x350] sm:$0xf]
  %v3158 = vld [vmem:[%s15 + $0x354] sm:$0xf]
  %v3159 = vld [vmem:[%s15 + $0x358] sm:$0xf]
  %v3160 = vld [vmem:[%s15 + $0x35c] sm:$0xf]
  %v3161 = vld [vmem:[%s15 + $0x360] sm:$0xf]
  %v3162 = vld [vmem:[%s15 + $0x364] sm:$0xf]
  %v3163 = vld [vmem:[%s15 + $0x368] sm:$0xf]
  %v3164 = vld [vmem:[%s15 + $0x36c] sm:$0xf]
  %v3165 = vld [vmem:[%s15 + $0x370] sm:$0xf]
  %v3166 = vld [vmem:[%s15 + $0x374] sm:$0xf]
  %v3167 = vld [vmem:[%s15 + $0x378] sm:$0xf]
  %v3168 = vld [vmem:[%s15 + $0x37c] sm:$0xf]
  %v3169 = vld [vmem:[%s15 + $0x380] sm:$0xf]
  %v3170 = vld [vmem:[%s15 + $0x384] sm:$0xf]
  %v3171 = vld [vmem:[%s15 + $0x388] sm:$0xf]
  %v3172 = vld [vmem:[%s15 + $0x38c] sm:$0xf]
  %v3173 = vld [vmem:[%s15 + $0x390] sm:$0xf]
  %v3174 = vld [vmem:[%s15 + $0x394] sm:$0xf]
  %v3175 = vld [vmem:[%s15 + $0x398] sm:$0xf]
  %v3176 = vld [vmem:[%s15 + $0x39c] sm:$0xf]
  %v3177 = vld [vmem:[%s15 + $0x3a0] sm:$0xf]
  %v3178 = vld [vmem:[%s15 + $0x3a4] sm:$0xf]
  %v3179 = vld [vmem:[%s15 + $0x3a8] sm:$0xf]
  %v3180 = vld [vmem:[%s15 + $0x3ac] sm:$0xf]
  %v3181 = vld [vmem:[%s15 + $0x3b0] sm:$0xf]
  %v3182 = vld [vmem:[%s15 + $0x3b4] sm:$0xf]
  %v3183 = vld [vmem:[%s15 + $0x3b8] sm:$0xf]
  %v3184 = vld [vmem:[%s15 + $0x3bc] sm:$0xf]
  %v3185 = vld [vmem:[%s15 + $0x3c0] sm:$0xf]
  %v3186 = vld [vmem:[%s15 + $0x3c4] sm:$0xf]
  %v3187 = vld [vmem:[%s15 + $0x3c8] sm:$0xf]
  %v3188 = vld [vmem:[%s15 + $0x3cc] sm:$0xf]
  %v3189 = vld [vmem:[%s15 + $0x3d0] sm:$0xf]
  %v3190 = vld [vmem:[%s15 + $0x3d4] sm:$0xf]
  %v3191 = vld [vmem:[%s15 + $0x3d8] sm:$0xf]
  %v3192 = vld [vmem:[%s15 + $0x3dc] sm:$0xf]
  %v3193 = vld [vmem:[%s15 + $0x3e0] sm:$0xf]
  %v3194 = vld [vmem:[%s15 + $0x3e4] sm:$0xf]
  %v3195 = vld [vmem:[%s15 + $0x3e8] sm:$0xf]
  %v3196 = vld [vmem:[%s15 + $0x3ec] sm:$0xf]
  %v3197 = vld [vmem:[%s15 + $0x3f0] sm:$0xf]
  %v3198 = vld [vmem:[%s15 + $0x3f4] sm:$0xf]
  %v3199 = vld [vmem:[%s15 + $0x3f8] sm:$0xf]
  %v3200 = vld [vmem:[%s15 + $0x3fc] sm:$0xf]
  %v3265 = vunpack.c.l.b16 %v3137
  %v3266 = vunpack.c.l.b16 %v3138
  %v3267 = vunpack.c.l.b16 %v3139
  %v3268 = vunpack.c.l.b16 %v3140
  %v3269 = vunpack.c.l.b16 %v3141
  %v3270 = vunpack.c.l.b16 %v3142
  %v3271 = vunpack.c.l.b16 %v3143
  %v3272 = vunpack.c.l.b16 %v3144
  %v3273 = vunpack.c.l.b16 %v3145
  %v3274 = vunpack.c.l.b16 %v3146
  %v3275 = vunpack.c.l.b16 %v3147
  %v3276 = vunpack.c.l.b16 %v3148
  %v3277 = vunpack.c.l.b16 %v3149
  %v3278 = vunpack.c.l.b16 %v3150
  %v3279 = vunpack.c.l.b16 %v3151
  %v3280 = vunpack.c.l.b16 %v3152
  %v3281 = vunpack.c.l.b16 %v3153
  %v3282 = vunpack.c.l.b16 %v3154
  %v3283 = vunpack.c.l.b16 %v3155
  %v3284 = vunpack.c.l.b16 %v3156
  %v3285 = vunpack.c.l.b16 %v3157
  %v3286 = vunpack.c.l.b16 %v3158
  %v3287 = vunpack.c.l.b16 %v3159
  %v3288 = vunpack.c.l.b16 %v3160
  %v3289 = vunpack.c.l.b16 %v3161
  %v3290 = vunpack.c.l.b16 %v3162
  %v3291 = vunpack.c.l.b16 %v3163
  %v3292 = vunpack.c.l.b16 %v3164
  %v3293 = vunpack.c.l.b16 %v3165
  %v3294 = vunpack.c.l.b16 %v3166
  %v3295 = vunpack.c.l.b16 %v3167
  %v3296 = vunpack.c.l.b16 %v3168
  %v3297 = vunpack.c.l.b16 %v3169
  %v3298 = vunpack.c.l.b16 %v3170
  %v3299 = vunpack.c.l.b16 %v3171
  %v3300 = vunpack.c.l.b16 %v3172
  %v3301 = vunpack.c.l.b16 %v3173
  %v3302 = vunpack.c.l.b16 %v3174
  %v3303 = vunpack.c.l.b16 %v3175
  %v3304 = vunpack.c.l.b16 %v3176
  %v3305 = vunpack.c.l.b16 %v3177
  %v3306 = vunpack.c.l.b16 %v3178
  %v3307 = vunpack.c.l.b16 %v3179
  %v3308 = vunpack.c.l.b16 %v3180
  %v3309 = vunpack.c.l.b16 %v3181
  %v3310 = vunpack.c.l.b16 %v3182
  %v3311 = vunpack.c.l.b16 %v3183
  %v3312 = vunpack.c.l.b16 %v3184
  %v3313 = vunpack.c.l.b16 %v3185
  %v3314 = vunpack.c.l.b16 %v3186
  %v3315 = vunpack.c.l.b16 %v3187
  %v3316 = vunpack.c.l.b16 %v3188
  %v3317 = vunpack.c.l.b16 %v3189
  %v3318 = vunpack.c.l.b16 %v3190
  %v3319 = vunpack.c.l.b16 %v3191
  %v3320 = vunpack.c.l.b16 %v3192
  %v3321 = vunpack.c.l.b16 %v3193
  %v3322 = vunpack.c.l.b16 %v3194
  %v3323 = vunpack.c.l.b16 %v3195
  %v3324 = vunpack.c.l.b16 %v3196
  %v3325 = vunpack.c.l.b16 %v3197
  %v3326 = vunpack.c.l.b16 %v3198
  %v3327 = vunpack.c.l.b16 %v3199
  %v3328 = vunpack.c.l.b16 %v3200
  %v3329 = vpack.c.b16 %v3266, %v3265
  %v3330 = vpack.c.b16 %v3268, %v3267
  %v3331 = vpack.c.b16 %v3270, %v3269
  %v3332 = vpack.c.b16 %v3272, %v3271
  %v3333 = vpack.c.b16 %v3274, %v3273
  %v3334 = vpack.c.b16 %v3276, %v3275
  %v3335 = vpack.c.b16 %v3278, %v3277
  %v3336 = vpack.c.b16 %v3280, %v3279
  %v3337 = vpack.c.b16 %v3282, %v3281
  %v3338 = vpack.c.b16 %v3284, %v3283
  %v3339 = vpack.c.b16 %v3286, %v3285
  %v3340 = vpack.c.b16 %v3288, %v3287
  %v3341 = vpack.c.b16 %v3290, %v3289
  %v3342 = vpack.c.b16 %v3292, %v3291
  %v3343 = vpack.c.b16 %v3294, %v3293
  %v3344 = vpack.c.b16 %v3296, %v3295
  %v3345 = vpack.c.b16 %v3298, %v3297
  %v3346 = vpack.c.b16 %v3300, %v3299
  %v3347 = vpack.c.b16 %v3302, %v3301
  %v3348 = vpack.c.b16 %v3304, %v3303
  %v3349 = vpack.c.b16 %v3306, %v3305
  %v3350 = vpack.c.b16 %v3308, %v3307
  %v3351 = vpack.c.b16 %v3310, %v3309
  %v3352 = vpack.c.b16 %v3312, %v3311
  %v3353 = vpack.c.b16 %v3314, %v3313
  %v3354 = vpack.c.b16 %v3316, %v3315
  %v3355 = vpack.c.b16 %v3318, %v3317
  %v3356 = vpack.c.b16 %v3320, %v3319
  %v3357 = vpack.c.b16 %v3322, %v3321
  %v3358 = vpack.c.b16 %v3324, %v3323
  %v3359 = vpack.c.b16 %v3326, %v3325
  %v3360 = vpack.c.b16 %v3328, %v3327
  %3393 = vmatprep.subr.bf16.mxu0 0
  %3394 = vmatpush1.bf16.msra.mxu0 %v3336
  %3395 = vmatprep.subr.bf16.mxu0 0
  %3396 = vmatpush1.bf16.msra.mxu0 %v3335
  %3397 = vmatprep.subr.bf16.mxu0 0
  %3398 = vmatpush1.bf16.msra.mxu0 %v3334
  %3399 = vmatprep.subr.bf16.mxu0 0
  %3400 = vmatpush1.bf16.msra.mxu0 %v3333
  %3401 = vmatprep.subr.bf16.mxu0 0
  %3402 = vmatpush1.bf16.msra.mxu0 %v3332
  %3403 = vmatprep.subr.bf16.mxu0 0
  %3404 = vmatpush1.bf16.msra.mxu0 %v3331
  %3405 = vmatprep.subr.bf16.mxu0 0
  %3406 = vmatpush1.bf16.msra.mxu0 %v3330
  %3407 = vmatprep.subr.bf16.mxu0 0
  %3408 = vmatpush1.bf16.msra.mxu0 %v3329
  %3409 = vmatprep.subr.bf16.mxu0 0
  %3410 = vmatpush2.bf16.msra.mxu0 %v3344
  %3411 = vmatprep.subr.bf16.mxu0 0
  %3412 = vmatpush2.bf16.msra.mxu0 %v3343
  %3413 = vmatprep.subr.bf16.mxu0 0
  %3414 = vmatpush2.bf16.msra.mxu0 %v3342
  %3415 = vmatprep.subr.bf16.mxu0 0
  %3416 = vmatpush2.bf16.msra.mxu0 %v3341
  %3417 = vmatprep.subr.bf16.mxu0 0
  %3418 = vmatpush2.bf16.msra.mxu0 %v3340
  %3419 = vmatprep.subr.bf16.mxu0 0
  %3420 = vmatpush2.bf16.msra.mxu0 %v3339
  %3421 = vmatprep.subr.bf16.mxu0 0
  %3422 = vmatpush2.bf16.msra.mxu0 %v3338
  %3423 = vmatprep.subr.bf16.mxu0 0
  %3424 = vmatpush2.bf16.msra.mxu0 %v3337
  %3425 = vmatprep.mubr.bf16.mxu0 %v3134
  %3426 = vmatmul.mubr.bf16.gmra.mxu0 %v3133
  %v3427 = vpop.f32.mrf.mxu0
  %v3428 = vadd.f32 0.0, %v3427
  %v3429 = vpop.f32.mrf.mxu0
  %v3430 = vpop.f32.mrf.mxu0
  %v3431 = vadd.f32 0.0, %v3430
  %v3432 = vpop.f32.mrf.mxu0
  %3433 = vdwg.mxu0
  %3434 = vmatprep.subr.bf16.mxu0 0
  %3435 = vmatpush1.bf16.msra.mxu0 %v3352
  %3436 = vmatprep.subr.bf16.mxu0 0
  %3437 = vmatpush1.bf16.msra.mxu0 %v3351
  %3438 = vmatprep.subr.bf16.mxu0 0
  %3439 = vmatpush1.bf16.msra.mxu0 %v3350
  %3440 = vmatprep.subr.bf16.mxu0 0
  %3441 = vmatpush1.bf16.msra.mxu0 %v3349
  %3442 = vmatprep.subr.bf16.mxu0 0
  %3443 = vmatpush1.bf16.msra.mxu0 %v3348
  %3444 = vmatprep.subr.bf16.mxu0 0
  %3445 = vmatpush1.bf16.msra.mxu0 %v3347
  %3446 = vmatprep.subr.bf16.mxu0 0
  %3447 = vmatpush1.bf16.msra.mxu0 %v3346
  %3448 = vmatprep.subr.bf16.mxu0 0
  %3449 = vmatpush1.bf16.msra.mxu0 %v3345
  %3450 = vmatprep.subr.bf16.mxu0 0
  %3451 = vmatpush2.bf16.msra.mxu0 %v3360
  %3452 = vmatprep.subr.bf16.mxu0 0
  %3453 = vmatpush2.bf16.msra.mxu0 %v3359
  %3454 = vmatprep.subr.bf16.mxu0 0
  %3455 = vmatpush2.bf16.msra.mxu0 %v3358
  %3456 = vmatprep.subr.bf16.mxu0 0
  %3457 = vmatpush2.bf16.msra.mxu0 %v3357
  %3458 = vmatprep.subr.bf16.mxu0 0
  %3459 = vmatpush2.bf16.msra.mxu0 %v3356
  %3460 = vmatprep.subr.bf16.mxu0 0
  %3461 = vmatpush2.bf16.msra.mxu0 %v3355
  %3462 = vmatprep.subr.bf16.mxu0 0
  %3463 = vmatpush2.bf16.msra.mxu0 %v3354
  %3464 = vmatprep.subr.bf16.mxu0 0
  %3465 = vmatpush2.bf16.msra.mxu0 %v3353
  %3466 = vmatprep.mubr.bf16.mxu0 %v3136
  %3467 = vmatmul.mubr.bf16.gmra.mxu0 %v3135
  %v3468 = vpop.f32.mrf.mxu0
  %v3469 = vadd.f32 %v3428, %v3468
  %v3470 = vpop.f32.mrf.mxu0
  %v3471 = vpop.f32.mrf.mxu0
  %v3472 = vadd.f32 %v3431, %v3471
  %v3473 = vpop.f32.mrf.mxu0
  %3474 = vdwg.mxu0
  %v3475 = vadd.f32 %v2967, %v3469
  %v3476 = vadd.f32 %v2968, %v3472
  %v3477 = vadd.f32 %v1443, %v3475
  %v3478 = vadd.f32 %v1444, %v3476
  %v3479 = vld [vmem:[%s16] sm:$0x1]
  %v3481 = vlaneseq
  %v3482 = vshrl.u32 %v3481, 7
  %v3483 = vsub.s32 0, %v3482
  %v3484 = vrot.slane %v3479, %v3483
  %v3486 = vadd.f32 %v3477, %v3484
  %v3487 = vadd.f32 %v3478, %v3484
  %v3488 = vld [vmem:[%s17] sm:$0x1]
  %v3489 = vld [vmem:[%s18] sm:$0x1]
  %v3490 = vsel %vm199, %v3486, 0.0
  %3491 = vadd.xlane.f32.xlu0 %v3490
  %v3492 = vpop.xlane.xlu0 %3491
  %v3493 = vsel %vm199, %v3487, 0.0
  %3494 = vadd.xlane.f32.xlu0 %v3493
  %v3495 = vpop.xlane.xlu0 %3494
  %v3496 = vmul.f32 %v3492, %v1408
  %v3497 = vmul.f32 %v3495, %v1408
  %v3498 = vsub.f32 %v3486, %v3496
  %v3499 = vsub.f32 %v3487, %v3497
  %v3500 = vmul.f32 %v3498, %v3498
  %v3501 = vmul.f32 %v3499, %v3499
  %v3502 = vsel %vm199, %v3500, 0.0
  %3503 = vadd.xlane.f32.xlu0 %v3502
  %v3504 = vpop.xlane.xlu0 %3503
  %v3505 = vsel %vm199, %v3501, 0.0
  %3506 = vadd.xlane.f32.xlu0 %v3505
  %v3507 = vpop.xlane.xlu0 %3506
  %v3508 = vmul.f32 %v3504, %v1408
  %v3509 = vmul.f32 %v3507, %v1408
  %v3510 = vadd.f32 %v3508, 1e-05
  %v3511 = vadd.f32 %v3509, 1e-05
  %v3512 = vrsqrt.pop %v3510
  %v3513 = vrsqrt.pop %v3511
  %v3514 = vmul.f32 %v3498, %v3512
  %v3515 = vmul.f32 %v3499, %v3513
  %v3517 = vlaneseq
  %v3518 = vshrl.u32 %v3517, 7
  %v3519 = vsub.s32 0, %v3518
  %v3520 = vrot.slane %v3488, %v3519
  %v3522 = vmul.f32 %v3514, %v3520
  %v3523 = vmul.f32 %v3515, %v3520
  %v3525 = vlaneseq
  %v3526 = vshrl.u32 %v3525, 7
  %v3527 = vsub.s32 0, %v3526
  %v3528 = vrot.slane %v3489, %v3527
  %v3530 = vadd.f32 %v3522, %v3528
  %v3531 = vadd.f32 %v3523, %v3528
  %v3532 = vpack.c.bf16 %v3531, %v3530
  %s3533 = scalar_lea.vmem %s3, 16
  %v3534 = vld [vmem:[%s3533] sm:$0xf]
  %v3535 = vld [vmem:[%s3533 + $0x4] sm:$0xf]
  %v3536 = vld [vmem:[%s3533 + $0x8] sm:$0xf]
  %v3537 = vld [vmem:[%s3533 + $0xc] sm:$0xf]
  %s3538 = scalar_lea.vmem %s6, 1
  %v3539 = vld [vmem:[%s3538] sm:$0x1]
  %v3541 = vlaneseq
  %v3542 = vshrl.u32 %v3541, 7
  %v3543 = vsub.s32 0, %v3542
  %v3544 = vrot.slane %v3539, %v3543
  %v3550 = vunpack.c.l.b16 %v3534
  %v3551 = vunpack.c.l.b16 %v3535
  %v3552 = vunpack.c.l.b16 %v3536
  %v3553 = vunpack.c.l.b16 %v3537
  %v3554 = vpack.c.b16 %v3551, %v3550
  %v3555 = vpack.c.b16 %v3553, %v3552
  %v3559 = vsel %vm199, %v3532, 0
  %3561 = vmatprep.subr.bf16.mxu0 0
  %3562 = vmatpush1.bf16.msra.mxu0 0
  %3563 = vmatprep.subr.bf16.mxu0 0
  %3564 = vmatpush1.bf16.msra.mxu0 0
  %3565 = vmatprep.subr.bf16.mxu0 0
  %3566 = vmatpush1.bf16.msra.mxu0 0
  %3567 = vmatprep.subr.bf16.mxu0 0
  %3568 = vmatpush1.bf16.msra.mxu0 0
  %3569 = vmatprep.subr.bf16.mxu0 0
  %3570 = vmatpush1.bf16.msra.mxu0 0
  %3571 = vmatprep.subr.bf16.mxu0 0
  %3572 = vmatpush1.bf16.msra.mxu0 0
  %3573 = vmatprep.subr.bf16.mxu0 0
  %3574 = vmatpush1.bf16.msra.mxu0 %v3555
  %3575 = vmatprep.subr.bf16.mxu0 0
  %3576 = vmatpush1.bf16.msra.mxu0 %v3554
  %3577 = vmatprep.subr.bf16.mxu0 0
  %3578 = vmatpush2.bf16.msra.mxu0 0
  %3579 = vmatprep.subr.bf16.mxu0 0
  %3580 = vmatpush2.bf16.msra.mxu0 0
  %3581 = vmatprep.subr.bf16.mxu0 0
  %3582 = vmatpush2.bf16.msra.mxu0 0
  %3583 = vmatprep.subr.bf16.mxu0 0
  %3584 = vmatpush2.bf16.msra.mxu0 0
  %3585 = vmatprep.subr.bf16.mxu0 0
  %3586 = vmatpush2.bf16.msra.mxu0 0
  %3587 = vmatprep.subr.bf16.mxu0 0
  %3588 = vmatpush2.bf16.msra.mxu0 0
  %3589 = vmatprep.subr.bf16.mxu0 0
  %3590 = vmatpush2.bf16.msra.mxu0 0
  %3591 = vmatprep.subr.bf16.mxu0 0
  %3592 = vmatpush2.bf16.msra.mxu0 0
  %3593 = vmatprep.mubr.bf16.mxu0 0
  %3594 = vmatmul.mubr.bf16.gmra.mxu0 %v3559
  %v3595 = vpop.f32.mrf.mxu0
  %v3596 = vadd.f32 %v3544, %v3595
  %v3597 = vpop.f32.mrf.mxu0
  %v3598 = vpop.f32.mrf.mxu0
  %v3599 = vadd.f32 %v3544, %v3598
  %v3600 = vpop.f32.mrf.mxu0
  %3601 = vdwg.mxu0
  %s3602 = scalar_lea.vmem %s4, 16
  %v3603 = vld [vmem:[%s3602] sm:$0xf]
  %v3604 = vld [vmem:[%s3602 + $0x4] sm:$0xf]
  %v3605 = vld [vmem:[%s3602 + $0x8] sm:$0xf]
  %v3606 = vld [vmem:[%s3602 + $0xc] sm:$0xf]
  %s3607 = scalar_lea.vmem %s7, 1
  %v3608 = vld [vmem:[%s3607] sm:$0x1]
  %v3610 = vlaneseq
  %v3611 = vshrl.u32 %v3610, 7
  %v3612 = vsub.s32 0, %v3611
  %v3613 = vrot.slane %v3608, %v3612
  %v3619 = vunpack.c.l.b16 %v3603
  %v3620 = vunpack.c.l.b16 %v3604
  %v3621 = vunpack.c.l.b16 %v3605
  %v3622 = vunpack.c.l.b16 %v3606
  %v3623 = vpack.c.b16 %v3620, %v3619
  %v3624 = vpack.c.b16 %v3622, %v3621
  %3627 = vmatprep.subr.bf16.mxu0 0
  %3628 = vmatpush1.bf16.msra.mxu0 0
  %3629 = vmatprep.subr.bf16.mxu0 0
  %3630 = vmatpush1.bf16.msra.mxu0 0
  %3631 = vmatprep.subr.bf16.mxu0 0
  %3632 = vmatpush1.bf16.msra.mxu0 0
  %3633 = vmatprep.subr.bf16.mxu0 0
  %3634 = vmatpush1.bf16.msra.mxu0 0
  %3635 = vmatprep.subr.bf16.mxu0 0
  %3636 = vmatpush1.bf16.msra.mxu0 0
  %3637 = vmatprep.subr.bf16.mxu0 0
  %3638 = vmatpush1.bf16.msra.mxu0 0
  %3639 = vmatprep.subr.bf16.mxu0 0
  %3640 = vmatpush1.bf16.msra.mxu0 %v3624
  %3641 = vmatprep.subr.bf16.mxu0 0
  %3642 = vmatpush1.bf16.msra.mxu0 %v3623
  %3643 = vmatprep.subr.bf16.mxu0 0
  %3644 = vmatpush2.bf16.msra.mxu0 0
  %3645 = vmatprep.subr.bf16.mxu0 0
  %3646 = vmatpush2.bf16.msra.mxu0 0
  %3647 = vmatprep.subr.bf16.mxu0 0
  %3648 = vmatpush2.bf16.msra.mxu0 0
  %3649 = vmatprep.subr.bf16.mxu0 0
  %3650 = vmatpush2.bf16.msra.mxu0 0
  %3651 = vmatprep.subr.bf16.mxu0 0
  %3652 = vmatpush2.bf16.msra.mxu0 0
  %3653 = vmatprep.subr.bf16.mxu0 0
  %3654 = vmatpush2.bf16.msra.mxu0 0
  %3655 = vmatprep.subr.bf16.mxu0 0
  %3656 = vmatpush2.bf16.msra.mxu0 0
  %3657 = vmatprep.subr.bf16.mxu0 0
  %3658 = vmatpush2.bf16.msra.mxu0 0
  %3659 = vmatprep.mubr.bf16.mxu0 0
  %3660 = vmatmul.mubr.bf16.gmra.mxu0 %v3559
  %v3661 = vpop.f32.mrf.mxu0
  %v3662 = vadd.f32 %v3613, %v3661
  %v3663 = vpop.f32.mrf.mxu0
  %v3664 = vpop.f32.mrf.mxu0
  %v3665 = vadd.f32 %v3613, %v3664
  %v3666 = vpop.f32.mrf.mxu0
  %3667 = vdwg.mxu0
  %s3668 = scalar_lea.vmem %s5, 16
  %v3669 = vld [vmem:[%s3668] sm:$0xf]
  %v3670 = vld [vmem:[%s3668 + $0x4] sm:$0xf]
  %v3671 = vld [vmem:[%s3668 + $0x8] sm:$0xf]
  %v3672 = vld [vmem:[%s3668 + $0xc] sm:$0xf]
  %s3673 = scalar_lea.vmem %s8, 1
  %v3674 = vld [vmem:[%s3673] sm:$0x1]
  %v3676 = vlaneseq
  %v3677 = vshrl.u32 %v3676, 7
  %v3678 = vsub.s32 0, %v3677
  %v3679 = vrot.slane %v3674, %v3678
  %v3685 = vunpack.c.l.b16 %v3669
  %v3686 = vunpack.c.l.b16 %v3670
  %v3687 = vunpack.c.l.b16 %v3671
  %v3688 = vunpack.c.l.b16 %v3672
  %v3689 = vpack.c.b16 %v3686, %v3685
  %v3690 = vpack.c.b16 %v3688, %v3687
  %3693 = vmatprep.subr.bf16.mxu0 0
  %3694 = vmatpush1.bf16.msra.mxu0 0
  %3695 = vmatprep.subr.bf16.mxu0 0
  %3696 = vmatpush1.bf16.msra.mxu0 0
  %3697 = vmatprep.subr.bf16.mxu0 0
  %3698 = vmatpush1.bf16.msra.mxu0 0
  %3699 = vmatprep.subr.bf16.mxu0 0
  %3700 = vmatpush1.bf16.msra.mxu0 0
  %3701 = vmatprep.subr.bf16.mxu0 0
  %3702 = vmatpush1.bf16.msra.mxu0 0
  %3703 = vmatprep.subr.bf16.mxu0 0
  %3704 = vmatpush1.bf16.msra.mxu0 0
  %3705 = vmatprep.subr.bf16.mxu0 0
  %3706 = vmatpush1.bf16.msra.mxu0 %v3690
  %3707 = vmatprep.subr.bf16.mxu0 0
  %3708 = vmatpush1.bf16.msra.mxu0 %v3689
  %3709 = vmatprep.subr.bf16.mxu0 0
  %3710 = vmatpush2.bf16.msra.mxu0 0
  %3711 = vmatprep.subr.bf16.mxu0 0
  %3712 = vmatpush2.bf16.msra.mxu0 0
  %3713 = vmatprep.subr.bf16.mxu0 0
  %3714 = vmatpush2.bf16.msra.mxu0 0
  %3715 = vmatprep.subr.bf16.mxu0 0
  %3716 = vmatpush2.bf16.msra.mxu0 0
  %3717 = vmatprep.subr.bf16.mxu0 0
  %3718 = vmatpush2.bf16.msra.mxu0 0
  %3719 = vmatprep.subr.bf16.mxu0 0
  %3720 = vmatpush2.bf16.msra.mxu0 0
  %3721 = vmatprep.subr.bf16.mxu0 0
  %3722 = vmatpush2.bf16.msra.mxu0 0
  %3723 = vmatprep.subr.bf16.mxu0 0
  %3724 = vmatpush2.bf16.msra.mxu0 0
  %3725 = vmatprep.mubr.bf16.mxu0 0
  %3726 = vmatmul.mubr.bf16.gmra.mxu0 %v3559
  %v3727 = vpop.f32.mrf.mxu0
  %v3728 = vadd.f32 %v3679, %v3727
  %v3729 = vpop.f32.mrf.mxu0
  %v3730 = vpop.f32.mrf.mxu0
  %v3731 = vadd.f32 %v3679, %v3730
  %v3732 = vpop.f32.mrf.mxu0
  %3733 = vdwg.mxu0
  %3736 = vrot.lane.b32.xlu0 %v3596, 120
  %v3737 = vpop.permute.xlu0 %3736
  %3738 = vrot.lane.b32.xlu0 %v3599, 120
  %v3739 = vpop.permute.xlu0 %3738
  %3742 = vrot.lane.b32.xlu0 %v3596, 112
  %v3743 = vpop.permute.xlu0 %3742
  %3744 = vrot.lane.b32.xlu0 %v3599, 112
  %v3745 = vpop.permute.xlu0 %3744
  %3748 = vrot.lane.b32.xlu0 %v3596, 104
  %v3749 = vpop.permute.xlu0 %3748
  %3750 = vrot.lane.b32.xlu0 %v3599, 104
  %v3751 = vpop.permute.xlu0 %3750
  %v3754 = vpack.c.bf16 %v3596, %v3596
  %v3755 = vpack.c.bf16 %v3599, %v3599
  %v3756 = vpack.c.bf16 %v3737, %v3737
  %v3757 = vpack.c.bf16 %v3739, %v3739
  %v3758 = vpack.c.bf16 %v3743, %v3743
  %v3759 = vpack.c.bf16 %v3745, %v3745
  %v3760 = vpack.c.bf16 %v3749, %v3749
  %v3761 = vpack.c.bf16 %v3751, %v3751
  %3764 = vrot.lane.b32.xlu0 %v3662, 120
  %v3765 = vpop.permute.xlu0 %3764
  %3766 = vrot.lane.b32.xlu0 %v3665, 120
  %v3767 = vpop.permute.xlu0 %3766
  %3770 = vrot.lane.b32.xlu0 %v3662, 112
  %v3771 = vpop.permute.xlu0 %3770
  %3772 = vrot.lane.b32.xlu0 %v3665, 112
  %v3773 = vpop.permute.xlu0 %3772
  %3776 = vrot.lane.b32.xlu0 %v3662, 104
  %v3777 = vpop.permute.xlu0 %3776
  %3778 = vrot.lane.b32.xlu0 %v3665, 104
  %v3779 = vpop.permute.xlu0 %3778
  %v3782 = vpack.c.bf16 %v3662, %v3662
  %v3783 = vpack.c.bf16 %v3665, %v3665
  %v3784 = vpack.c.bf16 %v3765, %v3765
  %v3785 = vpack.c.bf16 %v3767, %v3767
  %v3786 = vpack.c.bf16 %v3771, %v3771
  %v3787 = vpack.c.bf16 %v3773, %v3773
  %v3788 = vpack.c.bf16 %v3777, %v3777
  %v3789 = vpack.c.bf16 %v3779, %v3779
  %3792 = vrot.lane.b32.xlu0 %v3728, 120
  %v3793 = vpop.permute.xlu0 %3792
  %3794 = vrot.lane.b32.xlu0 %v3731, 120
  %v3795 = vpop.permute.xlu0 %3794
  %3798 = vrot.lane.b32.xlu0 %v3728, 112
  %v3799 = vpop.permute.xlu0 %3798
  %3800 = vrot.lane.b32.xlu0 %v3731, 112
  %v3801 = vpop.permute.xlu0 %3800
  %3804 = vrot.lane.b32.xlu0 %v3728, 104
  %v3805 = vpop.permute.xlu0 %3804
  %3806 = vrot.lane.b32.xlu0 %v3731, 104
  %v3807 = vpop.permute.xlu0 %3806
  %v3810 = vpack.c.bf16 %v3728, %v3728
  %v3811 = vpack.c.bf16 %v3731, %v3731
  %v3812 = vpack.c.bf16 %v3793, %v3793
  %v3813 = vpack.c.bf16 %v3795, %v3795
  %v3814 = vpack.c.bf16 %v3799, %v3799
  %v3815 = vpack.c.bf16 %v3801, %v3801
  %v3816 = vpack.c.bf16 %v3805, %v3805
  %v3817 = vpack.c.bf16 %v3807, %v3807
  %v3819 = vsel %vm456, %v3754, 0
  %v3822 = vsel %vm456, %v3782, 0
  %3824 = vmatprep.subr.bf16.mxu0 0
  %3825 = vmatpush1.bf16.xpose.msra.mxu0 0
  %3826 = vmatprep.subr.bf16.mxu0 0
  %3827 = vmatpush1.bf16.xpose.msra.mxu0 0
  %3828 = vmatprep.subr.bf16.mxu0 0
  %3829 = vmatpush1.bf16.xpose.msra.mxu0 0
  %3830 = vmatprep.subr.bf16.mxu0 0
  %3831 = vmatpush1.bf16.xpose.msra.mxu0 0
  %3832 = vmatprep.subr.bf16.mxu0 0
  %3833 = vmatpush1.bf16.xpose.msra.mxu0 0
  %3834 = vmatprep.subr.bf16.mxu0 0
  %3835 = vmatpush1.bf16.xpose.msra.mxu0 0
  %3836 = vmatprep.subr.bf16.mxu0 0
  %3837 = vmatpush1.bf16.xpose.msra.mxu0 0
  %3838 = vmatprep.subr.bf16.mxu0 0
  %3839 = vmatpush1.bf16.xpose.msra.mxu0 %v3822
  %3840 = vmatprep.subr.bf16.mxu0 0
  %3841 = vmatpush2.bf16.xpose.msra.mxu0 0
  %3842 = vmatprep.subr.bf16.mxu0 0
  %3843 = vmatpush2.bf16.xpose.msra.mxu0 0
  %3844 = vmatprep.subr.bf16.mxu0 0
  %3845 = vmatpush2.bf16.xpose.msra.mxu0 0
  %3846 = vmatprep.subr.bf16.mxu0 0
  %3847 = vmatpush2.bf16.xpose.msra.mxu0 0
  %3848 = vmatprep.subr.bf16.mxu0 0
  %3849 = vmatpush2.bf16.xpose.msra.mxu0 0
  %3850 = vmatprep.subr.bf16.mxu0 0
  %3851 = vmatpush2.bf16.xpose.msra.mxu0 0
  %3852 = vmatprep.subr.bf16.mxu0 0
  %3853 = vmatpush2.bf16.xpose.msra.mxu0 0
  %3854 = vmatprep.subr.bf16.mxu0 0
  %3855 = vmatpush2.bf16.xpose.msra.mxu0 0
  %3856 = vmatprep.mubr.bf16.mxu0 0
  %3857 = vmatmul.mubr.bf16.gmra.mxu0 %v3819
  %v3858 = vpop.f32.mrf.mxu0
  %v3859 = vadd.f32 0.0, %v3858
  %v3860 = vpop.f32.mrf.mxu0
  %v3861 = vpop.f32.mrf.mxu0
  %v3862 = vpop.f32.mrf.mxu0
  %3863 = vdwg.mxu0
  %v3865 = vsel %vm456, %v3755, 0
  %v3868 = vsel %vm456, %v3783, 0
  %3870 = vmatprep.subr.bf16.mxu0 0
  %3871 = vmatpush1.bf16.xpose.msra.mxu0 0
  %3872 = vmatprep.subr.bf16.mxu0 0
  %3873 = vmatpush1.bf16.xpose.msra.mxu0 0
  %3874 = vmatprep.subr.bf16.mxu0 0
  %3875 = vmatpush1.bf16.xpose.msra.mxu0 0
  %3876 = vmatprep.subr.bf16.mxu0 0
  %3877 = vmatpush1.bf16.xpose.msra.mxu0 0
  %3878 = vmatprep.subr.bf16.mxu0 0
  %3879 = vmatpush1.bf16.xpose.msra.mxu0 0
  %3880 = vmatprep.subr.bf16.mxu0 0
  %3881 = vmatpush1.bf16.xpose.msra.mxu0 0
  %3882 = vmatprep.subr.bf16.mxu0 0
  %3883 = vmatpush1.bf16.xpose.msra.mxu0 0
  %3884 = vmatprep.subr.bf16.mxu0 0
  %3885 = vmatpush1.bf16.xpose.msra.mxu0 %v3868
  %3886 = vmatprep.subr.bf16.mxu0 0
  %3887 = vmatpush2.bf16.xpose.msra.mxu0 0
  %3888 = vmatprep.subr.bf16.mxu0 0
  %3889 = vmatpush2.bf16.xpose.msra.mxu0 0
  %3890 = vmatprep.subr.bf16.mxu0 0
  %3891 = vmatpush2.bf16.xpose.msra.mxu0 0
  %3892 = vmatprep.subr.bf16.mxu0 0
  %3893 = vmatpush2.bf16.xpose.msra.mxu0 0
  %3894 = vmatprep.subr.bf16.mxu0 0
  %3895 = vmatpush2.bf16.xpose.msra.mxu0 0
  %3896 = vmatprep.subr.bf16.mxu0 0
  %3897 = vmatpush2.bf16.xpose.msra.mxu0 0
  %3898 = vmatprep.subr.bf16.mxu0 0
  %3899 = vmatpush2.bf16.xpose.msra.mxu0 0
  %3900 = vmatprep.subr.bf16.mxu0 0
  %3901 = vmatpush2.bf16.xpose.msra.mxu0 0
  %3902 = vmatprep.mubr.bf16.mxu0 0
  %3903 = vmatmul.mubr.bf16.gmra.mxu0 %v3865
  %v3904 = vpop.f32.mrf.mxu0
  %v3905 = vadd.f32 0.0, %v3904
  %v3906 = vpop.f32.mrf.mxu0
  %v3907 = vpop.f32.mrf.mxu0
  %v3908 = vpop.f32.mrf.mxu0
  %3909 = vdwg.mxu0
  %v3911 = vsel %vm456, %v3756, 0
  %v3914 = vsel %vm456, %v3784, 0
  %3916 = vmatprep.subr.bf16.mxu0 0
  %3917 = vmatpush1.bf16.xpose.msra.mxu0 0
  %3918 = vmatprep.subr.bf16.mxu0 0
  %3919 = vmatpush1.bf16.xpose.msra.mxu0 0
  %3920 = vmatprep.subr.bf16.mxu0 0
  %3921 = vmatpush1.bf16.xpose.msra.mxu0 0
  %3922 = vmatprep.subr.bf16.mxu0 0
  %3923 = vmatpush1.bf16.xpose.msra.mxu0 0
  %3924 = vmatprep.subr.bf16.mxu0 0
  %3925 = vmatpush1.bf16.xpose.msra.mxu0 0
  %3926 = vmatprep.subr.bf16.mxu0 0
  %3927 = vmatpush1.bf16.xpose.msra.mxu0 0
  %3928 = vmatprep.subr.bf16.mxu0 0
  %3929 = vmatpush1.bf16.xpose.msra.mxu0 0
  %3930 = vmatprep.subr.bf16.mxu0 0
  %3931 = vmatpush1.bf16.xpose.msra.mxu0 %v3914
  %3932 = vmatprep.subr.bf16.mxu0 0
  %3933 = vmatpush2.bf16.xpose.msra.mxu0 0
  %3934 = vmatprep.subr.bf16.mxu0 0
  %3935 = vmatpush2.bf16.xpose.msra.mxu0 0
  %3936 = vmatprep.subr.bf16.mxu0 0
  %3937 = vmatpush2.bf16.xpose.msra.mxu0 0
  %3938 = vmatprep.subr.bf16.mxu0 0
  %3939 = vmatpush2.bf16.xpose.msra.mxu0 0
  %3940 = vmatprep.subr.bf16.mxu0 0
  %3941 = vmatpush2.bf16.xpose.msra.mxu0 0
  %3942 = vmatprep.subr.bf16.mxu0 0
  %3943 = vmatpush2.bf16.xpose.msra.mxu0 0
  %3944 = vmatprep.subr.bf16.mxu0 0
  %3945 = vmatpush2.bf16.xpose.msra.mxu0 0
  %3946 = vmatprep.subr.bf16.mxu0 0
  %3947 = vmatpush2.bf16.xpose.msra.mxu0 0
  %3948 = vmatprep.mubr.bf16.mxu0 0
  %3949 = vmatmul.mubr.bf16.gmra.mxu0 %v3911
  %v3950 = vpop.f32.mrf.mxu0
  %v3951 = vadd.f32 0.0, %v3950
  %v3952 = vpop.f32.mrf.mxu0
  %v3953 = vpop.f32.mrf.mxu0
  %v3954 = vpop.f32.mrf.mxu0
  %3955 = vdwg.mxu0
  %v3957 = vsel %vm456, %v3757, 0
  %v3960 = vsel %vm456, %v3785, 0
  %3962 = vmatprep.subr.bf16.mxu0 0
  %3963 = vmatpush1.bf16.xpose.msra.mxu0 0
  %3964 = vmatprep.subr.bf16.mxu0 0
  %3965 = vmatpush1.bf16.xpose.msra.mxu0 0
  %3966 = vmatprep.subr.bf16.mxu0 0
  %3967 = vmatpush1.bf16.xpose.msra.mxu0 0
  %3968 = vmatprep.subr.bf16.mxu0 0
  %3969 = vmatpush1.bf16.xpose.msra.mxu0 0
  %3970 = vmatprep.subr.bf16.mxu0 0
  %3971 = vmatpush1.bf16.xpose.msra.mxu0 0
  %3972 = vmatprep.subr.bf16.mxu0 0
  %3973 = vmatpush1.bf16.xpose.msra.mxu0 0
  %3974 = vmatprep.subr.bf16.mxu0 0
  %3975 = vmatpush1.bf16.xpose.msra.mxu0 0
  %3976 = vmatprep.subr.bf16.mxu0 0
  %3977 = vmatpush1.bf16.xpose.msra.mxu0 %v3960
  %3978 = vmatprep.subr.bf16.mxu0 0
  %3979 = vmatpush2.bf16.xpose.msra.mxu0 0
  %3980 = vmatprep.subr.bf16.mxu0 0
  %3981 = vmatpush2.bf16.xpose.msra.mxu0 0
  %3982 = vmatprep.subr.bf16.mxu0 0
  %3983 = vmatpush2.bf16.xpose.msra.mxu0 0
  %3984 = vmatprep.subr.bf16.mxu0 0
  %3985 = vmatpush2.bf16.xpose.msra.mxu0 0
  %3986 = vmatprep.subr.bf16.mxu0 0
  %3987 = vmatpush2.bf16.xpose.msra.mxu0 0
  %3988 = vmatprep.subr.bf16.mxu0 0
  %3989 = vmatpush2.bf16.xpose.msra.mxu0 0
  %3990 = vmatprep.subr.bf16.mxu0 0
  %3991 = vmatpush2.bf16.xpose.msra.mxu0 0
  %3992 = vmatprep.subr.bf16.mxu0 0
  %3993 = vmatpush2.bf16.xpose.msra.mxu0 0
  %3994 = vmatprep.mubr.bf16.mxu0 0
  %3995 = vmatmul.mubr.bf16.gmra.mxu0 %v3957
  %v3996 = vpop.f32.mrf.mxu0
  %v3997 = vadd.f32 0.0, %v3996
  %v3998 = vpop.f32.mrf.mxu0
  %v3999 = vpop.f32.mrf.mxu0
  %v4000 = vpop.f32.mrf.mxu0
  %4001 = vdwg.mxu0
  %v4003 = vsel %vm456, %v3758, 0
  %v4006 = vsel %vm456, %v3786, 0
  %4008 = vmatprep.subr.bf16.mxu0 0
  %4009 = vmatpush1.bf16.xpose.msra.mxu0 0
  %4010 = vmatprep.subr.bf16.mxu0 0
  %4011 = vmatpush1.bf16.xpose.msra.mxu0 0
  %4012 = vmatprep.subr.bf16.mxu0 0
  %4013 = vmatpush1.bf16.xpose.msra.mxu0 0
  %4014 = vmatprep.subr.bf16.mxu0 0
  %4015 = vmatpush1.bf16.xpose.msra.mxu0 0
  %4016 = vmatprep.subr.bf16.mxu0 0
  %4017 = vmatpush1.bf16.xpose.msra.mxu0 0
  %4018 = vmatprep.subr.bf16.mxu0 0
  %4019 = vmatpush1.bf16.xpose.msra.mxu0 0
  %4020 = vmatprep.subr.bf16.mxu0 0
  %4021 = vmatpush1.bf16.xpose.msra.mxu0 0
  %4022 = vmatprep.subr.bf16.mxu0 0
  %4023 = vmatpush1.bf16.xpose.msra.mxu0 %v4006
  %4024 = vmatprep.subr.bf16.mxu0 0
  %4025 = vmatpush2.bf16.xpose.msra.mxu0 0
  %4026 = vmatprep.subr.bf16.mxu0 0
  %4027 = vmatpush2.bf16.xpose.msra.mxu0 0
  %4028 = vmatprep.subr.bf16.mxu0 0
  %4029 = vmatpush2.bf16.xpose.msra.mxu0 0
  %4030 = vmatprep.subr.bf16.mxu0 0
  %4031 = vmatpush2.bf16.xpose.msra.mxu0 0
  %4032 = vmatprep.subr.bf16.mxu0 0
  %4033 = vmatpush2.bf16.xpose.msra.mxu0 0
  %4034 = vmatprep.subr.bf16.mxu0 0
  %4035 = vmatpush2.bf16.xpose.msra.mxu0 0
  %4036 = vmatprep.subr.bf16.mxu0 0
  %4037 = vmatpush2.bf16.xpose.msra.mxu0 0
  %4038 = vmatprep.subr.bf16.mxu0 0
  %4039 = vmatpush2.bf16.xpose.msra.mxu0 0
  %4040 = vmatprep.mubr.bf16.mxu0 0
  %4041 = vmatmul.mubr.bf16.gmra.mxu0 %v4003
  %v4042 = vpop.f32.mrf.mxu0
  %v4043 = vadd.f32 0.0, %v4042
  %v4044 = vpop.f32.mrf.mxu0
  %v4045 = vpop.f32.mrf.mxu0
  %v4046 = vpop.f32.mrf.mxu0
  %4047 = vdwg.mxu0
  %v4049 = vsel %vm456, %v3759, 0
  %v4052 = vsel %vm456, %v3787, 0
  %4054 = vmatprep.subr.bf16.mxu0 0
  %4055 = vmatpush1.bf16.xpose.msra.mxu0 0
  %4056 = vmatprep.subr.bf16.mxu0 0
  %4057 = vmatpush1.bf16.xpose.msra.mxu0 0
  %4058 = vmatprep.subr.bf16.mxu0 0
  %4059 = vmatpush1.bf16.xpose.msra.mxu0 0
  %4060 = vmatprep.subr.bf16.mxu0 0
  %4061 = vmatpush1.bf16.xpose.msra.mxu0 0
  %4062 = vmatprep.subr.bf16.mxu0 0
  %4063 = vmatpush1.bf16.xpose.msra.mxu0 0
  %4064 = vmatprep.subr.bf16.mxu0 0
  %4065 = vmatpush1.bf16.xpose.msra.mxu0 0
  %4066 = vmatprep.subr.bf16.mxu0 0
  %4067 = vmatpush1.bf16.xpose.msra.mxu0 0
  %4068 = vmatprep.subr.bf16.mxu0 0
  %4069 = vmatpush1.bf16.xpose.msra.mxu0 %v4052
  %4070 = vmatprep.subr.bf16.mxu0 0
  %4071 = vmatpush2.bf16.xpose.msra.mxu0 0
  %4072 = vmatprep.subr.bf16.mxu0 0
  %4073 = vmatpush2.bf16.xpose.msra.mxu0 0
  %4074 = vmatprep.subr.bf16.mxu0 0
  %4075 = vmatpush2.bf16.xpose.msra.mxu0 0
  %4076 = vmatprep.subr.bf16.mxu0 0
  %4077 = vmatpush2.bf16.xpose.msra.mxu0 0
  %4078 = vmatprep.subr.bf16.mxu0 0
  %4079 = vmatpush2.bf16.xpose.msra.mxu0 0
  %4080 = vmatprep.subr.bf16.mxu0 0
  %4081 = vmatpush2.bf16.xpose.msra.mxu0 0
  %4082 = vmatprep.subr.bf16.mxu0 0
  %4083 = vmatpush2.bf16.xpose.msra.mxu0 0
  %4084 = vmatprep.subr.bf16.mxu0 0
  %4085 = vmatpush2.bf16.xpose.msra.mxu0 0
  %4086 = vmatprep.mubr.bf16.mxu0 0
  %4087 = vmatmul.mubr.bf16.gmra.mxu0 %v4049
  %v4088 = vpop.f32.mrf.mxu0
  %v4089 = vadd.f32 0.0, %v4088
  %v4090 = vpop.f32.mrf.mxu0
  %v4091 = vpop.f32.mrf.mxu0
  %v4092 = vpop.f32.mrf.mxu0
  %4093 = vdwg.mxu0
  %v4095 = vsel %vm456, %v3760, 0
  %v4098 = vsel %vm456, %v3788, 0
  %4100 = vmatprep.subr.bf16.mxu0 0
  %4101 = vmatpush1.bf16.xpose.msra.mxu0 0
  %4102 = vmatprep.subr.bf16.mxu0 0
  %4103 = vmatpush1.bf16.xpose.msra.mxu0 0
  %4104 = vmatprep.subr.bf16.mxu0 0
  %4105 = vmatpush1.bf16.xpose.msra.mxu0 0
  %4106 = vmatprep.subr.bf16.mxu0 0
  %4107 = vmatpush1.bf16.xpose.msra.mxu0 0
  %4108 = vmatprep.subr.bf16.mxu0 0
  %4109 = vmatpush1.bf16.xpose.msra.mxu0 0
  %4110 = vmatprep.subr.bf16.mxu0 0
  %4111 = vmatpush1.bf16.xpose.msra.mxu0 0
  %4112 = vmatprep.subr.bf16.mxu0 0
  %4113 = vmatpush1.bf16.xpose.msra.mxu0 0
  %4114 = vmatprep.subr.bf16.mxu0 0
  %4115 = vmatpush1.bf16.xpose.msra.mxu0 %v4098
  %4116 = vmatprep.subr.bf16.mxu0 0
  %4117 = vmatpush2.bf16.xpose.msra.mxu0 0
  %4118 = vmatprep.subr.bf16.mxu0 0
  %4119 = vmatpush2.bf16.xpose.msra.mxu0 0
  %4120 = vmatprep.subr.bf16.mxu0 0
  %4121 = vmatpush2.bf16.xpose.msra.mxu0 0
  %4122 = vmatprep.subr.bf16.mxu0 0
  %4123 = vmatpush2.bf16.xpose.msra.mxu0 0
  %4124 = vmatprep.subr.bf16.mxu0 0
  %4125 = vmatpush2.bf16.xpose.msra.mxu0 0
  %4126 = vmatprep.subr.bf16.mxu0 0
  %4127 = vmatpush2.bf16.xpose.msra.mxu0 0
  %4128 = vmatprep.subr.bf16.mxu0 0
  %4129 = vmatpush2.bf16.xpose.msra.mxu0 0
  %4130 = vmatprep.subr.bf16.mxu0 0
  %4131 = vmatpush2.bf16.xpose.msra.mxu0 0
  %4132 = vmatprep.mubr.bf16.mxu0 0
  %4133 = vmatmul.mubr.bf16.gmra.mxu0 %v4095
  %v4134 = vpop.f32.mrf.mxu0
  %v4135 = vadd.f32 0.0, %v4134
  %v4136 = vpop.f32.mrf.mxu0
  %v4137 = vpop.f32.mrf.mxu0
  %v4138 = vpop.f32.mrf.mxu0
  %4139 = vdwg.mxu0
  %v4141 = vsel %vm456, %v3761, 0
  %v4144 = vsel %vm456, %v3789, 0
  %4146 = vmatprep.subr.bf16.mxu0 0
  %4147 = vmatpush1.bf16.xpose.msra.mxu0 0
  %4148 = vmatprep.subr.bf16.mxu0 0
  %4149 = vmatpush1.bf16.xpose.msra.mxu0 0
  %4150 = vmatprep.subr.bf16.mxu0 0
  %4151 = vmatpush1.bf16.xpose.msra.mxu0 0
  %4152 = vmatprep.subr.bf16.mxu0 0
  %4153 = vmatpush1.bf16.xpose.msra.mxu0 0
  %4154 = vmatprep.subr.bf16.mxu0 0
  %4155 = vmatpush1.bf16.xpose.msra.mxu0 0
  %4156 = vmatprep.subr.bf16.mxu0 0
  %4157 = vmatpush1.bf16.xpose.msra.mxu0 0
  %4158 = vmatprep.subr.bf16.mxu0 0
  %4159 = vmatpush1.bf16.xpose.msra.mxu0 0
  %4160 = vmatprep.subr.bf16.mxu0 0
  %4161 = vmatpush1.bf16.xpose.msra.mxu0 %v4144
  %4162 = vmatprep.subr.bf16.mxu0 0
  %4163 = vmatpush2.bf16.xpose.msra.mxu0 0
  %4164 = vmatprep.subr.bf16.mxu0 0
  %4165 = vmatpush2.bf16.xpose.msra.mxu0 0
  %4166 = vmatprep.subr.bf16.mxu0 0
  %4167 = vmatpush2.bf16.xpose.msra.mxu0 0
  %4168 = vmatprep.subr.bf16.mxu0 0
  %4169 = vmatpush2.bf16.xpose.msra.mxu0 0
  %4170 = vmatprep.subr.bf16.mxu0 0
  %4171 = vmatpush2.bf16.xpose.msra.mxu0 0
  %4172 = vmatprep.subr.bf16.mxu0 0
  %4173 = vmatpush2.bf16.xpose.msra.mxu0 0
  %4174 = vmatprep.subr.bf16.mxu0 0
  %4175 = vmatpush2.bf16.xpose.msra.mxu0 0
  %4176 = vmatprep.subr.bf16.mxu0 0
  %4177 = vmatpush2.bf16.xpose.msra.mxu0 0
  %4178 = vmatprep.mubr.bf16.mxu0 0
  %4179 = vmatmul.mubr.bf16.gmra.mxu0 %v4141
  %v4180 = vpop.f32.mrf.mxu0
  %v4181 = vadd.f32 0.0, %v4180
  %v4182 = vpop.f32.mrf.mxu0
  %v4183 = vpop.f32.mrf.mxu0
  %v4184 = vpop.f32.mrf.mxu0
  %4185 = vdwg.mxu0
  %v4186 = vmul.f32 %v3859, 0.35355338
  %v4187 = vmul.f32 %v3905, 0.35355338
  %v4188 = vmul.f32 %v3951, 0.35355338
  %v4189 = vmul.f32 %v3997, 0.35355338
  %v4190 = vmul.f32 %v4043, 0.35355338
  %v4191 = vmul.f32 %v4089, 0.35355338
  %v4192 = vmul.f32 %v4135, 0.35355338
  %v4193 = vmul.f32 %v4181, 0.35355338
  %v4194 = vsel %vm456, %v4186, -inf
  %4195 = vmax.xlane.f32.xlu0 %v4194
  %v4196 = vpop.xlane.xlu0 %4195
  %v4197 = vsel %vm456, %v4187, -inf
  %4198 = vmax.xlane.f32.xlu0 %v4197
  %v4199 = vpop.xlane.xlu0 %4198
  %v4200 = vsel %vm456, %v4188, -inf
  %4201 = vmax.xlane.f32.xlu0 %v4200
  %v4202 = vpop.xlane.xlu0 %4201
  %v4203 = vsel %vm456, %v4189, -inf
  %4204 = vmax.xlane.f32.xlu0 %v4203
  %v4205 = vpop.xlane.xlu0 %4204
  %v4206 = vsel %vm456, %v4190, -inf
  %4207 = vmax.xlane.f32.xlu0 %v4206
  %v4208 = vpop.xlane.xlu0 %4207
  %v4209 = vsel %vm456, %v4191, -inf
  %4210 = vmax.xlane.f32.xlu0 %v4209
  %v4211 = vpop.xlane.xlu0 %4210
  %v4212 = vsel %vm456, %v4192, -inf
  %4213 = vmax.xlane.f32.xlu0 %v4212
  %v4214 = vpop.xlane.xlu0 %4213
  %v4215 = vsel %vm456, %v4193, -inf
  %4216 = vmax.xlane.f32.xlu0 %v4215
  %v4217 = vpop.xlane.xlu0 %4216
  %v4218 = vsub.f32 %v4186, %v4196
  %v4219 = vsub.f32 %v4187, %v4199
  %v4220 = vsub.f32 %v4188, %v4202
  %v4221 = vsub.f32 %v4189, %v4205
  %v4222 = vsub.f32 %v4190, %v4208
  %v4223 = vsub.f32 %v4191, %v4211
  %v4224 = vsub.f32 %v4192, %v4214
  %v4225 = vsub.f32 %v4193, %v4217
  %v4226 = vmul.f32 %v4218, 1.442695
  %v4227 = vpow.pop %v4226
  %v4228 = vmul.f32 %v4219, 1.442695
  %v4229 = vpow.pop %v4228
  %v4230 = vmul.f32 %v4220, 1.442695
  %v4231 = vpow.pop %v4230
  %v4232 = vmul.f32 %v4221, 1.442695
  %v4233 = vpow.pop %v4232
  %v4234 = vmul.f32 %v4222, 1.442695
  %v4235 = vpow.pop %v4234
  %v4236 = vmul.f32 %v4223, 1.442695
  %v4237 = vpow.pop %v4236
  %v4238 = vmul.f32 %v4224, 1.442695
  %v4239 = vpow.pop %v4238
  %v4240 = vmul.f32 %v4225, 1.442695
  %v4241 = vpow.pop %v4240
  %v4242 = vsel %vm456, %v4227, 0.0
  %4243 = vadd.xlane.f32.xlu0 %v4242
  %v4244 = vpop.xlane.xlu0 %4243
  %v4245 = vsel %vm456, %v4229, 0.0
  %4246 = vadd.xlane.f32.xlu0 %v4245
  %v4247 = vpop.xlane.xlu0 %4246
  %v4248 = vsel %vm456, %v4231, 0.0
  %4249 = vadd.xlane.f32.xlu0 %v4248
  %v4250 = vpop.xlane.xlu0 %4249
  %v4251 = vsel %vm456, %v4233, 0.0
  %4252 = vadd.xlane.f32.xlu0 %v4251
  %v4253 = vpop.xlane.xlu0 %4252
  %v4254 = vsel %vm456, %v4235, 0.0
  %4255 = vadd.xlane.f32.xlu0 %v4254
  %v4256 = vpop.xlane.xlu0 %4255
  %v4257 = vsel %vm456, %v4237, 0.0
  %4258 = vadd.xlane.f32.xlu0 %v4257
  %v4259 = vpop.xlane.xlu0 %4258
  %v4260 = vsel %vm456, %v4239, 0.0
  %4261 = vadd.xlane.f32.xlu0 %v4260
  %v4262 = vpop.xlane.xlu0 %4261
  %v4263 = vsel %vm456, %v4241, 0.0
  %4264 = vadd.xlane.f32.xlu0 %v4263
  %v4265 = vpop.xlane.xlu0 %4264
  %v4266 = vrcp.pop %v4244
  %v4267 = vrcp.pop %v4247
  %v4268 = vrcp.pop %v4250
  %v4269 = vrcp.pop %v4253
  %v4270 = vrcp.pop %v4256
  %v4271 = vrcp.pop %v4259
  %v4272 = vrcp.pop %v4262
  %v4273 = vrcp.pop %v4265
  %v4274 = vmul.f32 %v4227, %v4266
  %v4275 = vmul.f32 %v4229, %v4267
  %v4276 = vmul.f32 %v4231, %v4268
  %v4277 = vmul.f32 %v4233, %v4269
  %v4278 = vmul.f32 %v4235, %v4270
  %v4279 = vmul.f32 %v4237, %v4271
  %v4280 = vmul.f32 %v4239, %v4272
  %v4281 = vmul.f32 %v4241, %v4273
  %v4282 = vpack.c.bf16 %v4274, %v4274
  %v4283 = vpack.c.bf16 %v4275, %v4275
  %v4284 = vpack.c.bf16 %v4276, %v4276
  %v4285 = vpack.c.bf16 %v4277, %v4277
  %v4286 = vpack.c.bf16 %v4278, %v4278
  %v4287 = vpack.c.bf16 %v4279, %v4279
  %v4288 = vpack.c.bf16 %v4280, %v4280
  %v4289 = vpack.c.bf16 %v4281, %v4281
  %v4291 = vsel %vm456, %v4282, 0
  %v4294 = vsel %vm932, %v3810, 0
  %4296 = vmatprep.subr.bf16.mxu0 0
  %4297 = vmatpush1.bf16.msra.mxu0 0
  %4298 = vmatprep.subr.bf16.mxu0 0
  %4299 = vmatpush1.bf16.msra.mxu0 0
  %4300 = vmatprep.subr.bf16.mxu0 0
  %4301 = vmatpush1.bf16.msra.mxu0 0
  %4302 = vmatprep.subr.bf16.mxu0 0
  %4303 = vmatpush1.bf16.msra.mxu0 0
  %4304 = vmatprep.subr.bf16.mxu0 0
  %4305 = vmatpush1.bf16.msra.mxu0 0
  %4306 = vmatprep.subr.bf16.mxu0 0
  %4307 = vmatpush1.bf16.msra.mxu0 0
  %4308 = vmatprep.subr.bf16.mxu0 0
  %4309 = vmatpush1.bf16.msra.mxu0 0
  %4310 = vmatprep.subr.bf16.mxu0 0
  %4311 = vmatpush1.bf16.msra.mxu0 %v4294
  %4312 = vmatprep.subr.bf16.mxu0 0
  %4313 = vmatpush2.bf16.msra.mxu0 0
  %4314 = vmatprep.subr.bf16.mxu0 0
  %4315 = vmatpush2.bf16.msra.mxu0 0
  %4316 = vmatprep.subr.bf16.mxu0 0
  %4317 = vmatpush2.bf16.msra.mxu0 0
  %4318 = vmatprep.subr.bf16.mxu0 0
  %4319 = vmatpush2.bf16.msra.mxu0 0
  %4320 = vmatprep.subr.bf16.mxu0 0
  %4321 = vmatpush2.bf16.msra.mxu0 0
  %4322 = vmatprep.subr.bf16.mxu0 0
  %4323 = vmatpush2.bf16.msra.mxu0 0
  %4324 = vmatprep.subr.bf16.mxu0 0
  %4325 = vmatpush2.bf16.msra.mxu0 0
  %4326 = vmatprep.subr.bf16.mxu0 0
  %4327 = vmatpush2.bf16.msra.mxu0 0
  %4328 = vmatprep.mubr.bf16.mxu0 0
  %4329 = vmatmul.mubr.bf16.gmra.mxu0 %v4291
  %v4330 = vpop.f32.mrf.mxu0
  %v4331 = vadd.f32 0.0, %v4330
  %v4332 = vpop.f32.mrf.mxu0
  %v4333 = vpop.f32.mrf.mxu0
  %v4334 = vpop.f32.mrf.mxu0
  %4335 = vdwg.mxu0
  %v4337 = vsel %vm456, %v4283, 0
  %v4340 = vsel %vm932, %v3811, 0
  %4342 = vmatprep.subr.bf16.mxu0 0
  %4343 = vmatpush1.bf16.msra.mxu0 0
  %4344 = vmatprep.subr.bf16.mxu0 0
  %4345 = vmatpush1.bf16.msra.mxu0 0
  %4346 = vmatprep.subr.bf16.mxu0 0
  %4347 = vmatpush1.bf16.msra.mxu0 0
  %4348 = vmatprep.subr.bf16.mxu0 0
  %4349 = vmatpush1.bf16.msra.mxu0 0
  %4350 = vmatprep.subr.bf16.mxu0 0
  %4351 = vmatpush1.bf16.msra.mxu0 0
  %4352 = vmatprep.subr.bf16.mxu0 0
  %4353 = vmatpush1.bf16.msra.mxu0 0
  %4354 = vmatprep.subr.bf16.mxu0 0
  %4355 = vmatpush1.bf16.msra.mxu0 0
  %4356 = vmatprep.subr.bf16.mxu0 0
  %4357 = vmatpush1.bf16.msra.mxu0 %v4340
  %4358 = vmatprep.subr.bf16.mxu0 0
  %4359 = vmatpush2.bf16.msra.mxu0 0
  %4360 = vmatprep.subr.bf16.mxu0 0
  %4361 = vmatpush2.bf16.msra.mxu0 0
  %4362 = vmatprep.subr.bf16.mxu0 0
  %4363 = vmatpush2.bf16.msra.mxu0 0
  %4364 = vmatprep.subr.bf16.mxu0 0
  %4365 = vmatpush2.bf16.msra.mxu0 0
  %4366 = vmatprep.subr.bf16.mxu0 0
  %4367 = vmatpush2.bf16.msra.mxu0 0
  %4368 = vmatprep.subr.bf16.mxu0 0
  %4369 = vmatpush2.bf16.msra.mxu0 0
  %4370 = vmatprep.subr.bf16.mxu0 0
  %4371 = vmatpush2.bf16.msra.mxu0 0
  %4372 = vmatprep.subr.bf16.mxu0 0
  %4373 = vmatpush2.bf16.msra.mxu0 0
  %4374 = vmatprep.mubr.bf16.mxu0 0
  %4375 = vmatmul.mubr.bf16.gmra.mxu0 %v4337
  %v4376 = vpop.f32.mrf.mxu0
  %v4377 = vadd.f32 0.0, %v4376
  %v4378 = vpop.f32.mrf.mxu0
  %v4379 = vpop.f32.mrf.mxu0
  %v4380 = vpop.f32.mrf.mxu0
  %4381 = vdwg.mxu0
  %v4383 = vsel %vm456, %v4284, 0
  %v4386 = vsel %vm932, %v3812, 0
  %4388 = vmatprep.subr.bf16.mxu0 0
  %4389 = vmatpush1.bf16.msra.mxu0 0
  %4390 = vmatprep.subr.bf16.mxu0 0
  %4391 = vmatpush1.bf16.msra.mxu0 0
  %4392 = vmatprep.subr.bf16.mxu0 0
  %4393 = vmatpush1.bf16.msra.mxu0 0
  %4394 = vmatprep.subr.bf16.mxu0 0
  %4395 = vmatpush1.bf16.msra.mxu0 0
  %4396 = vmatprep.subr.bf16.mxu0 0
  %4397 = vmatpush1.bf16.msra.mxu0 0
  %4398 = vmatprep.subr.bf16.mxu0 0
  %4399 = vmatpush1.bf16.msra.mxu0 0
  %4400 = vmatprep.subr.bf16.mxu0 0
  %4401 = vmatpush1.bf16.msra.mxu0 0
  %4402 = vmatprep.subr.bf16.mxu0 0
  %4403 = vmatpush1.bf16.msra.mxu0 %v4386
  %4404 = vmatprep.subr.bf16.mxu0 0
  %4405 = vmatpush2.bf16.msra.mxu0 0
  %4406 = vmatprep.subr.bf16.mxu0 0
  %4407 = vmatpush2.bf16.msra.mxu0 0
  %4408 = vmatprep.subr.bf16.mxu0 0
  %4409 = vmatpush2.bf16.msra.mxu0 0
  %4410 = vmatprep.subr.bf16.mxu0 0
  %4411 = vmatpush2.bf16.msra.mxu0 0
  %4412 = vmatprep.subr.bf16.mxu0 0
  %4413 = vmatpush2.bf16.msra.mxu0 0
  %4414 = vmatprep.subr.bf16.mxu0 0
  %4415 = vmatpush2.bf16.msra.mxu0 0
  %4416 = vmatprep.subr.bf16.mxu0 0
  %4417 = vmatpush2.bf16.msra.mxu0 0
  %4418 = vmatprep.subr.bf16.mxu0 0
  %4419 = vmatpush2.bf16.msra.mxu0 0
  %4420 = vmatprep.mubr.bf16.mxu0 0
  %4421 = vmatmul.mubr.bf16.gmra.mxu0 %v4383
  %v4422 = vpop.f32.mrf.mxu0
  %v4423 = vadd.f32 0.0, %v4422
  %v4424 = vpop.f32.mrf.mxu0
  %v4425 = vpop.f32.mrf.mxu0
  %v4426 = vpop.f32.mrf.mxu0
  %4427 = vdwg.mxu0
  %v4429 = vsel %vm456, %v4285, 0
  %v4432 = vsel %vm932, %v3813, 0
  %4434 = vmatprep.subr.bf16.mxu0 0
  %4435 = vmatpush1.bf16.msra.mxu0 0
  %4436 = vmatprep.subr.bf16.mxu0 0
  %4437 = vmatpush1.bf16.msra.mxu0 0
  %4438 = vmatprep.subr.bf16.mxu0 0
  %4439 = vmatpush1.bf16.msra.mxu0 0
  %4440 = vmatprep.subr.bf16.mxu0 0
  %4441 = vmatpush1.bf16.msra.mxu0 0
  %4442 = vmatprep.subr.bf16.mxu0 0
  %4443 = vmatpush1.bf16.msra.mxu0 0
  %4444 = vmatprep.subr.bf16.mxu0 0
  %4445 = vmatpush1.bf16.msra.mxu0 0
  %4446 = vmatprep.subr.bf16.mxu0 0
  %4447 = vmatpush1.bf16.msra.mxu0 0
  %4448 = vmatprep.subr.bf16.mxu0 0
  %4449 = vmatpush1.bf16.msra.mxu0 %v4432
  %4450 = vmatprep.subr.bf16.mxu0 0
  %4451 = vmatpush2.bf16.msra.mxu0 0
  %4452 = vmatprep.subr.bf16.mxu0 0
  %4453 = vmatpush2.bf16.msra.mxu0 0
  %4454 = vmatprep.subr.bf16.mxu0 0
  %4455 = vmatpush2.bf16.msra.mxu0 0
  %4456 = vmatprep.subr.bf16.mxu0 0
  %4457 = vmatpush2.bf16.msra.mxu0 0
  %4458 = vmatprep.subr.bf16.mxu0 0
  %4459 = vmatpush2.bf16.msra.mxu0 0
  %4460 = vmatprep.subr.bf16.mxu0 0
  %4461 = vmatpush2.bf16.msra.mxu0 0
  %4462 = vmatprep.subr.bf16.mxu0 0
  %4463 = vmatpush2.bf16.msra.mxu0 0
  %4464 = vmatprep.subr.bf16.mxu0 0
  %4465 = vmatpush2.bf16.msra.mxu0 0
  %4466 = vmatprep.mubr.bf16.mxu0 0
  %4467 = vmatmul.mubr.bf16.gmra.mxu0 %v4429
  %v4468 = vpop.f32.mrf.mxu0
  %v4469 = vadd.f32 0.0, %v4468
  %v4470 = vpop.f32.mrf.mxu0
  %v4471 = vpop.f32.mrf.mxu0
  %v4472 = vpop.f32.mrf.mxu0
  %4473 = vdwg.mxu0
  %v4475 = vsel %vm456, %v4286, 0
  %v4478 = vsel %vm932, %v3814, 0
  %4480 = vmatprep.subr.bf16.mxu0 0
  %4481 = vmatpush1.bf16.msra.mxu0 0
  %4482 = vmatprep.subr.bf16.mxu0 0
  %4483 = vmatpush1.bf16.msra.mxu0 0
  %4484 = vmatprep.subr.bf16.mxu0 0
  %4485 = vmatpush1.bf16.msra.mxu0 0
  %4486 = vmatprep.subr.bf16.mxu0 0
  %4487 = vmatpush1.bf16.msra.mxu0 0
  %4488 = vmatprep.subr.bf16.mxu0 0
  %4489 = vmatpush1.bf16.msra.mxu0 0
  %4490 = vmatprep.subr.bf16.mxu0 0
  %4491 = vmatpush1.bf16.msra.mxu0 0
  %4492 = vmatprep.subr.bf16.mxu0 0
  %4493 = vmatpush1.bf16.msra.mxu0 0
  %4494 = vmatprep.subr.bf16.mxu0 0
  %4495 = vmatpush1.bf16.msra.mxu0 %v4478
  %4496 = vmatprep.subr.bf16.mxu0 0
  %4497 = vmatpush2.bf16.msra.mxu0 0
  %4498 = vmatprep.subr.bf16.mxu0 0
  %4499 = vmatpush2.bf16.msra.mxu0 0
  %4500 = vmatprep.subr.bf16.mxu0 0
  %4501 = vmatpush2.bf16.msra.mxu0 0
  %4502 = vmatprep.subr.bf16.mxu0 0
  %4503 = vmatpush2.bf16.msra.mxu0 0
  %4504 = vmatprep.subr.bf16.mxu0 0
  %4505 = vmatpush2.bf16.msra.mxu0 0
  %4506 = vmatprep.subr.bf16.mxu0 0
  %4507 = vmatpush2.bf16.msra.mxu0 0
  %4508 = vmatprep.subr.bf16.mxu0 0
  %4509 = vmatpush2.bf16.msra.mxu0 0
  %4510 = vmatprep.subr.bf16.mxu0 0
  %4511 = vmatpush2.bf16.msra.mxu0 0
  %4512 = vmatprep.mubr.bf16.mxu0 0
  %4513 = vmatmul.mubr.bf16.gmra.mxu0 %v4475
  %v4514 = vpop.f32.mrf.mxu0
  %v4515 = vadd.f32 0.0, %v4514
  %v4516 = vpop.f32.mrf.mxu0
  %v4517 = vpop.f32.mrf.mxu0
  %v4518 = vpop.f32.mrf.mxu0
  %4519 = vdwg.mxu0
  %v4521 = vsel %vm456, %v4287, 0
  %v4524 = vsel %vm932, %v3815, 0
  %4526 = vmatprep.subr.bf16.mxu0 0
  %4527 = vmatpush1.bf16.msra.mxu0 0
  %4528 = vmatprep.subr.bf16.mxu0 0
  %4529 = vmatpush1.bf16.msra.mxu0 0
  %4530 = vmatprep.subr.bf16.mxu0 0
  %4531 = vmatpush1.bf16.msra.mxu0 0
  %4532 = vmatprep.subr.bf16.mxu0 0
  %4533 = vmatpush1.bf16.msra.mxu0 0
  %4534 = vmatprep.subr.bf16.mxu0 0
  %4535 = vmatpush1.bf16.msra.mxu0 0
  %4536 = vmatprep.subr.bf16.mxu0 0
  %4537 = vmatpush1.bf16.msra.mxu0 0
  %4538 = vmatprep.subr.bf16.mxu0 0
  %4539 = vmatpush1.bf16.msra.mxu0 0
  %4540 = vmatprep.subr.bf16.mxu0 0
  %4541 = vmatpush1.bf16.msra.mxu0 %v4524
  %4542 = vmatprep.subr.bf16.mxu0 0
  %4543 = vmatpush2.bf16.msra.mxu0 0
  %4544 = vmatprep.subr.bf16.mxu0 0
  %4545 = vmatpush2.bf16.msra.mxu0 0
  %4546 = vmatprep.subr.bf16.mxu0 0
  %4547 = vmatpush2.bf16.msra.mxu0 0
  %4548 = vmatprep.subr.bf16.mxu0 0
  %4549 = vmatpush2.bf16.msra.mxu0 0
  %4550 = vmatprep.subr.bf16.mxu0 0
  %4551 = vmatpush2.bf16.msra.mxu0 0
  %4552 = vmatprep.subr.bf16.mxu0 0
  %4553 = vmatpush2.bf16.msra.mxu0 0
  %4554 = vmatprep.subr.bf16.mxu0 0
  %4555 = vmatpush2.bf16.msra.mxu0 0
  %4556 = vmatprep.subr.bf16.mxu0 0
  %4557 = vmatpush2.bf16.msra.mxu0 0
  %4558 = vmatprep.mubr.bf16.mxu0 0
  %4559 = vmatmul.mubr.bf16.gmra.mxu0 %v4521
  %v4560 = vpop.f32.mrf.mxu0
  %v4561 = vadd.f32 0.0, %v4560
  %v4562 = vpop.f32.mrf.mxu0
  %v4563 = vpop.f32.mrf.mxu0
  %v4564 = vpop.f32.mrf.mxu0
  %4565 = vdwg.mxu0
  %v4567 = vsel %vm456, %v4288, 0
  %v4570 = vsel %vm932, %v3816, 0
  %4572 = vmatprep.subr.bf16.mxu0 0
  %4573 = vmatpush1.bf16.msra.mxu0 0
  %4574 = vmatprep.subr.bf16.mxu0 0
  %4575 = vmatpush1.bf16.msra.mxu0 0
  %4576 = vmatprep.subr.bf16.mxu0 0
  %4577 = vmatpush1.bf16.msra.mxu0 0
  %4578 = vmatprep.subr.bf16.mxu0 0
  %4579 = vmatpush1.bf16.msra.mxu0 0
  %4580 = vmatprep.subr.bf16.mxu0 0
  %4581 = vmatpush1.bf16.msra.mxu0 0
  %4582 = vmatprep.subr.bf16.mxu0 0
  %4583 = vmatpush1.bf16.msra.mxu0 0
  %4584 = vmatprep.subr.bf16.mxu0 0
  %4585 = vmatpush1.bf16.msra.mxu0 0
  %4586 = vmatprep.subr.bf16.mxu0 0
  %4587 = vmatpush1.bf16.msra.mxu0 %v4570
  %4588 = vmatprep.subr.bf16.mxu0 0
  %4589 = vmatpush2.bf16.msra.mxu0 0
  %4590 = vmatprep.subr.bf16.mxu0 0
  %4591 = vmatpush2.bf16.msra.mxu0 0
  %4592 = vmatprep.subr.bf16.mxu0 0
  %4593 = vmatpush2.bf16.msra.mxu0 0
  %4594 = vmatprep.subr.bf16.mxu0 0
  %4595 = vmatpush2.bf16.msra.mxu0 0
  %4596 = vmatprep.subr.bf16.mxu0 0
  %4597 = vmatpush2.bf16.msra.mxu0 0
  %4598 = vmatprep.subr.bf16.mxu0 0
  %4599 = vmatpush2.bf16.msra.mxu0 0
  %4600 = vmatprep.subr.bf16.mxu0 0
  %4601 = vmatpush2.bf16.msra.mxu0 0
  %4602 = vmatprep.subr.bf16.mxu0 0
  %4603 = vmatpush2.bf16.msra.mxu0 0
  %4604 = vmatprep.mubr.bf16.mxu0 0
  %4605 = vmatmul.mubr.bf16.gmra.mxu0 %v4567
  %v4606 = vpop.f32.mrf.mxu0
  %v4607 = vadd.f32 0.0, %v4606
  %v4608 = vpop.f32.mrf.mxu0
  %v4609 = vpop.f32.mrf.mxu0
  %v4610 = vpop.f32.mrf.mxu0
  %4611 = vdwg.mxu0
  %v4613 = vsel %vm456, %v4289, 0
  %v4616 = vsel %vm932, %v3817, 0
  %4618 = vmatprep.subr.bf16.mxu0 0
  %4619 = vmatpush1.bf16.msra.mxu0 0
  %4620 = vmatprep.subr.bf16.mxu0 0
  %4621 = vmatpush1.bf16.msra.mxu0 0
  %4622 = vmatprep.subr.bf16.mxu0 0
  %4623 = vmatpush1.bf16.msra.mxu0 0
  %4624 = vmatprep.subr.bf16.mxu0 0
  %4625 = vmatpush1.bf16.msra.mxu0 0
  %4626 = vmatprep.subr.bf16.mxu0 0
  %4627 = vmatpush1.bf16.msra.mxu0 0
  %4628 = vmatprep.subr.bf16.mxu0 0
  %4629 = vmatpush1.bf16.msra.mxu0 0
  %4630 = vmatprep.subr.bf16.mxu0 0
  %4631 = vmatpush1.bf16.msra.mxu0 0
  %4632 = vmatprep.subr.bf16.mxu0 0
  %4633 = vmatpush1.bf16.msra.mxu0 %v4616
  %4634 = vmatprep.subr.bf16.mxu0 0
  %4635 = vmatpush2.bf16.msra.mxu0 0
  %4636 = vmatprep.subr.bf16.mxu0 0
  %4637 = vmatpush2.bf16.msra.mxu0 0
  %4638 = vmatprep.subr.bf16.mxu0 0
  %4639 = vmatpush2.bf16.msra.mxu0 0
  %4640 = vmatprep.subr.bf16.mxu0 0
  %4641 = vmatpush2.bf16.msra.mxu0 0
  %4642 = vmatprep.subr.bf16.mxu0 0
  %4643 = vmatpush2.bf16.msra.mxu0 0
  %4644 = vmatprep.subr.bf16.mxu0 0
  %4645 = vmatpush2.bf16.msra.mxu0 0
  %4646 = vmatprep.subr.bf16.mxu0 0
  %4647 = vmatpush2.bf16.msra.mxu0 0
  %4648 = vmatprep.subr.bf16.mxu0 0
  %4649 = vmatpush2.bf16.msra.mxu0 0
  %4650 = vmatprep.mubr.bf16.mxu0 0
  %4651 = vmatmul.mubr.bf16.gmra.mxu0 %v4613
  %v4652 = vpop.f32.mrf.mxu0
  %v4653 = vadd.f32 0.0, %v4652
  %v4654 = vpop.f32.mrf.mxu0
  %v4655 = vpop.f32.mrf.mxu0
  %v4656 = vpop.f32.mrf.mxu0
  %4657 = vdwg.mxu0
  %4660 = vrot.lane.b32.xlu0 %v4423, 8
  %v4661 = vpop.permute.xlu0 %4660
  %4662 = vrot.lane.b32.xlu0 %v4469, 8
  %v4663 = vpop.permute.xlu0 %4662
  %4668 = vrot.lane.b32.xlu0 %v4515, 16
  %v4669 = vpop.permute.xlu0 %4668
  %4670 = vrot.lane.b32.xlu0 %v4561, 16
  %v4671 = vpop.permute.xlu0 %4670
  %4676 = vrot.lane.b32.xlu0 %v4607, 24
  %v4677 = vpop.permute.xlu0 %4676
  %4678 = vrot.lane.b32.xlu0 %v4653, 24
  %v4679 = vpop.permute.xlu0 %4678
  %v4682 = vsel %vm456, %v4331, %v4661
  %v4683 = vsel %vm456, %v4377, %v4663
  %v4684 = vsel %vm1324, %v4682, %v4669
  %v4685 = vsel %vm1324, %v4683, %v4671
  %v4686 = vsel %vm1327, %v4684, %v4677
  %v4687 = vsel %vm1327, %v4685, %v4679
  %v4688 = vpack.c.bf16 %v4687, %v4686
  %s4689 = scalar_lea.vmem %s9, 16
  %v4690 = vld [vmem:[%s4689] sm:$0xf]
  %v4691 = vld [vmem:[%s4689 + $0x4] sm:$0xf]
  %v4692 = vld [vmem:[%s4689 + $0x8] sm:$0xf]
  %v4693 = vld [vmem:[%s4689 + $0xc] sm:$0xf]
  %s4694 = scalar_lea.vmem %s10, 1
  %v4695 = vld [vmem:[%s4694] sm:$0x1]
  %v4697 = vlaneseq
  %v4698 = vshrl.u32 %v4697, 7
  %v4699 = vsub.s32 0, %v4698
  %v4700 = vrot.slane %v4695, %v4699
  %v4706 = vunpack.c.l.b16 %v4690
  %v4707 = vunpack.c.l.b16 %v4691
  %v4708 = vunpack.c.l.b16 %v4692
  %v4709 = vunpack.c.l.b16 %v4693
  %v4710 = vpack.c.b16 %v4707, %v4706
  %v4711 = vpack.c.b16 %v4709, %v4708
  %v4715 = vsel %vm199, %v4688, 0
  %4717 = vmatprep.subr.bf16.mxu0 0
  %4718 = vmatpush1.bf16.msra.mxu0 0
  %4719 = vmatprep.subr.bf16.mxu0 0
  %4720 = vmatpush1.bf16.msra.mxu0 0
  %4721 = vmatprep.subr.bf16.mxu0 0
  %4722 = vmatpush1.bf16.msra.mxu0 0
  %4723 = vmatprep.subr.bf16.mxu0 0
  %4724 = vmatpush1.bf16.msra.mxu0 0
  %4725 = vmatprep.subr.bf16.mxu0 0
  %4726 = vmatpush1.bf16.msra.mxu0 0
  %4727 = vmatprep.subr.bf16.mxu0 0
  %4728 = vmatpush1.bf16.msra.mxu0 0
  %4729 = vmatprep.subr.bf16.mxu0 0
  %4730 = vmatpush1.bf16.msra.mxu0 %v4711
  %4731 = vmatprep.subr.bf16.mxu0 0
  %4732 = vmatpush1.bf16.msra.mxu0 %v4710
  %4733 = vmatprep.subr.bf16.mxu0 0
  %4734 = vmatpush2.bf16.msra.mxu0 0
  %4735 = vmatprep.subr.bf16.mxu0 0
  %4736 = vmatpush2.bf16.msra.mxu0 0
  %4737 = vmatprep.subr.bf16.mxu0 0
  %4738 = vmatpush2.bf16.msra.mxu0 0
  %4739 = vmatprep.subr.bf16.mxu0 0
  %4740 = vmatpush2.bf16.msra.mxu0 0
  %4741 = vmatprep.subr.bf16.mxu0 0
  %4742 = vmatpush2.bf16.msra.mxu0 0
  %4743 = vmatprep.subr.bf16.mxu0 0
  %4744 = vmatpush2.bf16.msra.mxu0 0
  %4745 = vmatprep.subr.bf16.mxu0 0
  %4746 = vmatpush2.bf16.msra.mxu0 0
  %4747 = vmatprep.subr.bf16.mxu0 0
  %4748 = vmatpush2.bf16.msra.mxu0 0
  %4749 = vmatprep.mubr.bf16.mxu0 0
  %4750 = vmatmul.mubr.bf16.gmra.mxu0 %v4715
  %v4751 = vpop.f32.mrf.mxu0
  %v4752 = vadd.f32 %v4700, %v4751
  %v4753 = vpop.f32.mrf.mxu0
  %v4754 = vpop.f32.mrf.mxu0
  %v4755 = vadd.f32 %v4700, %v4754
  %v4756 = vpop.f32.mrf.mxu0
  %4757 = vdwg.mxu0
  %v4758 = vadd.f32 %v3530, %v4752
  %v4759 = vadd.f32 %v3531, %v4755
  %s4760 = scalar_lea.vmem %s11, 1
  %v4761 = vld [vmem:[%s4760] sm:$0x1]
  %s4762 = scalar_lea.vmem %s12, 1
  %v4763 = vld [vmem:[%s4762] sm:$0x1]
  %v4764 = vsel %vm199, %v4758, 0.0
  %4765 = vadd.xlane.f32.xlu0 %v4764
  %v4766 = vpop.xlane.xlu0 %4765
  %v4767 = vsel %vm199, %v4759, 0.0
  %4768 = vadd.xlane.f32.xlu0 %v4767
  %v4769 = vpop.xlane.xlu0 %4768
  %v4770 = vmul.f32 %v4766, %v1408
  %v4771 = vmul.f32 %v4769, %v1408
  %v4772 = vsub.f32 %v4758, %v4770
  %v4773 = vsub.f32 %v4759, %v4771
  %v4774 = vmul.f32 %v4772, %v4772
  %v4775 = vmul.f32 %v4773, %v4773
  %v4776 = vsel %vm199, %v4774, 0.0
  %4777 = vadd.xlane.f32.xlu0 %v4776
  %v4778 = vpop.xlane.xlu0 %4777
  %v4779 = vsel %vm199, %v4775, 0.0
  %4780 = vadd.xlane.f32.xlu0 %v4779
  %v4781 = vpop.xlane.xlu0 %4780
  %v4782 = vmul.f32 %v4778, %v1408
  %v4783 = vmul.f32 %v4781, %v1408
  %v4784 = vadd.f32 %v4782, 1e-05
  %v4785 = vadd.f32 %v4783, 1e-05
  %v4786 = vrsqrt.pop %v4784
  %v4787 = vrsqrt.pop %v4785
  %v4788 = vmul.f32 %v4772, %v4786
  %v4789 = vmul.f32 %v4773, %v4787
  %v4791 = vlaneseq
  %v4792 = vshrl.u32 %v4791, 7
  %v4793 = vsub.s32 0, %v4792
  %v4794 = vrot.slane %v4761, %v4793
  %v4796 = vmul.f32 %v4788, %v4794
  %v4797 = vmul.f32 %v4789, %v4794
  %v4799 = vlaneseq
  %v4800 = vshrl.u32 %v4799, 7
  %v4801 = vsub.s32 0, %v4800
  %v4802 = vrot.slane %v4763, %v4801
  %v4804 = vadd.f32 %v4796, %v4802
  %v4805 = vadd.f32 %v4797, %v4802
  %v4806 = vpack.c.bf16 %v4805, %v4804
  %s4807 = scalar_lea.vmem %s13, 256
  %v4808 = vld [vmem:[%s4807] sm:$0xff]
  %v4809 = vld [vmem:[%s4807 + $0x8] sm:$0xff]
  %v4810 = vld [vmem:[%s4807 + $0x40] sm:$0xff]
  %v4811 = vld [vmem:[%s4807 + $0x48] sm:$0xff]
  %v4812 = vld [vmem:[%s4807 + $0x80] sm:$0xff]
  %v4813 = vld [vmem:[%s4807 + $0x88] sm:$0xff]
  %v4814 = vld [vmem:[%s4807 + $0xc0] sm:$0xff]
  %v4815 = vld [vmem:[%s4807 + $0xc8] sm:$0xff]
  %s4816 = scalar_lea.vmem %s14, 16
  %v4817 = vld [vmem:[%s4816] sm:$0xf]
  %v4819 = vlaneseq
  %v4820 = vshrl.u32 %v4819, 7
  %v4821 = vsub.s32 0, %v4820
  %v4822 = vrot.slane %v4817, %v4821
  %v4823 = vlaneseq
  %v4824 = vshrl.u32 %v4823, 7
  %v4825 = vsub.s32 1, %v4824
  %v4826 = vrot.slane %v4817, %v4825
  %v4827 = vlaneseq
  %v4828 = vshrl.u32 %v4827, 7
  %v4829 = vsub.s32 2, %v4828
  %v4830 = vrot.slane %v4817, %v4829
  %v4831 = vlaneseq
  %v4832 = vshrl.u32 %v4831, 7
  %v4833 = vsub.s32 3, %v4832
  %v4834 = vrot.slane %v4817, %v4833
  %v4847 = vunpack.c.l.b16 %v4808
  %v4848 = vunpack.c.h.b16 %v4808
  %v4849 = vunpack.c.l.b16 %v4809
  %v4850 = vunpack.c.h.b16 %v4809
  %v4851 = vunpack.c.l.b16 %v4810
  %v4852 = vunpack.c.h.b16 %v4810
  %v4853 = vunpack.c.l.b16 %v4811
  %v4854 = vunpack.c.h.b16 %v4811
  %v4855 = vunpack.c.l.b16 %v4812
  %v4856 = vunpack.c.h.b16 %v4812
  %v4857 = vunpack.c.l.b16 %v4813
  %v4858 = vunpack.c.h.b16 %v4813
  %v4859 = vunpack.c.l.b16 %v4814
  %v4860 = vunpack.c.h.b16 %v4814
  %v4861 = vunpack.c.l.b16 %v4815
  %v4862 = vunpack.c.h.b16 %v4815
  %v4863 = vpack.c.b16 %v4851, %v4847
  %v4864 = vpack.c.b16 %v4852, %v4848
  %v4865 = vpack.c.b16 %v4853, %v4849
  %v4866 = vpack.c.b16 %v4854, %v4850
  %v4867 = vpack.c.b16 %v4859, %v4855
  %v4868 = vpack.c.b16 %v4860, %v4856
  %v4869 = vpack.c.b16 %v4861, %v4857
  %v4870 = vpack.c.b16 %v4862, %v4858
  %v4880 = vsel %vm199, %v4806, 0
  %4882 = vmatprep.subr.bf16.mxu0 0
  %4883 = vmatpush1.bf16.msra.mxu0 0
  %4884 = vmatprep.subr.bf16.mxu0 0
  %4885 = vmatpush1.bf16.msra.mxu0 0
  %4886 = vmatprep.subr.bf16.mxu0 0
  %4887 = vmatpush1.bf16.msra.mxu0 0
  %4888 = vmatprep.subr.bf16.mxu0 0
  %4889 = vmatpush1.bf16.msra.mxu0 0
  %4890 = vmatprep.subr.bf16.mxu0 0
  %4891 = vmatpush1.bf16.msra.mxu0 0
  %4892 = vmatprep.subr.bf16.mxu0 0
  %4893 = vmatpush1.bf16.msra.mxu0 0
  %4894 = vmatprep.subr.bf16.mxu0 %v4868
  %4895 = vmatpush1.bf16.msra.mxu0 %v4867
  %4896 = vmatprep.subr.bf16.mxu0 %v4864
  %4897 = vmatpush1.bf16.msra.mxu0 %v4863
  %4898 = vmatprep.subr.bf16.mxu0 0
  %4899 = vmatpush2.bf16.msra.mxu0 0
  %4900 = vmatprep.subr.bf16.mxu0 0
  %4901 = vmatpush2.bf16.msra.mxu0 0
  %4902 = vmatprep.subr.bf16.mxu0 0
  %4903 = vmatpush2.bf16.msra.mxu0 0
  %4904 = vmatprep.subr.bf16.mxu0 0
  %4905 = vmatpush2.bf16.msra.mxu0 0
  %4906 = vmatprep.subr.bf16.mxu0 0
  %4907 = vmatpush2.bf16.msra.mxu0 0
  %4908 = vmatprep.subr.bf16.mxu0 0
  %4909 = vmatpush2.bf16.msra.mxu0 0
  %4910 = vmatprep.subr.bf16.mxu0 0
  %4911 = vmatpush2.bf16.msra.mxu0 0
  %4912 = vmatprep.subr.bf16.mxu0 0
  %4913 = vmatpush2.bf16.msra.mxu0 0
  %4914 = vmatprep.mubr.bf16.mxu0 0
  %4915 = vmatmul.mubr.bf16.gmra.mxu0 %v4880
  %v4916 = vpop.f32.mrf.mxu0
  %v4917 = vadd.f32 %v4822, %v4916
  %v4918 = vpop.f32.mrf.mxu0
  %v4919 = vadd.f32 %v4826, %v4918
  %v4920 = vpop.f32.mrf.mxu0
  %v4921 = vadd.f32 %v4822, %v4920
  %v4922 = vpop.f32.mrf.mxu0
  %v4923 = vadd.f32 %v4826, %v4922
  %4924 = vdwg.mxu0
  %4925 = vmatprep.subr.bf16.mxu0 0
  %4926 = vmatpush1.bf16.msra.mxu0 0
  %4927 = vmatprep.subr.bf16.mxu0 0
  %4928 = vmatpush1.bf16.msra.mxu0 0
  %4929 = vmatprep.subr.bf16.mxu0 0
  %4930 = vmatpush1.bf16.msra.mxu0 0
  %4931 = vmatprep.subr.bf16.mxu0 0
  %4932 = vmatpush1.bf16.msra.mxu0 0
  %4933 = vmatprep.subr.bf16.mxu0 0
  %4934 = vmatpush1.bf16.msra.mxu0 0
  %4935 = vmatprep.subr.bf16.mxu0 0
  %4936 = vmatpush1.bf16.msra.mxu0 0
  %4937 = vmatprep.subr.bf16.mxu0 %v4870
  %4938 = vmatpush1.bf16.msra.mxu0 %v4869
  %4939 = vmatprep.subr.bf16.mxu0 %v4866
  %4940 = vmatpush1.bf16.msra.mxu0 %v4865
  %4941 = vmatprep.subr.bf16.mxu0 0
  %4942 = vmatpush2.bf16.msra.mxu0 0
  %4943 = vmatprep.subr.bf16.mxu0 0
  %4944 = vmatpush2.bf16.msra.mxu0 0
  %4945 = vmatprep.subr.bf16.mxu0 0
  %4946 = vmatpush2.bf16.msra.mxu0 0
  %4947 = vmatprep.subr.bf16.mxu0 0
  %4948 = vmatpush2.bf16.msra.mxu0 0
  %4949 = vmatprep.subr.bf16.mxu0 0
  %4950 = vmatpush2.bf16.msra.mxu0 0
  %4951 = vmatprep.subr.bf16.mxu0 0
  %4952 = vmatpush2.bf16.msra.mxu0 0
  %4953 = vmatprep.subr.bf16.mxu0 0
  %4954 = vmatpush2.bf16.msra.mxu0 0
  %4955 = vmatprep.subr.bf16.mxu0 0
  %4956 = vmatpush2.bf16.msra.mxu0 0
  %4957 = vmatprep.mubr.bf16.mxu0 0
  %4958 = vmatmul.mubr.bf16.gmra.mxu0 %v4880
  %v4959 = vpop.f32.mrf.mxu0
  %v4960 = vadd.f32 %v4830, %v4959
  %v4961 = vpop.f32.mrf.mxu0
  %v4962 = vadd.f32 %v4834, %v4961
  %v4963 = vpop.f32.mrf.mxu0
  %v4964 = vadd.f32 %v4830, %v4963
  %v4965 = vpop.f32.mrf.mxu0
  %v4966 = vadd.f32 %v4834, %v4965
  %4967 = vdwg.mxu0
  %v4968 = vmax.f32 %v4917, 0.0
  %v4969 = vmax.f32 %v4919, 0.0
  %v4970 = vmax.f32 %v4960, 0.0
  %v4971 = vmax.f32 %v4962, 0.0
  %v4972 = vmax.f32 %v4921, 0.0
  %v4973 = vmax.f32 %v4923, 0.0
  %v4974 = vmax.f32 %v4964, 0.0
  %v4975 = vmax.f32 %v4966, 0.0
  %v4976 = vpack.c.bf16 %v4972, %v4968
  %v4977 = vpack.c.bf16 %v4973, %v4969
  %v4978 = vpack.c.bf16 %v4974, %v4970
  %v4979 = vpack.c.bf16 %v4975, %v4971
  %s4980 = scalar_lea.vmem %s15, 1024
  %v4981 = vld [vmem:[%s4980] sm:$0xf]
  %v4982 = vld [vmem:[%s4980 + $0x4] sm:$0xf]
  %v4983 = vld [vmem:[%s4980 + $0x8] sm:$0xf]
  %v4984 = vld [vmem:[%s4980 + $0xc] sm:$0xf]
  %v4985 = vld [vmem:[%s4980 + $0x10] sm:$0xf]
  %v4986 = vld [vmem:[%s4980 + $0x14] sm:$0xf]
  %v4987 = vld [vmem:[%s4980 + $0x18] sm:$0xf]
  %v4988 = vld [vmem:[%s4980 + $0x1c] sm:$0xf]
  %v4989 = vld [vmem:[%s4980 + $0x20] sm:$0xf]
  %v4990 = vld [vmem:[%s4980 + $0x24] sm:$0xf]
  %v4991 = vld [vmem:[%s4980 + $0x28] sm:$0xf]
  %v4992 = vld [vmem:[%s4980 + $0x2c] sm:$0xf]
  %v4993 = vld [vmem:[%s4980 + $0x30] sm:$0xf]
  %v4994 = vld [vmem:[%s4980 + $0x34] sm:$0xf]
  %v4995 = vld [vmem:[%s4980 + $0x38] sm:$0xf]
  %v4996 = vld [vmem:[%s4980 + $0x3c] sm:$0xf]
  %v4997 = vld [vmem:[%s4980 + $0x40] sm:$0xf]
  %v4998 = vld [vmem:[%s4980 + $0x44] sm:$0xf]
  %v4999 = vld [vmem:[%s4980 + $0x48] sm:$0xf]
  %v5000 = vld [vmem:[%s4980 + $0x4c] sm:$0xf]
  %v5001 = vld [vmem:[%s4980 + $0x50] sm:$0xf]
  %v5002 = vld [vmem:[%s4980 + $0x54] sm:$0xf]
  %v5003 = vld [vmem:[%s4980 + $0x58] sm:$0xf]
  %v5004 = vld [vmem:[%s4980 + $0x5c] sm:$0xf]
  %v5005 = vld [vmem:[%s4980 + $0x60] sm:$0xf]
  %v5006 = vld [vmem:[%s4980 + $0x64] sm:$0xf]
  %v5007 = vld [vmem:[%s4980 + $0x68] sm:$0xf]
  %v5008 = vld [vmem:[%s4980 + $0x6c] sm:$0xf]
  %v5009 = vld [vmem:[%s4980 + $0x70] sm:$0xf]
  %v5010 = vld [vmem:[%s4980 + $0x74] sm:$0xf]
  %v5011 = vld [vmem:[%s4980 + $0x78] sm:$0xf]
  %v5012 = vld [vmem:[%s4980 + $0x7c] sm:$0xf]
  %v5013 = vld [vmem:[%s4980 + $0x80] sm:$0xf]
  %v5014 = vld [vmem:[%s4980 + $0x84] sm:$0xf]
  %v5015 = vld [vmem:[%s4980 + $0x88] sm:$0xf]
  %v5016 = vld [vmem:[%s4980 + $0x8c] sm:$0xf]
  %v5017 = vld [vmem:[%s4980 + $0x90] sm:$0xf]
  %v5018 = vld [vmem:[%s4980 + $0x94] sm:$0xf]
  %v5019 = vld [vmem:[%s4980 + $0x98] sm:$0xf]
  %v5020 = vld [vmem:[%s4980 + $0x9c] sm:$0xf]
  %v5021 = vld [vmem:[%s4980 + $0xa0] sm:$0xf]
  %v5022 = vld [vmem:[%s4980 + $0xa4] sm:$0xf]
  %v5023 = vld [vmem:[%s4980 + $0xa8] sm:$0xf]
  %v5024 = vld [vmem:[%s4980 + $0xac] sm:$0xf]
  %v5025 = vld [vmem:[%s4980 + $0xb0] sm:$0xf]
  %v5026 = vld [vmem:[%s4980 + $0xb4] sm:$0xf]
  %v5027 = vld [vmem:[%s4980 + $0xb8] sm:$0xf]
  %v5028 = vld [vmem:[%s4980 + $0xbc] sm:$0xf]
  %v5029 = vld [vmem:[%s4980 + $0xc0] sm:$0xf]
  %v5030 = vld [vmem:[%s4980 + $0xc4] sm:$0xf]
  %v5031 = vld [vmem:[%s4980 + $0xc8] sm:$0xf]
  %v5032 = vld [vmem:[%s4980 + $0xcc] sm:$0xf]
  %v5033 = vld [vmem:[%s4980 + $0xd0] sm:$0xf]
  %v5034 = vld [vmem:[%s4980 + $0xd4] sm:$0xf]
  %v5035 = vld [vmem:[%s4980 + $0xd8] sm:$0xf]
  %v5036 = vld [vmem:[%s4980 + $0xdc] sm:$0xf]
  %v5037 = vld [vmem:[%s4980 + $0xe0] sm:$0xf]
  %v5038 = vld [vmem:[%s4980 + $0xe4] sm:$0xf]
  %v5039 = vld [vmem:[%s4980 + $0xe8] sm:$0xf]
  %v5040 = vld [vmem:[%s4980 + $0xec] sm:$0xf]
  %v5041 = vld [vmem:[%s4980 + $0xf0] sm:$0xf]
  %v5042 = vld [vmem:[%s4980 + $0xf4] sm:$0xf]
  %v5043 = vld [vmem:[%s4980 + $0xf8] sm:$0xf]
  %v5044 = vld [vmem:[%s4980 + $0xfc] sm:$0xf]
  %v5045 = vld [vmem:[%s4807 + $0x10] sm:$0xff]
  %v5046 = vld [vmem:[%s4807 + $0x18] sm:$0xff]
  %v5047 = vld [vmem:[%s4807 + $0x50] sm:$0xff]
  %v5048 = vld [vmem:[%s4807 + $0x58] sm:$0xff]
  %v5049 = vld [vmem:[%s4807 + $0x90] sm:$0xff]
  %v5050 = vld [vmem:[%s4807 + $0x98] sm:$0xff]
  %v5051 = vld [vmem:[%s4807 + $0xd0] sm:$0xff]
  %v5052 = vld [vmem:[%s4807 + $0xd8] sm:$0xff]
  %v5053 = vld [vmem:[%s4816 + $0x4] sm:$0xf]
  %v5055 = vlaneseq
  %v5056 = vshrl.u32 %v5055, 7
  %v5057 = vsub.s32 0, %v5056
  %v5058 = vrot.slane %v5053, %v5057
  %v5059 = vlaneseq
  %v5060 = vshrl.u32 %v5059, 7
  %v5061 = vsub.s32 1, %v5060
  %v5062 = vrot.slane %v5053, %v5061
  %v5063 = vlaneseq
  %v5064 = vshrl.u32 %v5063, 7
  %v5065 = vsub.s32 2, %v5064
  %v5066 = vrot.slane %v5053, %v5065
  %v5067 = vlaneseq
  %v5068 = vshrl.u32 %v5067, 7
  %v5069 = vsub.s32 3, %v5068
  %v5070 = vrot.slane %v5053, %v5069
  %v5083 = vunpack.c.l.b16 %v5045
  %v5084 = vunpack.c.h.b16 %v5045
  %v5085 = vunpack.c.l.b16 %v5046
  %v5086 = vunpack.c.h.b16 %v5046
  %v5087 = vunpack.c.l.b16 %v5047
  %v5088 = vunpack.c.h.b16 %v5047
  %v5089 = vunpack.c.l.b16 %v5048
  %v5090 = vunpack.c.h.b16 %v5048
  %v5091 = vunpack.c.l.b16 %v5049
  %v5092 = vunpack.c.h.b16 %v5049
  %v5093 = vunpack.c.l.b16 %v5050
  %v5094 = vunpack.c.h.b16 %v5050
  %v5095 = vunpack.c.l.b16 %v5051
  %v5096 = vunpack.c.h.b16 %v5051
  %v5097 = vunpack.c.l.b16 %v5052
  %v5098 = vunpack.c.h.b16 %v5052
  %v5099 = vpack.c.b16 %v5087, %v5083
  %v5100 = vpack.c.b16 %v5088, %v5084
  %v5101 = vpack.c.b16 %v5089, %v5085
  %v5102 = vpack.c.b16 %v5090, %v5086
  %v5103 = vpack.c.b16 %v5095, %v5091
  %v5104 = vpack.c.b16 %v5096, %v5092
  %v5105 = vpack.c.b16 %v5097, %v5093
  %v5106 = vpack.c.b16 %v5098, %v5094
  %5115 = vmatprep.subr.bf16.mxu0 0
  %5116 = vmatpush1.bf16.msra.mxu0 0
  %5117 = vmatprep.subr.bf16.mxu0 0
  %5118 = vmatpush1.bf16.msra.mxu0 0
  %5119 = vmatprep.subr.bf16.mxu0 0
  %5120 = vmatpush1.bf16.msra.mxu0 0
  %5121 = vmatprep.subr.bf16.mxu0 0
  %5122 = vmatpush1.bf16.msra.mxu0 0
  %5123 = vmatprep.subr.bf16.mxu0 0
  %5124 = vmatpush1.bf16.msra.mxu0 0
  %5125 = vmatprep.subr.bf16.mxu0 0
  %5126 = vmatpush1.bf16.msra.mxu0 0
  %5127 = vmatprep.subr.bf16.mxu0 %v5104
  %5128 = vmatpush1.bf16.msra.mxu0 %v5103
  %5129 = vmatprep.subr.bf16.mxu0 %v5100
  %5130 = vmatpush1.bf16.msra.mxu0 %v5099
  %5131 = vmatprep.subr.bf16.mxu0 0
  %5132 = vmatpush2.bf16.msra.mxu0 0
  %5133 = vmatprep.subr.bf16.mxu0 0
  %5134 = vmatpush2.bf16.msra.mxu0 0
  %5135 = vmatprep.subr.bf16.mxu0 0
  %5136 = vmatpush2.bf16.msra.mxu0 0
  %5137 = vmatprep.subr.bf16.mxu0 0
  %5138 = vmatpush2.bf16.msra.mxu0 0
  %5139 = vmatprep.subr.bf16.mxu0 0
  %5140 = vmatpush2.bf16.msra.mxu0 0
  %5141 = vmatprep.subr.bf16.mxu0 0
  %5142 = vmatpush2.bf16.msra.mxu0 0
  %5143 = vmatprep.subr.bf16.mxu0 0
  %5144 = vmatpush2.bf16.msra.mxu0 0
  %5145 = vmatprep.subr.bf16.mxu0 0
  %5146 = vmatpush2.bf16.msra.mxu0 0
  %5147 = vmatprep.mubr.bf16.mxu0 0
  %5148 = vmatmul.mubr.bf16.gmra.mxu0 %v4880
  %v5149 = vpop.f32.mrf.mxu0
  %v5150 = vadd.f32 %v5058, %v5149
  %v5151 = vpop.f32.mrf.mxu0
  %v5152 = vadd.f32 %v5062, %v5151
  %v5153 = vpop.f32.mrf.mxu0
  %v5154 = vadd.f32 %v5058, %v5153
  %v5155 = vpop.f32.mrf.mxu0
  %v5156 = vadd.f32 %v5062, %v5155
  %5157 = vdwg.mxu0
  %5158 = vmatprep.subr.bf16.mxu0 0
  %5159 = vmatpush1.bf16.msra.mxu0 0
  %5160 = vmatprep.subr.bf16.mxu0 0
  %5161 = vmatpush1.bf16.msra.mxu0 0
  %5162 = vmatprep.subr.bf16.mxu0 0
  %5163 = vmatpush1.bf16.msra.mxu0 0
  %5164 = vmatprep.subr.bf16.mxu0 0
  %5165 = vmatpush1.bf16.msra.mxu0 0
  %5166 = vmatprep.subr.bf16.mxu0 0
  %5167 = vmatpush1.bf16.msra.mxu0 0
  %5168 = vmatprep.subr.bf16.mxu0 0
  %5169 = vmatpush1.bf16.msra.mxu0 0
  %5170 = vmatprep.subr.bf16.mxu0 %v5106
  %5171 = vmatpush1.bf16.msra.mxu0 %v5105
  %5172 = vmatprep.subr.bf16.mxu0 %v5102
  %5173 = vmatpush1.bf16.msra.mxu0 %v5101
  %5174 = vmatprep.subr.bf16.mxu0 0
  %5175 = vmatpush2.bf16.msra.mxu0 0
  %5176 = vmatprep.subr.bf16.mxu0 0
  %5177 = vmatpush2.bf16.msra.mxu0 0
  %5178 = vmatprep.subr.bf16.mxu0 0
  %5179 = vmatpush2.bf16.msra.mxu0 0
  %5180 = vmatprep.subr.bf16.mxu0 0
  %5181 = vmatpush2.bf16.msra.mxu0 0
  %5182 = vmatprep.subr.bf16.mxu0 0
  %5183 = vmatpush2.bf16.msra.mxu0 0
  %5184 = vmatprep.subr.bf16.mxu0 0
  %5185 = vmatpush2.bf16.msra.mxu0 0
  %5186 = vmatprep.subr.bf16.mxu0 0
  %5187 = vmatpush2.bf16.msra.mxu0 0
  %5188 = vmatprep.subr.bf16.mxu0 0
  %5189 = vmatpush2.bf16.msra.mxu0 0
  %5190 = vmatprep.mubr.bf16.mxu0 0
  %5191 = vmatmul.mubr.bf16.gmra.mxu0 %v4880
  %v5192 = vpop.f32.mrf.mxu0
  %v5193 = vadd.f32 %v5066, %v5192
  %v5194 = vpop.f32.mrf.mxu0
  %v5195 = vadd.f32 %v5070, %v5194
  %v5196 = vpop.f32.mrf.mxu0
  %v5197 = vadd.f32 %v5066, %v5196
  %v5198 = vpop.f32.mrf.mxu0
  %v5199 = vadd.f32 %v5070, %v5198
  %5200 = vdwg.mxu0
  %v5201 = vmax.f32 %v5150, 0.0
  %v5202 = vmax.f32 %v5152, 0.0
  %v5203 = vmax.f32 %v5193, 0.0
  %v5204 = vmax.f32 %v5195, 0.0
  %v5205 = vmax.f32 %v5154, 0.0
  %v5206 = vmax.f32 %v5156, 0.0
  %v5207 = vmax.f32 %v5197, 0.0
  %v5208 = vmax.f32 %v5199, 0.0
  %v5209 = vpack.c.bf16 %v5205, %v5201
  %v5210 = vpack.c.bf16 %v5206, %v5202
  %v5211 = vpack.c.bf16 %v5207, %v5203
  %v5212 = vpack.c.bf16 %v5208, %v5204
  %v5213 = vld [vmem:[%s4980 + $0x100] sm:$0xf]
  %v5214 = vld [vmem:[%s4980 + $0x104] sm:$0xf]
  %v5215 = vld [vmem:[%s4980 + $0x108] sm:$0xf]
  %v5216 = vld [vmem:[%s4980 + $0x10c] sm:$0xf]
  %v5217 = vld [vmem:[%s4980 + $0x110] sm:$0xf]
  %v5218 = vld [vmem:[%s4980 + $0x114] sm:$0xf]
  %v5219 = vld [vmem:[%s4980 + $0x118] sm:$0xf]
  %v5220 = vld [vmem:[%s4980 + $0x11c] sm:$0xf]
  %v5221 = vld [vmem:[%s4980 + $0x120] sm:$0xf]
  %v5222 = vld [vmem:[%s4980 + $0x124] sm:$0xf]
  %v5223 = vld [vmem:[%s4980 + $0x128] sm:$0xf]
  %v5224 = vld [vmem:[%s4980 + $0x12c] sm:$0xf]
  %v5225 = vld [vmem:[%s4980 + $0x130] sm:$0xf]
  %v5226 = vld [vmem:[%s4980 + $0x134] sm:$0xf]
  %v5227 = vld [vmem:[%s4980 + $0x138] sm:$0xf]
  %v5228 = vld [vmem:[%s4980 + $0x13c] sm:$0xf]
  %v5229 = vld [vmem:[%s4980 + $0x140] sm:$0xf]
  %v5230 = vld [vmem:[%s4980 + $0x144] sm:$0xf]
  %v5231 = vld [vmem:[%s4980 + $0x148] sm:$0xf]
  %v5232 = vld [vmem:[%s4980 + $0x14c] sm:$0xf]
  %v5233 = vld [vmem:[%s4980 + $0x150] sm:$0xf]
  %v5234 = vld [vmem:[%s4980 + $0x154] sm:$0xf]
  %v5235 = vld [vmem:[%s4980 + $0x158] sm:$0xf]
  %v5236 = vld [vmem:[%s4980 + $0x15c] sm:$0xf]
  %v5237 = vld [vmem:[%s4980 + $0x160] sm:$0xf]
  %v5238 = vld [vmem:[%s4980 + $0x164] sm:$0xf]
  %v5239 = vld [vmem:[%s4980 + $0x168] sm:$0xf]
  %v5240 = vld [vmem:[%s4980 + $0x16c] sm:$0xf]
  %v5241 = vld [vmem:[%s4980 + $0x170] sm:$0xf]
  %v5242 = vld [vmem:[%s4980 + $0x174] sm:$0xf]
  %v5243 = vld [vmem:[%s4980 + $0x178] sm:$0xf]
  %v5244 = vld [vmem:[%s4980 + $0x17c] sm:$0xf]
  %v5245 = vld [vmem:[%s4980 + $0x180] sm:$0xf]
  %v5246 = vld [vmem:[%s4980 + $0x184] sm:$0xf]
  %v5247 = vld [vmem:[%s4980 + $0x188] sm:$0xf]
  %v5248 = vld [vmem:[%s4980 + $0x18c] sm:$0xf]
  %v5249 = vld [vmem:[%s4980 + $0x190] sm:$0xf]
  %v5250 = vld [vmem:[%s4980 + $0x194] sm:$0xf]
  %v5251 = vld [vmem:[%s4980 + $0x198] sm:$0xf]
  %v5252 = vld [vmem:[%s4980 + $0x19c] sm:$0xf]
  %v5253 = vld [vmem:[%s4980 + $0x1a0] sm:$0xf]
  %v5254 = vld [vmem:[%s4980 + $0x1a4] sm:$0xf]
  %v5255 = vld [vmem:[%s4980 + $0x1a8] sm:$0xf]
  %v5256 = vld [vmem:[%s4980 + $0x1ac] sm:$0xf]
  %v5257 = vld [vmem:[%s4980 + $0x1b0] sm:$0xf]
  %v5258 = vld [vmem:[%s4980 + $0x1b4] sm:$0xf]
  %v5259 = vld [vmem:[%s4980 + $0x1b8] sm:$0xf]
  %v5260 = vld [vmem:[%s4980 + $0x1bc] sm:$0xf]
  %v5261 = vld [vmem:[%s4980 + $0x1c0] sm:$0xf]
  %v5262 = vld [vmem:[%s4980 + $0x1c4] sm:$0xf]
  %v5263 = vld [vmem:[%s4980 + $0x1c8] sm:$0xf]
  %v5264 = vld [vmem:[%s4980 + $0x1cc] sm:$0xf]
  %v5265 = vld [vmem:[%s4980 + $0x1d0] sm:$0xf]
  %v5266 = vld [vmem:[%s4980 + $0x1d4] sm:$0xf]
  %v5267 = vld [vmem:[%s4980 + $0x1d8] sm:$0xf]
  %v5268 = vld [vmem:[%s4980 + $0x1dc] sm:$0xf]
  %v5269 = vld [vmem:[%s4980 + $0x1e0] sm:$0xf]
  %v5270 = vld [vmem:[%s4980 + $0x1e4] sm:$0xf]
  %v5271 = vld [vmem:[%s4980 + $0x1e8] sm:$0xf]
  %v5272 = vld [vmem:[%s4980 + $0x1ec] sm:$0xf]
  %v5273 = vld [vmem:[%s4980 + $0x1f0] sm:$0xf]
  %v5274 = vld [vmem:[%s4980 + $0x1f4] sm:$0xf]
  %v5275 = vld [vmem:[%s4980 + $0x1f8] sm:$0xf]
  %v5276 = vld [vmem:[%s4980 + $0x1fc] sm:$0xf]
  %v5341 = vunpack.c.l.b16 %v5213
  %v5342 = vunpack.c.l.b16 %v5214
  %v5343 = vunpack.c.l.b16 %v5215
  %v5344 = vunpack.c.l.b16 %v5216
  %v5345 = vunpack.c.l.b16 %v5217
  %v5346 = vunpack.c.l.b16 %v5218
  %v5347 = vunpack.c.l.b16 %v5219
  %v5348 = vunpack.c.l.b16 %v5220
  %v5349 = vunpack.c.l.b16 %v5221
  %v5350 = vunpack.c.l.b16 %v5222
  %v5351 = vunpack.c.l.b16 %v5223
  %v5352 = vunpack.c.l.b16 %v5224
  %v5353 = vunpack.c.l.b16 %v5225
  %v5354 = vunpack.c.l.b16 %v5226
  %v5355 = vunpack.c.l.b16 %v5227
  %v5356 = vunpack.c.l.b16 %v5228
  %v5357 = vunpack.c.l.b16 %v5229
  %v5358 = vunpack.c.l.b16 %v5230
  %v5359 = vunpack.c.l.b16 %v5231
  %v5360 = vunpack.c.l.b16 %v5232
  %v5361 = vunpack.c.l.b16 %v5233
  %v5362 = vunpack.c.l.b16 %v5234
  %v5363 = vunpack.c.l.b16 %v5235
  %v5364 = vunpack.c.l.b16 %v5236
  %v5365 = vunpack.c.l.b16 %v5237
  %v5366 = vunpack.c.l.b16 %v5238
  %v5367 = vunpack.c.l.b16 %v5239
  %v5368 = vunpack.c.l.b16 %v5240
  %v5369 = vunpack.c.l.b16 %v5241
  %v5370 = vunpack.c.l.b16 %v5242
  %v5371 = vunpack.c.l.b16 %v5243
  %v5372 = vunpack.c.l.b16 %v5244
  %v5373 = vunpack.c.l.b16 %v5245
  %v5374 = vunpack.c.l.b16 %v5246
  %v5375 = vunpack.c.l.b16 %v5247
  %v5376 = vunpack.c.l.b16 %v5248
  %v5377 = vunpack.c.l.b16 %v5249
  %v5378 = vunpack.c.l.b16 %v5250
  %v5379 = vunpack.c.l.b16 %v5251
  %v5380 = vunpack.c.l.b16 %v5252
  %v5381 = vunpack.c.l.b16 %v5253
  %v5382 = vunpack.c.l.b16 %v5254
  %v5383 = vunpack.c.l.b16 %v5255
  %v5384 = vunpack.c.l.b16 %v5256
  %v5385 = vunpack.c.l.b16 %v5257
  %v5386 = vunpack.c.l.b16 %v5258
  %v5387 = vunpack.c.l.b16 %v5259
  %v5388 = vunpack.c.l.b16 %v5260
  %v5389 = vunpack.c.l.b16 %v5261
  %v5390 = vunpack.c.l.b16 %v5262
  %v5391 = vunpack.c.l.b16 %v5263
  %v5392 = vunpack.c.l.b16 %v5264
  %v5393 = vunpack.c.l.b16 %v5265
  %v5394 = vunpack.c.l.b16 %v5266
  %v5395 = vunpack.c.l.b16 %v5267
  %v5396 = vunpack.c.l.b16 %v5268
  %v5397 = vunpack.c.l.b16 %v5269
  %v5398 = vunpack.c.l.b16 %v5270
  %v5399 = vunpack.c.l.b16 %v5271
  %v5400 = vunpack.c.l.b16 %v5272
  %v5401 = vunpack.c.l.b16 %v5273
  %v5402 = vunpack.c.l.b16 %v5274
  %v5403 = vunpack.c.l.b16 %v5275
  %v5404 = vunpack.c.l.b16 %v5276
  %v5405 = vpack.c.b16 %v5342, %v5341
  %v5406 = vpack.c.b16 %v5344, %v5343
  %v5407 = vpack.c.b16 %v5346, %v5345
  %v5408 = vpack.c.b16 %v5348, %v5347
  %v5409 = vpack.c.b16 %v5350, %v5349
  %v5410 = vpack.c.b16 %v5352, %v5351
  %v5411 = vpack.c.b16 %v5354, %v5353
  %v5412 = vpack.c.b16 %v5356, %v5355
  %v5413 = vpack.c.b16 %v5358, %v5357
  %v5414 = vpack.c.b16 %v5360, %v5359
  %v5415 = vpack.c.b16 %v5362, %v5361
  %v5416 = vpack.c.b16 %v5364, %v5363
  %v5417 = vpack.c.b16 %v5366, %v5365
  %v5418 = vpack.c.b16 %v5368, %v5367
  %v5419 = vpack.c.b16 %v5370, %v5369
  %v5420 = vpack.c.b16 %v5372, %v5371
  %v5421 = vpack.c.b16 %v5374, %v5373
  %v5422 = vpack.c.b16 %v5376, %v5375
  %v5423 = vpack.c.b16 %v5378, %v5377
  %v5424 = vpack.c.b16 %v5380, %v5379
  %v5425 = vpack.c.b16 %v5382, %v5381
  %v5426 = vpack.c.b16 %v5384, %v5383
  %v5427 = vpack.c.b16 %v5386, %v5385
  %v5428 = vpack.c.b16 %v5388, %v5387
  %v5429 = vpack.c.b16 %v5390, %v5389
  %v5430 = vpack.c.b16 %v5392, %v5391
  %v5431 = vpack.c.b16 %v5394, %v5393
  %v5432 = vpack.c.b16 %v5396, %v5395
  %v5433 = vpack.c.b16 %v5398, %v5397
  %v5434 = vpack.c.b16 %v5400, %v5399
  %v5435 = vpack.c.b16 %v5402, %v5401
  %v5436 = vpack.c.b16 %v5404, %v5403
  %5469 = vmatprep.subr.bf16.mxu0 0
  %5470 = vmatpush1.bf16.msra.mxu0 %v5412
  %5471 = vmatprep.subr.bf16.mxu0 0
  %5472 = vmatpush1.bf16.msra.mxu0 %v5411
  %5473 = vmatprep.subr.bf16.mxu0 0
  %5474 = vmatpush1.bf16.msra.mxu0 %v5410
  %5475 = vmatprep.subr.bf16.mxu0 0
  %5476 = vmatpush1.bf16.msra.mxu0 %v5409
  %5477 = vmatprep.subr.bf16.mxu0 0
  %5478 = vmatpush1.bf16.msra.mxu0 %v5408
  %5479 = vmatprep.subr.bf16.mxu0 0
  %5480 = vmatpush1.bf16.msra.mxu0 %v5407
  %5481 = vmatprep.subr.bf16.mxu0 0
  %5482 = vmatpush1.bf16.msra.mxu0 %v5406
  %5483 = vmatprep.subr.bf16.mxu0 0
  %5484 = vmatpush1.bf16.msra.mxu0 %v5405
  %5485 = vmatprep.subr.bf16.mxu0 0
  %5486 = vmatpush2.bf16.msra.mxu0 %v5420
  %5487 = vmatprep.subr.bf16.mxu0 0
  %5488 = vmatpush2.bf16.msra.mxu0 %v5419
  %5489 = vmatprep.subr.bf16.mxu0 0
  %5490 = vmatpush2.bf16.msra.mxu0 %v5418
  %5491 = vmatprep.subr.bf16.mxu0 0
  %5492 = vmatpush2.bf16.msra.mxu0 %v5417
  %5493 = vmatprep.subr.bf16.mxu0 0
  %5494 = vmatpush2.bf16.msra.mxu0 %v5416
  %5495 = vmatprep.subr.bf16.mxu0 0
  %5496 = vmatpush2.bf16.msra.mxu0 %v5415
  %5497 = vmatprep.subr.bf16.mxu0 0
  %5498 = vmatpush2.bf16.msra.mxu0 %v5414
  %5499 = vmatprep.subr.bf16.mxu0 0
  %5500 = vmatpush2.bf16.msra.mxu0 %v5413
  %5501 = vmatprep.mubr.bf16.mxu0 %v5210
  %5502 = vmatmul.mubr.bf16.gmra.mxu0 %v5209
  %v5503 = vpop.f32.mrf.mxu0
  %v5504 = vadd.f32 0.0, %v5503
  %v5505 = vpop.f32.mrf.mxu0
  %v5506 = vpop.f32.mrf.mxu0
  %v5507 = vadd.f32 0.0, %v5506
  %v5508 = vpop.f32.mrf.mxu0
  %5509 = vdwg.mxu0
  %5510 = vmatprep.subr.bf16.mxu0 0
  %5511 = vmatpush1.bf16.msra.mxu0 %v5428
  %5512 = vmatprep.subr.bf16.mxu0 0
  %5513 = vmatpush1.bf16.msra.mxu0 %v5427
  %5514 = vmatprep.subr.bf16.mxu0 0
  %5515 = vmatpush1.bf16.msra.mxu0 %v5426
  %5516 = vmatprep.subr.bf16.mxu0 0
  %5517 = vmatpush1.bf16.msra.mxu0 %v5425
  %5518 = vmatprep.subr.bf16.mxu0 0
  %5519 = vmatpush1.bf16.msra.mxu0 %v5424
  %5520 = vmatprep.subr.bf16.mxu0 0
  %5521 = vmatpush1.bf16.msra.mxu0 %v5423
  %5522 = vmatprep.subr.bf16.mxu0 0
  %5523 = vmatpush1.bf16.msra.mxu0 %v5422
  %5524 = vmatprep.subr.bf16.mxu0 0
  %5525 = vmatpush1.bf16.msra.mxu0 %v5421
  %5526 = vmatprep.subr.bf16.mxu0 0
  %5527 = vmatpush2.bf16.msra.mxu0 %v5436
  %5528 = vmatprep.subr.bf16.mxu0 0
  %5529 = vmatpush2.bf16.msra.mxu0 %v5435
  %5530 = vmatprep.subr.bf16.mxu0 0
  %5531 = vmatpush2.bf16.msra.mxu0 %v5434
  %5532 = vmatprep.subr.bf16.mxu0 0
  %5533 = vmatpush2.bf16.msra.mxu0 %v5433
  %5534 = vmatprep.subr.bf16.mxu0 0
  %5535 = vmatpush2.bf16.msra.mxu0 %v5432
  %5536 = vmatprep.subr.bf16.mxu0 0
  %5537 = vmatpush2.bf16.msra.mxu0 %v5431
  %5538 = vmatprep.subr.bf16.mxu0 0
  %5539 = vmatpush2.bf16.msra.mxu0 %v5430
  %5540 = vmatprep.subr.bf16.mxu0 0
  %5541 = vmatpush2.bf16.msra.mxu0 %v5429
  %5542 = vmatprep.mubr.bf16.mxu0 %v5212
  %5543 = vmatmul.mubr.bf16.gmra.mxu0 %v5211
  %v5544 = vpop.f32.mrf.mxu0
  %v5545 = vadd.f32 %v5504, %v5544
  %v5546 = vpop.f32.mrf.mxu0
  %v5547 = vpop.f32.mrf.mxu0
  %v5548 = vadd.f32 %v5507, %v5547
  %v5549 = vpop.f32.mrf.mxu0
  %5550 = vdwg.mxu0
  %v5615 = vunpack.c.l.b16 %v4981
  %v5616 = vunpack.c.l.b16 %v4982
  %v5617 = vunpack.c.l.b16 %v4983
  %v5618 = vunpack.c.l.b16 %v4984
  %v5619 = vunpack.c.l.b16 %v4985
  %v5620 = vunpack.c.l.b16 %v4986
  %v5621 = vunpack.c.l.b16 %v4987
  %v5622 = vunpack.c.l.b16 %v4988
  %v5623 = vunpack.c.l.b16 %v4989
  %v5624 = vunpack.c.l.b16 %v4990
  %v5625 = vunpack.c.l.b16 %v4991
  %v5626 = vunpack.c.l.b16 %v4992
  %v5627 = vunpack.c.l.b16 %v4993
  %v5628 = vunpack.c.l.b16 %v4994
  %v5629 = vunpack.c.l.b16 %v4995
  %v5630 = vunpack.c.l.b16 %v4996
  %v5631 = vunpack.c.l.b16 %v4997
  %v5632 = vunpack.c.l.b16 %v4998
  %v5633 = vunpack.c.l.b16 %v4999
  %v5634 = vunpack.c.l.b16 %v5000
  %v5635 = vunpack.c.l.b16 %v5001
  %v5636 = vunpack.c.l.b16 %v5002
  %v5637 = vunpack.c.l.b16 %v5003
  %v5638 = vunpack.c.l.b16 %v5004
  %v5639 = vunpack.c.l.b16 %v5005
  %v5640 = vunpack.c.l.b16 %v5006
  %v5641 = vunpack.c.l.b16 %v5007
  %v5642 = vunpack.c.l.b16 %v5008
  %v5643 = vunpack.c.l.b16 %v5009
  %v5644 = vunpack.c.l.b16 %v5010
  %v5645 = vunpack.c.l.b16 %v5011
  %v5646 = vunpack.c.l.b16 %v5012
  %v5647 = vunpack.c.l.b16 %v5013
  %v5648 = vunpack.c.l.b16 %v5014
  %v5649 = vunpack.c.l.b16 %v5015
  %v5650 = vunpack.c.l.b16 %v5016
  %v5651 = vunpack.c.l.b16 %v5017
  %v5652 = vunpack.c.l.b16 %v5018
  %v5653 = vunpack.c.l.b16 %v5019
  %v5654 = vunpack.c.l.b16 %v5020
  %v5655 = vunpack.c.l.b16 %v5021
  %v5656 = vunpack.c.l.b16 %v5022
  %v5657 = vunpack.c.l.b16 %v5023
  %v5658 = vunpack.c.l.b16 %v5024
  %v5659 = vunpack.c.l.b16 %v5025
  %v5660 = vunpack.c.l.b16 %v5026
  %v5661 = vunpack.c.l.b16 %v5027
  %v5662 = vunpack.c.l.b16 %v5028
  %v5663 = vunpack.c.l.b16 %v5029
  %v5664 = vunpack.c.l.b16 %v5030
  %v5665 = vunpack.c.l.b16 %v5031
  %v5666 = vunpack.c.l.b16 %v5032
  %v5667 = vunpack.c.l.b16 %v5033
  %v5668 = vunpack.c.l.b16 %v5034
  %v5669 = vunpack.c.l.b16 %v5035
  %v5670 = vunpack.c.l.b16 %v5036
  %v5671 = vunpack.c.l.b16 %v5037
  %v5672 = vunpack.c.l.b16 %v5038
  %v5673 = vunpack.c.l.b16 %v5039
  %v5674 = vunpack.c.l.b16 %v5040
  %v5675 = vunpack.c.l.b16 %v5041
  %v5676 = vunpack.c.l.b16 %v5042
  %v5677 = vunpack.c.l.b16 %v5043
  %v5678 = vunpack.c.l.b16 %v5044
  %v5679 = vpack.c.b16 %v5616, %v5615
  %v5680 = vpack.c.b16 %v5618, %v5617
  %v5681 = vpack.c.b16 %v5620, %v5619
  %v5682 = vpack.c.b16 %v5622, %v5621
  %v5683 = vpack.c.b16 %v5624, %v5623
  %v5684 = vpack.c.b16 %v5626, %v5625
  %v5685 = vpack.c.b16 %v5628, %v5627
  %v5686 = vpack.c.b16 %v5630, %v5629
  %v5687 = vpack.c.b16 %v5632, %v5631
  %v5688 = vpack.c.b16 %v5634, %v5633
  %v5689 = vpack.c.b16 %v5636, %v5635
  %v5690 = vpack.c.b16 %v5638, %v5637
  %v5691 = vpack.c.b16 %v5640, %v5639
  %v5692 = vpack.c.b16 %v5642, %v5641
  %v5693 = vpack.c.b16 %v5644, %v5643
  %v5694 = vpack.c.b16 %v5646, %v5645
  %v5695 = vpack.c.b16 %v5648, %v5647
  %v5696 = vpack.c.b16 %v5650, %v5649
  %v5697 = vpack.c.b16 %v5652, %v5651
  %v5698 = vpack.c.b16 %v5654, %v5653
  %v5699 = vpack.c.b16 %v5656, %v5655
  %v5700 = vpack.c.b16 %v5658, %v5657
  %v5701 = vpack.c.b16 %v5660, %v5659
  %v5702 = vpack.c.b16 %v5662, %v5661
  %v5703 = vpack.c.b16 %v5664, %v5663
  %v5704 = vpack.c.b16 %v5666, %v5665
  %v5705 = vpack.c.b16 %v5668, %v5667
  %v5706 = vpack.c.b16 %v5670, %v5669
  %v5707 = vpack.c.b16 %v5672, %v5671
  %v5708 = vpack.c.b16 %v5674, %v5673
  %v5709 = vpack.c.b16 %v5676, %v5675
  %v5710 = vpack.c.b16 %v5678, %v5677
  %5743 = vmatprep.subr.bf16.mxu0 0
  %5744 = vmatpush1.bf16.msra.mxu0 %v5686
  %5745 = vmatprep.subr.bf16.mxu0 0
  %5746 = vmatpush1.bf16.msra.mxu0 %v5685
  %5747 = vmatprep.subr.bf16.mxu0 0
  %5748 = vmatpush1.bf16.msra.mxu0 %v5684
  %5749 = vmatprep.subr.bf16.mxu0 0
  %5750 = vmatpush1.bf16.msra.mxu0 %v5683
  %5751 = vmatprep.subr.bf16.mxu0 0
  %5752 = vmatpush1.bf16.msra.mxu0 %v5682
  %5753 = vmatprep.subr.bf16.mxu0 0
  %5754 = vmatpush1.bf16.msra.mxu0 %v5681
  %5755 = vmatprep.subr.bf16.mxu0 0
  %5756 = vmatpush1.bf16.msra.mxu0 %v5680
  %5757 = vmatprep.subr.bf16.mxu0 0
  %5758 = vmatpush1.bf16.msra.mxu0 %v5679
  %5759 = vmatprep.subr.bf16.mxu0 0
  %5760 = vmatpush2.bf16.msra.mxu0 %v5694
  %5761 = vmatprep.subr.bf16.mxu0 0
  %5762 = vmatpush2.bf16.msra.mxu0 %v5693
  %5763 = vmatprep.subr.bf16.mxu0 0
  %5764 = vmatpush2.bf16.msra.mxu0 %v5692
  %5765 = vmatprep.subr.bf16.mxu0 0
  %5766 = vmatpush2.bf16.msra.mxu0 %v5691
  %5767 = vmatprep.subr.bf16.mxu0 0
  %5768 = vmatpush2.bf16.msra.mxu0 %v5690
  %5769 = vmatprep.subr.bf16.mxu0 0
  %5770 = vmatpush2.bf16.msra.mxu0 %v5689
  %5771 = vmatprep.subr.bf16.mxu0 0
  %5772 = vmatpush2.bf16.msra.mxu0 %v5688
  %5773 = vmatprep.subr.bf16.mxu0 0
  %5774 = vmatpush2.bf16.msra.mxu0 %v5687
  %5775 = vmatprep.mubr.bf16.mxu0 %v4977
  %5776 = vmatmul.mubr.bf16.gmra.mxu0 %v4976
  %v5777 = vpop.f32.mrf.mxu0
  %v5778 = vadd.f32 %v5545, %v5777
  %v5779 = vpop.f32.mrf.mxu0
  %v5780 = vpop.f32.mrf.mxu0
  %v5781 = vadd.f32 %v5548, %v5780
  %v5782 = vpop.f32.mrf.mxu0
  %5783 = vdwg.mxu0
  %5784 = vmatprep.subr.bf16.mxu0 0
  %5785 = vmatpush1.bf16.msra.mxu0 %v5702
  %5786 = vmatprep.subr.bf16.mxu0 0
  %5787 = vmatpush1.bf16.msra.mxu0 %v5701
  %5788 = vmatprep.subr.bf16.mxu0 0
  %5789 = vmatpush1.bf16.msra.mxu0 %v5700
  %5790 = vmatprep.subr.bf16.mxu0 0
  %5791 = vmatpush1.bf16.msra.mxu0 %v5699
  %5792 = vmatprep.subr.bf16.mxu0 0
  %5793 = vmatpush1.bf16.msra.mxu0 %v5698
  %5794 = vmatprep.subr.bf16.mxu0 0
  %5795 = vmatpush1.bf16.msra.mxu0 %v5697
  %5796 = vmatprep.subr.bf16.mxu0 0
  %5797 = vmatpush1.bf16.msra.mxu0 %v5696
  %5798 = vmatprep.subr.bf16.mxu0 0
  %5799 = vmatpush1.bf16.msra.mxu0 %v5695
  %5800 = vmatprep.subr.bf16.mxu0 0
  %5801 = vmatpush2.bf16.msra.mxu0 %v5710
  %5802 = vmatprep.subr.bf16.mxu0 0
  %5803 = vmatpush2.bf16.msra.mxu0 %v5709
  %5804 = vmatprep.subr.bf16.mxu0 0
  %5805 = vmatpush2.bf16.msra.mxu0 %v5708
  %5806 = vmatprep.subr.bf16.mxu0 0
  %5807 = vmatpush2.bf16.msra.mxu0 %v5707
  %5808 = vmatprep.subr.bf16.mxu0 0
  %5809 = vmatpush2.bf16.msra.mxu0 %v5706
  %5810 = vmatprep.subr.bf16.mxu0 0
  %5811 = vmatpush2.bf16.msra.mxu0 %v5705
  %5812 = vmatprep.subr.bf16.mxu0 0
  %5813 = vmatpush2.bf16.msra.mxu0 %v5704
  %5814 = vmatprep.subr.bf16.mxu0 0
  %5815 = vmatpush2.bf16.msra.mxu0 %v5703
  %5816 = vmatprep.mubr.bf16.mxu0 %v4979
  %5817 = vmatmul.mubr.bf16.gmra.mxu0 %v4978
  %v5818 = vpop.f32.mrf.mxu0
  %v5819 = vadd.f32 %v5778, %v5818
  %v5820 = vpop.f32.mrf.mxu0
  %v5821 = vpop.f32.mrf.mxu0
  %v5822 = vadd.f32 %v5781, %v5821
  %v5823 = vpop.f32.mrf.mxu0
  %5824 = vdwg.mxu0
  %v5825 = vld [vmem:[%s4807 + $0x20] sm:$0xff]
  %v5826 = vld [vmem:[%s4807 + $0x28] sm:$0xff]
  %v5827 = vld [vmem:[%s4807 + $0x60] sm:$0xff]
  %v5828 = vld [vmem:[%s4807 + $0x68] sm:$0xff]
  %v5829 = vld [vmem:[%s4807 + $0xa0] sm:$0xff]
  %v5830 = vld [vmem:[%s4807 + $0xa8] sm:$0xff]
  %v5831 = vld [vmem:[%s4807 + $0xe0] sm:$0xff]
  %v5832 = vld [vmem:[%s4807 + $0xe8] sm:$0xff]
  %v5833 = vld [vmem:[%s4816 + $0x8] sm:$0xf]
  %v5835 = vlaneseq
  %v5836 = vshrl.u32 %v5835, 7
  %v5837 = vsub.s32 0, %v5836
  %v5838 = vrot.slane %v5833, %v5837
  %v5839 = vlaneseq
  %v5840 = vshrl.u32 %v5839, 7
  %v5841 = vsub.s32 1, %v5840
  %v5842 = vrot.slane %v5833, %v5841
  %v5843 = vlaneseq
  %v5844 = vshrl.u32 %v5843, 7
  %v5845 = vsub.s32 2, %v5844
  %v5846 = vrot.slane %v5833, %v5845
  %v5847 = vlaneseq
  %v5848 = vshrl.u32 %v5847, 7
  %v5849 = vsub.s32 3, %v5848
  %v5850 = vrot.slane %v5833, %v5849
  %v5863 = vunpack.c.l.b16 %v5825
  %v5864 = vunpack.c.h.b16 %v5825
  %v5865 = vunpack.c.l.b16 %v5826
  %v5866 = vunpack.c.h.b16 %v5826
  %v5867 = vunpack.c.l.b16 %v5827
  %v5868 = vunpack.c.h.b16 %v5827
  %v5869 = vunpack.c.l.b16 %v5828
  %v5870 = vunpack.c.h.b16 %v5828
  %v5871 = vunpack.c.l.b16 %v5829
  %v5872 = vunpack.c.h.b16 %v5829
  %v5873 = vunpack.c.l.b16 %v5830
  %v5874 = vunpack.c.h.b16 %v5830
  %v5875 = vunpack.c.l.b16 %v5831
  %v5876 = vunpack.c.h.b16 %v5831
  %v5877 = vunpack.c.l.b16 %v5832
  %v5878 = vunpack.c.h.b16 %v5832
  %v5879 = vpack.c.b16 %v5867, %v5863
  %v5880 = vpack.c.b16 %v5868, %v5864
  %v5881 = vpack.c.b16 %v5869, %v5865
  %v5882 = vpack.c.b16 %v5870, %v5866
  %v5883 = vpack.c.b16 %v5875, %v5871
  %v5884 = vpack.c.b16 %v5876, %v5872
  %v5885 = vpack.c.b16 %v5877, %v5873
  %v5886 = vpack.c.b16 %v5878, %v5874
  %5895 = vmatprep.subr.bf16.mxu0 0
  %5896 = vmatpush1.bf16.msra.mxu0 0
  %5897 = vmatprep.subr.bf16.mxu0 0
  %5898 = vmatpush1.bf16.msra.mxu0 0
  %5899 = vmatprep.subr.bf16.mxu0 0
  %5900 = vmatpush1.bf16.msra.mxu0 0
  %5901 = vmatprep.subr.bf16.mxu0 0
  %5902 = vmatpush1.bf16.msra.mxu0 0
  %5903 = vmatprep.subr.bf16.mxu0 0
  %5904 = vmatpush1.bf16.msra.mxu0 0
  %5905 = vmatprep.subr.bf16.mxu0 0
  %5906 = vmatpush1.bf16.msra.mxu0 0
  %5907 = vmatprep.subr.bf16.mxu0 %v5884
  %5908 = vmatpush1.bf16.msra.mxu0 %v5883
  %5909 = vmatprep.subr.bf16.mxu0 %v5880
  %5910 = vmatpush1.bf16.msra.mxu0 %v5879
  %5911 = vmatprep.subr.bf16.mxu0 0
  %5912 = vmatpush2.bf16.msra.mxu0 0
  %5913 = vmatprep.subr.bf16.mxu0 0
  %5914 = vmatpush2.bf16.msra.mxu0 0
  %5915 = vmatprep.subr.bf16.mxu0 0
  %5916 = vmatpush2.bf16.msra.mxu0 0
  %5917 = vmatprep.subr.bf16.mxu0 0
  %5918 = vmatpush2.bf16.msra.mxu0 0
  %5919 = vmatprep.subr.bf16.mxu0 0
  %5920 = vmatpush2.bf16.msra.mxu0 0
  %5921 = vmatprep.subr.bf16.mxu0 0
  %5922 = vmatpush2.bf16.msra.mxu0 0
  %5923 = vmatprep.subr.bf16.mxu0 0
  %5924 = vmatpush2.bf16.msra.mxu0 0
  %5925 = vmatprep.subr.bf16.mxu0 0
  %5926 = vmatpush2.bf16.msra.mxu0 0
  %5927 = vmatprep.mubr.bf16.mxu0 0
  %5928 = vmatmul.mubr.bf16.gmra.mxu0 %v4880
  %v5929 = vpop.f32.mrf.mxu0
  %v5930 = vadd.f32 %v5838, %v5929
  %v5931 = vpop.f32.mrf.mxu0
  %v5932 = vadd.f32 %v5842, %v5931
  %v5933 = vpop.f32.mrf.mxu0
  %v5934 = vadd.f32 %v5838, %v5933
  %v5935 = vpop.f32.mrf.mxu0
  %v5936 = vadd.f32 %v5842, %v5935
  %5937 = vdwg.mxu0
  %5938 = vmatprep.subr.bf16.mxu0 0
  %5939 = vmatpush1.bf16.msra.mxu0 0
  %5940 = vmatprep.subr.bf16.mxu0 0
  %5941 = vmatpush1.bf16.msra.mxu0 0
  %5942 = vmatprep.subr.bf16.mxu0 0
  %5943 = vmatpush1.bf16.msra.mxu0 0
  %5944 = vmatprep.subr.bf16.mxu0 0
  %5945 = vmatpush1.bf16.msra.mxu0 0
  %5946 = vmatprep.subr.bf16.mxu0 0
  %5947 = vmatpush1.bf16.msra.mxu0 0
  %5948 = vmatprep.subr.bf16.mxu0 0
  %5949 = vmatpush1.bf16.msra.mxu0 0
  %5950 = vmatprep.subr.bf16.mxu0 %v5886
  %5951 = vmatpush1.bf16.msra.mxu0 %v5885
  %5952 = vmatprep.subr.bf16.mxu0 %v5882
  %5953 = vmatpush1.bf16.msra.mxu0 %v5881
  %5954 = vmatprep.subr.bf16.mxu0 0
  %5955 = vmatpush2.bf16.msra.mxu0 0
  %5956 = vmatprep.subr.bf16.mxu0 0
  %5957 = vmatpush2.bf16.msra.mxu0 0
  %5958 = vmatprep.subr.bf16.mxu0 0
  %5959 = vmatpush2.bf16.msra.mxu0 0
  %5960 = vmatprep.subr.bf16.mxu0 0
  %5961 = vmatpush2.bf16.msra.mxu0 0
  %5962 = vmatprep.subr.bf16.mxu0 0
  %5963 = vmatpush2.bf16.msra.mxu0 0
  %5964 = vmatprep.subr.bf16.mxu0 0
  %5965 = vmatpush2.bf16.msra.mxu0 0
  %5966 = vmatprep.subr.bf16.mxu0 0
  %5967 = vmatpush2.bf16.msra.mxu0 0
  %5968 = vmatprep.subr.bf16.mxu0 0
  %5969 = vmatpush2.bf16.msra.mxu0 0
  %5970 = vmatprep.mubr.bf16.mxu0 0
  %5971 = vmatmul.mubr.bf16.gmra.mxu0 %v4880
  %v5972 = vpop.f32.mrf.mxu0
  %v5973 = vadd.f32 %v5846, %v5972
  %v5974 = vpop.f32.mrf.mxu0
  %v5975 = vadd.f32 %v5850, %v5974
  %v5976 = vpop.f32.mrf.mxu0
  %v5977 = vadd.f32 %v5846, %v5976
  %v5978 = vpop.f32.mrf.mxu0
  %v5979 = vadd.f32 %v5850, %v5978
  %5980 = vdwg.mxu0
  %v5981 = vmax.f32 %v5930, 0.0
  %v5982 = vmax.f32 %v5932, 0.0
  %v5983 = vmax.f32 %v5973, 0.0
  %v5984 = vmax.f32 %v5975, 0.0
  %v5985 = vmax.f32 %v5934, 0.0
  %v5986 = vmax.f32 %v5936, 0.0
  %v5987 = vmax.f32 %v5977, 0.0
  %v5988 = vmax.f32 %v5979, 0.0
  %v5989 = vpack.c.bf16 %v5985, %v5981
  %v5990 = vpack.c.bf16 %v5986, %v5982
  %v5991 = vpack.c.bf16 %v5987, %v5983
  %v5992 = vpack.c.bf16 %v5988, %v5984
  %v5993 = vld [vmem:[%s4980 + $0x200] sm:$0xf]
  %v5994 = vld [vmem:[%s4980 + $0x204] sm:$0xf]
  %v5995 = vld [vmem:[%s4980 + $0x208] sm:$0xf]
  %v5996 = vld [vmem:[%s4980 + $0x20c] sm:$0xf]
  %v5997 = vld [vmem:[%s4980 + $0x210] sm:$0xf]
  %v5998 = vld [vmem:[%s4980 + $0x214] sm:$0xf]
  %v5999 = vld [vmem:[%s4980 + $0x218] sm:$0xf]
  %v6000 = vld [vmem:[%s4980 + $0x21c] sm:$0xf]
  %v6001 = vld [vmem:[%s4980 + $0x220] sm:$0xf]
  %v6002 = vld [vmem:[%s4980 + $0x224] sm:$0xf]
  %v6003 = vld [vmem:[%s4980 + $0x228] sm:$0xf]
  %v6004 = vld [vmem:[%s4980 + $0x22c] sm:$0xf]
  %v6005 = vld [vmem:[%s4980 + $0x230] sm:$0xf]
  %v6006 = vld [vmem:[%s4980 + $0x234] sm:$0xf]
  %v6007 = vld [vmem:[%s4980 + $0x238] sm:$0xf]
  %v6008 = vld [vmem:[%s4980 + $0x23c] sm:$0xf]
  %v6009 = vld [vmem:[%s4980 + $0x240] sm:$0xf]
  %v6010 = vld [vmem:[%s4980 + $0x244] sm:$0xf]
  %v6011 = vld [vmem:[%s4980 + $0x248] sm:$0xf]
  %v6012 = vld [vmem:[%s4980 + $0x24c] sm:$0xf]
  %v6013 = vld [vmem:[%s4980 + $0x250] sm:$0xf]
  %v6014 = vld [vmem:[%s4980 + $0x254] sm:$0xf]
  %v6015 = vld [vmem:[%s4980 + $0x258] sm:$0xf]
  %v6016 = vld [vmem:[%s4980 + $0x25c] sm:$0xf]
  %v6017 = vld [vmem:[%s4980 + $0x260] sm:$0xf]
  %v6018 = vld [vmem:[%s4980 + $0x264] sm:$0xf]
  %v6019 = vld [vmem:[%s4980 + $0x268] sm:$0xf]
  %v6020 = vld [vmem:[%s4980 + $0x26c] sm:$0xf]
  %v6021 = vld [vmem:[%s4980 + $0x270] sm:$0xf]
  %v6022 = vld [vmem:[%s4980 + $0x274] sm:$0xf]
  %v6023 = vld [vmem:[%s4980 + $0x278] sm:$0xf]
  %v6024 = vld [vmem:[%s4980 + $0x27c] sm:$0xf]
  %v6025 = vld [vmem:[%s4980 + $0x280] sm:$0xf]
  %v6026 = vld [vmem:[%s4980 + $0x284] sm:$0xf]
  %v6027 = vld [vmem:[%s4980 + $0x288] sm:$0xf]
  %v6028 = vld [vmem:[%s4980 + $0x28c] sm:$0xf]
  %v6029 = vld [vmem:[%s4980 + $0x290] sm:$0xf]
  %v6030 = vld [vmem:[%s4980 + $0x294] sm:$0xf]
  %v6031 = vld [vmem:[%s4980 + $0x298] sm:$0xf]
  %v6032 = vld [vmem:[%s4980 + $0x29c] sm:$0xf]
  %v6033 = vld [vmem:[%s4980 + $0x2a0] sm:$0xf]
  %v6034 = vld [vmem:[%s4980 + $0x2a4] sm:$0xf]
  %v6035 = vld [vmem:[%s4980 + $0x2a8] sm:$0xf]
  %v6036 = vld [vmem:[%s4980 + $0x2ac] sm:$0xf]
  %v6037 = vld [vmem:[%s4980 + $0x2b0] sm:$0xf]
  %v6038 = vld [vmem:[%s4980 + $0x2b4] sm:$0xf]
  %v6039 = vld [vmem:[%s4980 + $0x2b8] sm:$0xf]
  %v6040 = vld [vmem:[%s4980 + $0x2bc] sm:$0xf]
  %v6041 = vld [vmem:[%s4980 + $0x2c0] sm:$0xf]
  %v6042 = vld [vmem:[%s4980 + $0x2c4] sm:$0xf]
  %v6043 = vld [vmem:[%s4980 + $0x2c8] sm:$0xf]
  %v6044 = vld [vmem:[%s4980 + $0x2cc] sm:$0xf]
  %v6045 = vld [vmem:[%s4980 + $0x2d0] sm:$0xf]
  %v6046 = vld [vmem:[%s4980 + $0x2d4] sm:$0xf]
  %v6047 = vld [vmem:[%s4980 + $0x2d8] sm:$0xf]
  %v6048 = vld [vmem:[%s4980 + $0x2dc] sm:$0xf]
  %v6049 = vld [vmem:[%s4980 + $0x2e0] sm:$0xf]
  %v6050 = vld [vmem:[%s4980 + $0x2e4] sm:$0xf]
  %v6051 = vld [vmem:[%s4980 + $0x2e8] sm:$0xf]
  %v6052 = vld [vmem:[%s4980 + $0x2ec] sm:$0xf]
  %v6053 = vld [vmem:[%s4980 + $0x2f0] sm:$0xf]
  %v6054 = vld [vmem:[%s4980 + $0x2f4] sm:$0xf]
  %v6055 = vld [vmem:[%s4980 + $0x2f8] sm:$0xf]
  %v6056 = vld [vmem:[%s4980 + $0x2fc] sm:$0xf]
  %v6121 = vunpack.c.l.b16 %v5993
  %v6122 = vunpack.c.l.b16 %v5994
  %v6123 = vunpack.c.l.b16 %v5995
  %v6124 = vunpack.c.l.b16 %v5996
  %v6125 = vunpack.c.l.b16 %v5997
  %v6126 = vunpack.c.l.b16 %v5998
  %v6127 = vunpack.c.l.b16 %v5999
  %v6128 = vunpack.c.l.b16 %v6000
  %v6129 = vunpack.c.l.b16 %v6001
  %v6130 = vunpack.c.l.b16 %v6002
  %v6131 = vunpack.c.l.b16 %v6003
  %v6132 = vunpack.c.l.b16 %v6004
  %v6133 = vunpack.c.l.b16 %v6005
  %v6134 = vunpack.c.l.b16 %v6006
  %v6135 = vunpack.c.l.b16 %v6007
  %v6136 = vunpack.c.l.b16 %v6008
  %v6137 = vunpack.c.l.b16 %v6009
  %v6138 = vunpack.c.l.b16 %v6010
  %v6139 = vunpack.c.l.b16 %v6011
  %v6140 = vunpack.c.l.b16 %v6012
  %v6141 = vunpack.c.l.b16 %v6013
  %v6142 = vunpack.c.l.b16 %v6014
  %v6143 = vunpack.c.l.b16 %v6015
  %v6144 = vunpack.c.l.b16 %v6016
  %v6145 = vunpack.c.l.b16 %v6017
  %v6146 = vunpack.c.l.b16 %v6018
  %v6147 = vunpack.c.l.b16 %v6019
  %v6148 = vunpack.c.l.b16 %v6020
  %v6149 = vunpack.c.l.b16 %v6021
  %v6150 = vunpack.c.l.b16 %v6022
  %v6151 = vunpack.c.l.b16 %v6023
  %v6152 = vunpack.c.l.b16 %v6024
  %v6153 = vunpack.c.l.b16 %v6025
  %v6154 = vunpack.c.l.b16 %v6026
  %v6155 = vunpack.c.l.b16 %v6027
  %v6156 = vunpack.c.l.b16 %v6028
  %v6157 = vunpack.c.l.b16 %v6029
  %v6158 = vunpack.c.l.b16 %v6030
  %v6159 = vunpack.c.l.b16 %v6031
  %v6160 = vunpack.c.l.b16 %v6032
  %v6161 = vunpack.c.l.b16 %v6033
  %v6162 = vunpack.c.l.b16 %v6034
  %v6163 = vunpack.c.l.b16 %v6035
  %v6164 = vunpack.c.l.b16 %v6036
  %v6165 = vunpack.c.l.b16 %v6037
  %v6166 = vunpack.c.l.b16 %v6038
  %v6167 = vunpack.c.l.b16 %v6039
  %v6168 = vunpack.c.l.b16 %v6040
  %v6169 = vunpack.c.l.b16 %v6041
  %v6170 = vunpack.c.l.b16 %v6042
  %v6171 = vunpack.c.l.b16 %v6043
  %v6172 = vunpack.c.l.b16 %v6044
  %v6173 = vunpack.c.l.b16 %v6045
  %v6174 = vunpack.c.l.b16 %v6046
  %v6175 = vunpack.c.l.b16 %v6047
  %v6176 = vunpack.c.l.b16 %v6048
  %v6177 = vunpack.c.l.b16 %v6049
  %v6178 = vunpack.c.l.b16 %v6050
  %v6179 = vunpack.c.l.b16 %v6051
  %v6180 = vunpack.c.l.b16 %v6052
  %v6181 = vunpack.c.l.b16 %v6053
  %v6182 = vunpack.c.l.b16 %v6054
  %v6183 = vunpack.c.l.b16 %v6055
  %v6184 = vunpack.c.l.b16 %v6056
  %v6185 = vpack.c.b16 %v6122, %v6121
  %v6186 = vpack.c.b16 %v6124, %v6123
  %v6187 = vpack.c.b16 %v6126, %v6125
  %v6188 = vpack.c.b16 %v6128, %v6127
  %v6189 = vpack.c.b16 %v6130, %v6129
  %v6190 = vpack.c.b16 %v6132, %v6131
  %v6191 = vpack.c.b16 %v6134, %v6133
  %v6192 = vpack.c.b16 %v6136, %v6135
  %v6193 = vpack.c.b16 %v6138, %v6137
  %v6194 = vpack.c.b16 %v6140, %v6139
  %v6195 = vpack.c.b16 %v6142, %v6141
  %v6196 = vpack.c.b16 %v6144, %v6143
  %v6197 = vpack.c.b16 %v6146, %v6145
  %v6198 = vpack.c.b16 %v6148, %v6147
  %v6199 = vpack.c.b16 %v6150, %v6149
  %v6200 = vpack.c.b16 %v6152, %v6151
  %v6201 = vpack.c.b16 %v6154, %v6153
  %v6202 = vpack.c.b16 %v6156, %v6155
  %v6203 = vpack.c.b16 %v6158, %v6157
  %v6204 = vpack.c.b16 %v6160, %v6159
  %v6205 = vpack.c.b16 %v6162, %v6161
  %v6206 = vpack.c.b16 %v6164, %v6163
  %v6207 = vpack.c.b16 %v6166, %v6165
  %v6208 = vpack.c.b16 %v6168, %v6167
  %v6209 = vpack.c.b16 %v6170, %v6169
  %v6210 = vpack.c.b16 %v6172, %v6171
  %v6211 = vpack.c.b16 %v6174, %v6173
  %v6212 = vpack.c.b16 %v6176, %v6175
  %v6213 = vpack.c.b16 %v6178, %v6177
  %v6214 = vpack.c.b16 %v6180, %v6179
  %v6215 = vpack.c.b16 %v6182, %v6181
  %v6216 = vpack.c.b16 %v6184, %v6183
  %6249 = vmatprep.subr.bf16.mxu0 0
  %6250 = vmatpush1.bf16.msra.mxu0 %v6192
  %6251 = vmatprep.subr.bf16.mxu0 0
  %6252 = vmatpush1.bf16.msra.mxu0 %v6191
  %6253 = vmatprep.subr.bf16.mxu0 0
  %6254 = vmatpush1.bf16.msra.mxu0 %v6190
  %6255 = vmatprep.subr.bf16.mxu0 0
  %6256 = vmatpush1.bf16.msra.mxu0 %v6189
  %6257 = vmatprep.subr.bf16.mxu0 0
  %6258 = vmatpush1.bf16.msra.mxu0 %v6188
  %6259 = vmatprep.subr.bf16.mxu0 0
  %6260 = vmatpush1.bf16.msra.mxu0 %v6187
  %6261 = vmatprep.subr.bf16.mxu0 0
  %6262 = vmatpush1.bf16.msra.mxu0 %v6186
  %6263 = vmatprep.subr.bf16.mxu0 0
  %6264 = vmatpush1.bf16.msra.mxu0 %v6185
  %6265 = vmatprep.subr.bf16.mxu0 0
  %6266 = vmatpush2.bf16.msra.mxu0 %v6200
  %6267 = vmatprep.subr.bf16.mxu0 0
  %6268 = vmatpush2.bf16.msra.mxu0 %v6199
  %6269 = vmatprep.subr.bf16.mxu0 0
  %6270 = vmatpush2.bf16.msra.mxu0 %v6198
  %6271 = vmatprep.subr.bf16.mxu0 0
  %6272 = vmatpush2.bf16.msra.mxu0 %v6197
  %6273 = vmatprep.subr.bf16.mxu0 0
  %6274 = vmatpush2.bf16.msra.mxu0 %v6196
  %6275 = vmatprep.subr.bf16.mxu0 0
  %6276 = vmatpush2.bf16.msra.mxu0 %v6195
  %6277 = vmatprep.subr.bf16.mxu0 0
  %6278 = vmatpush2.bf16.msra.mxu0 %v6194
  %6279 = vmatprep.subr.bf16.mxu0 0
  %6280 = vmatpush2.bf16.msra.mxu0 %v6193
  %6281 = vmatprep.mubr.bf16.mxu0 %v5990
  %6282 = vmatmul.mubr.bf16.gmra.mxu0 %v5989
  %v6283 = vpop.f32.mrf.mxu0
  %v6284 = vadd.f32 0.0, %v6283
  %v6285 = vpop.f32.mrf.mxu0
  %v6286 = vpop.f32.mrf.mxu0
  %v6287 = vadd.f32 0.0, %v6286
  %v6288 = vpop.f32.mrf.mxu0
  %6289 = vdwg.mxu0
  %6290 = vmatprep.subr.bf16.mxu0 0
  %6291 = vmatpush1.bf16.msra.mxu0 %v6208
  %6292 = vmatprep.subr.bf16.mxu0 0
  %6293 = vmatpush1.bf16.msra.mxu0 %v6207
  %6294 = vmatprep.subr.bf16.mxu0 0
  %6295 = vmatpush1.bf16.msra.mxu0 %v6206
  %6296 = vmatprep.subr.bf16.mxu0 0
  %6297 = vmatpush1.bf16.msra.mxu0 %v6205
  %6298 = vmatprep.subr.bf16.mxu0 0
  %6299 = vmatpush1.bf16.msra.mxu0 %v6204
  %6300 = vmatprep.subr.bf16.mxu0 0
  %6301 = vmatpush1.bf16.msra.mxu0 %v6203
  %6302 = vmatprep.subr.bf16.mxu0 0
  %6303 = vmatpush1.bf16.msra.mxu0 %v6202
  %6304 = vmatprep.subr.bf16.mxu0 0
  %6305 = vmatpush1.bf16.msra.mxu0 %v6201
  %6306 = vmatprep.subr.bf16.mxu0 0
  %6307 = vmatpush2.bf16.msra.mxu0 %v6216
  %6308 = vmatprep.subr.bf16.mxu0 0
  %6309 = vmatpush2.bf16.msra.mxu0 %v6215
  %6310 = vmatprep.subr.bf16.mxu0 0
  %6311 = vmatpush2.bf16.msra.mxu0 %v6214
  %6312 = vmatprep.subr.bf16.mxu0 0
  %6313 = vmatpush2.bf16.msra.mxu0 %v6213
  %6314 = vmatprep.subr.bf16.mxu0 0
  %6315 = vmatpush2.bf16.msra.mxu0 %v6212
  %6316 = vmatprep.subr.bf16.mxu0 0
  %6317 = vmatpush2.bf16.msra.mxu0 %v6211
  %6318 = vmatprep.subr.bf16.mxu0 0
  %6319 = vmatpush2.bf16.msra.mxu0 %v6210
  %6320 = vmatprep.subr.bf16.mxu0 0
  %6321 = vmatpush2.bf16.msra.mxu0 %v6209
  %6322 = vmatprep.mubr.bf16.mxu0 %v5992
  %6323 = vmatmul.mubr.bf16.gmra.mxu0 %v5991
  %v6324 = vpop.f32.mrf.mxu0
  %v6325 = vadd.f32 %v6284, %v6324
  %v6326 = vpop.f32.mrf.mxu0
  %v6327 = vpop.f32.mrf.mxu0
  %v6328 = vadd.f32 %v6287, %v6327
  %v6329 = vpop.f32.mrf.mxu0
  %6330 = vdwg.mxu0
  %v6331 = vadd.f32 %v5819, %v6325
  %v6332 = vadd.f32 %v5822, %v6328
  %v6333 = vld [vmem:[%s4807 + $0x30] sm:$0xff]
  %v6334 = vld [vmem:[%s4807 + $0x38] sm:$0xff]
  %v6335 = vld [vmem:[%s4807 + $0x70] sm:$0xff]
  %v6336 = vld [vmem:[%s4807 + $0x78] sm:$0xff]
  %v6337 = vld [vmem:[%s4807 + $0xb0] sm:$0xff]
  %v6338 = vld [vmem:[%s4807 + $0xb8] sm:$0xff]
  %v6339 = vld [vmem:[%s4807 + $0xf0] sm:$0xff]
  %v6340 = vld [vmem:[%s4807 + $0xf8] sm:$0xff]
  %v6341 = vld [vmem:[%s4816 + $0xc] sm:$0xf]
  %v6343 = vlaneseq
  %v6344 = vshrl.u32 %v6343, 7
  %v6345 = vsub.s32 0, %v6344
  %v6346 = vrot.slane %v6341, %v6345
  %v6347 = vlaneseq
  %v6348 = vshrl.u32 %v6347, 7
  %v6349 = vsub.s32 1, %v6348
  %v6350 = vrot.slane %v6341, %v6349
  %v6351 = vlaneseq
  %v6352 = vshrl.u32 %v6351, 7
  %v6353 = vsub.s32 2, %v6352
  %v6354 = vrot.slane %v6341, %v6353
  %v6355 = vlaneseq
  %v6356 = vshrl.u32 %v6355, 7
  %v6357 = vsub.s32 3, %v6356
  %v6358 = vrot.slane %v6341, %v6357
  %v6371 = vunpack.c.l.b16 %v6333
  %v6372 = vunpack.c.h.b16 %v6333
  %v6373 = vunpack.c.l.b16 %v6334
  %v6374 = vunpack.c.h.b16 %v6334
  %v6375 = vunpack.c.l.b16 %v6335
  %v6376 = vunpack.c.h.b16 %v6335
  %v6377 = vunpack.c.l.b16 %v6336
  %v6378 = vunpack.c.h.b16 %v6336
  %v6379 = vunpack.c.l.b16 %v6337
  %v6380 = vunpack.c.h.b16 %v6337
  %v6381 = vunpack.c.l.b16 %v6338
  %v6382 = vunpack.c.h.b16 %v6338
  %v6383 = vunpack.c.l.b16 %v6339
  %v6384 = vunpack.c.h.b16 %v6339
  %v6385 = vunpack.c.l.b16 %v6340
  %v6386 = vunpack.c.h.b16 %v6340
  %v6387 = vpack.c.b16 %v6375, %v6371
  %v6388 = vpack.c.b16 %v6376, %v6372
  %v6389 = vpack.c.b16 %v6377, %v6373
  %v6390 = vpack.c.b16 %v6378, %v6374
  %v6391 = vpack.c.b16 %v6383, %v6379
  %v6392 = vpack.c.b16 %v6384, %v6380
  %v6393 = vpack.c.b16 %v6385, %v6381
  %v6394 = vpack.c.b16 %v6386, %v6382
  %6403 = vmatprep.subr.bf16.mxu0 0
  %6404 = vmatpush1.bf16.msra.mxu0 0
  %6405 = vmatprep.subr.bf16.mxu0 0
  %6406 = vmatpush1.bf16.msra.mxu0 0
  %6407 = vmatprep.subr.bf16.mxu0 0
  %6408 = vmatpush1.bf16.msra.mxu0 0
  %6409 = vmatprep.subr.bf16.mxu0 0
  %6410 = vmatpush1.bf16.msra.mxu0 0
  %6411 = vmatprep.subr.bf16.mxu0 0
  %6412 = vmatpush1.bf16.msra.mxu0 0
  %6413 = vmatprep.subr.bf16.mxu0 0
  %6414 = vmatpush1.bf16.msra.mxu0 0
  %6415 = vmatprep.subr.bf16.mxu0 %v6392
  %6416 = vmatpush1.bf16.msra.mxu0 %v6391
  %6417 = vmatprep.subr.bf16.mxu0 %v6388
  %6418 = vmatpush1.bf16.msra.mxu0 %v6387
  %6419 = vmatprep.subr.bf16.mxu0 0
  %6420 = vmatpush2.bf16.msra.mxu0 0
  %6421 = vmatprep.subr.bf16.mxu0 0
  %6422 = vmatpush2.bf16.msra.mxu0 0
  %6423 = vmatprep.subr.bf16.mxu0 0
  %6424 = vmatpush2.bf16.msra.mxu0 0
  %6425 = vmatprep.subr.bf16.mxu0 0
  %6426 = vmatpush2.bf16.msra.mxu0 0
  %6427 = vmatprep.subr.bf16.mxu0 0
  %6428 = vmatpush2.bf16.msra.mxu0 0
  %6429 = vmatprep.subr.bf16.mxu0 0
  %6430 = vmatpush2.bf16.msra.mxu0 0
  %6431 = vmatprep.subr.bf16.mxu0 0
  %6432 = vmatpush2.bf16.msra.mxu0 0
  %6433 = vmatprep.subr.bf16.mxu0 0
  %6434 = vmatpush2.bf16.msra.mxu0 0
  %6435 = vmatprep.mubr.bf16.mxu0 0
  %6436 = vmatmul.mubr.bf16.gmra.mxu0 %v4880
  %v6437 = vpop.f32.mrf.mxu0
  %v6438 = vadd.f32 %v6346, %v6437
  %v6439 = vpop.f32.mrf.mxu0
  %v6440 = vadd.f32 %v6350, %v6439
  %v6441 = vpop.f32.mrf.mxu0
  %v6442 = vadd.f32 %v6346, %v6441
  %v6443 = vpop.f32.mrf.mxu0
  %v6444 = vadd.f32 %v6350, %v6443
  %6445 = vdwg.mxu0
  %6446 = vmatprep.subr.bf16.mxu0 0
  %6447 = vmatpush1.bf16.msra.mxu0 0
  %6448 = vmatprep.subr.bf16.mxu0 0
  %6449 = vmatpush1.bf16.msra.mxu0 0
  %6450 = vmatprep.subr.bf16.mxu0 0
  %6451 = vmatpush1.bf16.msra.mxu0 0
  %6452 = vmatprep.subr.bf16.mxu0 0
  %6453 = vmatpush1.bf16.msra.mxu0 0
  %6454 = vmatprep.subr.bf16.mxu0 0
  %6455 = vmatpush1.bf16.msra.mxu0 0
  %6456 = vmatprep.subr.bf16.mxu0 0
  %6457 = vmatpush1.bf16.msra.mxu0 0
  %6458 = vmatprep.subr.bf16.mxu0 %v6394
  %6459 = vmatpush1.bf16.msra.mxu0 %v6393
  %6460 = vmatprep.subr.bf16.mxu0 %v6390
  %6461 = vmatpush1.bf16.msra.mxu0 %v6389
  %6462 = vmatprep.subr.bf16.mxu0 0
  %6463 = vmatpush2.bf16.msra.mxu0 0
  %6464 = vmatprep.subr.bf16.mxu0 0
  %6465 = vmatpush2.bf16.msra.mxu0 0
  %6466 = vmatprep.subr.bf16.mxu0 0
  %6467 = vmatpush2.bf16.msra.mxu0 0
  %6468 = vmatprep.subr.bf16.mxu0 0
  %6469 = vmatpush2.bf16.msra.mxu0 0
  %6470 = vmatprep.subr.bf16.mxu0 0
  %6471 = vmatpush2.bf16.msra.mxu0 0
  %6472 = vmatprep.subr.bf16.mxu0 0
  %6473 = vmatpush2.bf16.msra.mxu0 0
  %6474 = vmatprep.subr.bf16.mxu0 0
  %6475 = vmatpush2.bf16.msra.mxu0 0
  %6476 = vmatprep.subr.bf16.mxu0 0
  %6477 = vmatpush2.bf16.msra.mxu0 0
  %6478 = vmatprep.mubr.bf16.mxu0 0
  %6479 = vmatmul.mubr.bf16.gmra.mxu0 %v4880
  %v6480 = vpop.f32.mrf.mxu0
  %v6481 = vadd.f32 %v6354, %v6480
  %v6482 = vpop.f32.mrf.mxu0
  %v6483 = vadd.f32 %v6358, %v6482
  %v6484 = vpop.f32.mrf.mxu0
  %v6485 = vadd.f32 %v6354, %v6484
  %v6486 = vpop.f32.mrf.mxu0
  %v6487 = vadd.f32 %v6358, %v6486
  %6488 = vdwg.mxu0
  %v6489 = vmax.f32 %v6438, 0.0
  %v6490 = vmax.f32 %v6440, 0.0
  %v6491 = vmax.f32 %v6481, 0.0
  %v6492 = vmax.f32 %v6483, 0.0
  %v6493 = vmax.f32 %v6442, 0.0
  %v6494 = vmax.f32 %v6444, 0.0
  %v6495 = vmax.f32 %v6485, 0.0
  %v6496 = vmax.f32 %v6487, 0.0
  %v6497 = vpack.c.bf16 %v6493, %v6489
  %v6498 = vpack.c.bf16 %v6494, %v6490
  %v6499 = vpack.c.bf16 %v6495, %v6491
  %v6500 = vpack.c.bf16 %v6496, %v6492
  %v6501 = vld [vmem:[%s4980 + $0x300] sm:$0xf]
  %v6502 = vld [vmem:[%s4980 + $0x304] sm:$0xf]
  %v6503 = vld [vmem:[%s4980 + $0x308] sm:$0xf]
  %v6504 = vld [vmem:[%s4980 + $0x30c] sm:$0xf]
  %v6505 = vld [vmem:[%s4980 + $0x310] sm:$0xf]
  %v6506 = vld [vmem:[%s4980 + $0x314] sm:$0xf]
  %v6507 = vld [vmem:[%s4980 + $0x318] sm:$0xf]
  %v6508 = vld [vmem:[%s4980 + $0x31c] sm:$0xf]
  %v6509 = vld [vmem:[%s4980 + $0x320] sm:$0xf]
  %v6510 = vld [vmem:[%s4980 + $0x324] sm:$0xf]
  %v6511 = vld [vmem:[%s4980 + $0x328] sm:$0xf]
  %v6512 = vld [vmem:[%s4980 + $0x32c] sm:$0xf]
  %v6513 = vld [vmem:[%s4980 + $0x330] sm:$0xf]
  %v6514 = vld [vmem:[%s4980 + $0x334] sm:$0xf]
  %v6515 = vld [vmem:[%s4980 + $0x338] sm:$0xf]
  %v6516 = vld [vmem:[%s4980 + $0x33c] sm:$0xf]
  %v6517 = vld [vmem:[%s4980 + $0x340] sm:$0xf]
  %v6518 = vld [vmem:[%s4980 + $0x344] sm:$0xf]
  %v6519 = vld [vmem:[%s4980 + $0x348] sm:$0xf]
  %v6520 = vld [vmem:[%s4980 + $0x34c] sm:$0xf]
  %v6521 = vld [vmem:[%s4980 + $0x350] sm:$0xf]
  %v6522 = vld [vmem:[%s4980 + $0x354] sm:$0xf]
  %v6523 = vld [vmem:[%s4980 + $0x358] sm:$0xf]
  %v6524 = vld [vmem:[%s4980 + $0x35c] sm:$0xf]
  %v6525 = vld [vmem:[%s4980 + $0x360] sm:$0xf]
  %v6526 = vld [vmem:[%s4980 + $0x364] sm:$0xf]
  %v6527 = vld [vmem:[%s4980 + $0x368] sm:$0xf]
  %v6528 = vld [vmem:[%s4980 + $0x36c] sm:$0xf]
  %v6529 = vld [vmem:[%s4980 + $0x370] sm:$0xf]
  %v6530 = vld [vmem:[%s4980 + $0x374] sm:$0xf]
  %v6531 = vld [vmem:[%s4980 + $0x378] sm:$0xf]
  %v6532 = vld [vmem:[%s4980 + $0x37c] sm:$0xf]
  %v6533 = vld [vmem:[%s4980 + $0x380] sm:$0xf]
  %v6534 = vld [vmem:[%s4980 + $0x384] sm:$0xf]
  %v6535 = vld [vmem:[%s4980 + $0x388] sm:$0xf]
  %v6536 = vld [vmem:[%s4980 + $0x38c] sm:$0xf]
  %v6537 = vld [vmem:[%s4980 + $0x390] sm:$0xf]
  %v6538 = vld [vmem:[%s4980 + $0x394] sm:$0xf]
  %v6539 = vld [vmem:[%s4980 + $0x398] sm:$0xf]
  %v6540 = vld [vmem:[%s4980 + $0x39c] sm:$0xf]
  %v6541 = vld [vmem:[%s4980 + $0x3a0] sm:$0xf]
  %v6542 = vld [vmem:[%s4980 + $0x3a4] sm:$0xf]
  %v6543 = vld [vmem:[%s4980 + $0x3a8] sm:$0xf]
  %v6544 = vld [vmem:[%s4980 + $0x3ac] sm:$0xf]
  %v6545 = vld [vmem:[%s4980 + $0x3b0] sm:$0xf]
  %v6546 = vld [vmem:[%s4980 + $0x3b4] sm:$0xf]
  %v6547 = vld [vmem:[%s4980 + $0x3b8] sm:$0xf]
  %v6548 = vld [vmem:[%s4980 + $0x3bc] sm:$0xf]
  %v6549 = vld [vmem:[%s4980 + $0x3c0] sm:$0xf]
  %v6550 = vld [vmem:[%s4980 + $0x3c4] sm:$0xf]
  %v6551 = vld [vmem:[%s4980 + $0x3c8] sm:$0xf]
  %v6552 = vld [vmem:[%s4980 + $0x3cc] sm:$0xf]
  %v6553 = vld [vmem:[%s4980 + $0x3d0] sm:$0xf]
  %v6554 = vld [vmem:[%s4980 + $0x3d4] sm:$0xf]
  %v6555 = vld [vmem:[%s4980 + $0x3d8] sm:$0xf]
  %v6556 = vld [vmem:[%s4980 + $0x3dc] sm:$0xf]
  %v6557 = vld [vmem:[%s4980 + $0x3e0] sm:$0xf]
  %v6558 = vld [vmem:[%s4980 + $0x3e4] sm:$0xf]
  %v6559 = vld [vmem:[%s4980 + $0x3e8] sm:$0xf]
  %v6560 = vld [vmem:[%s4980 + $0x3ec] sm:$0xf]
  %v6561 = vld [vmem:[%s4980 + $0x3f0] sm:$0xf]
  %v6562 = vld [vmem:[%s4980 + $0x3f4] sm:$0xf]
  %v6563 = vld [vmem:[%s4980 + $0x3f8] sm:$0xf]
  %v6564 = vld [vmem:[%s4980 + $0x3fc] sm:$0xf]
  %v6629 = vunpack.c.l.b16 %v6501
  %v6630 = vunpack.c.l.b16 %v6502
  %v6631 = vunpack.c.l.b16 %v6503
  %v6632 = vunpack.c.l.b16 %v6504
  %v6633 = vunpack.c.l.b16 %v6505
  %v6634 = vunpack.c.l.b16 %v6506
  %v6635 = vunpack.c.l.b16 %v6507
  %v6636 = vunpack.c.l.b16 %v6508
  %v6637 = vunpack.c.l.b16 %v6509
  %v6638 = vunpack.c.l.b16 %v6510
  %v6639 = vunpack.c.l.b16 %v6511
  %v6640 = vunpack.c.l.b16 %v6512
  %v6641 = vunpack.c.l.b16 %v6513
  %v6642 = vunpack.c.l.b16 %v6514
  %v6643 = vunpack.c.l.b16 %v6515
  %v6644 = vunpack.c.l.b16 %v6516
  %v6645 = vunpack.c.l.b16 %v6517
  %v6646 = vunpack.c.l.b16 %v6518
  %v6647 = vunpack.c.l.b16 %v6519
  %v6648 = vunpack.c.l.b16 %v6520
  %v6649 = vunpack.c.l.b16 %v6521
  %v6650 = vunpack.c.l.b16 %v6522
  %v6651 = vunpack.c.l.b16 %v6523
  %v6652 = vunpack.c.l.b16 %v6524
  %v6653 = vunpack.c.l.b16 %v6525
  %v6654 = vunpack.c.l.b16 %v6526
  %v6655 = vunpack.c.l.b16 %v6527
  %v6656 = vunpack.c.l.b16 %v6528
  %v6657 = vunpack.c.l.b16 %v6529
  %v6658 = vunpack.c.l.b16 %v6530
  %v6659 = vunpack.c.l.b16 %v6531
  %v6660 = vunpack.c.l.b16 %v6532
  %v6661 = vunpack.c.l.b16 %v6533
  %v6662 = vunpack.c.l.b16 %v6534
  %v6663 = vunpack.c.l.b16 %v6535
  %v6664 = vunpack.c.l.b16 %v6536
  %v6665 = vunpack.c.l.b16 %v6537
  %v6666 = vunpack.c.l.b16 %v6538
  %v6667 = vunpack.c.l.b16 %v6539
  %v6668 = vunpack.c.l.b16 %v6540
  %v6669 = vunpack.c.l.b16 %v6541
  %v6670 = vunpack.c.l.b16 %v6542
  %v6671 = vunpack.c.l.b16 %v6543
  %v6672 = vunpack.c.l.b16 %v6544
  %v6673 = vunpack.c.l.b16 %v6545
  %v6674 = vunpack.c.l.b16 %v6546
  %v6675 = vunpack.c.l.b16 %v6547
  %v6676 = vunpack.c.l.b16 %v6548
  %v6677 = vunpack.c.l.b16 %v6549
  %v6678 = vunpack.c.l.b16 %v6550
  %v6679 = vunpack.c.l.b16 %v6551
  %v6680 = vunpack.c.l.b16 %v6552
  %v6681 = vunpack.c.l.b16 %v6553
  %v6682 = vunpack.c.l.b16 %v6554
  %v6683 = vunpack.c.l.b16 %v6555
  %v6684 = vunpack.c.l.b16 %v6556
  %v6685 = vunpack.c.l.b16 %v6557
  %v6686 = vunpack.c.l.b16 %v6558
  %v6687 = vunpack.c.l.b16 %v6559
  %v6688 = vunpack.c.l.b16 %v6560
  %v6689 = vunpack.c.l.b16 %v6561
  %v6690 = vunpack.c.l.b16 %v6562
  %v6691 = vunpack.c.l.b16 %v6563
  %v6692 = vunpack.c.l.b16 %v6564
  %v6693 = vpack.c.b16 %v6630, %v6629
  %v6694 = vpack.c.b16 %v6632, %v6631
  %v6695 = vpack.c.b16 %v6634, %v6633
  %v6696 = vpack.c.b16 %v6636, %v6635
  %v6697 = vpack.c.b16 %v6638, %v6637
  %v6698 = vpack.c.b16 %v6640, %v6639
  %v6699 = vpack.c.b16 %v6642, %v6641
  %v6700 = vpack.c.b16 %v6644, %v6643
  %v6701 = vpack.c.b16 %v6646, %v6645
  %v6702 = vpack.c.b16 %v6648, %v6647
  %v6703 = vpack.c.b16 %v6650, %v6649
  %v6704 = vpack.c.b16 %v6652, %v6651
  %v6705 = vpack.c.b16 %v6654, %v6653
  %v6706 = vpack.c.b16 %v6656, %v6655
  %v6707 = vpack.c.b16 %v6658, %v6657
  %v6708 = vpack.c.b16 %v6660, %v6659
  %v6709 = vpack.c.b16 %v6662, %v6661
  %v6710 = vpack.c.b16 %v6664, %v6663
  %v6711 = vpack.c.b16 %v6666, %v6665
  %v6712 = vpack.c.b16 %v6668, %v6667
  %v6713 = vpack.c.b16 %v6670, %v6669
  %v6714 = vpack.c.b16 %v6672, %v6671
  %v6715 = vpack.c.b16 %v6674, %v6673
  %v6716 = vpack.c.b16 %v6676, %v6675
  %v6717 = vpack.c.b16 %v6678, %v6677
  %v6718 = vpack.c.b16 %v6680, %v6679
  %v6719 = vpack.c.b16 %v6682, %v6681
  %v6720 = vpack.c.b16 %v6684, %v6683
  %v6721 = vpack.c.b16 %v6686, %v6685
  %v6722 = vpack.c.b16 %v6688, %v6687
  %v6723 = vpack.c.b16 %v6690, %v6689
  %v6724 = vpack.c.b16 %v6692, %v6691
  %6757 = vmatprep.subr.bf16.mxu0 0
  %6758 = vmatpush1.bf16.msra.mxu0 %v6700
  %6759 = vmatprep.subr.bf16.mxu0 0
  %6760 = vmatpush1.bf16.msra.mxu0 %v6699
  %6761 = vmatprep.subr.bf16.mxu0 0
  %6762 = vmatpush1.bf16.msra.mxu0 %v6698
  %6763 = vmatprep.subr.bf16.mxu0 0
  %6764 = vmatpush1.bf16.msra.mxu0 %v6697
  %6765 = vmatprep.subr.bf16.mxu0 0
  %6766 = vmatpush1.bf16.msra.mxu0 %v6696
  %6767 = vmatprep.subr.bf16.mxu0 0
  %6768 = vmatpush1.bf16.msra.mxu0 %v6695
  %6769 = vmatprep.subr.bf16.mxu0 0
  %6770 = vmatpush1.bf16.msra.mxu0 %v6694
  %6771 = vmatprep.subr.bf16.mxu0 0
  %6772 = vmatpush1.bf16.msra.mxu0 %v6693
  %6773 = vmatprep.subr.bf16.mxu0 0
  %6774 = vmatpush2.bf16.msra.mxu0 %v6708
  %6775 = vmatprep.subr.bf16.mxu0 0
  %6776 = vmatpush2.bf16.msra.mxu0 %v6707
  %6777 = vmatprep.subr.bf16.mxu0 0
  %6778 = vmatpush2.bf16.msra.mxu0 %v6706
  %6779 = vmatprep.subr.bf16.mxu0 0
  %6780 = vmatpush2.bf16.msra.mxu0 %v6705
  %6781 = vmatprep.subr.bf16.mxu0 0
  %6782 = vmatpush2.bf16.msra.mxu0 %v6704
  %6783 = vmatprep.subr.bf16.mxu0 0
  %6784 = vmatpush2.bf16.msra.mxu0 %v6703
  %6785 = vmatprep.subr.bf16.mxu0 0
  %6786 = vmatpush2.bf16.msra.mxu0 %v6702
  %6787 = vmatprep.subr.bf16.mxu0 0
  %6788 = vmatpush2.bf16.msra.mxu0 %v6701
  %6789 = vmatprep.mubr.bf16.mxu0 %v6498
  %6790 = vmatmul.mubr.bf16.gmra.mxu0 %v6497
  %v6791 = vpop.f32.mrf.mxu0
  %v6792 = vadd.f32 0.0, %v6791
  %v6793 = vpop.f32.mrf.mxu0
  %v6794 = vpop.f32.mrf.mxu0
  %v6795 = vadd.f32 0.0, %v6794
  %v6796 = vpop.f32.mrf.mxu0
  %6797 = vdwg.mxu0
  %6798 = vmatprep.subr.bf16.mxu0 0
  %6799 = vmatpush1.bf16.msra.mxu0 %v6716
  %6800 = vmatprep.subr.bf16.mxu0 0
  %6801 = vmatpush1.bf16.msra.mxu0 %v6715
  %6802 = vmatprep.subr.bf16.mxu0 0
  %6803 = vmatpush1.bf16.msra.mxu0 %v6714
  %6804 = vmatprep.subr.bf16.mxu0 0
  %6805 = vmatpush1.bf16.msra.mxu0 %v6713
  %6806 = vmatprep.subr.bf16.mxu0 0
  %6807 = vmatpush1.bf16.msra.mxu0 %v6712
  %6808 = vmatprep.subr.bf16.mxu0 0
  %6809 = vmatpush1.bf16.msra.mxu0 %v6711
  %6810 = vmatprep.subr.bf16.mxu0 0
  %6811 = vmatpush1.bf16.msra.mxu0 %v6710
  %6812 = vmatprep.subr.bf16.mxu0 0
  %6813 = vmatpush1.bf16.msra.mxu0 %v6709
  %6814 = vmatprep.subr.bf16.mxu0 0
  %6815 = vmatpush2.bf16.msra.mxu0 %v6724
  %6816 = vmatprep.subr.bf16.mxu0 0
  %6817 = vmatpush2.bf16.msra.mxu0 %v6723
  %6818 = vmatprep.subr.bf16.mxu0 0
  %6819 = vmatpush2.bf16.msra.mxu0 %v6722
  %6820 = vmatprep.subr.bf16.mxu0 0
  %6821 = vmatpush2.bf16.msra.mxu0 %v6721
  %6822 = vmatprep.subr.bf16.mxu0 0
  %6823 = vmatpush2.bf16.msra.mxu0 %v6720
  %6824 = vmatprep.subr.bf16.mxu0 0
  %6825 = vmatpush2.bf16.msra.mxu0 %v6719
  %6826 = vmatprep.subr.bf16.mxu0 0
  %6827 = vmatpush2.bf16.msra.mxu0 %v6718
  %6828 = vmatprep.subr.bf16.mxu0 0
  %6829 = vmatpush2.bf16.msra.mxu0 %v6717
  %6830 = vmatprep.mubr.bf16.mxu0 %v6500
  %6831 = vmatmul.mubr.bf16.gmra.mxu0 %v6499
  %v6832 = vpop.f32.mrf.mxu0
  %v6833 = vadd.f32 %v6792, %v6832
  %v6834 = vpop.f32.mrf.mxu0
  %v6835 = vpop.f32.mrf.mxu0
  %v6836 = vadd.f32 %v6795, %v6835
  %v6837 = vpop.f32.mrf.mxu0
  %6838 = vdwg.mxu0
  %v6839 = vadd.f32 %v6331, %v6833
  %v6840 = vadd.f32 %v6332, %v6836
  %v6841 = vadd.f32 %v4804, %v6839
  %v6842 = vadd.f32 %v4805, %v6840
  %s6843 = scalar_lea.vmem %s16, 1
  %v6844 = vld [vmem:[%s6843] sm:$0x1]
  %v6846 = vlaneseq
  %v6847 = vshrl.u32 %v6846, 7
  %v6848 = vsub.s32 0, %v6847
  %v6849 = vrot.slane %v6844, %v6848
  %v6851 = vadd.f32 %v6841, %v6849
  %v6852 = vadd.f32 %v6842, %v6849
  %s6853 = scalar_lea.vmem %s17, 1
  %v6854 = vld [vmem:[%s6853] sm:$0x1]
  %s6855 = scalar_lea.vmem %s18, 1
  %v6856 = vld [vmem:[%s6855] sm:$0x1]
  %v6857 = vsel %vm199, %v6851, 0.0
  %6858 = vadd.xlane.f32.xlu0 %v6857
  %v6859 = vpop.xlane.xlu0 %6858
  %v6860 = vsel %vm199, %v6852, 0.0
  %6861 = vadd.xlane.f32.xlu0 %v6860
  %v6862 = vpop.xlane.xlu0 %6861
  %v6863 = vmul.f32 %v6859, %v1408
  %v6864 = vmul.f32 %v6862, %v1408
  %v6865 = vsub.f32 %v6851, %v6863
  %v6866 = vsub.f32 %v6852, %v6864
  %v6867 = vmul.f32 %v6865, %v6865
  %v6868 = vmul.f32 %v6866, %v6866
  %v6869 = vsel %vm199, %v6867, 0.0
  %6870 = vadd.xlane.f32.xlu0 %v6869
  %v6871 = vpop.xlane.xlu0 %6870
  %v6872 = vsel %vm199, %v6868, 0.0
  %6873 = vadd.xlane.f32.xlu0 %v6872
  %v6874 = vpop.xlane.xlu0 %6873
  %v6875 = vmul.f32 %v6871, %v1408
  %v6876 = vmul.f32 %v6874, %v1408
  %v6877 = vadd.f32 %v6875, 1e-05
  %v6878 = vadd.f32 %v6876, 1e-05
  %v6879 = vrsqrt.pop %v6877
  %v6880 = vrsqrt.pop %v6878
  %v6881 = vmul.f32 %v6865, %v6879
  %v6882 = vmul.f32 %v6866, %v6880
  %v6884 = vlaneseq
  %v6885 = vshrl.u32 %v6884, 7
  %v6886 = vsub.s32 0, %v6885
  %v6887 = vrot.slane %v6854, %v6886
  %v6889 = vmul.f32 %v6881, %v6887
  %v6890 = vmul.f32 %v6882, %v6887
  %v6892 = vlaneseq
  %v6893 = vshrl.u32 %v6892, 7
  %v6894 = vsub.s32 0, %v6893
  %v6895 = vrot.slane %v6856, %v6894
  %v6897 = vadd.f32 %v6889, %v6895
  %v6898 = vadd.f32 %v6890, %v6895
  %v6899 = vpack.c.bf16 %v6898, %v6897
  %v6900 = vld [vmem:[%s19] sm:$0xf]
  %v6901 = vld [vmem:[%s19 + $0x4] sm:$0xf]
  %v6902 = vld [vmem:[%s19 + $0x8] sm:$0xf]
  %v6903 = vld [vmem:[%s19 + $0xc] sm:$0xf]
  %v6904 = vld [vmem:[%s20] sm:$0x1]
  %v6906 = vlaneseq
  %v6907 = vshrl.u32 %v6906, 7
  %v6908 = vsub.s32 0, %v6907
  %v6909 = vrot.slane %v6904, %v6908
  %v6915 = vunpack.c.l.b16 %v6900
  %v6916 = vunpack.c.l.b16 %v6901
  %v6917 = vunpack.c.l.b16 %v6902
  %v6918 = vunpack.c.l.b16 %v6903
  %v6919 = vpack.c.b16 %v6916, %v6915
  %v6920 = vpack.c.b16 %v6918, %v6917
  %v6924 = vsel %vm199, %v6899, 0
  %6926 = vmatprep.subr.bf16.mxu0 0
  %6927 = vmatpush1.bf16.msra.mxu0 0
  %6928 = vmatprep.subr.bf16.mxu0 0
  %6929 = vmatpush1.bf16.msra.mxu0 0
  %6930 = vmatprep.subr.bf16.mxu0 0
  %6931 = vmatpush1.bf16.msra.mxu0 0
  %6932 = vmatprep.subr.bf16.mxu0 0
  %6933 = vmatpush1.bf16.msra.mxu0 0
  %6934 = vmatprep.subr.bf16.mxu0 0
  %6935 = vmatpush1.bf16.msra.mxu0 0
  %6936 = vmatprep.subr.bf16.mxu0 0
  %6937 = vmatpush1.bf16.msra.mxu0 0
  %6938 = vmatprep.subr.bf16.mxu0 0
  %6939 = vmatpush1.bf16.msra.mxu0 %v6920
  %6940 = vmatprep.subr.bf16.mxu0 0
  %6941 = vmatpush1.bf16.msra.mxu0 %v6919
  %6942 = vmatprep.subr.bf16.mxu0 0
  %6943 = vmatpush2.bf16.msra.mxu0 0
  %6944 = vmatprep.subr.bf16.mxu0 0
  %6945 = vmatpush2.bf16.msra.mxu0 0
  %6946 = vmatprep.subr.bf16.mxu0 0
  %6947 = vmatpush2.bf16.msra.mxu0 0
  %6948 = vmatprep.subr.bf16.mxu0 0
  %6949 = vmatpush2.bf16.msra.mxu0 0
  %6950 = vmatprep.subr.bf16.mxu0 0
  %6951 = vmatpush2.bf16.msra.mxu0 0
  %6952 = vmatprep.subr.bf16.mxu0 0
  %6953 = vmatpush2.bf16.msra.mxu0 0
  %6954 = vmatprep.subr.bf16.mxu0 0
  %6955 = vmatpush2.bf16.msra.mxu0 0
  %6956 = vmatprep.subr.bf16.mxu0 0
  %6957 = vmatpush2.bf16.msra.mxu0 0
  %6958 = vmatprep.mubr.bf16.mxu0 0
  %6959 = vmatmul.mubr.bf16.gmra.mxu0 %v6924
  %v6960 = vpop.f32.mrf.mxu0
  %v6961 = vadd.f32 %v6909, %v6960
  %v6962 = vpop.f32.mrf.mxu0
  %v6963 = vpop.f32.mrf.mxu0
  %v6964 = vadd.f32 %v6909, %v6963
  %v6965 = vpop.f32.mrf.mxu0
  %6966 = vdwg.mxu0
  %6967 = vst [vmem:[%s21] sm:$0xff] %v6961
  %6968 = vst [vmem:[%s21 + $0x8] sm:$0xff] %v6964
  // Predicated region
  $region86: #{transformer_classifier_tagger.1} parent=0 // pred_check
    _
  $region87: #{transformer_classifier_tagger.1} parent=0 // pred_check_branch
    %6970 = sbr.rel (0) target = $region89
  $region88: #{transformer_classifier_tagger.1} parent=0 // pred_region
    _
  $region89: #{transformer_classifier_tagger.1} parent=0 // pred_fallthru
    _
  // Predicated region
  $region90: #{transformer_classifier_tagger.1} parent=0 // pred_check
    _
  $region91: #{transformer_classifier_tagger.1} parent=0 // pred_check_branch
    %6972 = sbr.rel (0) target = $region93
  $region92: #{transformer_classifier_tagger.1} parent=0 // pred_region
    _
  $region93: #{transformer_classifier_tagger.1} parent=0 // pred_fallthru
    _

</llo_original>
